<compile_context>
chip_gen: v7x
topology: tpu7x:2x2x1
jax: 0.10.0
libtpu: 0.0.40
codegen_flags: <defaults>
</compile_context>

<pallas_src>
import jax
import jax.numpy as jnp
from jax.experimental import pallas as pl
from jax.experimental.pallas import tpu as pltpu


# ---------------------------------------------------------------------------
# Config matching RenderingNetwork(__init__) at small synthetic sizes:
#   feature_vector_size=32, mode='idr', d_in=9, d_out=3, dims=[64, 64],
#   weight_norm=True, multires_loc=0, multires_view=4, is_reflection_dir=True
# ---------------------------------------------------------------------------
FEATURE_VECTOR_SIZE = 32
D_IN = 9                      # points(3) + view_dirs(3) + normals(3)
D_OUT = 3
HIDDEN_DIMS = [64, 64]
MULTIRES_VIEW = 4
IS_REFLECTION_DIR = True
MODE = "idr"

COMPUTE_DTYPE = jnp.bfloat16  # MXU operand dtype (accumulation stays f32)
TM_MAX = 4096                 # max rows per grid step (tiny per-step VMEM)
TM_MIN = 128

D_STATIC = 3 + 3 + FEATURE_VECTOR_SIZE   # packed lanes: [points | normals | features]
D_PACKED = D_STATIC + 3                  # + raw view_dirs in the last 3 lanes


# ----------------------------- glue helpers --------------------------------
def embed_view(x, multires):
    """NeRF positional embedding: [x, sin(2^k x), cos(2^k x)]_{k=0..L-1} (reference only)."""
    if multires <= 0:
        return x
    outs = [x]
    for k in range(multires):
        f = 2.0 ** k
        outs.append(jnp.sin(x * f))
        outs.append(jnp.cos(x * f))
    return jnp.concatenate(outs, axis=-1)


def embed_view_out_ch(multires):
    return 3 + 3 * 2 * multires if multires > 0 else 3


def fold_weight_norm(v, g):
    """nn.utils.weight_norm: W = g * v / ||v||_row (norm over input dim, per out row).
    v: (out_dim, in_dim) torch layout, g: (out_dim,). Returns (in_dim, out_dim)."""
    norm = jnp.sqrt(jnp.sum(v * v, axis=1, keepdims=True))  # (out_dim, 1)
    w = g[:, None] * v / norm                                # (out_dim, in_dim)
    return w.T                                               # (in_dim, out_dim)


def _choose_tm(n, tm_max=TM_MAX, tm_min=TM_MIN):
    """Largest power-of-two tile <= tm_max that still leaves >= 2 grid steps
    (keeps both v7x TensorCores busy); never below tm_min."""
    tm = tm_max
    while tm > tm_min and n <= tm:
        tm //= 2
    return tm


# ----------------------------- Pallas kernel --------------------------------
def rendering_mlp_kernel(x_ref, w0st_ref, w0v_ref, w0s_ref, w0c_ref, b0_ref,
                         w1_ref, b1_ref, w2_ref, b2_ref, o_ref):
    f32 = jnp.float32
    cdt = w1_ref.dtype            # bf16 matmul operands, f32 accumulation

    x = x_ref[...]                                    # (TM, 41) packed bf16 rows
    n = x[:, 3:6].astype(f32)                         # normals
    v = x[:, D_STATIC:D_STATIC + 3].astype(f32)       # raw view dirs

    # reflection direction: r = 2*(n.v)*n - v   (f32 elementwise + tiny lane reduce)
    if IS_REFLECTION_DIR:
        v = 2.0 * jnp.sum(n * v, axis=-1, keepdims=True) * n - v

    # One (TM, 12) operand for all frequencies -> single sin / single cos call.
    v12 = jnp.concatenate([v * (2.0 ** k) for k in range(MULTIRES_VIEW)], axis=-1)
    s12 = jnp.sin(v12).astype(cdt)
    c12 = jnp.cos(v12).astype(cdt)
    v_c = v.astype(cdt)

    # Layer 0 = sum of 4 adjacent dots (MRB-friendly on v7x):
    #   packed static 41 lanes (raw-view lanes hit zero weight rows)
    #   + reflected view (identity part) + sin(12) + cos(12).
    h = (jnp.dot(x, w0st_ref[...], preferred_element_type=f32)
         + jnp.dot(v_c, w0v_ref[...], preferred_element_type=f32)
         + jnp.dot(s12, w0s_ref[...], preferred_element_type=f32)
         + jnp.dot(c12, w0c_ref[...], preferred_element_type=f32))
    h = jnp.maximum(h + b0_ref[...], 0.0)             # bias + ReLU in f32

    h = jnp.dot(h.astype(cdt), w1_ref[...], preferred_element_type=f32) + b1_ref[...]
    h = jnp.maximum(h, 0.0)

    y = jnp.dot(h.astype(cdt), w2_ref[...], preferred_element_type=f32) + b2_ref[...]
    o_ref[...] = jnp.tanh(y).astype(o_ref.dtype)       # final tanh


def rendering_mlp_pallas(packed, kp, *, tm=None):
    """packed: (N, D_PACKED) rows, lane order [points | normals | features | view_dirs].
    kp: dict from prepare_params()."""
    N = packed.shape[0]
    assert packed.shape[1] == D_PACKED
    if tm is None:
        tm = _choose_tm(N)
    grid_n = pl.cdiv(N, tm)
    n_pad = grid_n * tm
    if n_pad != N:
        # Pads ONLY the single packed buffer (XLA fuses this with the packing
        # concat). Ideal callers hand in an already padded packed buffer.
        packed = jnp.pad(packed, ((0, n_pad - N), (0, 0)))

    full = lambda a: pl.BlockSpec(a.shape, lambda i: (0,) * a.ndim)
    weights = (kp["w0st"], kp["w0v"], kp["w0s"], kp["w0c"], kp["b0"],
               kp["w1"], kp["b1"], kp["w2"], kp["b2"])

    out = pl.pallas_call(
        rendering_mlp_kernel,
        out_shape=jax.ShapeDtypeStruct((n_pad, D_OUT), jnp.float32),
        grid_spec=pltpu.PrefetchScalarGridSpec(
            num_scalar_prefetch=0,
            grid=(grid_n,),
            in_specs=[pl.BlockSpec((tm, D_PACKED), lambda i: (i, 0))]
                     + [full(w) for w in weights],
            out_specs=pl.BlockSpec((tm, D_OUT), lambda i: (i, 0)),
        ),
        compiler_params=pltpu.CompilerParams(
            dimension_semantics=("parallel",)),
    )(packed, *weights)
    # Padded tail rows hold tanh(bias)-valued garbage; always slice them off.
    return out[:N]


# ----------------------------- full forward ---------------------------------
def rendering_network_forward(points, normals, view_dirs, feature_vectors, kp):
    """Matches RenderingNetwork.forward (mode='idr', reflection dir, multires_view=4).
    Reflection, embedding, concat and the 3-layer MLP all run inside the kernel;
    the wrapper only packs the raw per-point channels into one bf16 buffer."""
    assert feature_vectors.shape[1] == FEATURE_VECTOR_SIZE
    packed = jnp.concatenate(
        [points, normals, feature_vectors, view_dirs], axis=-1
    ).astype(COMPUTE_DTYPE)
    return rendering_mlp_pallas(packed, kp)


# ----------------------------- references -----------------------------------
def _bf16_round(x):
    return x.astype(jnp.bfloat16).astype(jnp.float32)


def rendering_network_forward_ref_f32(points, normals, view_dirs, feature_vectors,
                                      params_f32):
    """Pure f32 reference with the module's exact semantics."""
    p = points.astype(jnp.float32)
    n = normals.astype(jnp.float32)
    v = view_dirs.astype(jnp.float32)
    f = feature_vectors.astype(jnp.float32)
    if IS_REFLECTION_DIR:
        v = 2.0 * jnp.sum(n * v, axis=1, keepdims=True) * n - v
    v_e = embed_view(v, MULTIRES_VIEW)
    x = jnp.concatenate([p, v_e, n, f], axis=-1)
    (w0, b0), (w1, b1), (w2, b2) = params_f32
    x = jnp.maximum(x @ w0 + b0, 0.0)
    x = jnp.maximum(x @ w1 + b1, 0.0)
    return jnp.tanh(x @ w2 + b2)


def rendering_network_forward_ref_bf16(points, normals, view_dirs, feature_vectors,
                                       params_f32):
    """Reference mirroring the kernel's numerics: bf16 matmul operands, f32 accum."""
    p = points.astype(jnp.float32)
    n = normals.astype(jnp.float32)
    v = view_dirs.astype(jnp.float32)
    f = feature_vectors.astype(jnp.float32)
    if IS_REFLECTION_DIR:
        v = 2.0 * jnp.sum(n * v, axis=1, keepdims=True) * n - v
    v_e = embed_view(v, MULTIRES_VIEW)
    x = jnp.concatenate([p, v_e, n, f], axis=-1)
    (w0, b0), (w1, b1), (w2, b2) = params_f32
    x = jnp.maximum(_bf16_round(x) @ _bf16_round(w0) + b0, 0.0)
    x = jnp.maximum(_bf16_round(x) @ _bf16_round(w1) + b1, 0.0)
    return jnp.tanh(_bf16_round(x) @ _bf16_round(w2) + b2)


# ----------------------------- param init -----------------------------------
def init_params(key):
    """Per-layer (W (in_dim,out_dim) f32 with weight-norm folded, b (out_dim,) f32)."""
    d0 = D_IN + FEATURE_VECTOR_SIZE + (embed_view_out_ch(MULTIRES_VIEW) - 3)
    layer_dims = [d0] + HIDDEN_DIMS + [D_OUT]
    params = []
    for l in range(len(layer_dims) - 1):
        din, dout = layer_dims[l], layer_dims[l + 1]
        key, kv, kg, kb = jax.random.split(key, 4)
        v = jax.random.normal(kv, (dout, din), jnp.float32) * 0.1   # torch layout
        g = 1.0 + 0.1 * jax.random.normal(kg, (dout,), jnp.float32)
        b = 0.01 * jax.random.normal(kb, (dout,), jnp.float32)
        params.append((fold_weight_norm(v, g), b))
    return params


def prepare_params(params_f32, compute_dtype=COMPUTE_DTYPE):
    """Repack layer-0 weights to match the packed-input / fused-embedding kernel
    and cast weights to the MXU compute dtype; biases stay f32.

    Original W0 row layout (in_dim = 65):
      0:3 points | 3:6 view(identity) | 6:6+6L interleaved sin/cos per freq |
      6+6L:9+6L normals | 9+6L:65 features
    """
    (w0, b0), (w1, b1), (w2, b2) = params_f32
    L = MULTIRES_VIEW
    h0 = w0.shape[1]
    cast = lambda w: w.astype(compute_dtype)
    w0_stat = jnp.concatenate([
        w0[0:3],                                    # points   -> packed lanes 0:3
        w0[6 + 6 * L: 9 + 6 * L],                   # normals  -> packed lanes 3:6
        w0[9 + 6 * L:],                             # features -> packed lanes 6:38
        jnp.zeros((3, h0), w0.dtype),               # raw-view lanes 38:41 (handled separately)
    ], axis=0)                                      # (41, h0)
    w0v = w0[3:6]                                   # (3, h0) identity view part
    w0s = jnp.concatenate([w0[6 + 6 * k: 9 + 6 * k] for k in range(L)], axis=0)   # (12, h0)
    w0c = jnp.concatenate([w0[9 + 6 * k: 12 + 6 * k] for k in range(L)], axis=0)  # (12, h0)
    as_row = lambda b: b.reshape(1, -1).astype(jnp.float32)
    return dict(
        w0st=cast(w0_stat), w0v=cast(w0v), w0s=cast(w0s), w0c=cast(w0c),
        b0=as_row(b0), w1=cast(w1), b1=as_row(b1), w2=cast(w2), b2=as_row(b2),
    )


# ----------------------------- main ------------------------------------------
if __name__ == "__main__":
    key = jax.random.PRNGKey(0)
    kpts, knrm, kvd, kfeat, kparam = jax.random.split(key, 5)

    N = 300  # NOT a multiple of the row tile -> exercises padding + a 2-step grid
    points = jax.random.normal(kpts, (N, 3), jnp.float32)
    normals = jax.random.normal(knrm, (N, 3), jnp.float32)
    normals = normals / jnp.linalg.norm(normals, axis=1, keepdims=True)
    view_dirs = jax.random.normal(kvd, (N, 3), jnp.float32)
    view_dirs = view_dirs / jnp.linalg.norm(view_dirs, axis=1, keepdims=True)
    feature_vectors = jax.random.normal(kfeat, (N, FEATURE_VECTOR_SIZE), jnp.float32)

    # Upstream producers (the implicit/SDF network) would emit bf16 directly;
    # this halves the kernel's HBM read of the per-point inputs.
    to_bf16 = lambda a: a.astype(jnp.bfloat16)
    points_b, normals_b, view_b, feats_b = map(
        to_bf16, (points, normals, view_dirs, feature_vectors))

    params_f32 = init_params(kparam)
    kparams = prepare_params(params_f32)

    fwd = jax.jit(rendering_network_forward)
    out = fwd(points_b, normals_b, view_b, feats_b, kparams)
    out = jax.block_until_ready(out)
    assert out.shape == (N, D_OUT)

    ref_b = rendering_network_forward_ref_bf16(points_b, normals_b, view_b, feats_b,
                                               params_f32)
    ref_f = rendering_network_forward_ref_f32(points_b, normals_b, view_b, feats_b,
                                              params_f32)
    # Tight check against the bf16-operand-matched reference ...
    assert jnp.allclose(out, ref_b, atol=5e-3, rtol=0.0), \
        float(jnp.max(jnp.abs(out - ref_b)))
    # ... and a looser check against the pure-f32 reference (catches dtype regressions).
    assert jnp.allclose(out, ref_f, atol=3e-2, rtol=0.0), \
        float(jnp.max(jnp.abs(out - ref_f)))

    print("KERNEL_OK")
</pallas_src>

<mosaic_0001>
module attributes {stable_mosaic.version = 11 : i64} {
  func.func @rendering_mlp_kernel(%arg0: i32, %arg1: memref<256x41xbf16, #tpu.memory_space<vmem>>, %arg2: memref<41x64xbf16, #tpu.memory_space<vmem>>, %arg3: memref<3x64xbf16, #tpu.memory_space<vmem>>, %arg4: memref<12x64xbf16, #tpu.memory_space<vmem>>, %arg5: memref<12x64xbf16, #tpu.memory_space<vmem>>, %arg6: memref<1x64xf32, #tpu.memory_space<vmem>>, %arg7: memref<64x64xbf16, #tpu.memory_space<vmem>>, %arg8: memref<1x64xf32, #tpu.memory_space<vmem>>, %arg9: memref<64x3xbf16, #tpu.memory_space<vmem>>, %arg10: memref<1x3xf32, #tpu.memory_space<vmem>>, %arg11: memref<256x3xf32, #tpu.memory_space<vmem>>) attributes {dimension_semantics = [#tpu.dimension_semantics<parallel>], iteration_bounds = array<i64: 2>, scalar_prefetch = 0 : i64, scratch_operands = 0 : i64, tpu.core_type = #tpu.core_type<tc>, window_params = [{transform_indices = @transform_0, window_bounds = array<i64: 256, 41>}, {pipeline_mode = #tpu.pipeline_mode<synchronous>, transform_indices = @transform_1, window_bounds = array<i64: 41, 64>}, {pipeline_mode = #tpu.pipeline_mode<synchronous>, transform_indices = @transform_2, window_bounds = array<i64: 3, 64>}, {pipeline_mode = #tpu.pipeline_mode<synchronous>, transform_indices = @transform_3, window_bounds = array<i64: 12, 64>}, {pipeline_mode = #tpu.pipeline_mode<synchronous>, transform_indices = @transform_4, window_bounds = array<i64: 12, 64>}, {pipeline_mode = #tpu.pipeline_mode<synchronous>, transform_indices = @transform_5, window_bounds = array<i64: 1, 64>}, {pipeline_mode = #tpu.pipeline_mode<synchronous>, transform_indices = @transform_6, window_bounds = array<i64: 64, 64>}, {pipeline_mode = #tpu.pipeline_mode<synchronous>, transform_indices = @transform_7, window_bounds = array<i64: 1, 64>}, {pipeline_mode = #tpu.pipeline_mode<synchronous>, transform_indices = @transform_8, window_bounds = array<i64: 64, 3>}, {pipeline_mode = #tpu.pipeline_mode<synchronous>, transform_indices = @transform_9, window_bounds = array<i64: 1, 3>}, {transform_indices = @transform_10, window_bounds = array<i64: 256, 3>}]} {
    %c0 = arith.constant 0 : index
    %c0_0 = arith.constant 0 : index
    %0 = vector.load %arg1[%c0, %c0_0] : memref<256x41xbf16, #tpu.memory_space<vmem>>, vector<256x41xbf16>
    %1 = vector.extract_strided_slice %0 {offsets = [0, 3], sizes = [256, 3], strides = [1, 1]} : vector<256x41xbf16> to vector<256x3xbf16>
    %2 = arith.extf %1 : vector<256x3xbf16> to vector<256x3xf32>
    %3 = vector.extract_strided_slice %0 {offsets = [0, 38], sizes = [256, 3], strides = [1, 1]} : vector<256x41xbf16> to vector<256x3xbf16>
    %4 = arith.extf %3 : vector<256x3xbf16> to vector<256x3xf32>
    %5 = arith.mulf %2, %4 : vector<256x3xf32>
    %cst = arith.constant dense<0.000000e+00> : vector<256xf32>
    %6 = vector.multi_reduction <add>, %5, %cst [1] : vector<256x3xf32> to vector<256xf32>
    %7 = vector.shape_cast %6 : vector<256xf32> to vector<256x1xf32>
    %cst_1 = arith.constant 2.000000e+00 : f32
    %8 = vector.broadcast %cst_1 : f32 to vector<256x1xf32>
    %9 = arith.mulf %8, %7 : vector<256x1xf32>
    %10 = vector.broadcast %9 : vector<256x1xf32> to vector<256x3xf32>
    %11 = arith.mulf %10, %2 : vector<256x3xf32>
    %12 = arith.subf %11, %4 : vector<256x3xf32>
    %cst_2 = arith.constant 1.000000e+00 : f32
    %13 = vector.broadcast %cst_2 : f32 to vector<256x3xf32>
    %14 = arith.mulf %12, %13 : vector<256x3xf32>
    %cst_3 = arith.constant 2.000000e+00 : f32
    %15 = vector.broadcast %cst_3 : f32 to vector<256x3xf32>
    %16 = arith.mulf %12, %15 : vector<256x3xf32>
    %cst_4 = arith.constant 4.000000e+00 : f32
    %17 = vector.broadcast %cst_4 : f32 to vector<256x3xf32>
    %18 = arith.mulf %12, %17 : vector<256x3xf32>
    %cst_5 = arith.constant 8.000000e+00 : f32
    %19 = vector.broadcast %cst_5 : f32 to vector<256x3xf32>
    %20 = arith.mulf %12, %19 : vector<256x3xf32>
    %21 = tpu.concatenate %14, %16, %18, %20 in 1 : vector<256x3xf32>, vector<256x3xf32>, vector<256x3xf32>, vector<256x3xf32> -> vector<256x12xf32>
    %22 = math.sin %21 : vector<256x12xf32>
    %23 = arith.truncf %22 : vector<256x12xf32> to vector<256x12xbf16>
    %24 = math.cos %21 : vector<256x12xf32>
    %25 = arith.truncf %24 : vector<256x12xf32> to vector<256x12xbf16>
    %26 = arith.truncf %12 : vector<256x3xf32> to vector<256x3xbf16>
    %c0_6 = arith.constant 0 : index
    %c0_7 = arith.constant 0 : index
    %27 = vector.load %arg2[%c0_6, %c0_7] : memref<41x64xbf16, #tpu.memory_space<vmem>>, vector<41x64xbf16>
    %cst_8 = arith.constant dense<0.000000e+00> : vector<256x64xf32>
    %28 = tpu.matmul %0, %27, %cst_8 {dimension_numbers = #tpu.dot_dimension_numbers<[1], [0], [0], [1], [0, 0, 1, 1], [], []>} : vector<256x41xbf16>, vector<41x64xbf16>, vector<256x64xf32> -> vector<256x64xf32>
    %c0_9 = arith.constant 0 : index
    %c0_10 = arith.constant 0 : index
    %29 = vector.load %arg3[%c0_9, %c0_10] : memref<3x64xbf16, #tpu.memory_space<vmem>>, vector<3x64xbf16>
    %cst_11 = arith.constant dense<0.000000e+00> : vector<256x64xf32>
    %30 = tpu.matmul %26, %29, %cst_11 {dimension_numbers = #tpu.dot_dimension_numbers<[1], [0], [0], [1], [0, 0, 1, 1], [], []>} : vector<256x3xbf16>, vector<3x64xbf16>, vector<256x64xf32> -> vector<256x64xf32>
    %31 = arith.addf %28, %30 : vector<256x64xf32>
    %c0_12 = arith.constant 0 : index
    %c0_13 = arith.constant 0 : index
    %32 = vector.load %arg4[%c0_12, %c0_13] : memref<12x64xbf16, #tpu.memory_space<vmem>>, vector<12x64xbf16>
    %cst_14 = arith.constant dense<0.000000e+00> : vector<256x64xf32>
    %33 = tpu.matmul %23, %32, %cst_14 {dimension_numbers = #tpu.dot_dimension_numbers<[1], [0], [0], [1], [0, 0, 1, 1], [], []>} : vector<256x12xbf16>, vector<12x64xbf16>, vector<256x64xf32> -> vector<256x64xf32>
    %34 = arith.addf %31, %33 : vector<256x64xf32>
    %c0_15 = arith.constant 0 : index
    %c0_16 = arith.constant 0 : index
    %35 = vector.load %arg5[%c0_15, %c0_16] : memref<12x64xbf16, #tpu.memory_space<vmem>>, vector<12x64xbf16>
    %cst_17 = arith.constant dense<0.000000e+00> : vector<256x64xf32>
    %36 = tpu.matmul %25, %35, %cst_17 {dimension_numbers = #tpu.dot_dimension_numbers<[1], [0], [0], [1], [0, 0, 1, 1], [], []>} : vector<256x12xbf16>, vector<12x64xbf16>, vector<256x64xf32> -> vector<256x64xf32>
    %37 = arith.addf %34, %36 : vector<256x64xf32>
    %c0_18 = arith.constant 0 : index
    %c0_19 = arith.constant 0 : index
    %38 = vector.load %arg6[%c0_18, %c0_19] : memref<1x64xf32, #tpu.memory_space<vmem>>, vector<1x64xf32>
    %39 = vector.broadcast %38 : vector<1x64xf32> to vector<256x64xf32>
    %40 = arith.addf %37, %39 : vector<256x64xf32>
    %cst_20 = arith.constant 0.000000e+00 : f32
    %41 = vector.broadcast %cst_20 : f32 to vector<256x64xf32>
    %42 = arith.maximumf %40, %41 : vector<256x64xf32>
    %43 = arith.truncf %42 : vector<256x64xf32> to vector<256x64xbf16>
    %c0_21 = arith.constant 0 : index
    %c0_22 = arith.constant 0 : index
    %44 = vector.load %arg7[%c0_21, %c0_22] : memref<64x64xbf16, #tpu.memory_space<vmem>>, vector<64x64xbf16>
    %cst_23 = arith.constant dense<0.000000e+00> : vector<256x64xf32>
    %45 = tpu.matmul %43, %44, %cst_23 {dimension_numbers = #tpu.dot_dimension_numbers<[1], [0], [0], [1], [0, 0, 1, 1], [], []>} : vector<256x64xbf16>, vector<64x64xbf16>, vector<256x64xf32> -> vector<256x64xf32>
    %c0_24 = arith.constant 0 : index
    %c0_25 = arith.constant 0 : index
    %46 = vector.load %arg8[%c0_24, %c0_25] : memref<1x64xf32, #tpu.memory_space<vmem>>, vector<1x64xf32>
    %47 = vector.broadcast %46 : vector<1x64xf32> to vector<256x64xf32>
    %48 = arith.addf %45, %47 : vector<256x64xf32>
    %cst_26 = arith.constant 0.000000e+00 : f32
    %49 = vector.broadcast %cst_26 : f32 to vector<256x64xf32>
    %50 = arith.maximumf %48, %49 : vector<256x64xf32>
    %51 = arith.truncf %50 : vector<256x64xf32> to vector<256x64xbf16>
    %c0_27 = arith.constant 0 : index
    %c0_28 = arith.constant 0 : index
    %52 = vector.load %arg9[%c0_27, %c0_28] : memref<64x3xbf16, #tpu.memory_space<vmem>>, vector<64x3xbf16>
    %cst_29 = arith.constant dense<0.000000e+00> : vector<256x3xf32>
    %53 = tpu.matmul %51, %52, %cst_29 {dimension_numbers = #tpu.dot_dimension_numbers<[1], [0], [0], [1], [0, 0, 1, 1], [], []>} : vector<256x64xbf16>, vector<64x3xbf16>, vector<256x3xf32> -> vector<256x3xf32>
    %c0_30 = arith.constant 0 : index
    %c0_31 = arith.constant 0 : index
    %54 = vector.load %arg10[%c0_30, %c0_31] : memref<1x3xf32, #tpu.memory_space<vmem>>, vector<1x3xf32>
    %55 = vector.broadcast %54 : vector<1x3xf32> to vector<256x3xf32>
    %56 = arith.addf %53, %55 : vector<256x3xf32>
    %57 = math.tanh %56 : vector<256x3xf32>
    %c0_32 = arith.constant 0 : index
    %c0_33 = arith.constant 0 : index
    %58 = vector.load %arg11[%c0_32, %c0_33] : memref<256x3xf32, #tpu.memory_space<vmem>>, vector<256x3xf32>
    tpu.vector_store %arg11[%c0_32, %c0_33], %57 {strides = array<i32>} : memref<256x3xf32, #tpu.memory_space<vmem>>, vector<256x3xf32>,
    return
  }
  func.func @transform_0(%arg0: i32) -> (i32, i32) {
    %c0_i32 = arith.constant 0 : i32
    %c0_i32_0 = arith.constant 0 : i32
    return %arg0, %c0_i32 : i32, i32
  }
  func.func @transform_1(%arg0: i32) -> (i32, i32) {
    %c0_i32 = arith.constant 0 : i32
    %c0_i32_0 = arith.constant 0 : i32
    %c0_i32_1 = arith.constant 0 : i32
    return %c0_i32, %c0_i32_0 : i32, i32
  }
  func.func @transform_2(%arg0: i32) -> (i32, i32) {
    %c0_i32 = arith.constant 0 : i32
    %c0_i32_0 = arith.constant 0 : i32
    %c0_i32_1 = arith.constant 0 : i32
    return %c0_i32, %c0_i32_0 : i32, i32
  }
  func.func @transform_3(%arg0: i32) -> (i32, i32) {
    %c0_i32 = arith.constant 0 : i32
    %c0_i32_0 = arith.constant 0 : i32
    %c0_i32_1 = arith.constant 0 : i32
    return %c0_i32, %c0_i32_0 : i32, i32
  }
  func.func @transform_4(%arg0: i32) -> (i32, i32) {
    %c0_i32 = arith.constant 0 : i32
    %c0_i32_0 = arith.constant 0 : i32
    %c0_i32_1 = arith.constant 0 : i32
    return %c0_i32, %c0_i32_0 : i32, i32
  }
  func.func @transform_5(%arg0: i32) -> (i32, i32) {
    %c0_i32 = arith.constant 0 : i32
    %c0_i32_0 = arith.constant 0 : i32
    %c0_i32_1 = arith.constant 0 : i32
    return %c0_i32, %c0_i32_0 : i32, i32
  }
  func.func @transform_6(%arg0: i32) -> (i32, i32) {
    %c0_i32 = arith.constant 0 : i32
    %c0_i32_0 = arith.constant 0 : i32
    %c0_i32_1 = arith.constant 0 : i32
    return %c0_i32, %c0_i32_0 : i32, i32
  }
  func.func @transform_7(%arg0: i32) -> (i32, i32) {
    %c0_i32 = arith.constant 0 : i32
    %c0_i32_0 = arith.constant 0 : i32
    %c0_i32_1 = arith.constant 0 : i32
    return %c0_i32, %c0_i32_0 : i32, i32
  }
  func.func @transform_8(%arg0: i32) -> (i32, i32) {
    %c0_i32 = arith.constant 0 : i32
    %c0_i32_0 = arith.constant 0 : i32
    %c0_i32_1 = arith.constant 0 : i32
    return %c0_i32, %c0_i32_0 : i32, i32
  }
  func.func @transform_9(%arg0: i32) -> (i32, i32) {
    %c0_i32 = arith.constant 0 : i32
    %c0_i32_0 = arith.constant 0 : i32
    %c0_i32_1 = arith.constant 0 : i32
    return %c0_i32, %c0_i32_0 : i32, i32
  }
  func.func @transform_10(%arg0: i32) -> (i32, i32) {
    %c0_i32 = arith.constant 0 : i32
    %c0_i32_0 = arith.constant 0 : i32
    return %arg0, %c0_i32 : i32, i32
  }
}

</mosaic_0001>

<llo_original>
// kernel: rendering_network_forward.1
$region0: #{rendering_network_forward.1}
  #allocation0 [shape = 'u32[]', space=smem, size = 0x4, offset = 0x4, fixed_abs, tag = 'smem constant byte address 0x4 - core index']
  #allocation1 [shape = 'u32[144,128]{1,0:T(1,128)}', space=vmem, size = 0x12000, scoped, tag = 'internal scratch']
  %s0 = inlined_call_operand.vmem [shape: bf16[512,41], index: 0, kind: input, shape index: {}]
  %s1 = inlined_call_operand.vmem [shape: bf16[41,64], index: 1, kind: input, shape index: {}]
  %s2 = inlined_call_operand.vmem [shape: bf16[3,64], index: 2, kind: input, shape index: {}]
  %s3 = inlined_call_operand.vmem [shape: bf16[12,64], index: 3, kind: input, shape index: {}]
  %s4 = inlined_call_operand.vmem [shape: bf16[12,64], index: 4, kind: input, shape index: {}]
  %s5 = inlined_call_operand.vmem [shape: f32[1,64], index: 5, kind: input, shape index: {}]
  %s6 = inlined_call_operand.vmem [shape: bf16[64,64], index: 6, kind: input, shape index: {}]
  %s7 = inlined_call_operand.vmem [shape: f32[1,64], index: 7, kind: input, shape index: {}]
  %s8 = inlined_call_operand.vmem [shape: bf16[64,3], index: 8, kind: input, shape index: {}]
  %s9 = inlined_call_operand.vmem [shape: f32[1,3], index: 9, kind: input, shape index: {}]
  %s10 = inlined_call_operand.vmem [shape: f32[512,3], index: 10, kind: output, shape index: {}]
  %s11 = sld [smem:[#allocation0]]
  $region73: #{rendering_network_forward.1} parent=0
    _
  %s13 = ssub.s32 1, %s11
  %s14 = scalar_select 0, %s13, %s11
  loop: start=0, step=1, limit=4
  $region2: #{rendering_network_forward.1} parent=0 // loop_pre_header
    _
  $region3: #{rendering_network_forward.1} parent=0 // loop_header
    %s16 = sphi 0, %s20
    %p17 = scmp.ge.s32.totalorder %s16, 4
    %s26 = sphi 0, %s28
    %s29 = sphi 0, %s26
    %s30 = sphi 0, %s29
    %s46 = sphi 0, %s30
    %s50 = sphi 0, %s50
    %s52 = sphi 0, %s50
    %s53 = sphi 0, %s52
    %s67 = sphi 0, %s53
    %s71 = sphi 0, %s71
    %s73 = sphi 0, %s71
    %s74 = sphi 0, %s73
    %s88 = sphi 0, %s74
    %s92 = sphi 0, %s92
    %s94 = sphi 0, %s92
    %s95 = sphi 0, %s94
    %s109 = sphi 0, %s95
    %s113 = sphi 0, %s113
    %s115 = sphi 0, %s113
    %s116 = sphi 0, %s115
    %s130 = sphi 0, %s116
    %s134 = sphi 0, %s134
    %s136 = sphi 0, %s134
    %s137 = sphi 0, %s136
    %s151 = sphi 0, %s137
    %s155 = sphi 0, %s155
    %s157 = sphi 0, %s155
    %s158 = sphi 0, %s157
    %s172 = sphi 0, %s158
    %s176 = sphi 0, %s176
    %s178 = sphi 0, %s176
    %s179 = sphi 0, %s178
    %s193 = sphi 0, %s179
    %s197 = sphi 0, %s197
    %s199 = sphi 0, %s197
    %s200 = sphi 0, %s199
    %s214 = sphi 0, %s200
    %s218 = sphi 0, %s218
    %s220 = sphi 0, %s218
    %s221 = sphi 0, %s220
    %s235 = sphi 0, %s221
    %s241 = sphi 0, %s243
    %s244 = sphi 0, %s241
    %s245 = sphi 0, %s244
    %s261 = sphi 0, %s245
  $region4: #{rendering_network_forward.1} parent=0 // loop_header_branch
    %19 = sbr.rel (%p17) target = $region8
  $region5: #{rendering_network_forward.1} parent=0 // loop_body
    %s21 = ssub.s32 %s16, 1
    %s22 = ssub.s32 %s16, 2
    %s23 = sadd.s32 %s16, 1
    %s24 = ssub.s32 %s16, %s23
    %p25 = scmp.eq.s32.totalorder %s24, 0
    %s27 = sadd.s32 %s26, 1
    %s28 = scalar_select %p25, %s26, %s27
    %p31 = pneg %p25
    %p32 = scmp.eq.s32.totalorder %s16, 1
    %p33 = por %p31, %p32
    %p34 = scmp.ne.s32.totalorder %s26, %s29
    %p35 = scmp.eq.s32.totalorder %s16, 0
    %p36 = por %p34, %p35
    %p37 = scmp.ne.s32.totalorder %s26, %s29
    %p38 = scmp.eq.s32.totalorder %s21, 1
    %p39 = por %p37, %p38
    %p40 = scmp.ne.s32.totalorder %s29, %s30
    %p41 = scmp.eq.s32.totalorder %s21, 0
    %p42 = por %p40, %p41
    %p43 = scmp.ne.s32.totalorder %s29, %s30
    %p44 = scmp.eq.s32.totalorder %s22, 1
    %p45 = por %p43, %p44
    %p47 = scmp.ne.s32.totalorder %s30, %s46
    %p48 = scmp.eq.s32.totalorder %s22, 0
    %p49 = por %p47, %p48
    %s51 = sadd.s32 %s50, 1
    %p54 = scmp.eq.s32.totalorder %s16, 1
    %p55 = scmp.ne.s32.totalorder %s50, %s52
    %p56 = scmp.eq.s32.totalorder %s16, 0
    %p57 = por %p55, %p56
    %p58 = scmp.ne.s32.totalorder %s50, %s52
    %p59 = scmp.eq.s32.totalorder %s21, 1
    %p60 = por %p58, %p59
    %p61 = scmp.ne.s32.totalorder %s52, %s53
    %p62 = scmp.eq.s32.totalorder %s21, 0
    %p63 = por %p61, %p62
    %p64 = scmp.ne.s32.totalorder %s52, %s53
    %p65 = scmp.eq.s32.totalorder %s22, 1
    %p66 = por %p64, %p65
    %p68 = scmp.ne.s32.totalorder %s53, %s67
    %p69 = scmp.eq.s32.totalorder %s22, 0
    %p70 = por %p68, %p69
    %s72 = sadd.s32 %s71, 1
    %p75 = scmp.eq.s32.totalorder %s16, 1
    %p76 = scmp.ne.s32.totalorder %s71, %s73
    %p77 = scmp.eq.s32.totalorder %s16, 0
    %p78 = por %p76, %p77
    %p79 = scmp.ne.s32.totalorder %s71, %s73
    %p80 = scmp.eq.s32.totalorder %s21, 1
    %p81 = por %p79, %p80
    %p82 = scmp.ne.s32.totalorder %s73, %s74
    %p83 = scmp.eq.s32.totalorder %s21, 0
    %p84 = por %p82, %p83
    %p85 = scmp.ne.s32.totalorder %s73, %s74
    %p86 = scmp.eq.s32.totalorder %s22, 1
    %p87 = por %p85, %p86
    %p89 = scmp.ne.s32.totalorder %s74, %s88
    %p90 = scmp.eq.s32.totalorder %s22, 0
    %p91 = por %p89, %p90
    %s93 = sadd.s32 %s92, 1
    %p96 = scmp.eq.s32.totalorder %s16, 1
    %p97 = scmp.ne.s32.totalorder %s92, %s94
    %p98 = scmp.eq.s32.totalorder %s16, 0
    %p99 = por %p97, %p98
    %p100 = scmp.ne.s32.totalorder %s92, %s94
    %p101 = scmp.eq.s32.totalorder %s21, 1
    %p102 = por %p100, %p101
    %p103 = scmp.ne.s32.totalorder %s94, %s95
    %p104 = scmp.eq.s32.totalorder %s21, 0
    %p105 = por %p103, %p104
    %p106 = scmp.ne.s32.totalorder %s94, %s95
    %p107 = scmp.eq.s32.totalorder %s22, 1
    %p108 = por %p106, %p107
    %p110 = scmp.ne.s32.totalorder %s95, %s109
    %p111 = scmp.eq.s32.totalorder %s22, 0
    %p112 = por %p110, %p111
    %s114 = sadd.s32 %s113, 1
    %p117 = scmp.eq.s32.totalorder %s16, 1
    %p118 = scmp.ne.s32.totalorder %s113, %s115
    %p119 = scmp.eq.s32.totalorder %s16, 0
    %p120 = por %p118, %p119
    %p121 = scmp.ne.s32.totalorder %s113, %s115
    %p122 = scmp.eq.s32.totalorder %s21, 1
    %p123 = por %p121, %p122
    %p124 = scmp.ne.s32.totalorder %s115, %s116
    %p125 = scmp.eq.s32.totalorder %s21, 0
    %p126 = por %p124, %p125
    %p127 = scmp.ne.s32.totalorder %s115, %s116
    %p128 = scmp.eq.s32.totalorder %s22, 1
    %p129 = por %p127, %p128
    %p131 = scmp.ne.s32.totalorder %s116, %s130
    %p132 = scmp.eq.s32.totalorder %s22, 0
    %p133 = por %p131, %p132
    %s135 = sadd.s32 %s134, 1
    %p138 = scmp.eq.s32.totalorder %s16, 1
    %p139 = scmp.ne.s32.totalorder %s134, %s136
    %p140 = scmp.eq.s32.totalorder %s16, 0
    %p141 = por %p139, %p140
    %p142 = scmp.ne.s32.totalorder %s134, %s136
    %p143 = scmp.eq.s32.totalorder %s21, 1
    %p144 = por %p142, %p143
    %p145 = scmp.ne.s32.totalorder %s136, %s137
    %p146 = scmp.eq.s32.totalorder %s21, 0
    %p147 = por %p145, %p146
    %p148 = scmp.ne.s32.totalorder %s136, %s137
    %p149 = scmp.eq.s32.totalorder %s22, 1
    %p150 = por %p148, %p149
    %p152 = scmp.ne.s32.totalorder %s137, %s151
    %p153 = scmp.eq.s32.totalorder %s22, 0
    %p154 = por %p152, %p153
    %s156 = sadd.s32 %s155, 1
    %p159 = scmp.eq.s32.totalorder %s16, 1
    %p160 = scmp.ne.s32.totalorder %s155, %s157
    %p161 = scmp.eq.s32.totalorder %s16, 0
    %p162 = por %p160, %p161
    %p163 = scmp.ne.s32.totalorder %s155, %s157
    %p164 = scmp.eq.s32.totalorder %s21, 1
    %p165 = por %p163, %p164
    %p166 = scmp.ne.s32.totalorder %s157, %s158
    %p167 = scmp.eq.s32.totalorder %s21, 0
    %p168 = por %p166, %p167
    %p169 = scmp.ne.s32.totalorder %s157, %s158
    %p170 = scmp.eq.s32.totalorder %s22, 1
    %p171 = por %p169, %p170
    %p173 = scmp.ne.s32.totalorder %s158, %s172
    %p174 = scmp.eq.s32.totalorder %s22, 0
    %p175 = por %p173, %p174
    %s177 = sadd.s32 %s176, 1
    %p180 = scmp.eq.s32.totalorder %s16, 1
    %p181 = scmp.ne.s32.totalorder %s176, %s178
    %p182 = scmp.eq.s32.totalorder %s16, 0
    %p183 = por %p181, %p182
    %p184 = scmp.ne.s32.totalorder %s176, %s178
    %p185 = scmp.eq.s32.totalorder %s21, 1
    %p186 = por %p184, %p185
    %p187 = scmp.ne.s32.totalorder %s178, %s179
    %p188 = scmp.eq.s32.totalorder %s21, 0
    %p189 = por %p187, %p188
    %p190 = scmp.ne.s32.totalorder %s178, %s179
    %p191 = scmp.eq.s32.totalorder %s22, 1
    %p192 = por %p190, %p191
    %p194 = scmp.ne.s32.totalorder %s179, %s193
    %p195 = scmp.eq.s32.totalorder %s22, 0
    %p196 = por %p194, %p195
    %s198 = sadd.s32 %s197, 1
    %p201 = scmp.eq.s32.totalorder %s16, 1
    %p202 = scmp.ne.s32.totalorder %s197, %s199
    %p203 = scmp.eq.s32.totalorder %s16, 0
    %p204 = por %p202, %p203
    %p205 = scmp.ne.s32.totalorder %s197, %s199
    %p206 = scmp.eq.s32.totalorder %s21, 1
    %p207 = por %p205, %p206
    %p208 = scmp.ne.s32.totalorder %s199, %s200
    %p209 = scmp.eq.s32.totalorder %s21, 0
    %p210 = por %p208, %p209
    %p211 = scmp.ne.s32.totalorder %s199, %s200
    %p212 = scmp.eq.s32.totalorder %s22, 1
    %p213 = por %p211, %p212
    %p215 = scmp.ne.s32.totalorder %s200, %s214
    %p216 = scmp.eq.s32.totalorder %s22, 0
    %p217 = por %p215, %p216
    %s219 = sadd.s32 %s218, 1
    %p222 = scmp.eq.s32.totalorder %s16, 1
    %p223 = scmp.ne.s32.totalorder %s218, %s220
    %p224 = scmp.eq.s32.totalorder %s16, 0
    %p225 = por %p223, %p224
    %p226 = scmp.ne.s32.totalorder %s218, %s220
    %p227 = scmp.eq.s32.totalorder %s21, 1
    %p228 = por %p226, %p227
    %p229 = scmp.ne.s32.totalorder %s220, %s221
    %p230 = scmp.eq.s32.totalorder %s21, 0
    %p231 = por %p229, %p230
    %p232 = scmp.ne.s32.totalorder %s220, %s221
    %p233 = scmp.eq.s32.totalorder %s22, 1
    %p234 = por %p232, %p233
    %p236 = scmp.ne.s32.totalorder %s221, %s235
    %p237 = scmp.eq.s32.totalorder %s22, 0
    %p238 = por %p236, %p237
    %s239 = ssub.s32 %s16, %s23
    %p240 = scmp.eq.s32.totalorder %s239, 0
    %s242 = sadd.s32 %s241, 1
    %s243 = scalar_select %p240, %s241, %s242
    %p246 = pneg %p240
    %p247 = scmp.eq.s32.totalorder %s16, 1
    %p248 = por %p246, %p247
    %p249 = scmp.ne.s32.totalorder %s241, %s244
    %p250 = scmp.eq.s32.totalorder %s16, 0
    %p251 = por %p249, %p250
    %p252 = scmp.ne.s32.totalorder %s241, %s244
    %p253 = scmp.eq.s32.totalorder %s21, 1
    %p254 = por %p252, %p253
    %p255 = scmp.ne.s32.totalorder %s244, %s245
    %p256 = scmp.eq.s32.totalorder %s21, 0
    %p257 = por %p255, %p256
    %p258 = scmp.ne.s32.totalorder %s244, %s245
    %p259 = scmp.eq.s32.totalorder %s22, 1
    %p260 = por %p258, %p259
    %p262 = scmp.ne.s32.totalorder %s245, %s261
    %p263 = scmp.eq.s32.totalorder %s22, 0
    %p264 = por %p262, %p263
    %p265 = scmp.le.s32.totalorder 1, %s16
    %p266 = scmp.lt.s32.totalorder %s16, 3
    %p267 = pnand %p265, %p266
    %p268 = pneg %p267
    // Predicated region
    $region9: #{rendering_network_forward.1} parent=5 // pred_check
      _
    $region10: #{rendering_network_forward.1} parent=5 // pred_check_branch
      %270 = sbr.rel (%p267) target = $region12
    $region11: #{rendering_network_forward.1} parent=5 // pred_region
      %s271 = ssub.s32 %s16, 1
      // Predicated region
      $region13: #{rendering_network_forward.1} parent=11 // pred_check
        %p272 = pneg %p63
      $region14: #{rendering_network_forward.1} parent=11 // pred_check_branch
        %274 = sbr.rel (%p272) target = $region16
      $region15: #{rendering_network_forward.1} parent=11 // pred_region
        _
      $region16: #{rendering_network_forward.1} parent=11 // pred_fallthru
        _
      // Predicated region
      $region17: #{rendering_network_forward.1} parent=11 // pred_check
        %p275 = pneg %p84
      $region18: #{rendering_network_forward.1} parent=11 // pred_check_branch
        %277 = sbr.rel (%p275) target = $region20
      $region19: #{rendering_network_forward.1} parent=11 // pred_region
        _
      $region20: #{rendering_network_forward.1} parent=11 // pred_fallthru
        _
      // Predicated region
      $region21: #{rendering_network_forward.1} parent=11 // pred_check
        %p278 = pneg %p105
      $region22: #{rendering_network_forward.1} parent=11 // pred_check_branch
        %280 = sbr.rel (%p278) target = $region24
      $region23: #{rendering_network_forward.1} parent=11 // pred_region
        _
      $region24: #{rendering_network_forward.1} parent=11 // pred_fallthru
        _
      // Predicated region
      $region25: #{rendering_network_forward.1} parent=11 // pred_check
        %p281 = pneg %p126
      $region26: #{rendering_network_forward.1} parent=11 // pred_check_branch
        %283 = sbr.rel (%p281) target = $region28
      $region27: #{rendering_network_forward.1} parent=11 // pred_region
        _
      $region28: #{rendering_network_forward.1} parent=11 // pred_fallthru
        _
      // Predicated region
      $region29: #{rendering_network_forward.1} parent=11 // pred_check
        %p284 = pneg %p147
      $region30: #{rendering_network_forward.1} parent=11 // pred_check_branch
        %286 = sbr.rel (%p284) target = $region32
      $region31: #{rendering_network_forward.1} parent=11 // pred_region
        _
      $region32: #{rendering_network_forward.1} parent=11 // pred_fallthru
        _
      // Predicated region
      $region33: #{rendering_network_forward.1} parent=11 // pred_check
        %p287 = pneg %p168
      $region34: #{rendering_network_forward.1} parent=11 // pred_check_branch
        %289 = sbr.rel (%p287) target = $region36
      $region35: #{rendering_network_forward.1} parent=11 // pred_region
        _
      $region36: #{rendering_network_forward.1} parent=11 // pred_fallthru
        _
      // Predicated region
      $region37: #{rendering_network_forward.1} parent=11 // pred_check
        %p290 = pneg %p189
      $region38: #{rendering_network_forward.1} parent=11 // pred_check_branch
        %292 = sbr.rel (%p290) target = $region40
      $region39: #{rendering_network_forward.1} parent=11 // pred_region
        _
      $region40: #{rendering_network_forward.1} parent=11 // pred_fallthru
        _
      // Predicated region
      $region41: #{rendering_network_forward.1} parent=11 // pred_check
        %p293 = pneg %p210
      $region42: #{rendering_network_forward.1} parent=11 // pred_check_branch
        %295 = sbr.rel (%p293) target = $region44
      $region43: #{rendering_network_forward.1} parent=11 // pred_region
        _
      $region44: #{rendering_network_forward.1} parent=11 // pred_fallthru
        _
      // Predicated region
      $region45: #{rendering_network_forward.1} parent=11 // pred_check
        %p296 = pneg %p231
      $region46: #{rendering_network_forward.1} parent=11 // pred_check_branch
        %298 = sbr.rel (%p296) target = $region48
      $region47: #{rendering_network_forward.1} parent=11 // pred_region
        _
      $region48: #{rendering_network_forward.1} parent=11 // pred_fallthru
        _
    $region12: #{rendering_network_forward.1} parent=5 // pred_fallthru
      _
    %p299 = scmp.lt.s32.totalorder %s16, 2
    // Predicated region
    $region49: #{rendering_network_forward.1} parent=5 // pred_check
      %p300 = pneg %p299
    $region50: #{rendering_network_forward.1} parent=5 // pred_check_branch
      %302 = sbr.rel (%p300) target = $region52
    $region51: #{rendering_network_forward.1} parent=5 // pred_region
      // Predicated region
      $region53: #{rendering_network_forward.1} parent=51 // pred_check
        %p303 = pneg %p36
      $region54: #{rendering_network_forward.1} parent=51 // pred_check_branch
        %305 = sbr.rel (%p303) target = $region56
      $region55: #{rendering_network_forward.1} parent=51 // pred_region
        %s306 = smul.u32 32, %s16
        %p307 = scmp.lt.s32.totalorder %s306, 63
        %s308 = scalar_select %p307, %s306, 63
        %s309 = smul.addr %s308, 4
        %s310 = scalar_lea.vmem %s0, %s309
        %s311 = smul.u32 32, %s16
      $region56: #{rendering_network_forward.1} parent=51 // pred_fallthru
        _
    $region52: #{rendering_network_forward.1} parent=5 // pred_fallthru
      _
    %p312 = scmp.le.s32.totalorder 1, %s16
    %p313 = scmp.lt.s32.totalorder %s16, 3
    %p314 = pnand %p312, %p313
    %p315 = pneg %p314
    // Predicated region
    $region57: #{rendering_network_forward.1} parent=5 // pred_check
      _
    $region58: #{rendering_network_forward.1} parent=5 // pred_check_branch
      %317 = sbr.rel (%p314) target = $region60
    $region59: #{rendering_network_forward.1} parent=5 // pred_region
      %s318 = ssub.s32 %s16, 1
      %s319 = smul.u32 32, %s21
      %p320 = scmp.lt.s32.totalorder %s319, 63
      %s321 = scalar_select %p320, %s319, 63
      %s322 = smul.addr %s321, 4
      %s323 = scalar_lea.vmem %s0, %s322
      %p324 = pneg %p42
      %p325 = pneg %p39
      %p326 = pneg %p63
      %p327 = pneg %p60
      %p328 = pneg %p84
      %p329 = pneg %p81
      %p330 = pneg %p105
      %p331 = pneg %p102
      %p332 = pneg %p126
      %p333 = pneg %p123
      %p334 = pneg %p147
      %p335 = pneg %p144
      %p336 = pneg %p168
      %p337 = pneg %p165
      %p338 = pneg %p189
      %p339 = pneg %p186
      %p340 = pneg %p210
      %p341 = pneg %p207
      %p342 = pneg %p231
      %p343 = pneg %p228
      %p344 = pneg %p257
      %p345 = pneg %p254
      %s346 = smul.u32 32, %s21
      %p347 = scmp.lt.s32.totalorder %s346, 63
      %s348 = scalar_select %p347, %s346, 63
      %s349 = smul.addr %s348, 8
      %s350 = scalar_lea.vmem %s10, %s349
      %s351 = smul.u32 32, %s21
      %p352 = scmp.lt.s32.totalorder %s351, 63
      %s353 = scalar_select %p352, %s351, 63
      %s354 = smul.addr %s353, 4
      %s355 = scalar_lea.vmem %s0, %s354
      %s356 = smul.u32 32, %s21
      %s357 = smul.u32 32, %s21
      %p358 = scmp.lt.s32.totalorder %s357, 63
      %s359 = scalar_select %p358, %s357, 63
      %s360 = smul.addr %s359, 8
      %s361 = scalar_lea.vmem %s10, %s360
      %s362 = smul.u32 32, %s21
      %v364 = vld [vmem:[%s355] sm:$0xf]
      %v365 = vld [vmem:[%s355 + $0x4] sm:$0xf]
      %v366 = vld [vmem:[%s355 + $0x8] sm:$0xf]
      %v367 = vld [vmem:[%s355 + $0xc] sm:$0xf]
      %v368 = vld [vmem:[%s355 + $0x10] sm:$0xf]
      %v369 = vld [vmem:[%s355 + $0x14] sm:$0xf]
      %v370 = vld [vmem:[%s355 + $0x18] sm:$0xf]
      %v371 = vld [vmem:[%s355 + $0x1c] sm:$0xf]
      %v372 = vld [vmem:[%s355 + $0x20] sm:$0xf]
      %v373 = vld [vmem:[%s355 + $0x24] sm:$0xf]
      %v374 = vld [vmem:[%s355 + $0x28] sm:$0xf]
      %v375 = vld [vmem:[%s355 + $0x2c] sm:$0xf]
      %v376 = vld [vmem:[%s355 + $0x30] sm:$0xf]
      %v377 = vld [vmem:[%s355 + $0x34] sm:$0xf]
      %v378 = vld [vmem:[%s355 + $0x38] sm:$0xf]
      %v379 = vld [vmem:[%s355 + $0x3c] sm:$0xf]
      %v380 = vld [vmem:[%s355 + $0x40] sm:$0xf]
      %v381 = vld [vmem:[%s355 + $0x44] sm:$0xf]
      %v382 = vld [vmem:[%s355 + $0x48] sm:$0xf]
      %v383 = vld [vmem:[%s355 + $0x4c] sm:$0xf]
      %v384 = vld [vmem:[%s355 + $0x50] sm:$0xf]
      %v385 = vld [vmem:[%s355 + $0x54] sm:$0xf]
      %v386 = vld [vmem:[%s355 + $0x58] sm:$0xf]
      %v387 = vld [vmem:[%s355 + $0x5c] sm:$0xf]
      %v388 = vld [vmem:[%s355 + $0x60] sm:$0xf]
      %v389 = vld [vmem:[%s355 + $0x64] sm:$0xf]
      %v390 = vld [vmem:[%s355 + $0x68] sm:$0xf]
      %v391 = vld [vmem:[%s355 + $0x6c] sm:$0xf]
      %v392 = vld [vmem:[%s355 + $0x70] sm:$0xf]
      %v393 = vld [vmem:[%s355 + $0x74] sm:$0xf]
      %v394 = vld [vmem:[%s355 + $0x78] sm:$0xf]
      %v395 = vld [vmem:[%s355 + $0x7c] sm:$0xf]
      %v396 = vunpack.c.l.bf16 %v364
      %v397 = vunpack.c.l.bf16 %v365
      %v398 = vunpack.c.l.bf16 %v366
      %v399 = vunpack.c.l.bf16 %v367
      %v400 = vunpack.c.l.bf16 %v368
      %v401 = vunpack.c.l.bf16 %v369
      %v402 = vunpack.c.l.bf16 %v370
      %v403 = vunpack.c.l.bf16 %v371
      %v404 = vunpack.c.l.bf16 %v372
      %v405 = vunpack.c.l.bf16 %v373
      %v406 = vunpack.c.l.bf16 %v374
      %v407 = vunpack.c.l.bf16 %v375
      %v408 = vunpack.c.l.bf16 %v376
      %v409 = vunpack.c.l.bf16 %v377
      %v410 = vunpack.c.l.bf16 %v378
      %v411 = vunpack.c.l.bf16 %v379
      %v412 = vunpack.c.l.bf16 %v380
      %v413 = vunpack.c.l.bf16 %v381
      %v414 = vunpack.c.l.bf16 %v382
      %v415 = vunpack.c.l.bf16 %v383
      %v416 = vunpack.c.l.bf16 %v384
      %v417 = vunpack.c.l.bf16 %v385
      %v418 = vunpack.c.l.bf16 %v386
      %v419 = vunpack.c.l.bf16 %v387
      %v420 = vunpack.c.l.bf16 %v388
      %v421 = vunpack.c.l.bf16 %v389
      %v422 = vunpack.c.l.bf16 %v390
      %v423 = vunpack.c.l.bf16 %v391
      %v424 = vunpack.c.l.bf16 %v392
      %v425 = vunpack.c.l.bf16 %v393
      %v426 = vunpack.c.l.bf16 %v394
      %v427 = vunpack.c.l.bf16 %v395
      %460 = vrot.lane.b32.xlu0 %v396, 93
      %v461 = vpop.permute.xlu0 %460
      %462 = vrot.lane.b32.xlu0 %v397, 93
      %v463 = vpop.permute.xlu0 %462
      %464 = vrot.lane.b32.xlu0 %v398, 93
      %v465 = vpop.permute.xlu0 %464
      %466 = vrot.lane.b32.xlu0 %v399, 93
      %v467 = vpop.permute.xlu0 %466
      %468 = vrot.lane.b32.xlu0 %v400, 93
      %v469 = vpop.permute.xlu0 %468
      %470 = vrot.lane.b32.xlu0 %v401, 93
      %v471 = vpop.permute.xlu0 %470
      %472 = vrot.lane.b32.xlu0 %v402, 93
      %v473 = vpop.permute.xlu0 %472
      %474 = vrot.lane.b32.xlu0 %v403, 93
      %v475 = vpop.permute.xlu0 %474
      %476 = vrot.lane.b32.xlu0 %v404, 93
      %v477 = vpop.permute.xlu0 %476
      %478 = vrot.lane.b32.xlu0 %v405, 93
      %v479 = vpop.permute.xlu0 %478
      %480 = vrot.lane.b32.xlu0 %v406, 93
      %v481 = vpop.permute.xlu0 %480
      %482 = vrot.lane.b32.xlu0 %v407, 93
      %v483 = vpop.permute.xlu0 %482
      %484 = vrot.lane.b32.xlu0 %v408, 93
      %v485 = vpop.permute.xlu0 %484
      %486 = vrot.lane.b32.xlu0 %v409, 93
      %v487 = vpop.permute.xlu0 %486
      %488 = vrot.lane.b32.xlu0 %v410, 93
      %v489 = vpop.permute.xlu0 %488
      %490 = vrot.lane.b32.xlu0 %v411, 93
      %v491 = vpop.permute.xlu0 %490
      %492 = vrot.lane.b32.xlu0 %v412, 93
      %v493 = vpop.permute.xlu0 %492
      %494 = vrot.lane.b32.xlu0 %v413, 93
      %v495 = vpop.permute.xlu0 %494
      %496 = vrot.lane.b32.xlu0 %v414, 93
      %v497 = vpop.permute.xlu0 %496
      %498 = vrot.lane.b32.xlu0 %v415, 93
      %v499 = vpop.permute.xlu0 %498
      %500 = vrot.lane.b32.xlu0 %v416, 93
      %v501 = vpop.permute.xlu0 %500
      %502 = vrot.lane.b32.xlu0 %v417, 93
      %v503 = vpop.permute.xlu0 %502
      %504 = vrot.lane.b32.xlu0 %v418, 93
      %v505 = vpop.permute.xlu0 %504
      %506 = vrot.lane.b32.xlu0 %v419, 93
      %v507 = vpop.permute.xlu0 %506
      %508 = vrot.lane.b32.xlu0 %v420, 93
      %v509 = vpop.permute.xlu0 %508
      %510 = vrot.lane.b32.xlu0 %v421, 93
      %v511 = vpop.permute.xlu0 %510
      %512 = vrot.lane.b32.xlu0 %v422, 93
      %v513 = vpop.permute.xlu0 %512
      %514 = vrot.lane.b32.xlu0 %v423, 93
      %v515 = vpop.permute.xlu0 %514
      %516 = vrot.lane.b32.xlu0 %v424, 93
      %v517 = vpop.permute.xlu0 %516
      %518 = vrot.lane.b32.xlu0 %v425, 93
      %v519 = vpop.permute.xlu0 %518
      %520 = vrot.lane.b32.xlu0 %v426, 93
      %v521 = vpop.permute.xlu0 %520
      %522 = vrot.lane.b32.xlu0 %v427, 93
      %v523 = vpop.permute.xlu0 %522
      %v556 = vmul.f32 %v396, %v461
      %v557 = vmul.f32 %v397, %v463
      %v558 = vmul.f32 %v398, %v465
      %v559 = vmul.f32 %v399, %v467
      %v560 = vmul.f32 %v400, %v469
      %v561 = vmul.f32 %v401, %v471
      %v562 = vmul.f32 %v402, %v473
      %v563 = vmul.f32 %v403, %v475
      %v564 = vmul.f32 %v404, %v477
      %v565 = vmul.f32 %v405, %v479
      %v566 = vmul.f32 %v406, %v481
      %v567 = vmul.f32 %v407, %v483
      %v568 = vmul.f32 %v408, %v485
      %v569 = vmul.f32 %v409, %v487
      %v570 = vmul.f32 %v410, %v489
      %v571 = vmul.f32 %v411, %v491
      %v572 = vmul.f32 %v412, %v493
      %v573 = vmul.f32 %v413, %v495
      %v574 = vmul.f32 %v414, %v497
      %v575 = vmul.f32 %v415, %v499
      %v576 = vmul.f32 %v416, %v501
      %v577 = vmul.f32 %v417, %v503
      %v578 = vmul.f32 %v418, %v505
      %v579 = vmul.f32 %v419, %v507
      %v580 = vmul.f32 %v420, %v509
      %v581 = vmul.f32 %v421, %v511
      %v582 = vmul.f32 %v422, %v513
      %v583 = vmul.f32 %v423, %v515
      %v584 = vmul.f32 %v424, %v517
      %v585 = vmul.f32 %v425, %v519
      %v586 = vmul.f32 %v426, %v521
      %v587 = vmul.f32 %v427, %v523
      %620 = vrot.lane.b32.xlu0 %v556, 125
      %v621 = vpop.permute.xlu0 %620
      %622 = vrot.lane.b32.xlu0 %v557, 125
      %v623 = vpop.permute.xlu0 %622
      %624 = vrot.lane.b32.xlu0 %v558, 125
      %v625 = vpop.permute.xlu0 %624
      %626 = vrot.lane.b32.xlu0 %v559, 125
      %v627 = vpop.permute.xlu0 %626
      %628 = vrot.lane.b32.xlu0 %v560, 125
      %v629 = vpop.permute.xlu0 %628
      %630 = vrot.lane.b32.xlu0 %v561, 125
      %v631 = vpop.permute.xlu0 %630
      %632 = vrot.lane.b32.xlu0 %v562, 125
      %v633 = vpop.permute.xlu0 %632
      %634 = vrot.lane.b32.xlu0 %v563, 125
      %v635 = vpop.permute.xlu0 %634
      %636 = vrot.lane.b32.xlu0 %v564, 125
      %v637 = vpop.permute.xlu0 %636
      %638 = vrot.lane.b32.xlu0 %v565, 125
      %v639 = vpop.permute.xlu0 %638
      %640 = vrot.lane.b32.xlu0 %v566, 125
      %v641 = vpop.permute.xlu0 %640
      %642 = vrot.lane.b32.xlu0 %v567, 125
      %v643 = vpop.permute.xlu0 %642
      %644 = vrot.lane.b32.xlu0 %v568, 125
      %v645 = vpop.permute.xlu0 %644
      %646 = vrot.lane.b32.xlu0 %v569, 125
      %v647 = vpop.permute.xlu0 %646
      %648 = vrot.lane.b32.xlu0 %v570, 125
      %v649 = vpop.permute.xlu0 %648
      %650 = vrot.lane.b32.xlu0 %v571, 125
      %v651 = vpop.permute.xlu0 %650
      %652 = vrot.lane.b32.xlu0 %v572, 125
      %v653 = vpop.permute.xlu0 %652
      %654 = vrot.lane.b32.xlu0 %v573, 125
      %v655 = vpop.permute.xlu0 %654
      %656 = vrot.lane.b32.xlu0 %v574, 125
      %v657 = vpop.permute.xlu0 %656
      %658 = vrot.lane.b32.xlu0 %v575, 125
      %v659 = vpop.permute.xlu0 %658
      %660 = vrot.lane.b32.xlu0 %v576, 125
      %v661 = vpop.permute.xlu0 %660
      %662 = vrot.lane.b32.xlu0 %v577, 125
      %v663 = vpop.permute.xlu0 %662
      %664 = vrot.lane.b32.xlu0 %v578, 125
      %v665 = vpop.permute.xlu0 %664
      %666 = vrot.lane.b32.xlu0 %v579, 125
      %v667 = vpop.permute.xlu0 %666
      %668 = vrot.lane.b32.xlu0 %v580, 125
      %v669 = vpop.permute.xlu0 %668
      %670 = vrot.lane.b32.xlu0 %v581, 125
      %v671 = vpop.permute.xlu0 %670
      %672 = vrot.lane.b32.xlu0 %v582, 125
      %v673 = vpop.permute.xlu0 %672
      %674 = vrot.lane.b32.xlu0 %v583, 125
      %v675 = vpop.permute.xlu0 %674
      %676 = vrot.lane.b32.xlu0 %v584, 125
      %v677 = vpop.permute.xlu0 %676
      %678 = vrot.lane.b32.xlu0 %v585, 125
      %v679 = vpop.permute.xlu0 %678
      %680 = vrot.lane.b32.xlu0 %v586, 125
      %v681 = vpop.permute.xlu0 %680
      %682 = vrot.lane.b32.xlu0 %v587, 125
      %v683 = vpop.permute.xlu0 %682
      %vm716 = vcmask 23552
      %v717 = vsel %vm716, %v621, 0.0
      %718 = vadd.xlane.f32.xlu0 %v717
      %v719 = vpop.xlane.xlu0 %718
      %v720 = vsel %vm716, %v623, 0.0
      %721 = vadd.xlane.f32.xlu0 %v720
      %v722 = vpop.xlane.xlu0 %721
      %v723 = vsel %vm716, %v625, 0.0
      %724 = vadd.xlane.f32.xlu0 %v723
      %v725 = vpop.xlane.xlu0 %724
      %v726 = vsel %vm716, %v627, 0.0
      %727 = vadd.xlane.f32.xlu0 %v726
      %v728 = vpop.xlane.xlu0 %727
      %v729 = vsel %vm716, %v629, 0.0
      %730 = vadd.xlane.f32.xlu0 %v729
      %v731 = vpop.xlane.xlu0 %730
      %v732 = vsel %vm716, %v631, 0.0
      %733 = vadd.xlane.f32.xlu0 %v732
      %v734 = vpop.xlane.xlu0 %733
      %v735 = vsel %vm716, %v633, 0.0
      %736 = vadd.xlane.f32.xlu0 %v735
      %v737 = vpop.xlane.xlu0 %736
      %v738 = vsel %vm716, %v635, 0.0
      %739 = vadd.xlane.f32.xlu0 %v738
      %v740 = vpop.xlane.xlu0 %739
      %v741 = vsel %vm716, %v637, 0.0
      %742 = vadd.xlane.f32.xlu0 %v741
      %v743 = vpop.xlane.xlu0 %742
      %v744 = vsel %vm716, %v639, 0.0
      %745 = vadd.xlane.f32.xlu0 %v744
      %v746 = vpop.xlane.xlu0 %745
      %v747 = vsel %vm716, %v641, 0.0
      %748 = vadd.xlane.f32.xlu0 %v747
      %v749 = vpop.xlane.xlu0 %748
      %v750 = vsel %vm716, %v643, 0.0
      %751 = vadd.xlane.f32.xlu0 %v750
      %v752 = vpop.xlane.xlu0 %751
      %v753 = vsel %vm716, %v645, 0.0
      %754 = vadd.xlane.f32.xlu0 %v753
      %v755 = vpop.xlane.xlu0 %754
      %v756 = vsel %vm716, %v647, 0.0
      %757 = vadd.xlane.f32.xlu0 %v756
      %v758 = vpop.xlane.xlu0 %757
      %v759 = vsel %vm716, %v649, 0.0
      %760 = vadd.xlane.f32.xlu0 %v759
      %v761 = vpop.xlane.xlu0 %760
      %v762 = vsel %vm716, %v651, 0.0
      %763 = vadd.xlane.f32.xlu0 %v762
      %v764 = vpop.xlane.xlu0 %763
      %v765 = vsel %vm716, %v653, 0.0
      %766 = vadd.xlane.f32.xlu0 %v765
      %v767 = vpop.xlane.xlu0 %766
      %v768 = vsel %vm716, %v655, 0.0
      %769 = vadd.xlane.f32.xlu0 %v768
      %v770 = vpop.xlane.xlu0 %769
      %v771 = vsel %vm716, %v657, 0.0
      %772 = vadd.xlane.f32.xlu0 %v771
      %v773 = vpop.xlane.xlu0 %772
      %v774 = vsel %vm716, %v659, 0.0
      %775 = vadd.xlane.f32.xlu0 %v774
      %v776 = vpop.xlane.xlu0 %775
      %v777 = vsel %vm716, %v661, 0.0
      %778 = vadd.xlane.f32.xlu0 %v777
      %v779 = vpop.xlane.xlu0 %778
      %v780 = vsel %vm716, %v663, 0.0
      %781 = vadd.xlane.f32.xlu0 %v780
      %v782 = vpop.xlane.xlu0 %781
      %v783 = vsel %vm716, %v665, 0.0
      %784 = vadd.xlane.f32.xlu0 %v783
      %v785 = vpop.xlane.xlu0 %784
      %v786 = vsel %vm716, %v667, 0.0
      %787 = vadd.xlane.f32.xlu0 %v786
      %v788 = vpop.xlane.xlu0 %787
      %v789 = vsel %vm716, %v669, 0.0
      %790 = vadd.xlane.f32.xlu0 %v789
      %v791 = vpop.xlane.xlu0 %790
      %v792 = vsel %vm716, %v671, 0.0
      %793 = vadd.xlane.f32.xlu0 %v792
      %v794 = vpop.xlane.xlu0 %793
      %v795 = vsel %vm716, %v673, 0.0
      %796 = vadd.xlane.f32.xlu0 %v795
      %v797 = vpop.xlane.xlu0 %796
      %v798 = vsel %vm716, %v675, 0.0
      %799 = vadd.xlane.f32.xlu0 %v798
      %v800 = vpop.xlane.xlu0 %799
      %v801 = vsel %vm716, %v677, 0.0
      %802 = vadd.xlane.f32.xlu0 %v801
      %v803 = vpop.xlane.xlu0 %802
      %v804 = vsel %vm716, %v679, 0.0
      %805 = vadd.xlane.f32.xlu0 %v804
      %v806 = vpop.xlane.xlu0 %805
      %v807 = vsel %vm716, %v681, 0.0
      %808 = vadd.xlane.f32.xlu0 %v807
      %v809 = vpop.xlane.xlu0 %808
      %v810 = vsel %vm716, %v683, 0.0
      %811 = vadd.xlane.f32.xlu0 %v810
      %v812 = vpop.xlane.xlu0 %811
      %v813 = vmul.f32 %v719, 2.0
      %v814 = vmul.f32 %v722, 2.0
      %v815 = vmul.f32 %v725, 2.0
      %v816 = vmul.f32 %v728, 2.0
      %v817 = vmul.f32 %v731, 2.0
      %v818 = vmul.f32 %v734, 2.0
      %v819 = vmul.f32 %v737, 2.0
      %v820 = vmul.f32 %v740, 2.0
      %v821 = vmul.f32 %v743, 2.0
      %v822 = vmul.f32 %v746, 2.0
      %v823 = vmul.f32 %v749, 2.0
      %v824 = vmul.f32 %v752, 2.0
      %v825 = vmul.f32 %v755, 2.0
      %v826 = vmul.f32 %v758, 2.0
      %v827 = vmul.f32 %v761, 2.0
      %v828 = vmul.f32 %v764, 2.0
      %v829 = vmul.f32 %v767, 2.0
      %v830 = vmul.f32 %v770, 2.0
      %v831 = vmul.f32 %v773, 2.0
      %v832 = vmul.f32 %v776, 2.0
      %v833 = vmul.f32 %v779, 2.0
      %v834 = vmul.f32 %v782, 2.0
      %v835 = vmul.f32 %v785, 2.0
      %v836 = vmul.f32 %v788, 2.0
      %v837 = vmul.f32 %v791, 2.0
      %v838 = vmul.f32 %v794, 2.0
      %v839 = vmul.f32 %v797, 2.0
      %v840 = vmul.f32 %v800, 2.0
      %v841 = vmul.f32 %v803, 2.0
      %v842 = vmul.f32 %v806, 2.0
      %v843 = vmul.f32 %v809, 2.0
      %v844 = vmul.f32 %v812, 2.0
      %v845 = vmul.f32 %v813, %v396
      %v846 = vmul.f32 %v814, %v397
      %v847 = vmul.f32 %v815, %v398
      %v848 = vmul.f32 %v816, %v399
      %v849 = vmul.f32 %v817, %v400
      %v850 = vmul.f32 %v818, %v401
      %v851 = vmul.f32 %v819, %v402
      %v852 = vmul.f32 %v820, %v403
      %v853 = vmul.f32 %v821, %v404
      %v854 = vmul.f32 %v822, %v405
      %v855 = vmul.f32 %v823, %v406
      %v856 = vmul.f32 %v824, %v407
      %v857 = vmul.f32 %v825, %v408
      %v858 = vmul.f32 %v826, %v409
      %v859 = vmul.f32 %v827, %v410
      %v860 = vmul.f32 %v828, %v411
      %v861 = vmul.f32 %v829, %v412
      %v862 = vmul.f32 %v830, %v413
      %v863 = vmul.f32 %v831, %v414
      %v864 = vmul.f32 %v832, %v415
      %v865 = vmul.f32 %v833, %v416
      %v866 = vmul.f32 %v834, %v417
      %v867 = vmul.f32 %v835, %v418
      %v868 = vmul.f32 %v836, %v419
      %v869 = vmul.f32 %v837, %v420
      %v870 = vmul.f32 %v838, %v421
      %v871 = vmul.f32 %v839, %v422
      %v872 = vmul.f32 %v840, %v423
      %v873 = vmul.f32 %v841, %v424
      %v874 = vmul.f32 %v842, %v425
      %v875 = vmul.f32 %v843, %v426
      %v876 = vmul.f32 %v844, %v427
      %v877 = vsub.f32 %v845, %v461
      %v878 = vsub.f32 %v846, %v463
      %v879 = vsub.f32 %v847, %v465
      %v880 = vsub.f32 %v848, %v467
      %v881 = vsub.f32 %v849, %v469
      %v882 = vsub.f32 %v850, %v471
      %v883 = vsub.f32 %v851, %v473
      %v884 = vsub.f32 %v852, %v475
      %v885 = vsub.f32 %v853, %v477
      %v886 = vsub.f32 %v854, %v479
      %v887 = vsub.f32 %v855, %v481
      %v888 = vsub.f32 %v856, %v483
      %v889 = vsub.f32 %v857, %v485
      %v890 = vsub.f32 %v858, %v487
      %v891 = vsub.f32 %v859, %v489
      %v892 = vsub.f32 %v860, %v491
      %v893 = vsub.f32 %v861, %v493
      %v894 = vsub.f32 %v862, %v495
      %v895 = vsub.f32 %v863, %v497
      %v896 = vsub.f32 %v864, %v499
      %v897 = vsub.f32 %v865, %v501
      %v898 = vsub.f32 %v866, %v503
      %v899 = vsub.f32 %v867, %v505
      %v900 = vsub.f32 %v868, %v507
      %v901 = vsub.f32 %v869, %v509
      %v902 = vsub.f32 %v870, %v511
      %v903 = vsub.f32 %v871, %v513
      %v904 = vsub.f32 %v872, %v515
      %v905 = vsub.f32 %v873, %v517
      %v906 = vsub.f32 %v874, %v519
      %v907 = vsub.f32 %v875, %v521
      %v908 = vsub.f32 %v876, %v523
      %v909 = vmul.f32 %v877, 2.0
      %v910 = vmul.f32 %v878, 2.0
      %v911 = vmul.f32 %v879, 2.0
      %v912 = vmul.f32 %v880, 2.0
      %v913 = vmul.f32 %v881, 2.0
      %v914 = vmul.f32 %v882, 2.0
      %v915 = vmul.f32 %v883, 2.0
      %v916 = vmul.f32 %v884, 2.0
      %v917 = vmul.f32 %v885, 2.0
      %v918 = vmul.f32 %v886, 2.0
      %v919 = vmul.f32 %v887, 2.0
      %v920 = vmul.f32 %v888, 2.0
      %v921 = vmul.f32 %v889, 2.0
      %v922 = vmul.f32 %v890, 2.0
      %v923 = vmul.f32 %v891, 2.0
      %v924 = vmul.f32 %v892, 2.0
      %v925 = vmul.f32 %v893, 2.0
      %v926 = vmul.f32 %v894, 2.0
      %v927 = vmul.f32 %v895, 2.0
      %v928 = vmul.f32 %v896, 2.0
      %v929 = vmul.f32 %v897, 2.0
      %v930 = vmul.f32 %v898, 2.0
      %v931 = vmul.f32 %v899, 2.0
      %v932 = vmul.f32 %v900, 2.0
      %v933 = vmul.f32 %v901, 2.0
      %v934 = vmul.f32 %v902, 2.0
      %v935 = vmul.f32 %v903, 2.0
      %v936 = vmul.f32 %v904, 2.0
      %v937 = vmul.f32 %v905, 2.0
      %v938 = vmul.f32 %v906, 2.0
      %v939 = vmul.f32 %v907, 2.0
      %v940 = vmul.f32 %v908, 2.0
      %v941 = vmul.f32 %v877, 4.0
      %v942 = vmul.f32 %v878, 4.0
      %v943 = vmul.f32 %v879, 4.0
      %v944 = vmul.f32 %v880, 4.0
      %v945 = vmul.f32 %v881, 4.0
      %v946 = vmul.f32 %v882, 4.0
      %v947 = vmul.f32 %v883, 4.0
      %v948 = vmul.f32 %v884, 4.0
      %v949 = vmul.f32 %v885, 4.0
      %v950 = vmul.f32 %v886, 4.0
      %v951 = vmul.f32 %v887, 4.0
      %v952 = vmul.f32 %v888, 4.0
      %v953 = vmul.f32 %v889, 4.0
      %v954 = vmul.f32 %v890, 4.0
      %v955 = vmul.f32 %v891, 4.0
      %v956 = vmul.f32 %v892, 4.0
      %v957 = vmul.f32 %v893, 4.0
      %v958 = vmul.f32 %v894, 4.0
      %v959 = vmul.f32 %v895, 4.0
      %v960 = vmul.f32 %v896, 4.0
      %v961 = vmul.f32 %v897, 4.0
      %v962 = vmul.f32 %v898, 4.0
      %v963 = vmul.f32 %v899, 4.0
      %v964 = vmul.f32 %v900, 4.0
      %v965 = vmul.f32 %v901, 4.0
      %v966 = vmul.f32 %v902, 4.0
      %v967 = vmul.f32 %v903, 4.0
      %v968 = vmul.f32 %v904, 4.0
      %v969 = vmul.f32 %v905, 4.0
      %v970 = vmul.f32 %v906, 4.0
      %v971 = vmul.f32 %v907, 4.0
      %v972 = vmul.f32 %v908, 4.0
      %v973 = vmul.f32 %v877, 8.0
      %v974 = vmul.f32 %v878, 8.0
      %v975 = vmul.f32 %v879, 8.0
      %v976 = vmul.f32 %v880, 8.0
      %v977 = vmul.f32 %v881, 8.0
      %v978 = vmul.f32 %v882, 8.0
      %v979 = vmul.f32 %v883, 8.0
      %v980 = vmul.f32 %v884, 8.0
      %v981 = vmul.f32 %v885, 8.0
      %v982 = vmul.f32 %v886, 8.0
      %v983 = vmul.f32 %v887, 8.0
      %v984 = vmul.f32 %v888, 8.0
      %v985 = vmul.f32 %v889, 8.0
      %v986 = vmul.f32 %v890, 8.0
      %v987 = vmul.f32 %v891, 8.0
      %v988 = vmul.f32 %v892, 8.0
      %v989 = vmul.f32 %v893, 8.0
      %v990 = vmul.f32 %v894, 8.0
      %v991 = vmul.f32 %v895, 8.0
      %v992 = vmul.f32 %v896, 8.0
      %v993 = vmul.f32 %v897, 8.0
      %v994 = vmul.f32 %v898, 8.0
      %v995 = vmul.f32 %v899, 8.0
      %v996 = vmul.f32 %v900, 8.0
      %v997 = vmul.f32 %v901, 8.0
      %v998 = vmul.f32 %v902, 8.0
      %v999 = vmul.f32 %v903, 8.0
      %v1000 = vmul.f32 %v904, 8.0
      %v1001 = vmul.f32 %v905, 8.0
      %v1002 = vmul.f32 %v906, 8.0
      %v1003 = vmul.f32 %v907, 8.0
      %v1004 = vmul.f32 %v908, 8.0
      %1037 = vrot.lane.b32.xlu0 %v877, 125
      %v1038 = vpop.permute.xlu0 %1037
      %1039 = vrot.lane.b32.xlu0 %v878, 125
      %v1040 = vpop.permute.xlu0 %1039
      %1041 = vrot.lane.b32.xlu0 %v879, 125
      %v1042 = vpop.permute.xlu0 %1041
      %1043 = vrot.lane.b32.xlu0 %v880, 125
      %v1044 = vpop.permute.xlu0 %1043
      %1045 = vrot.lane.b32.xlu0 %v881, 125
      %v1046 = vpop.permute.xlu0 %1045
      %1047 = vrot.lane.b32.xlu0 %v882, 125
      %v1048 = vpop.permute.xlu0 %1047
      %1049 = vrot.lane.b32.xlu0 %v883, 125
      %v1050 = vpop.permute.xlu0 %1049
      %1051 = vrot.lane.b32.xlu0 %v884, 125
      %v1052 = vpop.permute.xlu0 %1051
      %1053 = vrot.lane.b32.xlu0 %v885, 125
      %v1054 = vpop.permute.xlu0 %1053
      %1055 = vrot.lane.b32.xlu0 %v886, 125
      %v1056 = vpop.permute.xlu0 %1055
      %1057 = vrot.lane.b32.xlu0 %v887, 125
      %v1058 = vpop.permute.xlu0 %1057
      %1059 = vrot.lane.b32.xlu0 %v888, 125
      %v1060 = vpop.permute.xlu0 %1059
      %1061 = vrot.lane.b32.xlu0 %v889, 125
      %v1062 = vpop.permute.xlu0 %1061
      %1063 = vrot.lane.b32.xlu0 %v890, 125
      %v1064 = vpop.permute.xlu0 %1063
      %1065 = vrot.lane.b32.xlu0 %v891, 125
      %v1066 = vpop.permute.xlu0 %1065
      %1067 = vrot.lane.b32.xlu0 %v892, 125
      %v1068 = vpop.permute.xlu0 %1067
      %1069 = vrot.lane.b32.xlu0 %v893, 125
      %v1070 = vpop.permute.xlu0 %1069
      %1071 = vrot.lane.b32.xlu0 %v894, 125
      %v1072 = vpop.permute.xlu0 %1071
      %1073 = vrot.lane.b32.xlu0 %v895, 125
      %v1074 = vpop.permute.xlu0 %1073
      %1075 = vrot.lane.b32.xlu0 %v896, 125
      %v1076 = vpop.permute.xlu0 %1075
      %1077 = vrot.lane.b32.xlu0 %v897, 125
      %v1078 = vpop.permute.xlu0 %1077
      %1079 = vrot.lane.b32.xlu0 %v898, 125
      %v1080 = vpop.permute.xlu0 %1079
      %1081 = vrot.lane.b32.xlu0 %v899, 125
      %v1082 = vpop.permute.xlu0 %1081
      %1083 = vrot.lane.b32.xlu0 %v900, 125
      %v1084 = vpop.permute.xlu0 %1083
      %1085 = vrot.lane.b32.xlu0 %v901, 125
      %v1086 = vpop.permute.xlu0 %1085
      %1087 = vrot.lane.b32.xlu0 %v902, 125
      %v1088 = vpop.permute.xlu0 %1087
      %1089 = vrot.lane.b32.xlu0 %v903, 125
      %v1090 = vpop.permute.xlu0 %1089
      %1091 = vrot.lane.b32.xlu0 %v904, 125
      %v1092 = vpop.permute.xlu0 %1091
      %1093 = vrot.lane.b32.xlu0 %v905, 125
      %v1094 = vpop.permute.xlu0 %1093
      %1095 = vrot.lane.b32.xlu0 %v906, 125
      %v1096 = vpop.permute.xlu0 %1095
      %1097 = vrot.lane.b32.xlu0 %v907, 125
      %v1098 = vpop.permute.xlu0 %1097
      %1099 = vrot.lane.b32.xlu0 %v908, 125
      %v1100 = vpop.permute.xlu0 %1099
      %1165 = vrot.lane.b32.xlu0 %v941, 3
      %v1166 = vpop.permute.xlu0 %1165
      %1167 = vrot.lane.b32.xlu0 %v942, 3
      %v1168 = vpop.permute.xlu0 %1167
      %1169 = vrot.lane.b32.xlu0 %v943, 3
      %v1170 = vpop.permute.xlu0 %1169
      %1171 = vrot.lane.b32.xlu0 %v944, 3
      %v1172 = vpop.permute.xlu0 %1171
      %1173 = vrot.lane.b32.xlu0 %v945, 3
      %v1174 = vpop.permute.xlu0 %1173
      %1175 = vrot.lane.b32.xlu0 %v946, 3
      %v1176 = vpop.permute.xlu0 %1175
      %1177 = vrot.lane.b32.xlu0 %v947, 3
      %v1178 = vpop.permute.xlu0 %1177
      %1179 = vrot.lane.b32.xlu0 %v948, 3
      %v1180 = vpop.permute.xlu0 %1179
      %1181 = vrot.lane.b32.xlu0 %v949, 3
      %v1182 = vpop.permute.xlu0 %1181
      %1183 = vrot.lane.b32.xlu0 %v950, 3
      %v1184 = vpop.permute.xlu0 %1183
      %1185 = vrot.lane.b32.xlu0 %v951, 3
      %v1186 = vpop.permute.xlu0 %1185
      %1187 = vrot.lane.b32.xlu0 %v952, 3
      %v1188 = vpop.permute.xlu0 %1187
      %1189 = vrot.lane.b32.xlu0 %v953, 3
      %v1190 = vpop.permute.xlu0 %1189
      %1191 = vrot.lane.b32.xlu0 %v954, 3
      %v1192 = vpop.permute.xlu0 %1191
      %1193 = vrot.lane.b32.xlu0 %v955, 3
      %v1194 = vpop.permute.xlu0 %1193
      %1195 = vrot.lane.b32.xlu0 %v956, 3
      %v1196 = vpop.permute.xlu0 %1195
      %1197 = vrot.lane.b32.xlu0 %v957, 3
      %v1198 = vpop.permute.xlu0 %1197
      %1199 = vrot.lane.b32.xlu0 %v958, 3
      %v1200 = vpop.permute.xlu0 %1199
      %1201 = vrot.lane.b32.xlu0 %v959, 3
      %v1202 = vpop.permute.xlu0 %1201
      %1203 = vrot.lane.b32.xlu0 %v960, 3
      %v1204 = vpop.permute.xlu0 %1203
      %1205 = vrot.lane.b32.xlu0 %v961, 3
      %v1206 = vpop.permute.xlu0 %1205
      %1207 = vrot.lane.b32.xlu0 %v962, 3
      %v1208 = vpop.permute.xlu0 %1207
      %1209 = vrot.lane.b32.xlu0 %v963, 3
      %v1210 = vpop.permute.xlu0 %1209
      %1211 = vrot.lane.b32.xlu0 %v964, 3
      %v1212 = vpop.permute.xlu0 %1211
      %1213 = vrot.lane.b32.xlu0 %v965, 3
      %v1214 = vpop.permute.xlu0 %1213
      %1215 = vrot.lane.b32.xlu0 %v966, 3
      %v1216 = vpop.permute.xlu0 %1215
      %1217 = vrot.lane.b32.xlu0 %v967, 3
      %v1218 = vpop.permute.xlu0 %1217
      %1219 = vrot.lane.b32.xlu0 %v968, 3
      %v1220 = vpop.permute.xlu0 %1219
      %1221 = vrot.lane.b32.xlu0 %v969, 3
      %v1222 = vpop.permute.xlu0 %1221
      %1223 = vrot.lane.b32.xlu0 %v970, 3
      %v1224 = vpop.permute.xlu0 %1223
      %1225 = vrot.lane.b32.xlu0 %v971, 3
      %v1226 = vpop.permute.xlu0 %1225
      %1227 = vrot.lane.b32.xlu0 %v972, 3
      %v1228 = vpop.permute.xlu0 %1227
      %1293 = vrot.lane.b32.xlu0 %v973, 6
      %v1294 = vpop.permute.xlu0 %1293
      %1295 = vrot.lane.b32.xlu0 %v974, 6
      %v1296 = vpop.permute.xlu0 %1295
      %1297 = vrot.lane.b32.xlu0 %v975, 6
      %v1298 = vpop.permute.xlu0 %1297
      %1299 = vrot.lane.b32.xlu0 %v976, 6
      %v1300 = vpop.permute.xlu0 %1299
      %1301 = vrot.lane.b32.xlu0 %v977, 6
      %v1302 = vpop.permute.xlu0 %1301
      %1303 = vrot.lane.b32.xlu0 %v978, 6
      %v1304 = vpop.permute.xlu0 %1303
      %1305 = vrot.lane.b32.xlu0 %v979, 6
      %v1306 = vpop.permute.xlu0 %1305
      %1307 = vrot.lane.b32.xlu0 %v980, 6
      %v1308 = vpop.permute.xlu0 %1307
      %1309 = vrot.lane.b32.xlu0 %v981, 6
      %v1310 = vpop.permute.xlu0 %1309
      %1311 = vrot.lane.b32.xlu0 %v982, 6
      %v1312 = vpop.permute.xlu0 %1311
      %1313 = vrot.lane.b32.xlu0 %v983, 6
      %v1314 = vpop.permute.xlu0 %1313
      %1315 = vrot.lane.b32.xlu0 %v984, 6
      %v1316 = vpop.permute.xlu0 %1315
      %1317 = vrot.lane.b32.xlu0 %v985, 6
      %v1318 = vpop.permute.xlu0 %1317
      %1319 = vrot.lane.b32.xlu0 %v986, 6
      %v1320 = vpop.permute.xlu0 %1319
      %1321 = vrot.lane.b32.xlu0 %v987, 6
      %v1322 = vpop.permute.xlu0 %1321
      %1323 = vrot.lane.b32.xlu0 %v988, 6
      %v1324 = vpop.permute.xlu0 %1323
      %1325 = vrot.lane.b32.xlu0 %v989, 6
      %v1326 = vpop.permute.xlu0 %1325
      %1327 = vrot.lane.b32.xlu0 %v990, 6
      %v1328 = vpop.permute.xlu0 %1327
      %1329 = vrot.lane.b32.xlu0 %v991, 6
      %v1330 = vpop.permute.xlu0 %1329
      %1331 = vrot.lane.b32.xlu0 %v992, 6
      %v1332 = vpop.permute.xlu0 %1331
      %1333 = vrot.lane.b32.xlu0 %v993, 6
      %v1334 = vpop.permute.xlu0 %1333
      %1335 = vrot.lane.b32.xlu0 %v994, 6
      %v1336 = vpop.permute.xlu0 %1335
      %1337 = vrot.lane.b32.xlu0 %v995, 6
      %v1338 = vpop.permute.xlu0 %1337
      %1339 = vrot.lane.b32.xlu0 %v996, 6
      %v1340 = vpop.permute.xlu0 %1339
      %1341 = vrot.lane.b32.xlu0 %v997, 6
      %v1342 = vpop.permute.xlu0 %1341
      %1343 = vrot.lane.b32.xlu0 %v998, 6
      %v1344 = vpop.permute.xlu0 %1343
      %1345 = vrot.lane.b32.xlu0 %v999, 6
      %v1346 = vpop.permute.xlu0 %1345
      %1347 = vrot.lane.b32.xlu0 %v1000, 6
      %v1348 = vpop.permute.xlu0 %1347
      %1349 = vrot.lane.b32.xlu0 %v1001, 6
      %v1350 = vpop.permute.xlu0 %1349
      %1351 = vrot.lane.b32.xlu0 %v1002, 6
      %v1352 = vpop.permute.xlu0 %1351
      %1353 = vrot.lane.b32.xlu0 %v1003, 6
      %v1354 = vpop.permute.xlu0 %1353
      %1355 = vrot.lane.b32.xlu0 %v1004, 6
      %v1356 = vpop.permute.xlu0 %1355
      %v1389 = vsel %vm716, %v1038, %v909
      %v1390 = vsel %vm716, %v1040, %v910
      %v1391 = vsel %vm716, %v1042, %v911
      %v1392 = vsel %vm716, %v1044, %v912
      %v1393 = vsel %vm716, %v1046, %v913
      %v1394 = vsel %vm716, %v1048, %v914
      %v1395 = vsel %vm716, %v1050, %v915
      %v1396 = vsel %vm716, %v1052, %v916
      %v1397 = vsel %vm716, %v1054, %v917
      %v1398 = vsel %vm716, %v1056, %v918
      %v1399 = vsel %vm716, %v1058, %v919
      %v1400 = vsel %vm716, %v1060, %v920
      %v1401 = vsel %vm716, %v1062, %v921
      %v1402 = vsel %vm716, %v1064, %v922
      %v1403 = vsel %vm716, %v1066, %v923
      %v1404 = vsel %vm716, %v1068, %v924
      %v1405 = vsel %vm716, %v1070, %v925
      %v1406 = vsel %vm716, %v1072, %v926
      %v1407 = vsel %vm716, %v1074, %v927
      %v1408 = vsel %vm716, %v1076, %v928
      %v1409 = vsel %vm716, %v1078, %v929
      %v1410 = vsel %vm716, %v1080, %v930
      %v1411 = vsel %vm716, %v1082, %v931
      %v1412 = vsel %vm716, %v1084, %v932
      %v1413 = vsel %vm716, %v1086, %v933
      %v1414 = vsel %vm716, %v1088, %v934
      %v1415 = vsel %vm716, %v1090, %v935
      %v1416 = vsel %vm716, %v1092, %v936
      %v1417 = vsel %vm716, %v1094, %v937
      %v1418 = vsel %vm716, %v1096, %v938
      %v1419 = vsel %vm716, %v1098, %v939
      %v1420 = vsel %vm716, %v1100, %v940
      %vm1421 = vcmask 48128
      %v1422 = vsel %vm1421, %v1389, %v1166
      %v1423 = vsel %vm1421, %v1390, %v1168
      %v1424 = vsel %vm1421, %v1391, %v1170
      %v1425 = vsel %vm1421, %v1392, %v1172
      %v1426 = vsel %vm1421, %v1393, %v1174
      %v1427 = vsel %vm1421, %v1394, %v1176
      %v1428 = vsel %vm1421, %v1395, %v1178
      %v1429 = vsel %vm1421, %v1396, %v1180
      %v1430 = vsel %vm1421, %v1397, %v1182
      %v1431 = vsel %vm1421, %v1398, %v1184
      %v1432 = vsel %vm1421, %v1399, %v1186
      %v1433 = vsel %vm1421, %v1400, %v1188
      %v1434 = vsel %vm1421, %v1401, %v1190
      %v1435 = vsel %vm1421, %v1402, %v1192
      %v1436 = vsel %vm1421, %v1403, %v1194
      %v1437 = vsel %vm1421, %v1404, %v1196
      %v1438 = vsel %vm1421, %v1405, %v1198
      %v1439 = vsel %vm1421, %v1406, %v1200
      %v1440 = vsel %vm1421, %v1407, %v1202
      %v1441 = vsel %vm1421, %v1408, %v1204
      %v1442 = vsel %vm1421, %v1409, %v1206
      %v1443 = vsel %vm1421, %v1410, %v1208
      %v1444 = vsel %vm1421, %v1411, %v1210
      %v1445 = vsel %vm1421, %v1412, %v1212
      %v1446 = vsel %vm1421, %v1413, %v1214
      %v1447 = vsel %vm1421, %v1414, %v1216
      %v1448 = vsel %vm1421, %v1415, %v1218
      %v1449 = vsel %vm1421, %v1416, %v1220
      %v1450 = vsel %vm1421, %v1417, %v1222
      %v1451 = vsel %vm1421, %v1418, %v1224
      %v1452 = vsel %vm1421, %v1419, %v1226
      %v1453 = vsel %vm1421, %v1420, %v1228
      %vm1454 = vcmask 72704
      %v1455 = vsel %vm1454, %v1422, %v1294
      %v1456 = vsel %vm1454, %v1423, %v1296
      %v1457 = vsel %vm1454, %v1424, %v1298
      %v1458 = vsel %vm1454, %v1425, %v1300
      %v1459 = vsel %vm1454, %v1426, %v1302
      %v1460 = vsel %vm1454, %v1427, %v1304
      %v1461 = vsel %vm1454, %v1428, %v1306
      %v1462 = vsel %vm1454, %v1429, %v1308
      %v1463 = vsel %vm1454, %v1430, %v1310
      %v1464 = vsel %vm1454, %v1431, %v1312
      %v1465 = vsel %vm1454, %v1432, %v1314
      %v1466 = vsel %vm1454, %v1433, %v1316
      %v1467 = vsel %vm1454, %v1434, %v1318
      %v1468 = vsel %vm1454, %v1435, %v1320
      %v1469 = vsel %vm1454, %v1436, %v1322
      %v1470 = vsel %vm1454, %v1437, %v1324
      %v1471 = vsel %vm1454, %v1438, %v1326
      %v1472 = vsel %vm1454, %v1439, %v1328
      %v1473 = vsel %vm1454, %v1440, %v1330
      %v1474 = vsel %vm1454, %v1441, %v1332
      %v1475 = vsel %vm1454, %v1442, %v1334
      %v1476 = vsel %vm1454, %v1443, %v1336
      %v1477 = vsel %vm1454, %v1444, %v1338
      %v1478 = vsel %vm1454, %v1445, %v1340
      %v1479 = vsel %vm1454, %v1446, %v1342
      %v1480 = vsel %vm1454, %v1447, %v1344
      %v1481 = vsel %vm1454, %v1448, %v1346
      %v1482 = vsel %vm1454, %v1449, %v1348
      %v1483 = vsel %vm1454, %v1450, %v1350
      %v1484 = vsel %vm1454, %v1451, %v1352
      %v1485 = vsel %vm1454, %v1452, %v1354
      %v1486 = vsel %vm1454, %v1453, %v1356
      %v1487 = vand.u32 2147483647, %v1455
      %vm1488 = vcmp.le.f32.partialorder %v1487, 0.7853982
      %vm1489 = vcmp.lt.s32.totalorder %v1455, 0
      %v1490 = vand.u32 %v1455, 2139095040
      %v1491 = vshrl.u32 %v1490, 23
      %v1492 = vsub.s32 %v1491, 127
      %v1493 = vand.u32 2147483647, %v1455
      %v1494 = vand.u32 %v1493, 8388607
      %v1495 = vor.u32 %v1494, 8388608
      %v1496 = vsub.s32 0, %v1495
      %v1497 = vadd.s32 %v1492, 1
      %vm1498 = vcmp.gt.s32.totalorder %v1497, 0
      %v1499 = vsel %vm1498, %v1497, 0
      %v1500 = vshrl.u32 %v1499, 5
      %v1501 = vand.u32 %v1499, 31
      %v1502 = vsub.s32 32, %v1501
      %v1503 = vshrl.u32 683565275, %v1502
      %v1504 = vshll.u32 683565275, %v1501
      %v1505 = vshrl.u32 2475754826, %v1502
      %v1506 = vor.u32 %v1504, %v1505
      %v1507 = vshll.u32 2475754826, %v1501
      %v1508 = vshrl.u32 2131351028, %v1502
      %v1509 = vor.u32 %v1507, %v1508
      %v1510 = vshll.u32 2131351028, %v1501
      %v1511 = vshrl.u32 2102212464, %v1502
      %v1512 = vor.u32 %v1510, %v1511
      %v1513 = vshll.u32 2102212464, %v1501
      %v1514 = vshrl.u32 920167782, %v1502
      %v1515 = vor.u32 %v1513, %v1514
      %v1516 = vshll.u32 920167782, %v1501
      %v1517 = vshrl.u32 1326507024, %v1502
      %v1518 = vor.u32 %v1516, %v1517
      %vm1519 = vcmp.lt.s32.totalorder %v1500, 1
      %vm1520 = vcmp.lt.s32.totalorder %v1500, 2
      %vm1521 = vcmp.lt.s32.totalorder %v1500, 3
      %vm1522 = vcmp.lt.s32.totalorder %v1500, 4
      %v1523 = vsel %vm1519, %v1503, %v1506
      %v1524 = vsel %vm1522, %v1512, 2102212464
      %v1525 = vsel %vm1521, %v1509, %v1524
      %v1526 = vsel %vm1520, %v1523, %v1525
      %v1527 = vsel %vm1519, %v1506, %v1509
      %v1528 = vsel %vm1522, %v1515, 920167782
      %v1529 = vsel %vm1521, %v1512, %v1528
      %v1530 = vsel %vm1520, %v1527, %v1529
      %v1531 = vsel %vm1519, %v1509, %v1512
      %v1532 = vsel %vm1522, %v1518, 1326507024
      %v1533 = vsel %vm1521, %v1515, %v1532
      %v1534 = vsel %vm1520, %v1531, %v1533
      %v1535 = vshll.u32 %v1495, 8
      %v1536 = vmul.u32.u64.compose %v1535, %v1534
      %v1537 = vextract.low.u32 %v1536
      %v1538 = vextract.high.u32 %v1536
      %v1539 = vmul.u32.u64.compose %v1535, %v1530
      %v1540 = vextract.low.u32 %v1539
      %v1541 = vextract.high.u32 %v1539
      %v1542 = vmul.u32 %v1535, %v1526
      %v1543 = vadd.s32 %v1538, %v1540
      %vm1544 = vc.u32 %v1538, %v1540
      %v1545 = vadd.s32 %v1541, 1
      %v1546 = vsel %vm1544, %v1545, %v1541
      %v1547 = vadd.s32 %v1542, %v1546
      %v1548 = vadd.s32 %v1547, 536870912
      %v1549 = vshrl.u32 %v1548, 30
      %v1550 = vshll.u32 %v1549, 30
      %v1551 = vsub.s32 %v1547, %v1550
      %vm1552 = vcmp.lt.s32.totalorder %v1551, 0
      %v1553 = vsub.s32 0, %v1551
      %v1554 = vsel %vm1552, %v1553, %v1551
      %v1555 = vclz %v1554
      %v1556 = vsub.s32 %v1555, 2
      %vm1557 = vcmp.gt.s32.totalorder 0, %v1556
      %v1558 = vsel %vm1557, 0, %v1556
      %v1559 = vsub.s32 32, %v1558
      %v1560 = vshll.u32 %v1551, %v1558
      %v1561 = vshrl.u32 %v1543, %v1559
      %v1562 = vor.u32 %v1560, %v1561
      %v1563 = vsub.s32 4294967266, %v1558
      %v1564 = vadd.s32 %v1563, 127
      %v1565 = vshll.u32 %v1564, 23
      %v1566 = vor.u32 4788187, %v1565
      %v1567 = vand.u32 2147483647, %v1566
      %v1569 = vcvt.s32.f32 %v1562
      %v1570 = vmul.f32 %v1569, %v1567
      %v1571 = vxor.u32 %v1570, 2147483648
      %v1572 = vsel %vm1489, %v1571, %v1570
      %v1573 = vsub.s32 4, %v1549
      %v1574 = vsel %vm1489, %v1573, %v1549
      %v1575 = vsel %vm1488, %v1455, %v1572
      %v1576 = vsel %vm1488, 0, %v1574
      %v1577 = vcosq.f32.pop %v1575
      %v1578 = vsinq.f32.pop %v1575
      %vm1579 = vweird.f32 %v1455
      %v1580 = vadd.s32 %v1576, 3
      %v1581 = vand.u32 %v1580, 3
      %vm1582 = vcmp.lt.s32.totalorder %v1581, 2
      %vm1583 = vcmp.eq.s32.totalorder %v1581, 0
      %v1584 = vxor.u32 %v1578, 2147483648
      %v1585 = vsel %vm1583, %v1577, %v1584
      %vm1586 = vcmp.eq.s32.totalorder %v1581, 2
      %v1587 = vxor.u32 %v1577, 2147483648
      %v1588 = vsel %vm1586, %v1587, %v1578
      %v1589 = vsel %vm1582, %v1585, %v1588
      %v1590 = vsel %vm1579, nan, %v1589
      %v1591 = vand.u32 2147483647, %v1456
      %vm1592 = vcmp.le.f32.partialorder %v1591, 0.7853982
      %vm1593 = vcmp.lt.s32.totalorder %v1456, 0
      %v1594 = vand.u32 %v1456, 2139095040
      %v1595 = vshrl.u32 %v1594, 23
      %v1596 = vsub.s32 %v1595, 127
      %v1597 = vand.u32 2147483647, %v1456
      %v1598 = vand.u32 %v1597, 8388607
      %v1599 = vor.u32 %v1598, 8388608
      %v1600 = vsub.s32 0, %v1599
      %v1601 = vadd.s32 %v1596, 1
      %vm1602 = vcmp.gt.s32.totalorder %v1601, 0
      %v1603 = vsel %vm1602, %v1601, 0
      %v1604 = vshrl.u32 %v1603, 5
      %v1605 = vand.u32 %v1603, 31
      %v1606 = vsub.s32 32, %v1605
      %v1607 = vshrl.u32 683565275, %v1606
      %v1608 = vshll.u32 683565275, %v1605
      %v1609 = vshrl.u32 2475754826, %v1606
      %v1610 = vor.u32 %v1608, %v1609
      %v1611 = vshll.u32 2475754826, %v1605
      %v1612 = vshrl.u32 2131351028, %v1606
      %v1613 = vor.u32 %v1611, %v1612
      %v1614 = vshll.u32 2131351028, %v1605
      %v1615 = vshrl.u32 2102212464, %v1606
      %v1616 = vor.u32 %v1614, %v1615
      %v1617 = vshll.u32 2102212464, %v1605
      %v1618 = vshrl.u32 920167782, %v1606
      %v1619 = vor.u32 %v1617, %v1618
      %v1620 = vshll.u32 920167782, %v1605
      %v1621 = vshrl.u32 1326507024, %v1606
      %v1622 = vor.u32 %v1620, %v1621
      %vm1623 = vcmp.lt.s32.totalorder %v1604, 1
      %vm1624 = vcmp.lt.s32.totalorder %v1604, 2
      %vm1625 = vcmp.lt.s32.totalorder %v1604, 3
      %vm1626 = vcmp.lt.s32.totalorder %v1604, 4
      %v1627 = vsel %vm1623, %v1607, %v1610
      %v1628 = vsel %vm1626, %v1616, 2102212464
      %v1629 = vsel %vm1625, %v1613, %v1628
      %v1630 = vsel %vm1624, %v1627, %v1629
      %v1631 = vsel %vm1623, %v1610, %v1613
      %v1632 = vsel %vm1626, %v1619, 920167782
      %v1633 = vsel %vm1625, %v1616, %v1632
      %v1634 = vsel %vm1624, %v1631, %v1633
      %v1635 = vsel %vm1623, %v1613, %v1616
      %v1636 = vsel %vm1626, %v1622, 1326507024
      %v1637 = vsel %vm1625, %v1619, %v1636
      %v1638 = vsel %vm1624, %v1635, %v1637
      %v1639 = vshll.u32 %v1599, 8
      %v1640 = vmul.u32.u64.compose %v1639, %v1638
      %v1641 = vextract.low.u32 %v1640
      %v1642 = vextract.high.u32 %v1640
      %v1643 = vmul.u32.u64.compose %v1639, %v1634
      %v1644 = vextract.low.u32 %v1643
      %v1645 = vextract.high.u32 %v1643
      %v1646 = vmul.u32 %v1639, %v1630
      %v1647 = vadd.s32 %v1642, %v1644
      %vm1648 = vc.u32 %v1642, %v1644
      %v1649 = vadd.s32 %v1645, 1
      %v1650 = vsel %vm1648, %v1649, %v1645
      %v1651 = vadd.s32 %v1646, %v1650
      %v1652 = vadd.s32 %v1651, 536870912
      %v1653 = vshrl.u32 %v1652, 30
      %v1654 = vshll.u32 %v1653, 30
      %v1655 = vsub.s32 %v1651, %v1654
      %vm1656 = vcmp.lt.s32.totalorder %v1655, 0
      %v1657 = vsub.s32 0, %v1655
      %v1658 = vsel %vm1656, %v1657, %v1655
      %v1659 = vclz %v1658
      %v1660 = vsub.s32 %v1659, 2
      %vm1661 = vcmp.gt.s32.totalorder 0, %v1660
      %v1662 = vsel %vm1661, 0, %v1660
      %v1663 = vsub.s32 32, %v1662
      %v1664 = vshll.u32 %v1655, %v1662
      %v1665 = vshrl.u32 %v1647, %v1663
      %v1666 = vor.u32 %v1664, %v1665
      %v1667 = vsub.s32 4294967266, %v1662
      %v1668 = vadd.s32 %v1667, 127
      %v1669 = vshll.u32 %v1668, 23
      %v1670 = vor.u32 4788187, %v1669
      %v1671 = vand.u32 2147483647, %v1670
      %v1673 = vcvt.s32.f32 %v1666
      %v1674 = vmul.f32 %v1673, %v1671
      %v1675 = vxor.u32 %v1674, 2147483648
      %v1676 = vsel %vm1593, %v1675, %v1674
      %v1677 = vsub.s32 4, %v1653
      %v1678 = vsel %vm1593, %v1677, %v1653
      %v1679 = vsel %vm1592, %v1456, %v1676
      %v1680 = vsel %vm1592, 0, %v1678
      %v1681 = vcosq.f32.pop %v1679
      %v1682 = vsinq.f32.pop %v1679
      %vm1683 = vweird.f32 %v1456
      %v1684 = vadd.s32 %v1680, 3
      %v1685 = vand.u32 %v1684, 3
      %vm1686 = vcmp.lt.s32.totalorder %v1685, 2
      %vm1687 = vcmp.eq.s32.totalorder %v1685, 0
      %v1688 = vxor.u32 %v1682, 2147483648
      %v1689 = vsel %vm1687, %v1681, %v1688
      %vm1690 = vcmp.eq.s32.totalorder %v1685, 2
      %v1691 = vxor.u32 %v1681, 2147483648
      %v1692 = vsel %vm1690, %v1691, %v1682
      %v1693 = vsel %vm1686, %v1689, %v1692
      %v1694 = vsel %vm1683, nan, %v1693
      %v1695 = vand.u32 2147483647, %v1457
      %vm1696 = vcmp.le.f32.partialorder %v1695, 0.7853982
      %vm1697 = vcmp.lt.s32.totalorder %v1457, 0
      %v1698 = vand.u32 %v1457, 2139095040
      %v1699 = vshrl.u32 %v1698, 23
      %v1700 = vsub.s32 %v1699, 127
      %v1701 = vand.u32 2147483647, %v1457
      %v1702 = vand.u32 %v1701, 8388607
      %v1703 = vor.u32 %v1702, 8388608
      %v1704 = vsub.s32 0, %v1703
      %v1705 = vadd.s32 %v1700, 1
      %vm1706 = vcmp.gt.s32.totalorder %v1705, 0
      %v1707 = vsel %vm1706, %v1705, 0
      %v1708 = vshrl.u32 %v1707, 5
      %v1709 = vand.u32 %v1707, 31
      %v1710 = vsub.s32 32, %v1709
      %v1711 = vshrl.u32 683565275, %v1710
      %v1712 = vshll.u32 683565275, %v1709
      %v1713 = vshrl.u32 2475754826, %v1710
      %v1714 = vor.u32 %v1712, %v1713
      %v1715 = vshll.u32 2475754826, %v1709
      %v1716 = vshrl.u32 2131351028, %v1710
      %v1717 = vor.u32 %v1715, %v1716
      %v1718 = vshll.u32 2131351028, %v1709
      %v1719 = vshrl.u32 2102212464, %v1710
      %v1720 = vor.u32 %v1718, %v1719
      %v1721 = vshll.u32 2102212464, %v1709
      %v1722 = vshrl.u32 920167782, %v1710
      %v1723 = vor.u32 %v1721, %v1722
      %v1724 = vshll.u32 920167782, %v1709
      %v1725 = vshrl.u32 1326507024, %v1710
      %v1726 = vor.u32 %v1724, %v1725
      %vm1727 = vcmp.lt.s32.totalorder %v1708, 1
      %vm1728 = vcmp.lt.s32.totalorder %v1708, 2
      %vm1729 = vcmp.lt.s32.totalorder %v1708, 3
      %vm1730 = vcmp.lt.s32.totalorder %v1708, 4
      %v1731 = vsel %vm1727, %v1711, %v1714
      %v1732 = vsel %vm1730, %v1720, 2102212464
      %v1733 = vsel %vm1729, %v1717, %v1732
      %v1734 = vsel %vm1728, %v1731, %v1733
      %v1735 = vsel %vm1727, %v1714, %v1717
      %v1736 = vsel %vm1730, %v1723, 920167782
      %v1737 = vsel %vm1729, %v1720, %v1736
      %v1738 = vsel %vm1728, %v1735, %v1737
      %v1739 = vsel %vm1727, %v1717, %v1720
      %v1740 = vsel %vm1730, %v1726, 1326507024
      %v1741 = vsel %vm1729, %v1723, %v1740
      %v1742 = vsel %vm1728, %v1739, %v1741
      %v1743 = vshll.u32 %v1703, 8
      %v1744 = vmul.u32.u64.compose %v1743, %v1742
      %v1745 = vextract.low.u32 %v1744
      %v1746 = vextract.high.u32 %v1744
      %v1747 = vmul.u32.u64.compose %v1743, %v1738
      %v1748 = vextract.low.u32 %v1747
      %v1749 = vextract.high.u32 %v1747
      %v1750 = vmul.u32 %v1743, %v1734
      %v1751 = vadd.s32 %v1746, %v1748
      %vm1752 = vc.u32 %v1746, %v1748
      %v1753 = vadd.s32 %v1749, 1
      %v1754 = vsel %vm1752, %v1753, %v1749
      %v1755 = vadd.s32 %v1750, %v1754
      %v1756 = vadd.s32 %v1755, 536870912
      %v1757 = vshrl.u32 %v1756, 30
      %v1758 = vshll.u32 %v1757, 30
      %v1759 = vsub.s32 %v1755, %v1758
      %vm1760 = vcmp.lt.s32.totalorder %v1759, 0
      %v1761 = vsub.s32 0, %v1759
      %v1762 = vsel %vm1760, %v1761, %v1759
      %v1763 = vclz %v1762
      %v1764 = vsub.s32 %v1763, 2
      %vm1765 = vcmp.gt.s32.totalorder 0, %v1764
      %v1766 = vsel %vm1765, 0, %v1764
      %v1767 = vsub.s32 32, %v1766
      %v1768 = vshll.u32 %v1759, %v1766
      %v1769 = vshrl.u32 %v1751, %v1767
      %v1770 = vor.u32 %v1768, %v1769
      %v1771 = vsub.s32 4294967266, %v1766
      %v1772 = vadd.s32 %v1771, 127
      %v1773 = vshll.u32 %v1772, 23
      %v1774 = vor.u32 4788187, %v1773
      %v1775 = vand.u32 2147483647, %v1774
      %v1777 = vcvt.s32.f32 %v1770
      %v1778 = vmul.f32 %v1777, %v1775
      %v1779 = vxor.u32 %v1778, 2147483648
      %v1780 = vsel %vm1697, %v1779, %v1778
      %v1781 = vsub.s32 4, %v1757
      %v1782 = vsel %vm1697, %v1781, %v1757
      %v1783 = vsel %vm1696, %v1457, %v1780
      %v1784 = vsel %vm1696, 0, %v1782
      %v1785 = vcosq.f32.pop %v1783
      %v1786 = vsinq.f32.pop %v1783
      %vm1787 = vweird.f32 %v1457
      %v1788 = vadd.s32 %v1784, 3
      %v1789 = vand.u32 %v1788, 3
      %vm1790 = vcmp.lt.s32.totalorder %v1789, 2
      %vm1791 = vcmp.eq.s32.totalorder %v1789, 0
      %v1792 = vxor.u32 %v1786, 2147483648
      %v1793 = vsel %vm1791, %v1785, %v1792
      %vm1794 = vcmp.eq.s32.totalorder %v1789, 2
      %v1795 = vxor.u32 %v1785, 2147483648
      %v1796 = vsel %vm1794, %v1795, %v1786
      %v1797 = vsel %vm1790, %v1793, %v1796
      %v1798 = vsel %vm1787, nan, %v1797
      %v1799 = vand.u32 2147483647, %v1458
      %vm1800 = vcmp.le.f32.partialorder %v1799, 0.7853982
      %vm1801 = vcmp.lt.s32.totalorder %v1458, 0
      %v1802 = vand.u32 %v1458, 2139095040
      %v1803 = vshrl.u32 %v1802, 23
      %v1804 = vsub.s32 %v1803, 127
      %v1805 = vand.u32 2147483647, %v1458
      %v1806 = vand.u32 %v1805, 8388607
      %v1807 = vor.u32 %v1806, 8388608
      %v1808 = vsub.s32 0, %v1807
      %v1809 = vadd.s32 %v1804, 1
      %vm1810 = vcmp.gt.s32.totalorder %v1809, 0
      %v1811 = vsel %vm1810, %v1809, 0
      %v1812 = vshrl.u32 %v1811, 5
      %v1813 = vand.u32 %v1811, 31
      %v1814 = vsub.s32 32, %v1813
      %v1815 = vshrl.u32 683565275, %v1814
      %v1816 = vshll.u32 683565275, %v1813
      %v1817 = vshrl.u32 2475754826, %v1814
      %v1818 = vor.u32 %v1816, %v1817
      %v1819 = vshll.u32 2475754826, %v1813
      %v1820 = vshrl.u32 2131351028, %v1814
      %v1821 = vor.u32 %v1819, %v1820
      %v1822 = vshll.u32 2131351028, %v1813
      %v1823 = vshrl.u32 2102212464, %v1814
      %v1824 = vor.u32 %v1822, %v1823
      %v1825 = vshll.u32 2102212464, %v1813
      %v1826 = vshrl.u32 920167782, %v1814
      %v1827 = vor.u32 %v1825, %v1826
      %v1828 = vshll.u32 920167782, %v1813
      %v1829 = vshrl.u32 1326507024, %v1814
      %v1830 = vor.u32 %v1828, %v1829
      %vm1831 = vcmp.lt.s32.totalorder %v1812, 1
      %vm1832 = vcmp.lt.s32.totalorder %v1812, 2
      %vm1833 = vcmp.lt.s32.totalorder %v1812, 3
      %vm1834 = vcmp.lt.s32.totalorder %v1812, 4
      %v1835 = vsel %vm1831, %v1815, %v1818
      %v1836 = vsel %vm1834, %v1824, 2102212464
      %v1837 = vsel %vm1833, %v1821, %v1836
      %v1838 = vsel %vm1832, %v1835, %v1837
      %v1839 = vsel %vm1831, %v1818, %v1821
      %v1840 = vsel %vm1834, %v1827, 920167782
      %v1841 = vsel %vm1833, %v1824, %v1840
      %v1842 = vsel %vm1832, %v1839, %v1841
      %v1843 = vsel %vm1831, %v1821, %v1824
      %v1844 = vsel %vm1834, %v1830, 1326507024
      %v1845 = vsel %vm1833, %v1827, %v1844
      %v1846 = vsel %vm1832, %v1843, %v1845
      %v1847 = vshll.u32 %v1807, 8
      %v1848 = vmul.u32.u64.compose %v1847, %v1846
      %v1849 = vextract.low.u32 %v1848
      %v1850 = vextract.high.u32 %v1848
      %v1851 = vmul.u32.u64.compose %v1847, %v1842
      %v1852 = vextract.low.u32 %v1851
      %v1853 = vextract.high.u32 %v1851
      %v1854 = vmul.u32 %v1847, %v1838
      %v1855 = vadd.s32 %v1850, %v1852
      %vm1856 = vc.u32 %v1850, %v1852
      %v1857 = vadd.s32 %v1853, 1
      %v1858 = vsel %vm1856, %v1857, %v1853
      %v1859 = vadd.s32 %v1854, %v1858
      %v1860 = vadd.s32 %v1859, 536870912
      %v1861 = vshrl.u32 %v1860, 30
      %v1862 = vshll.u32 %v1861, 30
      %v1863 = vsub.s32 %v1859, %v1862
      %vm1864 = vcmp.lt.s32.totalorder %v1863, 0
      %v1865 = vsub.s32 0, %v1863
      %v1866 = vsel %vm1864, %v1865, %v1863
      %v1867 = vclz %v1866
      %v1868 = vsub.s32 %v1867, 2
      %vm1869 = vcmp.gt.s32.totalorder 0, %v1868
      %v1870 = vsel %vm1869, 0, %v1868
      %v1871 = vsub.s32 32, %v1870
      %v1872 = vshll.u32 %v1863, %v1870
      %v1873 = vshrl.u32 %v1855, %v1871
      %v1874 = vor.u32 %v1872, %v1873
      %v1875 = vsub.s32 4294967266, %v1870
      %v1876 = vadd.s32 %v1875, 127
      %v1877 = vshll.u32 %v1876, 23
      %v1878 = vor.u32 4788187, %v1877
      %v1879 = vand.u32 2147483647, %v1878
      %v1881 = vcvt.s32.f32 %v1874
      %v1882 = vmul.f32 %v1881, %v1879
      %v1883 = vxor.u32 %v1882, 2147483648
      %v1884 = vsel %vm1801, %v1883, %v1882
      %v1885 = vsub.s32 4, %v1861
      %v1886 = vsel %vm1801, %v1885, %v1861
      %v1887 = vsel %vm1800, %v1458, %v1884
      %v1888 = vsel %vm1800, 0, %v1886
      %v1889 = vcosq.f32.pop %v1887
      %v1890 = vsinq.f32.pop %v1887
      %vm1891 = vweird.f32 %v1458
      %v1892 = vadd.s32 %v1888, 3
      %v1893 = vand.u32 %v1892, 3
      %vm1894 = vcmp.lt.s32.totalorder %v1893, 2
      %vm1895 = vcmp.eq.s32.totalorder %v1893, 0
      %v1896 = vxor.u32 %v1890, 2147483648
      %v1897 = vsel %vm1895, %v1889, %v1896
      %vm1898 = vcmp.eq.s32.totalorder %v1893, 2
      %v1899 = vxor.u32 %v1889, 2147483648
      %v1900 = vsel %vm1898, %v1899, %v1890
      %v1901 = vsel %vm1894, %v1897, %v1900
      %v1902 = vsel %vm1891, nan, %v1901
      %v1903 = vand.u32 2147483647, %v1459
      %vm1904 = vcmp.le.f32.partialorder %v1903, 0.7853982
      %vm1905 = vcmp.lt.s32.totalorder %v1459, 0
      %v1906 = vand.u32 %v1459, 2139095040
      %v1907 = vshrl.u32 %v1906, 23
      %v1908 = vsub.s32 %v1907, 127
      %v1909 = vand.u32 2147483647, %v1459
      %v1910 = vand.u32 %v1909, 8388607
      %v1911 = vor.u32 %v1910, 8388608
      %v1912 = vsub.s32 0, %v1911
      %v1913 = vadd.s32 %v1908, 1
      %vm1914 = vcmp.gt.s32.totalorder %v1913, 0
      %v1915 = vsel %vm1914, %v1913, 0
      %v1916 = vshrl.u32 %v1915, 5
      %v1917 = vand.u32 %v1915, 31
      %v1918 = vsub.s32 32, %v1917
      %v1919 = vshrl.u32 683565275, %v1918
      %v1920 = vshll.u32 683565275, %v1917
      %v1921 = vshrl.u32 2475754826, %v1918
      %v1922 = vor.u32 %v1920, %v1921
      %v1923 = vshll.u32 2475754826, %v1917
      %v1924 = vshrl.u32 2131351028, %v1918
      %v1925 = vor.u32 %v1923, %v1924
      %v1926 = vshll.u32 2131351028, %v1917
      %v1927 = vshrl.u32 2102212464, %v1918
      %v1928 = vor.u32 %v1926, %v1927
      %v1929 = vshll.u32 2102212464, %v1917
      %v1930 = vshrl.u32 920167782, %v1918
      %v1931 = vor.u32 %v1929, %v1930
      %v1932 = vshll.u32 920167782, %v1917
      %v1933 = vshrl.u32 1326507024, %v1918
      %v1934 = vor.u32 %v1932, %v1933
      %vm1935 = vcmp.lt.s32.totalorder %v1916, 1
      %vm1936 = vcmp.lt.s32.totalorder %v1916, 2
      %vm1937 = vcmp.lt.s32.totalorder %v1916, 3
      %vm1938 = vcmp.lt.s32.totalorder %v1916, 4
      %v1939 = vsel %vm1935, %v1919, %v1922
      %v1940 = vsel %vm1938, %v1928, 2102212464
      %v1941 = vsel %vm1937, %v1925, %v1940
      %v1942 = vsel %vm1936, %v1939, %v1941
      %v1943 = vsel %vm1935, %v1922, %v1925
      %v1944 = vsel %vm1938, %v1931, 920167782
      %v1945 = vsel %vm1937, %v1928, %v1944
      %v1946 = vsel %vm1936, %v1943, %v1945
      %v1947 = vsel %vm1935, %v1925, %v1928
      %v1948 = vsel %vm1938, %v1934, 1326507024
      %v1949 = vsel %vm1937, %v1931, %v1948
      %v1950 = vsel %vm1936, %v1947, %v1949
      %v1951 = vshll.u32 %v1911, 8
      %v1952 = vmul.u32.u64.compose %v1951, %v1950
      %v1953 = vextract.low.u32 %v1952
      %v1954 = vextract.high.u32 %v1952
      %v1955 = vmul.u32.u64.compose %v1951, %v1946
      %v1956 = vextract.low.u32 %v1955
      %v1957 = vextract.high.u32 %v1955
      %v1958 = vmul.u32 %v1951, %v1942
      %v1959 = vadd.s32 %v1954, %v1956
      %vm1960 = vc.u32 %v1954, %v1956
      %v1961 = vadd.s32 %v1957, 1
      %v1962 = vsel %vm1960, %v1961, %v1957
      %v1963 = vadd.s32 %v1958, %v1962
      %v1964 = vadd.s32 %v1963, 536870912
      %v1965 = vshrl.u32 %v1964, 30
      %v1966 = vshll.u32 %v1965, 30
      %v1967 = vsub.s32 %v1963, %v1966
      %vm1968 = vcmp.lt.s32.totalorder %v1967, 0
      %v1969 = vsub.s32 0, %v1967
      %v1970 = vsel %vm1968, %v1969, %v1967
      %v1971 = vclz %v1970
      %v1972 = vsub.s32 %v1971, 2
      %vm1973 = vcmp.gt.s32.totalorder 0, %v1972
      %v1974 = vsel %vm1973, 0, %v1972
      %v1975 = vsub.s32 32, %v1974
      %v1976 = vshll.u32 %v1967, %v1974
      %v1977 = vshrl.u32 %v1959, %v1975
      %v1978 = vor.u32 %v1976, %v1977
      %v1979 = vsub.s32 4294967266, %v1974
      %v1980 = vadd.s32 %v1979, 127
      %v1981 = vshll.u32 %v1980, 23
      %v1982 = vor.u32 4788187, %v1981
      %v1983 = vand.u32 2147483647, %v1982
      %v1985 = vcvt.s32.f32 %v1978
      %v1986 = vmul.f32 %v1985, %v1983
      %v1987 = vxor.u32 %v1986, 2147483648
      %v1988 = vsel %vm1905, %v1987, %v1986
      %v1989 = vsub.s32 4, %v1965
      %v1990 = vsel %vm1905, %v1989, %v1965
      %v1991 = vsel %vm1904, %v1459, %v1988
      %v1992 = vsel %vm1904, 0, %v1990
      %v1993 = vcosq.f32.pop %v1991
      %v1994 = vsinq.f32.pop %v1991
      %vm1995 = vweird.f32 %v1459
      %v1996 = vadd.s32 %v1992, 3
      %v1997 = vand.u32 %v1996, 3
      %vm1998 = vcmp.lt.s32.totalorder %v1997, 2
      %vm1999 = vcmp.eq.s32.totalorder %v1997, 0
      %v2000 = vxor.u32 %v1994, 2147483648
      %v2001 = vsel %vm1999, %v1993, %v2000
      %vm2002 = vcmp.eq.s32.totalorder %v1997, 2
      %v2003 = vxor.u32 %v1993, 2147483648
      %v2004 = vsel %vm2002, %v2003, %v1994
      %v2005 = vsel %vm1998, %v2001, %v2004
      %v2006 = vsel %vm1995, nan, %v2005
      %v2007 = vand.u32 2147483647, %v1460
      %vm2008 = vcmp.le.f32.partialorder %v2007, 0.7853982
      %vm2009 = vcmp.lt.s32.totalorder %v1460, 0
      %v2010 = vand.u32 %v1460, 2139095040
      %v2011 = vshrl.u32 %v2010, 23
      %v2012 = vsub.s32 %v2011, 127
      %v2013 = vand.u32 2147483647, %v1460
      %v2014 = vand.u32 %v2013, 8388607
      %v2015 = vor.u32 %v2014, 8388608
      %v2016 = vsub.s32 0, %v2015
      %v2017 = vadd.s32 %v2012, 1
      %vm2018 = vcmp.gt.s32.totalorder %v2017, 0
      %v2019 = vsel %vm2018, %v2017, 0
      %v2020 = vshrl.u32 %v2019, 5
      %v2021 = vand.u32 %v2019, 31
      %v2022 = vsub.s32 32, %v2021
      %v2023 = vshrl.u32 683565275, %v2022
      %v2024 = vshll.u32 683565275, %v2021
      %v2025 = vshrl.u32 2475754826, %v2022
      %v2026 = vor.u32 %v2024, %v2025
      %v2027 = vshll.u32 2475754826, %v2021
      %v2028 = vshrl.u32 2131351028, %v2022
      %v2029 = vor.u32 %v2027, %v2028
      %v2030 = vshll.u32 2131351028, %v2021
      %v2031 = vshrl.u32 2102212464, %v2022
      %v2032 = vor.u32 %v2030, %v2031
      %v2033 = vshll.u32 2102212464, %v2021
      %v2034 = vshrl.u32 920167782, %v2022
      %v2035 = vor.u32 %v2033, %v2034
      %v2036 = vshll.u32 920167782, %v2021
      %v2037 = vshrl.u32 1326507024, %v2022
      %v2038 = vor.u32 %v2036, %v2037
      %vm2039 = vcmp.lt.s32.totalorder %v2020, 1
      %vm2040 = vcmp.lt.s32.totalorder %v2020, 2
      %vm2041 = vcmp.lt.s32.totalorder %v2020, 3
      %vm2042 = vcmp.lt.s32.totalorder %v2020, 4
      %v2043 = vsel %vm2039, %v2023, %v2026
      %v2044 = vsel %vm2042, %v2032, 2102212464
      %v2045 = vsel %vm2041, %v2029, %v2044
      %v2046 = vsel %vm2040, %v2043, %v2045
      %v2047 = vsel %vm2039, %v2026, %v2029
      %v2048 = vsel %vm2042, %v2035, 920167782
      %v2049 = vsel %vm2041, %v2032, %v2048
      %v2050 = vsel %vm2040, %v2047, %v2049
      %v2051 = vsel %vm2039, %v2029, %v2032
      %v2052 = vsel %vm2042, %v2038, 1326507024
      %v2053 = vsel %vm2041, %v2035, %v2052
      %v2054 = vsel %vm2040, %v2051, %v2053
      %v2055 = vshll.u32 %v2015, 8
      %v2056 = vmul.u32.u64.compose %v2055, %v2054
      %v2057 = vextract.low.u32 %v2056
      %v2058 = vextract.high.u32 %v2056
      %v2059 = vmul.u32.u64.compose %v2055, %v2050
      %v2060 = vextract.low.u32 %v2059
      %v2061 = vextract.high.u32 %v2059
      %v2062 = vmul.u32 %v2055, %v2046
      %v2063 = vadd.s32 %v2058, %v2060
      %vm2064 = vc.u32 %v2058, %v2060
      %v2065 = vadd.s32 %v2061, 1
      %v2066 = vsel %vm2064, %v2065, %v2061
      %v2067 = vadd.s32 %v2062, %v2066
      %v2068 = vadd.s32 %v2067, 536870912
      %v2069 = vshrl.u32 %v2068, 30
      %v2070 = vshll.u32 %v2069, 30
      %v2071 = vsub.s32 %v2067, %v2070
      %vm2072 = vcmp.lt.s32.totalorder %v2071, 0
      %v2073 = vsub.s32 0, %v2071
      %v2074 = vsel %vm2072, %v2073, %v2071
      %v2075 = vclz %v2074
      %v2076 = vsub.s32 %v2075, 2
      %vm2077 = vcmp.gt.s32.totalorder 0, %v2076
      %v2078 = vsel %vm2077, 0, %v2076
      %v2079 = vsub.s32 32, %v2078
      %v2080 = vshll.u32 %v2071, %v2078
      %v2081 = vshrl.u32 %v2063, %v2079
      %v2082 = vor.u32 %v2080, %v2081
      %v2083 = vsub.s32 4294967266, %v2078
      %v2084 = vadd.s32 %v2083, 127
      %v2085 = vshll.u32 %v2084, 23
      %v2086 = vor.u32 4788187, %v2085
      %v2087 = vand.u32 2147483647, %v2086
      %v2089 = vcvt.s32.f32 %v2082
      %v2090 = vmul.f32 %v2089, %v2087
      %v2091 = vxor.u32 %v2090, 2147483648
      %v2092 = vsel %vm2009, %v2091, %v2090
      %v2093 = vsub.s32 4, %v2069
      %v2094 = vsel %vm2009, %v2093, %v2069
      %v2095 = vsel %vm2008, %v1460, %v2092
      %v2096 = vsel %vm2008, 0, %v2094
      %v2097 = vcosq.f32.pop %v2095
      %v2098 = vsinq.f32.pop %v2095
      %vm2099 = vweird.f32 %v1460
      %v2100 = vadd.s32 %v2096, 3
      %v2101 = vand.u32 %v2100, 3
      %vm2102 = vcmp.lt.s32.totalorder %v2101, 2
      %vm2103 = vcmp.eq.s32.totalorder %v2101, 0
      %v2104 = vxor.u32 %v2098, 2147483648
      %v2105 = vsel %vm2103, %v2097, %v2104
      %vm2106 = vcmp.eq.s32.totalorder %v2101, 2
      %v2107 = vxor.u32 %v2097, 2147483648
      %v2108 = vsel %vm2106, %v2107, %v2098
      %v2109 = vsel %vm2102, %v2105, %v2108
      %v2110 = vsel %vm2099, nan, %v2109
      %v2111 = vand.u32 2147483647, %v1461
      %vm2112 = vcmp.le.f32.partialorder %v2111, 0.7853982
      %vm2113 = vcmp.lt.s32.totalorder %v1461, 0
      %v2114 = vand.u32 %v1461, 2139095040
      %v2115 = vshrl.u32 %v2114, 23
      %v2116 = vsub.s32 %v2115, 127
      %v2117 = vand.u32 2147483647, %v1461
      %v2118 = vand.u32 %v2117, 8388607
      %v2119 = vor.u32 %v2118, 8388608
      %v2120 = vsub.s32 0, %v2119
      %v2121 = vadd.s32 %v2116, 1
      %vm2122 = vcmp.gt.s32.totalorder %v2121, 0
      %v2123 = vsel %vm2122, %v2121, 0
      %v2124 = vshrl.u32 %v2123, 5
      %v2125 = vand.u32 %v2123, 31
      %v2126 = vsub.s32 32, %v2125
      %v2127 = vshrl.u32 683565275, %v2126
      %v2128 = vshll.u32 683565275, %v2125
      %v2129 = vshrl.u32 2475754826, %v2126
      %v2130 = vor.u32 %v2128, %v2129
      %v2131 = vshll.u32 2475754826, %v2125
      %v2132 = vshrl.u32 2131351028, %v2126
      %v2133 = vor.u32 %v2131, %v2132
      %v2134 = vshll.u32 2131351028, %v2125
      %v2135 = vshrl.u32 2102212464, %v2126
      %v2136 = vor.u32 %v2134, %v2135
      %v2137 = vshll.u32 2102212464, %v2125
      %v2138 = vshrl.u32 920167782, %v2126
      %v2139 = vor.u32 %v2137, %v2138
      %v2140 = vshll.u32 920167782, %v2125
      %v2141 = vshrl.u32 1326507024, %v2126
      %v2142 = vor.u32 %v2140, %v2141
      %vm2143 = vcmp.lt.s32.totalorder %v2124, 1
      %vm2144 = vcmp.lt.s32.totalorder %v2124, 2
      %vm2145 = vcmp.lt.s32.totalorder %v2124, 3
      %vm2146 = vcmp.lt.s32.totalorder %v2124, 4
      %v2147 = vsel %vm2143, %v2127, %v2130
      %v2148 = vsel %vm2146, %v2136, 2102212464
      %v2149 = vsel %vm2145, %v2133, %v2148
      %v2150 = vsel %vm2144, %v2147, %v2149
      %v2151 = vsel %vm2143, %v2130, %v2133
      %v2152 = vsel %vm2146, %v2139, 920167782
      %v2153 = vsel %vm2145, %v2136, %v2152
      %v2154 = vsel %vm2144, %v2151, %v2153
      %v2155 = vsel %vm2143, %v2133, %v2136
      %v2156 = vsel %vm2146, %v2142, 1326507024
      %v2157 = vsel %vm2145, %v2139, %v2156
      %v2158 = vsel %vm2144, %v2155, %v2157
      %v2159 = vshll.u32 %v2119, 8
      %v2160 = vmul.u32.u64.compose %v2159, %v2158
      %v2161 = vextract.low.u32 %v2160
      %v2162 = vextract.high.u32 %v2160
      %v2163 = vmul.u32.u64.compose %v2159, %v2154
      %v2164 = vextract.low.u32 %v2163
      %v2165 = vextract.high.u32 %v2163
      %v2166 = vmul.u32 %v2159, %v2150
      %v2167 = vadd.s32 %v2162, %v2164
      %vm2168 = vc.u32 %v2162, %v2164
      %v2169 = vadd.s32 %v2165, 1
      %v2170 = vsel %vm2168, %v2169, %v2165
      %v2171 = vadd.s32 %v2166, %v2170
      %v2172 = vadd.s32 %v2171, 536870912
      %v2173 = vshrl.u32 %v2172, 30
      %v2174 = vshll.u32 %v2173, 30
      %v2175 = vsub.s32 %v2171, %v2174
      %vm2176 = vcmp.lt.s32.totalorder %v2175, 0
      %v2177 = vsub.s32 0, %v2175
      %v2178 = vsel %vm2176, %v2177, %v2175
      %v2179 = vclz %v2178
      %v2180 = vsub.s32 %v2179, 2
      %vm2181 = vcmp.gt.s32.totalorder 0, %v2180
      %v2182 = vsel %vm2181, 0, %v2180
      %v2183 = vsub.s32 32, %v2182
      %v2184 = vshll.u32 %v2175, %v2182
      %v2185 = vshrl.u32 %v2167, %v2183
      %v2186 = vor.u32 %v2184, %v2185
      %v2187 = vsub.s32 4294967266, %v2182
      %v2188 = vadd.s32 %v2187, 127
      %v2189 = vshll.u32 %v2188, 23
      %v2190 = vor.u32 4788187, %v2189
      %v2191 = vand.u32 2147483647, %v2190
      %v2193 = vcvt.s32.f32 %v2186
      %v2194 = vmul.f32 %v2193, %v2191
      %v2195 = vxor.u32 %v2194, 2147483648
      %v2196 = vsel %vm2113, %v2195, %v2194
      %v2197 = vsub.s32 4, %v2173
      %v2198 = vsel %vm2113, %v2197, %v2173
      %v2199 = vsel %vm2112, %v1461, %v2196
      %v2200 = vsel %vm2112, 0, %v2198
      %v2201 = vcosq.f32.pop %v2199
      %v2202 = vsinq.f32.pop %v2199
      %vm2203 = vweird.f32 %v1461
      %v2204 = vadd.s32 %v2200, 3
      %v2205 = vand.u32 %v2204, 3
      %vm2206 = vcmp.lt.s32.totalorder %v2205, 2
      %vm2207 = vcmp.eq.s32.totalorder %v2205, 0
      %v2208 = vxor.u32 %v2202, 2147483648
      %v2209 = vsel %vm2207, %v2201, %v2208
      %vm2210 = vcmp.eq.s32.totalorder %v2205, 2
      %v2211 = vxor.u32 %v2201, 2147483648
      %v2212 = vsel %vm2210, %v2211, %v2202
      %v2213 = vsel %vm2206, %v2209, %v2212
      %v2214 = vsel %vm2203, nan, %v2213
      %v2215 = vand.u32 2147483647, %v1462
      %vm2216 = vcmp.le.f32.partialorder %v2215, 0.7853982
      %vm2217 = vcmp.lt.s32.totalorder %v1462, 0
      %v2218 = vand.u32 %v1462, 2139095040
      %v2219 = vshrl.u32 %v2218, 23
      %v2220 = vsub.s32 %v2219, 127
      %v2221 = vand.u32 2147483647, %v1462
      %v2222 = vand.u32 %v2221, 8388607
      %v2223 = vor.u32 %v2222, 8388608
      %v2224 = vsub.s32 0, %v2223
      %v2225 = vadd.s32 %v2220, 1
      %vm2226 = vcmp.gt.s32.totalorder %v2225, 0
      %v2227 = vsel %vm2226, %v2225, 0
      %v2228 = vshrl.u32 %v2227, 5
      %v2229 = vand.u32 %v2227, 31
      %v2230 = vsub.s32 32, %v2229
      %v2231 = vshrl.u32 683565275, %v2230
      %v2232 = vshll.u32 683565275, %v2229
      %v2233 = vshrl.u32 2475754826, %v2230
      %v2234 = vor.u32 %v2232, %v2233
      %v2235 = vshll.u32 2475754826, %v2229
      %v2236 = vshrl.u32 2131351028, %v2230
      %v2237 = vor.u32 %v2235, %v2236
      %v2238 = vshll.u32 2131351028, %v2229
      %v2239 = vshrl.u32 2102212464, %v2230
      %v2240 = vor.u32 %v2238, %v2239
      %v2241 = vshll.u32 2102212464, %v2229
      %v2242 = vshrl.u32 920167782, %v2230
      %v2243 = vor.u32 %v2241, %v2242
      %v2244 = vshll.u32 920167782, %v2229
      %v2245 = vshrl.u32 1326507024, %v2230
      %v2246 = vor.u32 %v2244, %v2245
      %vm2247 = vcmp.lt.s32.totalorder %v2228, 1
      %vm2248 = vcmp.lt.s32.totalorder %v2228, 2
      %vm2249 = vcmp.lt.s32.totalorder %v2228, 3
      %vm2250 = vcmp.lt.s32.totalorder %v2228, 4
      %v2251 = vsel %vm2247, %v2231, %v2234
      %v2252 = vsel %vm2250, %v2240, 2102212464
      %v2253 = vsel %vm2249, %v2237, %v2252
      %v2254 = vsel %vm2248, %v2251, %v2253
      %v2255 = vsel %vm2247, %v2234, %v2237
      %v2256 = vsel %vm2250, %v2243, 920167782
      %v2257 = vsel %vm2249, %v2240, %v2256
      %v2258 = vsel %vm2248, %v2255, %v2257
      %v2259 = vsel %vm2247, %v2237, %v2240
      %v2260 = vsel %vm2250, %v2246, 1326507024
      %v2261 = vsel %vm2249, %v2243, %v2260
      %v2262 = vsel %vm2248, %v2259, %v2261
      %v2263 = vshll.u32 %v2223, 8
      %v2264 = vmul.u32.u64.compose %v2263, %v2262
      %v2265 = vextract.low.u32 %v2264
      %v2266 = vextract.high.u32 %v2264
      %v2267 = vmul.u32.u64.compose %v2263, %v2258
      %v2268 = vextract.low.u32 %v2267
      %v2269 = vextract.high.u32 %v2267
      %v2270 = vmul.u32 %v2263, %v2254
      %v2271 = vadd.s32 %v2266, %v2268
      %vm2272 = vc.u32 %v2266, %v2268
      %v2273 = vadd.s32 %v2269, 1
      %v2274 = vsel %vm2272, %v2273, %v2269
      %v2275 = vadd.s32 %v2270, %v2274
      %v2276 = vadd.s32 %v2275, 536870912
      %v2277 = vshrl.u32 %v2276, 30
      %v2278 = vshll.u32 %v2277, 30
      %v2279 = vsub.s32 %v2275, %v2278
      %vm2280 = vcmp.lt.s32.totalorder %v2279, 0
      %v2281 = vsub.s32 0, %v2279
      %v2282 = vsel %vm2280, %v2281, %v2279
      %v2283 = vclz %v2282
      %v2284 = vsub.s32 %v2283, 2
      %vm2285 = vcmp.gt.s32.totalorder 0, %v2284
      %v2286 = vsel %vm2285, 0, %v2284
      %v2287 = vsub.s32 32, %v2286
      %v2288 = vshll.u32 %v2279, %v2286
      %v2289 = vshrl.u32 %v2271, %v2287
      %v2290 = vor.u32 %v2288, %v2289
      %v2291 = vsub.s32 4294967266, %v2286
      %v2292 = vadd.s32 %v2291, 127
      %v2293 = vshll.u32 %v2292, 23
      %v2294 = vor.u32 4788187, %v2293
      %v2295 = vand.u32 2147483647, %v2294
      %v2297 = vcvt.s32.f32 %v2290
      %v2298 = vmul.f32 %v2297, %v2295
      %v2299 = vxor.u32 %v2298, 2147483648
      %v2300 = vsel %vm2217, %v2299, %v2298
      %v2301 = vsub.s32 4, %v2277
      %v2302 = vsel %vm2217, %v2301, %v2277
      %v2303 = vsel %vm2216, %v1462, %v2300
      %v2304 = vsel %vm2216, 0, %v2302
      %v2305 = vcosq.f32.pop %v2303
      %v2306 = vsinq.f32.pop %v2303
      %vm2307 = vweird.f32 %v1462
      %v2308 = vadd.s32 %v2304, 3
      %v2309 = vand.u32 %v2308, 3
      %vm2310 = vcmp.lt.s32.totalorder %v2309, 2
      %vm2311 = vcmp.eq.s32.totalorder %v2309, 0
      %v2312 = vxor.u32 %v2306, 2147483648
      %v2313 = vsel %vm2311, %v2305, %v2312
      %vm2314 = vcmp.eq.s32.totalorder %v2309, 2
      %v2315 = vxor.u32 %v2305, 2147483648
      %v2316 = vsel %vm2314, %v2315, %v2306
      %v2317 = vsel %vm2310, %v2313, %v2316
      %v2318 = vsel %vm2307, nan, %v2317
      %v2319 = vand.u32 2147483647, %v1463
      %vm2320 = vcmp.le.f32.partialorder %v2319, 0.7853982
      %vm2321 = vcmp.lt.s32.totalorder %v1463, 0
      %v2322 = vand.u32 %v1463, 2139095040
      %v2323 = vshrl.u32 %v2322, 23
      %v2324 = vsub.s32 %v2323, 127
      %v2325 = vand.u32 2147483647, %v1463
      %v2326 = vand.u32 %v2325, 8388607
      %v2327 = vor.u32 %v2326, 8388608
      %v2328 = vsub.s32 0, %v2327
      %v2329 = vadd.s32 %v2324, 1
      %vm2330 = vcmp.gt.s32.totalorder %v2329, 0
      %v2331 = vsel %vm2330, %v2329, 0
      %v2332 = vshrl.u32 %v2331, 5
      %v2333 = vand.u32 %v2331, 31
      %v2334 = vsub.s32 32, %v2333
      %v2335 = vshrl.u32 683565275, %v2334
      %v2336 = vshll.u32 683565275, %v2333
      %v2337 = vshrl.u32 2475754826, %v2334
      %v2338 = vor.u32 %v2336, %v2337
      %v2339 = vshll.u32 2475754826, %v2333
      %v2340 = vshrl.u32 2131351028, %v2334
      %v2341 = vor.u32 %v2339, %v2340
      %v2342 = vshll.u32 2131351028, %v2333
      %v2343 = vshrl.u32 2102212464, %v2334
      %v2344 = vor.u32 %v2342, %v2343
      %v2345 = vshll.u32 2102212464, %v2333
      %v2346 = vshrl.u32 920167782, %v2334
      %v2347 = vor.u32 %v2345, %v2346
      %v2348 = vshll.u32 920167782, %v2333
      %v2349 = vshrl.u32 1326507024, %v2334
      %v2350 = vor.u32 %v2348, %v2349
      %vm2351 = vcmp.lt.s32.totalorder %v2332, 1
      %vm2352 = vcmp.lt.s32.totalorder %v2332, 2
      %vm2353 = vcmp.lt.s32.totalorder %v2332, 3
      %vm2354 = vcmp.lt.s32.totalorder %v2332, 4
      %v2355 = vsel %vm2351, %v2335, %v2338
      %v2356 = vsel %vm2354, %v2344, 2102212464
      %v2357 = vsel %vm2353, %v2341, %v2356
      %v2358 = vsel %vm2352, %v2355, %v2357
      %v2359 = vsel %vm2351, %v2338, %v2341
      %v2360 = vsel %vm2354, %v2347, 920167782
      %v2361 = vsel %vm2353, %v2344, %v2360
      %v2362 = vsel %vm2352, %v2359, %v2361
      %v2363 = vsel %vm2351, %v2341, %v2344
      %v2364 = vsel %vm2354, %v2350, 1326507024
      %v2365 = vsel %vm2353, %v2347, %v2364
      %v2366 = vsel %vm2352, %v2363, %v2365
      %v2367 = vshll.u32 %v2327, 8
      %v2368 = vmul.u32.u64.compose %v2367, %v2366
      %v2369 = vextract.low.u32 %v2368
      %v2370 = vextract.high.u32 %v2368
      %v2371 = vmul.u32.u64.compose %v2367, %v2362
      %v2372 = vextract.low.u32 %v2371
      %v2373 = vextract.high.u32 %v2371
      %v2374 = vmul.u32 %v2367, %v2358
      %v2375 = vadd.s32 %v2370, %v2372
      %vm2376 = vc.u32 %v2370, %v2372
      %v2377 = vadd.s32 %v2373, 1
      %v2378 = vsel %vm2376, %v2377, %v2373
      %v2379 = vadd.s32 %v2374, %v2378
      %v2380 = vadd.s32 %v2379, 536870912
      %v2381 = vshrl.u32 %v2380, 30
      %v2382 = vshll.u32 %v2381, 30
      %v2383 = vsub.s32 %v2379, %v2382
      %vm2384 = vcmp.lt.s32.totalorder %v2383, 0
      %v2385 = vsub.s32 0, %v2383
      %v2386 = vsel %vm2384, %v2385, %v2383
      %v2387 = vclz %v2386
      %v2388 = vsub.s32 %v2387, 2
      %vm2389 = vcmp.gt.s32.totalorder 0, %v2388
      %v2390 = vsel %vm2389, 0, %v2388
      %v2391 = vsub.s32 32, %v2390
      %v2392 = vshll.u32 %v2383, %v2390
      %v2393 = vshrl.u32 %v2375, %v2391
      %v2394 = vor.u32 %v2392, %v2393
      %v2395 = vsub.s32 4294967266, %v2390
      %v2396 = vadd.s32 %v2395, 127
      %v2397 = vshll.u32 %v2396, 23
      %v2398 = vor.u32 4788187, %v2397
      %v2399 = vand.u32 2147483647, %v2398
      %v2401 = vcvt.s32.f32 %v2394
      %v2402 = vmul.f32 %v2401, %v2399
      %v2403 = vxor.u32 %v2402, 2147483648
      %v2404 = vsel %vm2321, %v2403, %v2402
      %v2405 = vsub.s32 4, %v2381
      %v2406 = vsel %vm2321, %v2405, %v2381
      %v2407 = vsel %vm2320, %v1463, %v2404
      %v2408 = vsel %vm2320, 0, %v2406
      %v2409 = vcosq.f32.pop %v2407
      %v2410 = vsinq.f32.pop %v2407
      %vm2411 = vweird.f32 %v1463
      %v2412 = vadd.s32 %v2408, 3
      %v2413 = vand.u32 %v2412, 3
      %vm2414 = vcmp.lt.s32.totalorder %v2413, 2
      %vm2415 = vcmp.eq.s32.totalorder %v2413, 0
      %v2416 = vxor.u32 %v2410, 2147483648
      %v2417 = vsel %vm2415, %v2409, %v2416
      %vm2418 = vcmp.eq.s32.totalorder %v2413, 2
      %v2419 = vxor.u32 %v2409, 2147483648
      %v2420 = vsel %vm2418, %v2419, %v2410
      %v2421 = vsel %vm2414, %v2417, %v2420
      %v2422 = vsel %vm2411, nan, %v2421
      %v2423 = vand.u32 2147483647, %v1464
      %vm2424 = vcmp.le.f32.partialorder %v2423, 0.7853982
      %vm2425 = vcmp.lt.s32.totalorder %v1464, 0
      %v2426 = vand.u32 %v1464, 2139095040
      %v2427 = vshrl.u32 %v2426, 23
      %v2428 = vsub.s32 %v2427, 127
      %v2429 = vand.u32 2147483647, %v1464
      %v2430 = vand.u32 %v2429, 8388607
      %v2431 = vor.u32 %v2430, 8388608
      %v2432 = vsub.s32 0, %v2431
      %v2433 = vadd.s32 %v2428, 1
      %vm2434 = vcmp.gt.s32.totalorder %v2433, 0
      %v2435 = vsel %vm2434, %v2433, 0
      %v2436 = vshrl.u32 %v2435, 5
      %v2437 = vand.u32 %v2435, 31
      %v2438 = vsub.s32 32, %v2437
      %v2439 = vshrl.u32 683565275, %v2438
      %v2440 = vshll.u32 683565275, %v2437
      %v2441 = vshrl.u32 2475754826, %v2438
      %v2442 = vor.u32 %v2440, %v2441
      %v2443 = vshll.u32 2475754826, %v2437
      %v2444 = vshrl.u32 2131351028, %v2438
      %v2445 = vor.u32 %v2443, %v2444
      %v2446 = vshll.u32 2131351028, %v2437
      %v2447 = vshrl.u32 2102212464, %v2438
      %v2448 = vor.u32 %v2446, %v2447
      %v2449 = vshll.u32 2102212464, %v2437
      %v2450 = vshrl.u32 920167782, %v2438
      %v2451 = vor.u32 %v2449, %v2450
      %v2452 = vshll.u32 920167782, %v2437
      %v2453 = vshrl.u32 1326507024, %v2438
      %v2454 = vor.u32 %v2452, %v2453
      %vm2455 = vcmp.lt.s32.totalorder %v2436, 1
      %vm2456 = vcmp.lt.s32.totalorder %v2436, 2
      %vm2457 = vcmp.lt.s32.totalorder %v2436, 3
      %vm2458 = vcmp.lt.s32.totalorder %v2436, 4
      %v2459 = vsel %vm2455, %v2439, %v2442
      %v2460 = vsel %vm2458, %v2448, 2102212464
      %v2461 = vsel %vm2457, %v2445, %v2460
      %v2462 = vsel %vm2456, %v2459, %v2461
      %v2463 = vsel %vm2455, %v2442, %v2445
      %v2464 = vsel %vm2458, %v2451, 920167782
      %v2465 = vsel %vm2457, %v2448, %v2464
      %v2466 = vsel %vm2456, %v2463, %v2465
      %v2467 = vsel %vm2455, %v2445, %v2448
      %v2468 = vsel %vm2458, %v2454, 1326507024
      %v2469 = vsel %vm2457, %v2451, %v2468
      %v2470 = vsel %vm2456, %v2467, %v2469
      %v2471 = vshll.u32 %v2431, 8
      %v2472 = vmul.u32.u64.compose %v2471, %v2470
      %v2473 = vextract.low.u32 %v2472
      %v2474 = vextract.high.u32 %v2472
      %v2475 = vmul.u32.u64.compose %v2471, %v2466
      %v2476 = vextract.low.u32 %v2475
      %v2477 = vextract.high.u32 %v2475
      %v2478 = vmul.u32 %v2471, %v2462
      %v2479 = vadd.s32 %v2474, %v2476
      %vm2480 = vc.u32 %v2474, %v2476
      %v2481 = vadd.s32 %v2477, 1
      %v2482 = vsel %vm2480, %v2481, %v2477
      %v2483 = vadd.s32 %v2478, %v2482
      %v2484 = vadd.s32 %v2483, 536870912
      %v2485 = vshrl.u32 %v2484, 30
      %v2486 = vshll.u32 %v2485, 30
      %v2487 = vsub.s32 %v2483, %v2486
      %vm2488 = vcmp.lt.s32.totalorder %v2487, 0
      %v2489 = vsub.s32 0, %v2487
      %v2490 = vsel %vm2488, %v2489, %v2487
      %v2491 = vclz %v2490
      %v2492 = vsub.s32 %v2491, 2
      %vm2493 = vcmp.gt.s32.totalorder 0, %v2492
      %v2494 = vsel %vm2493, 0, %v2492
      %v2495 = vsub.s32 32, %v2494
      %v2496 = vshll.u32 %v2487, %v2494
      %v2497 = vshrl.u32 %v2479, %v2495
      %v2498 = vor.u32 %v2496, %v2497
      %v2499 = vsub.s32 4294967266, %v2494
      %v2500 = vadd.s32 %v2499, 127
      %v2501 = vshll.u32 %v2500, 23
      %v2502 = vor.u32 4788187, %v2501
      %v2503 = vand.u32 2147483647, %v2502
      %v2505 = vcvt.s32.f32 %v2498
      %v2506 = vmul.f32 %v2505, %v2503
      %v2507 = vxor.u32 %v2506, 2147483648
      %v2508 = vsel %vm2425, %v2507, %v2506
      %v2509 = vsub.s32 4, %v2485
      %v2510 = vsel %vm2425, %v2509, %v2485
      %v2511 = vsel %vm2424, %v1464, %v2508
      %v2512 = vsel %vm2424, 0, %v2510
      %v2513 = vcosq.f32.pop %v2511
      %v2514 = vsinq.f32.pop %v2511
      %vm2515 = vweird.f32 %v1464
      %v2516 = vadd.s32 %v2512, 3
      %v2517 = vand.u32 %v2516, 3
      %vm2518 = vcmp.lt.s32.totalorder %v2517, 2
      %vm2519 = vcmp.eq.s32.totalorder %v2517, 0
      %v2520 = vxor.u32 %v2514, 2147483648
      %v2521 = vsel %vm2519, %v2513, %v2520
      %vm2522 = vcmp.eq.s32.totalorder %v2517, 2
      %v2523 = vxor.u32 %v2513, 2147483648
      %v2524 = vsel %vm2522, %v2523, %v2514
      %v2525 = vsel %vm2518, %v2521, %v2524
      %v2526 = vsel %vm2515, nan, %v2525
      %v2527 = vand.u32 2147483647, %v1465
      %vm2528 = vcmp.le.f32.partialorder %v2527, 0.7853982
      %vm2529 = vcmp.lt.s32.totalorder %v1465, 0
      %v2530 = vand.u32 %v1465, 2139095040
      %v2531 = vshrl.u32 %v2530, 23
      %v2532 = vsub.s32 %v2531, 127
      %v2533 = vand.u32 2147483647, %v1465
      %v2534 = vand.u32 %v2533, 8388607
      %v2535 = vor.u32 %v2534, 8388608
      %v2536 = vsub.s32 0, %v2535
      %v2537 = vadd.s32 %v2532, 1
      %vm2538 = vcmp.gt.s32.totalorder %v2537, 0
      %v2539 = vsel %vm2538, %v2537, 0
      %v2540 = vshrl.u32 %v2539, 5
      %v2541 = vand.u32 %v2539, 31
      %v2542 = vsub.s32 32, %v2541
      %v2543 = vshrl.u32 683565275, %v2542
      %v2544 = vshll.u32 683565275, %v2541
      %v2545 = vshrl.u32 2475754826, %v2542
      %v2546 = vor.u32 %v2544, %v2545
      %v2547 = vshll.u32 2475754826, %v2541
      %v2548 = vshrl.u32 2131351028, %v2542
      %v2549 = vor.u32 %v2547, %v2548
      %v2550 = vshll.u32 2131351028, %v2541
      %v2551 = vshrl.u32 2102212464, %v2542
      %v2552 = vor.u32 %v2550, %v2551
      %v2553 = vshll.u32 2102212464, %v2541
      %v2554 = vshrl.u32 920167782, %v2542
      %v2555 = vor.u32 %v2553, %v2554
      %v2556 = vshll.u32 920167782, %v2541
      %v2557 = vshrl.u32 1326507024, %v2542
      %v2558 = vor.u32 %v2556, %v2557
      %vm2559 = vcmp.lt.s32.totalorder %v2540, 1
      %vm2560 = vcmp.lt.s32.totalorder %v2540, 2
      %vm2561 = vcmp.lt.s32.totalorder %v2540, 3
      %vm2562 = vcmp.lt.s32.totalorder %v2540, 4
      %v2563 = vsel %vm2559, %v2543, %v2546
      %v2564 = vsel %vm2562, %v2552, 2102212464
      %v2565 = vsel %vm2561, %v2549, %v2564
      %v2566 = vsel %vm2560, %v2563, %v2565
      %v2567 = vsel %vm2559, %v2546, %v2549
      %v2568 = vsel %vm2562, %v2555, 920167782
      %v2569 = vsel %vm2561, %v2552, %v2568
      %v2570 = vsel %vm2560, %v2567, %v2569
      %v2571 = vsel %vm2559, %v2549, %v2552
      %v2572 = vsel %vm2562, %v2558, 1326507024
      %v2573 = vsel %vm2561, %v2555, %v2572
      %v2574 = vsel %vm2560, %v2571, %v2573
      %v2575 = vshll.u32 %v2535, 8
      %v2576 = vmul.u32.u64.compose %v2575, %v2574
      %v2577 = vextract.low.u32 %v2576
      %v2578 = vextract.high.u32 %v2576
      %v2579 = vmul.u32.u64.compose %v2575, %v2570
      %v2580 = vextract.low.u32 %v2579
      %v2581 = vextract.high.u32 %v2579
      %v2582 = vmul.u32 %v2575, %v2566
      %v2583 = vadd.s32 %v2578, %v2580
      %vm2584 = vc.u32 %v2578, %v2580
      %v2585 = vadd.s32 %v2581, 1
      %v2586 = vsel %vm2584, %v2585, %v2581
      %v2587 = vadd.s32 %v2582, %v2586
      %v2588 = vadd.s32 %v2587, 536870912
      %v2589 = vshrl.u32 %v2588, 30
      %v2590 = vshll.u32 %v2589, 30
      %v2591 = vsub.s32 %v2587, %v2590
      %vm2592 = vcmp.lt.s32.totalorder %v2591, 0
      %v2593 = vsub.s32 0, %v2591
      %v2594 = vsel %vm2592, %v2593, %v2591
      %v2595 = vclz %v2594
      %v2596 = vsub.s32 %v2595, 2
      %vm2597 = vcmp.gt.s32.totalorder 0, %v2596
      %v2598 = vsel %vm2597, 0, %v2596
      %v2599 = vsub.s32 32, %v2598
      %v2600 = vshll.u32 %v2591, %v2598
      %v2601 = vshrl.u32 %v2583, %v2599
      %v2602 = vor.u32 %v2600, %v2601
      %v2603 = vsub.s32 4294967266, %v2598
      %v2604 = vadd.s32 %v2603, 127
      %v2605 = vshll.u32 %v2604, 23
      %v2606 = vor.u32 4788187, %v2605
      %v2607 = vand.u32 2147483647, %v2606
      %v2609 = vcvt.s32.f32 %v2602
      %v2610 = vmul.f32 %v2609, %v2607
      %v2611 = vxor.u32 %v2610, 2147483648
      %v2612 = vsel %vm2529, %v2611, %v2610
      %v2613 = vsub.s32 4, %v2589
      %v2614 = vsel %vm2529, %v2613, %v2589
      %v2615 = vsel %vm2528, %v1465, %v2612
      %v2616 = vsel %vm2528, 0, %v2614
      %v2617 = vcosq.f32.pop %v2615
      %v2618 = vsinq.f32.pop %v2615
      %vm2619 = vweird.f32 %v1465
      %v2620 = vadd.s32 %v2616, 3
      %v2621 = vand.u32 %v2620, 3
      %vm2622 = vcmp.lt.s32.totalorder %v2621, 2
      %vm2623 = vcmp.eq.s32.totalorder %v2621, 0
      %v2624 = vxor.u32 %v2618, 2147483648
      %v2625 = vsel %vm2623, %v2617, %v2624
      %vm2626 = vcmp.eq.s32.totalorder %v2621, 2
      %v2627 = vxor.u32 %v2617, 2147483648
      %v2628 = vsel %vm2626, %v2627, %v2618
      %v2629 = vsel %vm2622, %v2625, %v2628
      %v2630 = vsel %vm2619, nan, %v2629
      %v2631 = vand.u32 2147483647, %v1466
      %vm2632 = vcmp.le.f32.partialorder %v2631, 0.7853982
      %vm2633 = vcmp.lt.s32.totalorder %v1466, 0
      %v2634 = vand.u32 %v1466, 2139095040
      %v2635 = vshrl.u32 %v2634, 23
      %v2636 = vsub.s32 %v2635, 127
      %v2637 = vand.u32 2147483647, %v1466
      %v2638 = vand.u32 %v2637, 8388607
      %v2639 = vor.u32 %v2638, 8388608
      %v2640 = vsub.s32 0, %v2639
      %v2641 = vadd.s32 %v2636, 1
      %vm2642 = vcmp.gt.s32.totalorder %v2641, 0
      %v2643 = vsel %vm2642, %v2641, 0
      %v2644 = vshrl.u32 %v2643, 5
      %v2645 = vand.u32 %v2643, 31
      %v2646 = vsub.s32 32, %v2645
      %v2647 = vshrl.u32 683565275, %v2646
      %v2648 = vshll.u32 683565275, %v2645
      %v2649 = vshrl.u32 2475754826, %v2646
      %v2650 = vor.u32 %v2648, %v2649
      %v2651 = vshll.u32 2475754826, %v2645
      %v2652 = vshrl.u32 2131351028, %v2646
      %v2653 = vor.u32 %v2651, %v2652
      %v2654 = vshll.u32 2131351028, %v2645
      %v2655 = vshrl.u32 2102212464, %v2646
      %v2656 = vor.u32 %v2654, %v2655
      %v2657 = vshll.u32 2102212464, %v2645
      %v2658 = vshrl.u32 920167782, %v2646
      %v2659 = vor.u32 %v2657, %v2658
      %v2660 = vshll.u32 920167782, %v2645
      %v2661 = vshrl.u32 1326507024, %v2646
      %v2662 = vor.u32 %v2660, %v2661
      %vm2663 = vcmp.lt.s32.totalorder %v2644, 1
      %vm2664 = vcmp.lt.s32.totalorder %v2644, 2
      %vm2665 = vcmp.lt.s32.totalorder %v2644, 3
      %vm2666 = vcmp.lt.s32.totalorder %v2644, 4
      %v2667 = vsel %vm2663, %v2647, %v2650
      %v2668 = vsel %vm2666, %v2656, 2102212464
      %v2669 = vsel %vm2665, %v2653, %v2668
      %v2670 = vsel %vm2664, %v2667, %v2669
      %v2671 = vsel %vm2663, %v2650, %v2653
      %v2672 = vsel %vm2666, %v2659, 920167782
      %v2673 = vsel %vm2665, %v2656, %v2672
      %v2674 = vsel %vm2664, %v2671, %v2673
      %v2675 = vsel %vm2663, %v2653, %v2656
      %v2676 = vsel %vm2666, %v2662, 1326507024
      %v2677 = vsel %vm2665, %v2659, %v2676
      %v2678 = vsel %vm2664, %v2675, %v2677
      %v2679 = vshll.u32 %v2639, 8
      %v2680 = vmul.u32.u64.compose %v2679, %v2678
      %v2681 = vextract.low.u32 %v2680
      %v2682 = vextract.high.u32 %v2680
      %v2683 = vmul.u32.u64.compose %v2679, %v2674
      %v2684 = vextract.low.u32 %v2683
      %v2685 = vextract.high.u32 %v2683
      %v2686 = vmul.u32 %v2679, %v2670
      %v2687 = vadd.s32 %v2682, %v2684
      %vm2688 = vc.u32 %v2682, %v2684
      %v2689 = vadd.s32 %v2685, 1
      %v2690 = vsel %vm2688, %v2689, %v2685
      %v2691 = vadd.s32 %v2686, %v2690
      %v2692 = vadd.s32 %v2691, 536870912
      %v2693 = vshrl.u32 %v2692, 30
      %v2694 = vshll.u32 %v2693, 30
      %v2695 = vsub.s32 %v2691, %v2694
      %vm2696 = vcmp.lt.s32.totalorder %v2695, 0
      %v2697 = vsub.s32 0, %v2695
      %v2698 = vsel %vm2696, %v2697, %v2695
      %v2699 = vclz %v2698
      %v2700 = vsub.s32 %v2699, 2
      %vm2701 = vcmp.gt.s32.totalorder 0, %v2700
      %v2702 = vsel %vm2701, 0, %v2700
      %v2703 = vsub.s32 32, %v2702
      %v2704 = vshll.u32 %v2695, %v2702
      %v2705 = vshrl.u32 %v2687, %v2703
      %v2706 = vor.u32 %v2704, %v2705
      %v2707 = vsub.s32 4294967266, %v2702
      %v2708 = vadd.s32 %v2707, 127
      %v2709 = vshll.u32 %v2708, 23
      %v2710 = vor.u32 4788187, %v2709
      %v2711 = vand.u32 2147483647, %v2710
      %v2713 = vcvt.s32.f32 %v2706
      %v2714 = vmul.f32 %v2713, %v2711
      %v2715 = vxor.u32 %v2714, 2147483648
      %v2716 = vsel %vm2633, %v2715, %v2714
      %v2717 = vsub.s32 4, %v2693
      %v2718 = vsel %vm2633, %v2717, %v2693
      %v2719 = vsel %vm2632, %v1466, %v2716
      %v2720 = vsel %vm2632, 0, %v2718
      %v2721 = vcosq.f32.pop %v2719
      %v2722 = vsinq.f32.pop %v2719
      %vm2723 = vweird.f32 %v1466
      %v2724 = vadd.s32 %v2720, 3
      %v2725 = vand.u32 %v2724, 3
      %vm2726 = vcmp.lt.s32.totalorder %v2725, 2
      %vm2727 = vcmp.eq.s32.totalorder %v2725, 0
      %v2728 = vxor.u32 %v2722, 2147483648
      %v2729 = vsel %vm2727, %v2721, %v2728
      %vm2730 = vcmp.eq.s32.totalorder %v2725, 2
      %v2731 = vxor.u32 %v2721, 2147483648
      %v2732 = vsel %vm2730, %v2731, %v2722
      %v2733 = vsel %vm2726, %v2729, %v2732
      %v2734 = vsel %vm2723, nan, %v2733
      %v2735 = vand.u32 2147483647, %v1467
      %vm2736 = vcmp.le.f32.partialorder %v2735, 0.7853982
      %vm2737 = vcmp.lt.s32.totalorder %v1467, 0
      %v2738 = vand.u32 %v1467, 2139095040
      %v2739 = vshrl.u32 %v2738, 23
      %v2740 = vsub.s32 %v2739, 127
      %v2741 = vand.u32 2147483647, %v1467
      %v2742 = vand.u32 %v2741, 8388607
      %v2743 = vor.u32 %v2742, 8388608
      %v2744 = vsub.s32 0, %v2743
      %v2745 = vadd.s32 %v2740, 1
      %vm2746 = vcmp.gt.s32.totalorder %v2745, 0
      %v2747 = vsel %vm2746, %v2745, 0
      %v2748 = vshrl.u32 %v2747, 5
      %v2749 = vand.u32 %v2747, 31
      %v2750 = vsub.s32 32, %v2749
      %v2751 = vshrl.u32 683565275, %v2750
      %v2752 = vshll.u32 683565275, %v2749
      %v2753 = vshrl.u32 2475754826, %v2750
      %v2754 = vor.u32 %v2752, %v2753
      %v2755 = vshll.u32 2475754826, %v2749
      %v2756 = vshrl.u32 2131351028, %v2750
      %v2757 = vor.u32 %v2755, %v2756
      %v2758 = vshll.u32 2131351028, %v2749
      %v2759 = vshrl.u32 2102212464, %v2750
      %v2760 = vor.u32 %v2758, %v2759
      %v2761 = vshll.u32 2102212464, %v2749
      %v2762 = vshrl.u32 920167782, %v2750
      %v2763 = vor.u32 %v2761, %v2762
      %v2764 = vshll.u32 920167782, %v2749
      %v2765 = vshrl.u32 1326507024, %v2750
      %v2766 = vor.u32 %v2764, %v2765
      %vm2767 = vcmp.lt.s32.totalorder %v2748, 1
      %vm2768 = vcmp.lt.s32.totalorder %v2748, 2
      %vm2769 = vcmp.lt.s32.totalorder %v2748, 3
      %vm2770 = vcmp.lt.s32.totalorder %v2748, 4
      %v2771 = vsel %vm2767, %v2751, %v2754
      %v2772 = vsel %vm2770, %v2760, 2102212464
      %v2773 = vsel %vm2769, %v2757, %v2772
      %v2774 = vsel %vm2768, %v2771, %v2773
      %v2775 = vsel %vm2767, %v2754, %v2757
      %v2776 = vsel %vm2770, %v2763, 920167782
      %v2777 = vsel %vm2769, %v2760, %v2776
      %v2778 = vsel %vm2768, %v2775, %v2777
      %v2779 = vsel %vm2767, %v2757, %v2760
      %v2780 = vsel %vm2770, %v2766, 1326507024
      %v2781 = vsel %vm2769, %v2763, %v2780
      %v2782 = vsel %vm2768, %v2779, %v2781
      %v2783 = vshll.u32 %v2743, 8
      %v2784 = vmul.u32.u64.compose %v2783, %v2782
      %v2785 = vextract.low.u32 %v2784
      %v2786 = vextract.high.u32 %v2784
      %v2787 = vmul.u32.u64.compose %v2783, %v2778
      %v2788 = vextract.low.u32 %v2787
      %v2789 = vextract.high.u32 %v2787
      %v2790 = vmul.u32 %v2783, %v2774
      %v2791 = vadd.s32 %v2786, %v2788
      %vm2792 = vc.u32 %v2786, %v2788
      %v2793 = vadd.s32 %v2789, 1
      %v2794 = vsel %vm2792, %v2793, %v2789
      %v2795 = vadd.s32 %v2790, %v2794
      %v2796 = vadd.s32 %v2795, 536870912
      %v2797 = vshrl.u32 %v2796, 30
      %v2798 = vshll.u32 %v2797, 30
      %v2799 = vsub.s32 %v2795, %v2798
      %vm2800 = vcmp.lt.s32.totalorder %v2799, 0
      %v2801 = vsub.s32 0, %v2799
      %v2802 = vsel %vm2800, %v2801, %v2799
      %v2803 = vclz %v2802
      %v2804 = vsub.s32 %v2803, 2
      %vm2805 = vcmp.gt.s32.totalorder 0, %v2804
      %v2806 = vsel %vm2805, 0, %v2804
      %v2807 = vsub.s32 32, %v2806
      %v2808 = vshll.u32 %v2799, %v2806
      %v2809 = vshrl.u32 %v2791, %v2807
      %v2810 = vor.u32 %v2808, %v2809
      %v2811 = vsub.s32 4294967266, %v2806
      %v2812 = vadd.s32 %v2811, 127
      %v2813 = vshll.u32 %v2812, 23
      %v2814 = vor.u32 4788187, %v2813
      %v2815 = vand.u32 2147483647, %v2814
      %v2817 = vcvt.s32.f32 %v2810
      %v2818 = vmul.f32 %v2817, %v2815
      %v2819 = vxor.u32 %v2818, 2147483648
      %v2820 = vsel %vm2737, %v2819, %v2818
      %v2821 = vsub.s32 4, %v2797
      %v2822 = vsel %vm2737, %v2821, %v2797
      %v2823 = vsel %vm2736, %v1467, %v2820
      %v2824 = vsel %vm2736, 0, %v2822
      %v2825 = vcosq.f32.pop %v2823
      %v2826 = vsinq.f32.pop %v2823
      %vm2827 = vweird.f32 %v1467
      %v2828 = vadd.s32 %v2824, 3
      %v2829 = vand.u32 %v2828, 3
      %vm2830 = vcmp.lt.s32.totalorder %v2829, 2
      %vm2831 = vcmp.eq.s32.totalorder %v2829, 0
      %v2832 = vxor.u32 %v2826, 2147483648
      %v2833 = vsel %vm2831, %v2825, %v2832
      %vm2834 = vcmp.eq.s32.totalorder %v2829, 2
      %v2835 = vxor.u32 %v2825, 2147483648
      %v2836 = vsel %vm2834, %v2835, %v2826
      %v2837 = vsel %vm2830, %v2833, %v2836
      %v2838 = vsel %vm2827, nan, %v2837
      %v2839 = vand.u32 2147483647, %v1468
      %vm2840 = vcmp.le.f32.partialorder %v2839, 0.7853982
      %vm2841 = vcmp.lt.s32.totalorder %v1468, 0
      %v2842 = vand.u32 %v1468, 2139095040
      %v2843 = vshrl.u32 %v2842, 23
      %v2844 = vsub.s32 %v2843, 127
      %v2845 = vand.u32 2147483647, %v1468
      %v2846 = vand.u32 %v2845, 8388607
      %v2847 = vor.u32 %v2846, 8388608
      %v2848 = vsub.s32 0, %v2847
      %v2849 = vadd.s32 %v2844, 1
      %vm2850 = vcmp.gt.s32.totalorder %v2849, 0
      %v2851 = vsel %vm2850, %v2849, 0
      %v2852 = vshrl.u32 %v2851, 5
      %v2853 = vand.u32 %v2851, 31
      %v2854 = vsub.s32 32, %v2853
      %v2855 = vshrl.u32 683565275, %v2854
      %v2856 = vshll.u32 683565275, %v2853
      %v2857 = vshrl.u32 2475754826, %v2854
      %v2858 = vor.u32 %v2856, %v2857
      %v2859 = vshll.u32 2475754826, %v2853
      %v2860 = vshrl.u32 2131351028, %v2854
      %v2861 = vor.u32 %v2859, %v2860
      %v2862 = vshll.u32 2131351028, %v2853
      %v2863 = vshrl.u32 2102212464, %v2854
      %v2864 = vor.u32 %v2862, %v2863
      %v2865 = vshll.u32 2102212464, %v2853
      %v2866 = vshrl.u32 920167782, %v2854
      %v2867 = vor.u32 %v2865, %v2866
      %v2868 = vshll.u32 920167782, %v2853
      %v2869 = vshrl.u32 1326507024, %v2854
      %v2870 = vor.u32 %v2868, %v2869
      %vm2871 = vcmp.lt.s32.totalorder %v2852, 1
      %vm2872 = vcmp.lt.s32.totalorder %v2852, 2
      %vm2873 = vcmp.lt.s32.totalorder %v2852, 3
      %vm2874 = vcmp.lt.s32.totalorder %v2852, 4
      %v2875 = vsel %vm2871, %v2855, %v2858
      %v2876 = vsel %vm2874, %v2864, 2102212464
      %v2877 = vsel %vm2873, %v2861, %v2876
      %v2878 = vsel %vm2872, %v2875, %v2877
      %v2879 = vsel %vm2871, %v2858, %v2861
      %v2880 = vsel %vm2874, %v2867, 920167782
      %v2881 = vsel %vm2873, %v2864, %v2880
      %v2882 = vsel %vm2872, %v2879, %v2881
      %v2883 = vsel %vm2871, %v2861, %v2864
      %v2884 = vsel %vm2874, %v2870, 1326507024
      %v2885 = vsel %vm2873, %v2867, %v2884
      %v2886 = vsel %vm2872, %v2883, %v2885
      %v2887 = vshll.u32 %v2847, 8
      %v2888 = vmul.u32.u64.compose %v2887, %v2886
      %v2889 = vextract.low.u32 %v2888
      %v2890 = vextract.high.u32 %v2888
      %v2891 = vmul.u32.u64.compose %v2887, %v2882
      %v2892 = vextract.low.u32 %v2891
      %v2893 = vextract.high.u32 %v2891
      %v2894 = vmul.u32 %v2887, %v2878
      %v2895 = vadd.s32 %v2890, %v2892
      %vm2896 = vc.u32 %v2890, %v2892
      %v2897 = vadd.s32 %v2893, 1
      %v2898 = vsel %vm2896, %v2897, %v2893
      %v2899 = vadd.s32 %v2894, %v2898
      %v2900 = vadd.s32 %v2899, 536870912
      %v2901 = vshrl.u32 %v2900, 30
      %v2902 = vshll.u32 %v2901, 30
      %v2903 = vsub.s32 %v2899, %v2902
      %vm2904 = vcmp.lt.s32.totalorder %v2903, 0
      %v2905 = vsub.s32 0, %v2903
      %v2906 = vsel %vm2904, %v2905, %v2903
      %v2907 = vclz %v2906
      %v2908 = vsub.s32 %v2907, 2
      %vm2909 = vcmp.gt.s32.totalorder 0, %v2908
      %v2910 = vsel %vm2909, 0, %v2908
      %v2911 = vsub.s32 32, %v2910
      %v2912 = vshll.u32 %v2903, %v2910
      %v2913 = vshrl.u32 %v2895, %v2911
      %v2914 = vor.u32 %v2912, %v2913
      %v2915 = vsub.s32 4294967266, %v2910
      %v2916 = vadd.s32 %v2915, 127
      %v2917 = vshll.u32 %v2916, 23
      %v2918 = vor.u32 4788187, %v2917
      %v2919 = vand.u32 2147483647, %v2918
      %v2921 = vcvt.s32.f32 %v2914
      %v2922 = vmul.f32 %v2921, %v2919
      %v2923 = vxor.u32 %v2922, 2147483648
      %v2924 = vsel %vm2841, %v2923, %v2922
      %v2925 = vsub.s32 4, %v2901
      %v2926 = vsel %vm2841, %v2925, %v2901
      %v2927 = vsel %vm2840, %v1468, %v2924
      %v2928 = vsel %vm2840, 0, %v2926
      %v2929 = vcosq.f32.pop %v2927
      %v2930 = vsinq.f32.pop %v2927
      %vm2931 = vweird.f32 %v1468
      %v2932 = vadd.s32 %v2928, 3
      %v2933 = vand.u32 %v2932, 3
      %vm2934 = vcmp.lt.s32.totalorder %v2933, 2
      %vm2935 = vcmp.eq.s32.totalorder %v2933, 0
      %v2936 = vxor.u32 %v2930, 2147483648
      %v2937 = vsel %vm2935, %v2929, %v2936
      %vm2938 = vcmp.eq.s32.totalorder %v2933, 2
      %v2939 = vxor.u32 %v2929, 2147483648
      %v2940 = vsel %vm2938, %v2939, %v2930
      %v2941 = vsel %vm2934, %v2937, %v2940
      %v2942 = vsel %vm2931, nan, %v2941
      %v2943 = vand.u32 2147483647, %v1469
      %vm2944 = vcmp.le.f32.partialorder %v2943, 0.7853982
      %vm2945 = vcmp.lt.s32.totalorder %v1469, 0
      %v2946 = vand.u32 %v1469, 2139095040
      %v2947 = vshrl.u32 %v2946, 23
      %v2948 = vsub.s32 %v2947, 127
      %v2949 = vand.u32 2147483647, %v1469
      %v2950 = vand.u32 %v2949, 8388607
      %v2951 = vor.u32 %v2950, 8388608
      %v2952 = vsub.s32 0, %v2951
      %v2953 = vadd.s32 %v2948, 1
      %vm2954 = vcmp.gt.s32.totalorder %v2953, 0
      %v2955 = vsel %vm2954, %v2953, 0
      %v2956 = vshrl.u32 %v2955, 5
      %v2957 = vand.u32 %v2955, 31
      %v2958 = vsub.s32 32, %v2957
      %v2959 = vshrl.u32 683565275, %v2958
      %v2960 = vshll.u32 683565275, %v2957
      %v2961 = vshrl.u32 2475754826, %v2958
      %v2962 = vor.u32 %v2960, %v2961
      %v2963 = vshll.u32 2475754826, %v2957
      %v2964 = vshrl.u32 2131351028, %v2958
      %v2965 = vor.u32 %v2963, %v2964
      %v2966 = vshll.u32 2131351028, %v2957
      %v2967 = vshrl.u32 2102212464, %v2958
      %v2968 = vor.u32 %v2966, %v2967
      %v2969 = vshll.u32 2102212464, %v2957
      %v2970 = vshrl.u32 920167782, %v2958
      %v2971 = vor.u32 %v2969, %v2970
      %v2972 = vshll.u32 920167782, %v2957
      %v2973 = vshrl.u32 1326507024, %v2958
      %v2974 = vor.u32 %v2972, %v2973
      %vm2975 = vcmp.lt.s32.totalorder %v2956, 1
      %vm2976 = vcmp.lt.s32.totalorder %v2956, 2
      %vm2977 = vcmp.lt.s32.totalorder %v2956, 3
      %vm2978 = vcmp.lt.s32.totalorder %v2956, 4
      %v2979 = vsel %vm2975, %v2959, %v2962
      %v2980 = vsel %vm2978, %v2968, 2102212464
      %v2981 = vsel %vm2977, %v2965, %v2980
      %v2982 = vsel %vm2976, %v2979, %v2981
      %v2983 = vsel %vm2975, %v2962, %v2965
      %v2984 = vsel %vm2978, %v2971, 920167782
      %v2985 = vsel %vm2977, %v2968, %v2984
      %v2986 = vsel %vm2976, %v2983, %v2985
      %v2987 = vsel %vm2975, %v2965, %v2968
      %v2988 = vsel %vm2978, %v2974, 1326507024
      %v2989 = vsel %vm2977, %v2971, %v2988
      %v2990 = vsel %vm2976, %v2987, %v2989
      %v2991 = vshll.u32 %v2951, 8
      %v2992 = vmul.u32.u64.compose %v2991, %v2990
      %v2993 = vextract.low.u32 %v2992
      %v2994 = vextract.high.u32 %v2992
      %v2995 = vmul.u32.u64.compose %v2991, %v2986
      %v2996 = vextract.low.u32 %v2995
      %v2997 = vextract.high.u32 %v2995
      %v2998 = vmul.u32 %v2991, %v2982
      %v2999 = vadd.s32 %v2994, %v2996
      %vm3000 = vc.u32 %v2994, %v2996
      %v3001 = vadd.s32 %v2997, 1
      %v3002 = vsel %vm3000, %v3001, %v2997
      %v3003 = vadd.s32 %v2998, %v3002
      %v3004 = vadd.s32 %v3003, 536870912
      %v3005 = vshrl.u32 %v3004, 30
      %v3006 = vshll.u32 %v3005, 30
      %v3007 = vsub.s32 %v3003, %v3006
      %vm3008 = vcmp.lt.s32.totalorder %v3007, 0
      %v3009 = vsub.s32 0, %v3007
      %v3010 = vsel %vm3008, %v3009, %v3007
      %v3011 = vclz %v3010
      %v3012 = vsub.s32 %v3011, 2
      %vm3013 = vcmp.gt.s32.totalorder 0, %v3012
      %v3014 = vsel %vm3013, 0, %v3012
      %v3015 = vsub.s32 32, %v3014
      %v3016 = vshll.u32 %v3007, %v3014
      %v3017 = vshrl.u32 %v2999, %v3015
      %v3018 = vor.u32 %v3016, %v3017
      %v3019 = vsub.s32 4294967266, %v3014
      %v3020 = vadd.s32 %v3019, 127
      %v3021 = vshll.u32 %v3020, 23
      %v3022 = vor.u32 4788187, %v3021
      %v3023 = vand.u32 2147483647, %v3022
      %v3025 = vcvt.s32.f32 %v3018
      %v3026 = vmul.f32 %v3025, %v3023
      %v3027 = vxor.u32 %v3026, 2147483648
      %v3028 = vsel %vm2945, %v3027, %v3026
      %v3029 = vsub.s32 4, %v3005
      %v3030 = vsel %vm2945, %v3029, %v3005
      %v3031 = vsel %vm2944, %v1469, %v3028
      %v3032 = vsel %vm2944, 0, %v3030
      %v3033 = vcosq.f32.pop %v3031
      %v3034 = vsinq.f32.pop %v3031
      %vm3035 = vweird.f32 %v1469
      %v3036 = vadd.s32 %v3032, 3
      %v3037 = vand.u32 %v3036, 3
      %vm3038 = vcmp.lt.s32.totalorder %v3037, 2
      %vm3039 = vcmp.eq.s32.totalorder %v3037, 0
      %v3040 = vxor.u32 %v3034, 2147483648
      %v3041 = vsel %vm3039, %v3033, %v3040
      %vm3042 = vcmp.eq.s32.totalorder %v3037, 2
      %v3043 = vxor.u32 %v3033, 2147483648
      %v3044 = vsel %vm3042, %v3043, %v3034
      %v3045 = vsel %vm3038, %v3041, %v3044
      %v3046 = vsel %vm3035, nan, %v3045
      %v3047 = vand.u32 2147483647, %v1470
      %vm3048 = vcmp.le.f32.partialorder %v3047, 0.7853982
      %vm3049 = vcmp.lt.s32.totalorder %v1470, 0
      %v3050 = vand.u32 %v1470, 2139095040
      %v3051 = vshrl.u32 %v3050, 23
      %v3052 = vsub.s32 %v3051, 127
      %v3053 = vand.u32 2147483647, %v1470
      %v3054 = vand.u32 %v3053, 8388607
      %v3055 = vor.u32 %v3054, 8388608
      %v3056 = vsub.s32 0, %v3055
      %v3057 = vadd.s32 %v3052, 1
      %vm3058 = vcmp.gt.s32.totalorder %v3057, 0
      %v3059 = vsel %vm3058, %v3057, 0
      %v3060 = vshrl.u32 %v3059, 5
      %v3061 = vand.u32 %v3059, 31
      %v3062 = vsub.s32 32, %v3061
      %v3063 = vshrl.u32 683565275, %v3062
      %v3064 = vshll.u32 683565275, %v3061
      %v3065 = vshrl.u32 2475754826, %v3062
      %v3066 = vor.u32 %v3064, %v3065
      %v3067 = vshll.u32 2475754826, %v3061
      %v3068 = vshrl.u32 2131351028, %v3062
      %v3069 = vor.u32 %v3067, %v3068
      %v3070 = vshll.u32 2131351028, %v3061
      %v3071 = vshrl.u32 2102212464, %v3062
      %v3072 = vor.u32 %v3070, %v3071
      %v3073 = vshll.u32 2102212464, %v3061
      %v3074 = vshrl.u32 920167782, %v3062
      %v3075 = vor.u32 %v3073, %v3074
      %v3076 = vshll.u32 920167782, %v3061
      %v3077 = vshrl.u32 1326507024, %v3062
      %v3078 = vor.u32 %v3076, %v3077
      %vm3079 = vcmp.lt.s32.totalorder %v3060, 1
      %vm3080 = vcmp.lt.s32.totalorder %v3060, 2
      %vm3081 = vcmp.lt.s32.totalorder %v3060, 3
      %vm3082 = vcmp.lt.s32.totalorder %v3060, 4
      %v3083 = vsel %vm3079, %v3063, %v3066
      %v3084 = vsel %vm3082, %v3072, 2102212464
      %v3085 = vsel %vm3081, %v3069, %v3084
      %v3086 = vsel %vm3080, %v3083, %v3085
      %v3087 = vsel %vm3079, %v3066, %v3069
      %v3088 = vsel %vm3082, %v3075, 920167782
      %v3089 = vsel %vm3081, %v3072, %v3088
      %v3090 = vsel %vm3080, %v3087, %v3089
      %v3091 = vsel %vm3079, %v3069, %v3072
      %v3092 = vsel %vm3082, %v3078, 1326507024
      %v3093 = vsel %vm3081, %v3075, %v3092
      %v3094 = vsel %vm3080, %v3091, %v3093
      %v3095 = vshll.u32 %v3055, 8
      %v3096 = vmul.u32.u64.compose %v3095, %v3094
      %v3097 = vextract.low.u32 %v3096
      %v3098 = vextract.high.u32 %v3096
      %v3099 = vmul.u32.u64.compose %v3095, %v3090
      %v3100 = vextract.low.u32 %v3099
      %v3101 = vextract.high.u32 %v3099
      %v3102 = vmul.u32 %v3095, %v3086
      %v3103 = vadd.s32 %v3098, %v3100
      %vm3104 = vc.u32 %v3098, %v3100
      %v3105 = vadd.s32 %v3101, 1
      %v3106 = vsel %vm3104, %v3105, %v3101
      %v3107 = vadd.s32 %v3102, %v3106
      %v3108 = vadd.s32 %v3107, 536870912
      %v3109 = vshrl.u32 %v3108, 30
      %v3110 = vshll.u32 %v3109, 30
      %v3111 = vsub.s32 %v3107, %v3110
      %vm3112 = vcmp.lt.s32.totalorder %v3111, 0
      %v3113 = vsub.s32 0, %v3111
      %v3114 = vsel %vm3112, %v3113, %v3111
      %v3115 = vclz %v3114
      %v3116 = vsub.s32 %v3115, 2
      %vm3117 = vcmp.gt.s32.totalorder 0, %v3116
      %v3118 = vsel %vm3117, 0, %v3116
      %v3119 = vsub.s32 32, %v3118
      %v3120 = vshll.u32 %v3111, %v3118
      %v3121 = vshrl.u32 %v3103, %v3119
      %v3122 = vor.u32 %v3120, %v3121
      %v3123 = vsub.s32 4294967266, %v3118
      %v3124 = vadd.s32 %v3123, 127
      %v3125 = vshll.u32 %v3124, 23
      %v3126 = vor.u32 4788187, %v3125
      %v3127 = vand.u32 2147483647, %v3126
      %v3129 = vcvt.s32.f32 %v3122
      %v3130 = vmul.f32 %v3129, %v3127
      %v3131 = vxor.u32 %v3130, 2147483648
      %v3132 = vsel %vm3049, %v3131, %v3130
      %v3133 = vsub.s32 4, %v3109
      %v3134 = vsel %vm3049, %v3133, %v3109
      %v3135 = vsel %vm3048, %v1470, %v3132
      %v3136 = vsel %vm3048, 0, %v3134
      %v3137 = vcosq.f32.pop %v3135
      %v3138 = vsinq.f32.pop %v3135
      %vm3139 = vweird.f32 %v1470
      %v3140 = vadd.s32 %v3136, 3
      %v3141 = vand.u32 %v3140, 3
      %vm3142 = vcmp.lt.s32.totalorder %v3141, 2
      %vm3143 = vcmp.eq.s32.totalorder %v3141, 0
      %v3144 = vxor.u32 %v3138, 2147483648
      %v3145 = vsel %vm3143, %v3137, %v3144
      %vm3146 = vcmp.eq.s32.totalorder %v3141, 2
      %v3147 = vxor.u32 %v3137, 2147483648
      %v3148 = vsel %vm3146, %v3147, %v3138
      %v3149 = vsel %vm3142, %v3145, %v3148
      %v3150 = vsel %vm3139, nan, %v3149
      %v3151 = vand.u32 2147483647, %v1471
      %vm3152 = vcmp.le.f32.partialorder %v3151, 0.7853982
      %vm3153 = vcmp.lt.s32.totalorder %v1471, 0
      %v3154 = vand.u32 %v1471, 2139095040
      %v3155 = vshrl.u32 %v3154, 23
      %v3156 = vsub.s32 %v3155, 127
      %v3157 = vand.u32 2147483647, %v1471
      %v3158 = vand.u32 %v3157, 8388607
      %v3159 = vor.u32 %v3158, 8388608
      %v3160 = vsub.s32 0, %v3159
      %v3161 = vadd.s32 %v3156, 1
      %vm3162 = vcmp.gt.s32.totalorder %v3161, 0
      %v3163 = vsel %vm3162, %v3161, 0
      %v3164 = vshrl.u32 %v3163, 5
      %v3165 = vand.u32 %v3163, 31
      %v3166 = vsub.s32 32, %v3165
      %v3167 = vshrl.u32 683565275, %v3166
      %v3168 = vshll.u32 683565275, %v3165
      %v3169 = vshrl.u32 2475754826, %v3166
      %v3170 = vor.u32 %v3168, %v3169
      %v3171 = vshll.u32 2475754826, %v3165
      %v3172 = vshrl.u32 2131351028, %v3166
      %v3173 = vor.u32 %v3171, %v3172
      %v3174 = vshll.u32 2131351028, %v3165
      %v3175 = vshrl.u32 2102212464, %v3166
      %v3176 = vor.u32 %v3174, %v3175
      %v3177 = vshll.u32 2102212464, %v3165
      %v3178 = vshrl.u32 920167782, %v3166
      %v3179 = vor.u32 %v3177, %v3178
      %v3180 = vshll.u32 920167782, %v3165
      %v3181 = vshrl.u32 1326507024, %v3166
      %v3182 = vor.u32 %v3180, %v3181
      %vm3183 = vcmp.lt.s32.totalorder %v3164, 1
      %vm3184 = vcmp.lt.s32.totalorder %v3164, 2
      %vm3185 = vcmp.lt.s32.totalorder %v3164, 3
      %vm3186 = vcmp.lt.s32.totalorder %v3164, 4
      %v3187 = vsel %vm3183, %v3167, %v3170
      %v3188 = vsel %vm3186, %v3176, 2102212464
      %v3189 = vsel %vm3185, %v3173, %v3188
      %v3190 = vsel %vm3184, %v3187, %v3189
      %v3191 = vsel %vm3183, %v3170, %v3173
      %v3192 = vsel %vm3186, %v3179, 920167782
      %v3193 = vsel %vm3185, %v3176, %v3192
      %v3194 = vsel %vm3184, %v3191, %v3193
      %v3195 = vsel %vm3183, %v3173, %v3176
      %v3196 = vsel %vm3186, %v3182, 1326507024
      %v3197 = vsel %vm3185, %v3179, %v3196
      %v3198 = vsel %vm3184, %v3195, %v3197
      %v3199 = vshll.u32 %v3159, 8
      %v3200 = vmul.u32.u64.compose %v3199, %v3198
      %v3201 = vextract.low.u32 %v3200
      %v3202 = vextract.high.u32 %v3200
      %v3203 = vmul.u32.u64.compose %v3199, %v3194
      %v3204 = vextract.low.u32 %v3203
      %v3205 = vextract.high.u32 %v3203
      %v3206 = vmul.u32 %v3199, %v3190
      %v3207 = vadd.s32 %v3202, %v3204
      %vm3208 = vc.u32 %v3202, %v3204
      %v3209 = vadd.s32 %v3205, 1
      %v3210 = vsel %vm3208, %v3209, %v3205
      %v3211 = vadd.s32 %v3206, %v3210
      %v3212 = vadd.s32 %v3211, 536870912
      %v3213 = vshrl.u32 %v3212, 30
      %v3214 = vshll.u32 %v3213, 30
      %v3215 = vsub.s32 %v3211, %v3214
      %vm3216 = vcmp.lt.s32.totalorder %v3215, 0
      %v3217 = vsub.s32 0, %v3215
      %v3218 = vsel %vm3216, %v3217, %v3215
      %v3219 = vclz %v3218
      %v3220 = vsub.s32 %v3219, 2
      %vm3221 = vcmp.gt.s32.totalorder 0, %v3220
      %v3222 = vsel %vm3221, 0, %v3220
      %v3223 = vsub.s32 32, %v3222
      %v3224 = vshll.u32 %v3215, %v3222
      %v3225 = vshrl.u32 %v3207, %v3223
      %v3226 = vor.u32 %v3224, %v3225
      %v3227 = vsub.s32 4294967266, %v3222
      %v3228 = vadd.s32 %v3227, 127
      %v3229 = vshll.u32 %v3228, 23
      %v3230 = vor.u32 4788187, %v3229
      %v3231 = vand.u32 2147483647, %v3230
      %v3233 = vcvt.s32.f32 %v3226
      %v3234 = vmul.f32 %v3233, %v3231
      %v3235 = vxor.u32 %v3234, 2147483648
      %v3236 = vsel %vm3153, %v3235, %v3234
      %v3237 = vsub.s32 4, %v3213
      %v3238 = vsel %vm3153, %v3237, %v3213
      %v3239 = vsel %vm3152, %v1471, %v3236
      %v3240 = vsel %vm3152, 0, %v3238
      %v3241 = vcosq.f32.pop %v3239
      %v3242 = vsinq.f32.pop %v3239
      %vm3243 = vweird.f32 %v1471
      %v3244 = vadd.s32 %v3240, 3
      %v3245 = vand.u32 %v3244, 3
      %vm3246 = vcmp.lt.s32.totalorder %v3245, 2
      %vm3247 = vcmp.eq.s32.totalorder %v3245, 0
      %v3248 = vxor.u32 %v3242, 2147483648
      %v3249 = vsel %vm3247, %v3241, %v3248
      %vm3250 = vcmp.eq.s32.totalorder %v3245, 2
      %v3251 = vxor.u32 %v3241, 2147483648
      %v3252 = vsel %vm3250, %v3251, %v3242
      %v3253 = vsel %vm3246, %v3249, %v3252
      %v3254 = vsel %vm3243, nan, %v3253
      %v3255 = vand.u32 2147483647, %v1472
      %vm3256 = vcmp.le.f32.partialorder %v3255, 0.7853982
      %vm3257 = vcmp.lt.s32.totalorder %v1472, 0
      %v3258 = vand.u32 %v1472, 2139095040
      %v3259 = vshrl.u32 %v3258, 23
      %v3260 = vsub.s32 %v3259, 127
      %v3261 = vand.u32 2147483647, %v1472
      %v3262 = vand.u32 %v3261, 8388607
      %v3263 = vor.u32 %v3262, 8388608
      %v3264 = vsub.s32 0, %v3263
      %v3265 = vadd.s32 %v3260, 1
      %vm3266 = vcmp.gt.s32.totalorder %v3265, 0
      %v3267 = vsel %vm3266, %v3265, 0
      %v3268 = vshrl.u32 %v3267, 5
      %v3269 = vand.u32 %v3267, 31
      %v3270 = vsub.s32 32, %v3269
      %v3271 = vshrl.u32 683565275, %v3270
      %v3272 = vshll.u32 683565275, %v3269
      %v3273 = vshrl.u32 2475754826, %v3270
      %v3274 = vor.u32 %v3272, %v3273
      %v3275 = vshll.u32 2475754826, %v3269
      %v3276 = vshrl.u32 2131351028, %v3270
      %v3277 = vor.u32 %v3275, %v3276
      %v3278 = vshll.u32 2131351028, %v3269
      %v3279 = vshrl.u32 2102212464, %v3270
      %v3280 = vor.u32 %v3278, %v3279
      %v3281 = vshll.u32 2102212464, %v3269
      %v3282 = vshrl.u32 920167782, %v3270
      %v3283 = vor.u32 %v3281, %v3282
      %v3284 = vshll.u32 920167782, %v3269
      %v3285 = vshrl.u32 1326507024, %v3270
      %v3286 = vor.u32 %v3284, %v3285
      %vm3287 = vcmp.lt.s32.totalorder %v3268, 1
      %vm3288 = vcmp.lt.s32.totalorder %v3268, 2
      %vm3289 = vcmp.lt.s32.totalorder %v3268, 3
      %vm3290 = vcmp.lt.s32.totalorder %v3268, 4
      %v3291 = vsel %vm3287, %v3271, %v3274
      %v3292 = vsel %vm3290, %v3280, 2102212464
      %v3293 = vsel %vm3289, %v3277, %v3292
      %v3294 = vsel %vm3288, %v3291, %v3293
      %v3295 = vsel %vm3287, %v3274, %v3277
      %v3296 = vsel %vm3290, %v3283, 920167782
      %v3297 = vsel %vm3289, %v3280, %v3296
      %v3298 = vsel %vm3288, %v3295, %v3297
      %v3299 = vsel %vm3287, %v3277, %v3280
      %v3300 = vsel %vm3290, %v3286, 1326507024
      %v3301 = vsel %vm3289, %v3283, %v3300
      %v3302 = vsel %vm3288, %v3299, %v3301
      %v3303 = vshll.u32 %v3263, 8
      %v3304 = vmul.u32.u64.compose %v3303, %v3302
      %v3305 = vextract.low.u32 %v3304
      %v3306 = vextract.high.u32 %v3304
      %v3307 = vmul.u32.u64.compose %v3303, %v3298
      %v3308 = vextract.low.u32 %v3307
      %v3309 = vextract.high.u32 %v3307
      %v3310 = vmul.u32 %v3303, %v3294
      %v3311 = vadd.s32 %v3306, %v3308
      %vm3312 = vc.u32 %v3306, %v3308
      %v3313 = vadd.s32 %v3309, 1
      %v3314 = vsel %vm3312, %v3313, %v3309
      %v3315 = vadd.s32 %v3310, %v3314
      %v3316 = vadd.s32 %v3315, 536870912
      %v3317 = vshrl.u32 %v3316, 30
      %v3318 = vshll.u32 %v3317, 30
      %v3319 = vsub.s32 %v3315, %v3318
      %vm3320 = vcmp.lt.s32.totalorder %v3319, 0
      %v3321 = vsub.s32 0, %v3319
      %v3322 = vsel %vm3320, %v3321, %v3319
      %v3323 = vclz %v3322
      %v3324 = vsub.s32 %v3323, 2
      %vm3325 = vcmp.gt.s32.totalorder 0, %v3324
      %v3326 = vsel %vm3325, 0, %v3324
      %v3327 = vsub.s32 32, %v3326
      %v3328 = vshll.u32 %v3319, %v3326
      %v3329 = vshrl.u32 %v3311, %v3327
      %v3330 = vor.u32 %v3328, %v3329
      %v3331 = vsub.s32 4294967266, %v3326
      %v3332 = vadd.s32 %v3331, 127
      %v3333 = vshll.u32 %v3332, 23
      %v3334 = vor.u32 4788187, %v3333
      %v3335 = vand.u32 2147483647, %v3334
      %v3337 = vcvt.s32.f32 %v3330
      %v3338 = vmul.f32 %v3337, %v3335
      %v3339 = vxor.u32 %v3338, 2147483648
      %v3340 = vsel %vm3257, %v3339, %v3338
      %v3341 = vsub.s32 4, %v3317
      %v3342 = vsel %vm3257, %v3341, %v3317
      %v3343 = vsel %vm3256, %v1472, %v3340
      %v3344 = vsel %vm3256, 0, %v3342
      %v3345 = vcosq.f32.pop %v3343
      %v3346 = vsinq.f32.pop %v3343
      %vm3347 = vweird.f32 %v1472
      %v3348 = vadd.s32 %v3344, 3
      %v3349 = vand.u32 %v3348, 3
      %vm3350 = vcmp.lt.s32.totalorder %v3349, 2
      %vm3351 = vcmp.eq.s32.totalorder %v3349, 0
      %v3352 = vxor.u32 %v3346, 2147483648
      %v3353 = vsel %vm3351, %v3345, %v3352
      %vm3354 = vcmp.eq.s32.totalorder %v3349, 2
      %v3355 = vxor.u32 %v3345, 2147483648
      %v3356 = vsel %vm3354, %v3355, %v3346
      %v3357 = vsel %vm3350, %v3353, %v3356
      %v3358 = vsel %vm3347, nan, %v3357
      %v3359 = vand.u32 2147483647, %v1473
      %vm3360 = vcmp.le.f32.partialorder %v3359, 0.7853982
      %vm3361 = vcmp.lt.s32.totalorder %v1473, 0
      %v3362 = vand.u32 %v1473, 2139095040
      %v3363 = vshrl.u32 %v3362, 23
      %v3364 = vsub.s32 %v3363, 127
      %v3365 = vand.u32 2147483647, %v1473
      %v3366 = vand.u32 %v3365, 8388607
      %v3367 = vor.u32 %v3366, 8388608
      %v3368 = vsub.s32 0, %v3367
      %v3369 = vadd.s32 %v3364, 1
      %vm3370 = vcmp.gt.s32.totalorder %v3369, 0
      %v3371 = vsel %vm3370, %v3369, 0
      %v3372 = vshrl.u32 %v3371, 5
      %v3373 = vand.u32 %v3371, 31
      %v3374 = vsub.s32 32, %v3373
      %v3375 = vshrl.u32 683565275, %v3374
      %v3376 = vshll.u32 683565275, %v3373
      %v3377 = vshrl.u32 2475754826, %v3374
      %v3378 = vor.u32 %v3376, %v3377
      %v3379 = vshll.u32 2475754826, %v3373
      %v3380 = vshrl.u32 2131351028, %v3374
      %v3381 = vor.u32 %v3379, %v3380
      %v3382 = vshll.u32 2131351028, %v3373
      %v3383 = vshrl.u32 2102212464, %v3374
      %v3384 = vor.u32 %v3382, %v3383
      %v3385 = vshll.u32 2102212464, %v3373
      %v3386 = vshrl.u32 920167782, %v3374
      %v3387 = vor.u32 %v3385, %v3386
      %v3388 = vshll.u32 920167782, %v3373
      %v3389 = vshrl.u32 1326507024, %v3374
      %v3390 = vor.u32 %v3388, %v3389
      %vm3391 = vcmp.lt.s32.totalorder %v3372, 1
      %vm3392 = vcmp.lt.s32.totalorder %v3372, 2
      %vm3393 = vcmp.lt.s32.totalorder %v3372, 3
      %vm3394 = vcmp.lt.s32.totalorder %v3372, 4
      %v3395 = vsel %vm3391, %v3375, %v3378
      %v3396 = vsel %vm3394, %v3384, 2102212464
      %v3397 = vsel %vm3393, %v3381, %v3396
      %v3398 = vsel %vm3392, %v3395, %v3397
      %v3399 = vsel %vm3391, %v3378, %v3381
      %v3400 = vsel %vm3394, %v3387, 920167782
      %v3401 = vsel %vm3393, %v3384, %v3400
      %v3402 = vsel %vm3392, %v3399, %v3401
      %v3403 = vsel %vm3391, %v3381, %v3384
      %v3404 = vsel %vm3394, %v3390, 1326507024
      %v3405 = vsel %vm3393, %v3387, %v3404
      %v3406 = vsel %vm3392, %v3403, %v3405
      %v3407 = vshll.u32 %v3367, 8
      %v3408 = vmul.u32.u64.compose %v3407, %v3406
      %v3409 = vextract.low.u32 %v3408
      %v3410 = vextract.high.u32 %v3408
      %v3411 = vmul.u32.u64.compose %v3407, %v3402
      %v3412 = vextract.low.u32 %v3411
      %v3413 = vextract.high.u32 %v3411
      %v3414 = vmul.u32 %v3407, %v3398
      %v3415 = vadd.s32 %v3410, %v3412
      %vm3416 = vc.u32 %v3410, %v3412
      %v3417 = vadd.s32 %v3413, 1
      %v3418 = vsel %vm3416, %v3417, %v3413
      %v3419 = vadd.s32 %v3414, %v3418
      %v3420 = vadd.s32 %v3419, 536870912
      %v3421 = vshrl.u32 %v3420, 30
      %v3422 = vshll.u32 %v3421, 30
      %v3423 = vsub.s32 %v3419, %v3422
      %vm3424 = vcmp.lt.s32.totalorder %v3423, 0
      %v3425 = vsub.s32 0, %v3423
      %v3426 = vsel %vm3424, %v3425, %v3423
      %v3427 = vclz %v3426
      %v3428 = vsub.s32 %v3427, 2
      %vm3429 = vcmp.gt.s32.totalorder 0, %v3428
      %v3430 = vsel %vm3429, 0, %v3428
      %v3431 = vsub.s32 32, %v3430
      %v3432 = vshll.u32 %v3423, %v3430
      %v3433 = vshrl.u32 %v3415, %v3431
      %v3434 = vor.u32 %v3432, %v3433
      %v3435 = vsub.s32 4294967266, %v3430
      %v3436 = vadd.s32 %v3435, 127
      %v3437 = vshll.u32 %v3436, 23
      %v3438 = vor.u32 4788187, %v3437
      %v3439 = vand.u32 2147483647, %v3438
      %v3441 = vcvt.s32.f32 %v3434
      %v3442 = vmul.f32 %v3441, %v3439
      %v3443 = vxor.u32 %v3442, 2147483648
      %v3444 = vsel %vm3361, %v3443, %v3442
      %v3445 = vsub.s32 4, %v3421
      %v3446 = vsel %vm3361, %v3445, %v3421
      %v3447 = vsel %vm3360, %v1473, %v3444
      %v3448 = vsel %vm3360, 0, %v3446
      %v3449 = vcosq.f32.pop %v3447
      %v3450 = vsinq.f32.pop %v3447
      %vm3451 = vweird.f32 %v1473
      %v3452 = vadd.s32 %v3448, 3
      %v3453 = vand.u32 %v3452, 3
      %vm3454 = vcmp.lt.s32.totalorder %v3453, 2
      %vm3455 = vcmp.eq.s32.totalorder %v3453, 0
      %v3456 = vxor.u32 %v3450, 2147483648
      %v3457 = vsel %vm3455, %v3449, %v3456
      %vm3458 = vcmp.eq.s32.totalorder %v3453, 2
      %v3459 = vxor.u32 %v3449, 2147483648
      %v3460 = vsel %vm3458, %v3459, %v3450
      %v3461 = vsel %vm3454, %v3457, %v3460
      %v3462 = vsel %vm3451, nan, %v3461
      %v3463 = vand.u32 2147483647, %v1474
      %vm3464 = vcmp.le.f32.partialorder %v3463, 0.7853982
      %vm3465 = vcmp.lt.s32.totalorder %v1474, 0
      %v3466 = vand.u32 %v1474, 2139095040
      %v3467 = vshrl.u32 %v3466, 23
      %v3468 = vsub.s32 %v3467, 127
      %v3469 = vand.u32 2147483647, %v1474
      %v3470 = vand.u32 %v3469, 8388607
      %v3471 = vor.u32 %v3470, 8388608
      %v3472 = vsub.s32 0, %v3471
      %v3473 = vadd.s32 %v3468, 1
      %vm3474 = vcmp.gt.s32.totalorder %v3473, 0
      %v3475 = vsel %vm3474, %v3473, 0
      %v3476 = vshrl.u32 %v3475, 5
      %v3477 = vand.u32 %v3475, 31
      %v3478 = vsub.s32 32, %v3477
      %v3479 = vshrl.u32 683565275, %v3478
      %v3480 = vshll.u32 683565275, %v3477
      %v3481 = vshrl.u32 2475754826, %v3478
      %v3482 = vor.u32 %v3480, %v3481
      %v3483 = vshll.u32 2475754826, %v3477
      %v3484 = vshrl.u32 2131351028, %v3478
      %v3485 = vor.u32 %v3483, %v3484
      %v3486 = vshll.u32 2131351028, %v3477
      %v3487 = vshrl.u32 2102212464, %v3478
      %v3488 = vor.u32 %v3486, %v3487
      %v3489 = vshll.u32 2102212464, %v3477
      %v3490 = vshrl.u32 920167782, %v3478
      %v3491 = vor.u32 %v3489, %v3490
      %v3492 = vshll.u32 920167782, %v3477
      %v3493 = vshrl.u32 1326507024, %v3478
      %v3494 = vor.u32 %v3492, %v3493
      %vm3495 = vcmp.lt.s32.totalorder %v3476, 1
      %vm3496 = vcmp.lt.s32.totalorder %v3476, 2
      %vm3497 = vcmp.lt.s32.totalorder %v3476, 3
      %vm3498 = vcmp.lt.s32.totalorder %v3476, 4
      %v3499 = vsel %vm3495, %v3479, %v3482
      %v3500 = vsel %vm3498, %v3488, 2102212464
      %v3501 = vsel %vm3497, %v3485, %v3500
      %v3502 = vsel %vm3496, %v3499, %v3501
      %v3503 = vsel %vm3495, %v3482, %v3485
      %v3504 = vsel %vm3498, %v3491, 920167782
      %v3505 = vsel %vm3497, %v3488, %v3504
      %v3506 = vsel %vm3496, %v3503, %v3505
      %v3507 = vsel %vm3495, %v3485, %v3488
      %v3508 = vsel %vm3498, %v3494, 1326507024
      %v3509 = vsel %vm3497, %v3491, %v3508
      %v3510 = vsel %vm3496, %v3507, %v3509
      %v3511 = vshll.u32 %v3471, 8
      %v3512 = vmul.u32.u64.compose %v3511, %v3510
      %v3513 = vextract.low.u32 %v3512
      %v3514 = vextract.high.u32 %v3512
      %v3515 = vmul.u32.u64.compose %v3511, %v3506
      %v3516 = vextract.low.u32 %v3515
      %v3517 = vextract.high.u32 %v3515
      %v3518 = vmul.u32 %v3511, %v3502
      %v3519 = vadd.s32 %v3514, %v3516
      %vm3520 = vc.u32 %v3514, %v3516
      %v3521 = vadd.s32 %v3517, 1
      %v3522 = vsel %vm3520, %v3521, %v3517
      %v3523 = vadd.s32 %v3518, %v3522
      %v3524 = vadd.s32 %v3523, 536870912
      %v3525 = vshrl.u32 %v3524, 30
      %v3526 = vshll.u32 %v3525, 30
      %v3527 = vsub.s32 %v3523, %v3526
      %vm3528 = vcmp.lt.s32.totalorder %v3527, 0
      %v3529 = vsub.s32 0, %v3527
      %v3530 = vsel %vm3528, %v3529, %v3527
      %v3531 = vclz %v3530
      %v3532 = vsub.s32 %v3531, 2
      %vm3533 = vcmp.gt.s32.totalorder 0, %v3532
      %v3534 = vsel %vm3533, 0, %v3532
      %v3535 = vsub.s32 32, %v3534
      %v3536 = vshll.u32 %v3527, %v3534
      %v3537 = vshrl.u32 %v3519, %v3535
      %v3538 = vor.u32 %v3536, %v3537
      %v3539 = vsub.s32 4294967266, %v3534
      %v3540 = vadd.s32 %v3539, 127
      %v3541 = vshll.u32 %v3540, 23
      %v3542 = vor.u32 4788187, %v3541
      %v3543 = vand.u32 2147483647, %v3542
      %v3545 = vcvt.s32.f32 %v3538
      %v3546 = vmul.f32 %v3545, %v3543
      %v3547 = vxor.u32 %v3546, 2147483648
      %v3548 = vsel %vm3465, %v3547, %v3546
      %v3549 = vsub.s32 4, %v3525
      %v3550 = vsel %vm3465, %v3549, %v3525
      %v3551 = vsel %vm3464, %v1474, %v3548
      %v3552 = vsel %vm3464, 0, %v3550
      %v3553 = vcosq.f32.pop %v3551
      %v3554 = vsinq.f32.pop %v3551
      %vm3555 = vweird.f32 %v1474
      %v3556 = vadd.s32 %v3552, 3
      %v3557 = vand.u32 %v3556, 3
      %vm3558 = vcmp.lt.s32.totalorder %v3557, 2
      %vm3559 = vcmp.eq.s32.totalorder %v3557, 0
      %v3560 = vxor.u32 %v3554, 2147483648
      %v3561 = vsel %vm3559, %v3553, %v3560
      %vm3562 = vcmp.eq.s32.totalorder %v3557, 2
      %v3563 = vxor.u32 %v3553, 2147483648
      %v3564 = vsel %vm3562, %v3563, %v3554
      %v3565 = vsel %vm3558, %v3561, %v3564
      %v3566 = vsel %vm3555, nan, %v3565
      %v3567 = vand.u32 2147483647, %v1475
      %vm3568 = vcmp.le.f32.partialorder %v3567, 0.7853982
      %vm3569 = vcmp.lt.s32.totalorder %v1475, 0
      %v3570 = vand.u32 %v1475, 2139095040
      %v3571 = vshrl.u32 %v3570, 23
      %v3572 = vsub.s32 %v3571, 127
      %v3573 = vand.u32 2147483647, %v1475
      %v3574 = vand.u32 %v3573, 8388607
      %v3575 = vor.u32 %v3574, 8388608
      %v3576 = vsub.s32 0, %v3575
      %v3577 = vadd.s32 %v3572, 1
      %vm3578 = vcmp.gt.s32.totalorder %v3577, 0
      %v3579 = vsel %vm3578, %v3577, 0
      %v3580 = vshrl.u32 %v3579, 5
      %v3581 = vand.u32 %v3579, 31
      %v3582 = vsub.s32 32, %v3581
      %v3583 = vshrl.u32 683565275, %v3582
      %v3584 = vshll.u32 683565275, %v3581
      %v3585 = vshrl.u32 2475754826, %v3582
      %v3586 = vor.u32 %v3584, %v3585
      %v3587 = vshll.u32 2475754826, %v3581
      %v3588 = vshrl.u32 2131351028, %v3582
      %v3589 = vor.u32 %v3587, %v3588
      %v3590 = vshll.u32 2131351028, %v3581
      %v3591 = vshrl.u32 2102212464, %v3582
      %v3592 = vor.u32 %v3590, %v3591
      %v3593 = vshll.u32 2102212464, %v3581
      %v3594 = vshrl.u32 920167782, %v3582
      %v3595 = vor.u32 %v3593, %v3594
      %v3596 = vshll.u32 920167782, %v3581
      %v3597 = vshrl.u32 1326507024, %v3582
      %v3598 = vor.u32 %v3596, %v3597
      %vm3599 = vcmp.lt.s32.totalorder %v3580, 1
      %vm3600 = vcmp.lt.s32.totalorder %v3580, 2
      %vm3601 = vcmp.lt.s32.totalorder %v3580, 3
      %vm3602 = vcmp.lt.s32.totalorder %v3580, 4
      %v3603 = vsel %vm3599, %v3583, %v3586
      %v3604 = vsel %vm3602, %v3592, 2102212464
      %v3605 = vsel %vm3601, %v3589, %v3604
      %v3606 = vsel %vm3600, %v3603, %v3605
      %v3607 = vsel %vm3599, %v3586, %v3589
      %v3608 = vsel %vm3602, %v3595, 920167782
      %v3609 = vsel %vm3601, %v3592, %v3608
      %v3610 = vsel %vm3600, %v3607, %v3609
      %v3611 = vsel %vm3599, %v3589, %v3592
      %v3612 = vsel %vm3602, %v3598, 1326507024
      %v3613 = vsel %vm3601, %v3595, %v3612
      %v3614 = vsel %vm3600, %v3611, %v3613
      %v3615 = vshll.u32 %v3575, 8
      %v3616 = vmul.u32.u64.compose %v3615, %v3614
      %v3617 = vextract.low.u32 %v3616
      %v3618 = vextract.high.u32 %v3616
      %v3619 = vmul.u32.u64.compose %v3615, %v3610
      %v3620 = vextract.low.u32 %v3619
      %v3621 = vextract.high.u32 %v3619
      %v3622 = vmul.u32 %v3615, %v3606
      %v3623 = vadd.s32 %v3618, %v3620
      %vm3624 = vc.u32 %v3618, %v3620
      %v3625 = vadd.s32 %v3621, 1
      %v3626 = vsel %vm3624, %v3625, %v3621
      %v3627 = vadd.s32 %v3622, %v3626
      %v3628 = vadd.s32 %v3627, 536870912
      %v3629 = vshrl.u32 %v3628, 30
      %v3630 = vshll.u32 %v3629, 30
      %v3631 = vsub.s32 %v3627, %v3630
      %vm3632 = vcmp.lt.s32.totalorder %v3631, 0
      %v3633 = vsub.s32 0, %v3631
      %v3634 = vsel %vm3632, %v3633, %v3631
      %v3635 = vclz %v3634
      %v3636 = vsub.s32 %v3635, 2
      %vm3637 = vcmp.gt.s32.totalorder 0, %v3636
      %v3638 = vsel %vm3637, 0, %v3636
      %v3639 = vsub.s32 32, %v3638
      %v3640 = vshll.u32 %v3631, %v3638
      %v3641 = vshrl.u32 %v3623, %v3639
      %v3642 = vor.u32 %v3640, %v3641
      %v3643 = vsub.s32 4294967266, %v3638
      %v3644 = vadd.s32 %v3643, 127
      %v3645 = vshll.u32 %v3644, 23
      %v3646 = vor.u32 4788187, %v3645
      %v3647 = vand.u32 2147483647, %v3646
      %v3649 = vcvt.s32.f32 %v3642
      %v3650 = vmul.f32 %v3649, %v3647
      %v3651 = vxor.u32 %v3650, 2147483648
      %v3652 = vsel %vm3569, %v3651, %v3650
      %v3653 = vsub.s32 4, %v3629
      %v3654 = vsel %vm3569, %v3653, %v3629
      %v3655 = vsel %vm3568, %v1475, %v3652
      %v3656 = vsel %vm3568, 0, %v3654
      %v3657 = vcosq.f32.pop %v3655
      %v3658 = vsinq.f32.pop %v3655
      %vm3659 = vweird.f32 %v1475
      %v3660 = vadd.s32 %v3656, 3
      %v3661 = vand.u32 %v3660, 3
      %vm3662 = vcmp.lt.s32.totalorder %v3661, 2
      %vm3663 = vcmp.eq.s32.totalorder %v3661, 0
      %v3664 = vxor.u32 %v3658, 2147483648
      %v3665 = vsel %vm3663, %v3657, %v3664
      %vm3666 = vcmp.eq.s32.totalorder %v3661, 2
      %v3667 = vxor.u32 %v3657, 2147483648
      %v3668 = vsel %vm3666, %v3667, %v3658
      %v3669 = vsel %vm3662, %v3665, %v3668
      %v3670 = vsel %vm3659, nan, %v3669
      %v3671 = vand.u32 2147483647, %v1476
      %vm3672 = vcmp.le.f32.partialorder %v3671, 0.7853982
      %vm3673 = vcmp.lt.s32.totalorder %v1476, 0
      %v3674 = vand.u32 %v1476, 2139095040
      %v3675 = vshrl.u32 %v3674, 23
      %v3676 = vsub.s32 %v3675, 127
      %v3677 = vand.u32 2147483647, %v1476
      %v3678 = vand.u32 %v3677, 8388607
      %v3679 = vor.u32 %v3678, 8388608
      %v3680 = vsub.s32 0, %v3679
      %v3681 = vadd.s32 %v3676, 1
      %vm3682 = vcmp.gt.s32.totalorder %v3681, 0
      %v3683 = vsel %vm3682, %v3681, 0
      %v3684 = vshrl.u32 %v3683, 5
      %v3685 = vand.u32 %v3683, 31
      %v3686 = vsub.s32 32, %v3685
      %v3687 = vshrl.u32 683565275, %v3686
      %v3688 = vshll.u32 683565275, %v3685
      %v3689 = vshrl.u32 2475754826, %v3686
      %v3690 = vor.u32 %v3688, %v3689
      %v3691 = vshll.u32 2475754826, %v3685
      %v3692 = vshrl.u32 2131351028, %v3686
      %v3693 = vor.u32 %v3691, %v3692
      %v3694 = vshll.u32 2131351028, %v3685
      %v3695 = vshrl.u32 2102212464, %v3686
      %v3696 = vor.u32 %v3694, %v3695
      %v3697 = vshll.u32 2102212464, %v3685
      %v3698 = vshrl.u32 920167782, %v3686
      %v3699 = vor.u32 %v3697, %v3698
      %v3700 = vshll.u32 920167782, %v3685
      %v3701 = vshrl.u32 1326507024, %v3686
      %v3702 = vor.u32 %v3700, %v3701
      %vm3703 = vcmp.lt.s32.totalorder %v3684, 1
      %vm3704 = vcmp.lt.s32.totalorder %v3684, 2
      %vm3705 = vcmp.lt.s32.totalorder %v3684, 3
      %vm3706 = vcmp.lt.s32.totalorder %v3684, 4
      %v3707 = vsel %vm3703, %v3687, %v3690
      %v3708 = vsel %vm3706, %v3696, 2102212464
      %v3709 = vsel %vm3705, %v3693, %v3708
      %v3710 = vsel %vm3704, %v3707, %v3709
      %v3711 = vsel %vm3703, %v3690, %v3693
      %v3712 = vsel %vm3706, %v3699, 920167782
      %v3713 = vsel %vm3705, %v3696, %v3712
      %v3714 = vsel %vm3704, %v3711, %v3713
      %v3715 = vsel %vm3703, %v3693, %v3696
      %v3716 = vsel %vm3706, %v3702, 1326507024
      %v3717 = vsel %vm3705, %v3699, %v3716
      %v3718 = vsel %vm3704, %v3715, %v3717
      %v3719 = vshll.u32 %v3679, 8
      %v3720 = vmul.u32.u64.compose %v3719, %v3718
      %v3721 = vextract.low.u32 %v3720
      %v3722 = vextract.high.u32 %v3720
      %v3723 = vmul.u32.u64.compose %v3719, %v3714
      %v3724 = vextract.low.u32 %v3723
      %v3725 = vextract.high.u32 %v3723
      %v3726 = vmul.u32 %v3719, %v3710
      %v3727 = vadd.s32 %v3722, %v3724
      %vm3728 = vc.u32 %v3722, %v3724
      %v3729 = vadd.s32 %v3725, 1
      %v3730 = vsel %vm3728, %v3729, %v3725
      %v3731 = vadd.s32 %v3726, %v3730
      %v3732 = vadd.s32 %v3731, 536870912
      %v3733 = vshrl.u32 %v3732, 30
      %v3734 = vshll.u32 %v3733, 30
      %v3735 = vsub.s32 %v3731, %v3734
      %vm3736 = vcmp.lt.s32.totalorder %v3735, 0
      %v3737 = vsub.s32 0, %v3735
      %v3738 = vsel %vm3736, %v3737, %v3735
      %v3739 = vclz %v3738
      %v3740 = vsub.s32 %v3739, 2
      %vm3741 = vcmp.gt.s32.totalorder 0, %v3740
      %v3742 = vsel %vm3741, 0, %v3740
      %v3743 = vsub.s32 32, %v3742
      %v3744 = vshll.u32 %v3735, %v3742
      %v3745 = vshrl.u32 %v3727, %v3743
      %v3746 = vor.u32 %v3744, %v3745
      %v3747 = vsub.s32 4294967266, %v3742
      %v3748 = vadd.s32 %v3747, 127
      %v3749 = vshll.u32 %v3748, 23
      %v3750 = vor.u32 4788187, %v3749
      %v3751 = vand.u32 2147483647, %v3750
      %v3753 = vcvt.s32.f32 %v3746
      %v3754 = vmul.f32 %v3753, %v3751
      %v3755 = vxor.u32 %v3754, 2147483648
      %v3756 = vsel %vm3673, %v3755, %v3754
      %v3757 = vsub.s32 4, %v3733
      %v3758 = vsel %vm3673, %v3757, %v3733
      %v3759 = vsel %vm3672, %v1476, %v3756
      %v3760 = vsel %vm3672, 0, %v3758
      %v3761 = vcosq.f32.pop %v3759
      %v3762 = vsinq.f32.pop %v3759
      %vm3763 = vweird.f32 %v1476
      %v3764 = vadd.s32 %v3760, 3
      %v3765 = vand.u32 %v3764, 3
      %vm3766 = vcmp.lt.s32.totalorder %v3765, 2
      %vm3767 = vcmp.eq.s32.totalorder %v3765, 0
      %v3768 = vxor.u32 %v3762, 2147483648
      %v3769 = vsel %vm3767, %v3761, %v3768
      %vm3770 = vcmp.eq.s32.totalorder %v3765, 2
      %v3771 = vxor.u32 %v3761, 2147483648
      %v3772 = vsel %vm3770, %v3771, %v3762
      %v3773 = vsel %vm3766, %v3769, %v3772
      %v3774 = vsel %vm3763, nan, %v3773
      %v3775 = vand.u32 2147483647, %v1477
      %vm3776 = vcmp.le.f32.partialorder %v3775, 0.7853982
      %vm3777 = vcmp.lt.s32.totalorder %v1477, 0
      %v3778 = vand.u32 %v1477, 2139095040
      %v3779 = vshrl.u32 %v3778, 23
      %v3780 = vsub.s32 %v3779, 127
      %v3781 = vand.u32 2147483647, %v1477
      %v3782 = vand.u32 %v3781, 8388607
      %v3783 = vor.u32 %v3782, 8388608
      %v3784 = vsub.s32 0, %v3783
      %v3785 = vadd.s32 %v3780, 1
      %vm3786 = vcmp.gt.s32.totalorder %v3785, 0
      %v3787 = vsel %vm3786, %v3785, 0
      %v3788 = vshrl.u32 %v3787, 5
      %v3789 = vand.u32 %v3787, 31
      %v3790 = vsub.s32 32, %v3789
      %v3791 = vshrl.u32 683565275, %v3790
      %v3792 = vshll.u32 683565275, %v3789
      %v3793 = vshrl.u32 2475754826, %v3790
      %v3794 = vor.u32 %v3792, %v3793
      %v3795 = vshll.u32 2475754826, %v3789
      %v3796 = vshrl.u32 2131351028, %v3790
      %v3797 = vor.u32 %v3795, %v3796
      %v3798 = vshll.u32 2131351028, %v3789
      %v3799 = vshrl.u32 2102212464, %v3790
      %v3800 = vor.u32 %v3798, %v3799
      %v3801 = vshll.u32 2102212464, %v3789
      %v3802 = vshrl.u32 920167782, %v3790
      %v3803 = vor.u32 %v3801, %v3802
      %v3804 = vshll.u32 920167782, %v3789
      %v3805 = vshrl.u32 1326507024, %v3790
      %v3806 = vor.u32 %v3804, %v3805
      %vm3807 = vcmp.lt.s32.totalorder %v3788, 1
      %vm3808 = vcmp.lt.s32.totalorder %v3788, 2
      %vm3809 = vcmp.lt.s32.totalorder %v3788, 3
      %vm3810 = vcmp.lt.s32.totalorder %v3788, 4
      %v3811 = vsel %vm3807, %v3791, %v3794
      %v3812 = vsel %vm3810, %v3800, 2102212464
      %v3813 = vsel %vm3809, %v3797, %v3812
      %v3814 = vsel %vm3808, %v3811, %v3813
      %v3815 = vsel %vm3807, %v3794, %v3797
      %v3816 = vsel %vm3810, %v3803, 920167782
      %v3817 = vsel %vm3809, %v3800, %v3816
      %v3818 = vsel %vm3808, %v3815, %v3817
      %v3819 = vsel %vm3807, %v3797, %v3800
      %v3820 = vsel %vm3810, %v3806, 1326507024
      %v3821 = vsel %vm3809, %v3803, %v3820
      %v3822 = vsel %vm3808, %v3819, %v3821
      %v3823 = vshll.u32 %v3783, 8
      %v3824 = vmul.u32.u64.compose %v3823, %v3822
      %v3825 = vextract.low.u32 %v3824
      %v3826 = vextract.high.u32 %v3824
      %v3827 = vmul.u32.u64.compose %v3823, %v3818
      %v3828 = vextract.low.u32 %v3827
      %v3829 = vextract.high.u32 %v3827
      %v3830 = vmul.u32 %v3823, %v3814
      %v3831 = vadd.s32 %v3826, %v3828
      %vm3832 = vc.u32 %v3826, %v3828
      %v3833 = vadd.s32 %v3829, 1
      %v3834 = vsel %vm3832, %v3833, %v3829
      %v3835 = vadd.s32 %v3830, %v3834
      %v3836 = vadd.s32 %v3835, 536870912
      %v3837 = vshrl.u32 %v3836, 30
      %v3838 = vshll.u32 %v3837, 30
      %v3839 = vsub.s32 %v3835, %v3838
      %vm3840 = vcmp.lt.s32.totalorder %v3839, 0
      %v3841 = vsub.s32 0, %v3839
      %v3842 = vsel %vm3840, %v3841, %v3839
      %v3843 = vclz %v3842
      %v3844 = vsub.s32 %v3843, 2
      %vm3845 = vcmp.gt.s32.totalorder 0, %v3844
      %v3846 = vsel %vm3845, 0, %v3844
      %v3847 = vsub.s32 32, %v3846
      %v3848 = vshll.u32 %v3839, %v3846
      %v3849 = vshrl.u32 %v3831, %v3847
      %v3850 = vor.u32 %v3848, %v3849
      %v3851 = vsub.s32 4294967266, %v3846
      %v3852 = vadd.s32 %v3851, 127
      %v3853 = vshll.u32 %v3852, 23
      %v3854 = vor.u32 4788187, %v3853
      %v3855 = vand.u32 2147483647, %v3854
      %v3857 = vcvt.s32.f32 %v3850
      %v3858 = vmul.f32 %v3857, %v3855
      %v3859 = vxor.u32 %v3858, 2147483648
      %v3860 = vsel %vm3777, %v3859, %v3858
      %v3861 = vsub.s32 4, %v3837
      %v3862 = vsel %vm3777, %v3861, %v3837
      %v3863 = vsel %vm3776, %v1477, %v3860
      %v3864 = vsel %vm3776, 0, %v3862
      %v3865 = vcosq.f32.pop %v3863
      %v3866 = vsinq.f32.pop %v3863
      %vm3867 = vweird.f32 %v1477
      %v3868 = vadd.s32 %v3864, 3
      %v3869 = vand.u32 %v3868, 3
      %vm3870 = vcmp.lt.s32.totalorder %v3869, 2
      %vm3871 = vcmp.eq.s32.totalorder %v3869, 0
      %v3872 = vxor.u32 %v3866, 2147483648
      %v3873 = vsel %vm3871, %v3865, %v3872
      %vm3874 = vcmp.eq.s32.totalorder %v3869, 2
      %v3875 = vxor.u32 %v3865, 2147483648
      %v3876 = vsel %vm3874, %v3875, %v3866
      %v3877 = vsel %vm3870, %v3873, %v3876
      %v3878 = vsel %vm3867, nan, %v3877
      %v3879 = vand.u32 2147483647, %v1478
      %vm3880 = vcmp.le.f32.partialorder %v3879, 0.7853982
      %vm3881 = vcmp.lt.s32.totalorder %v1478, 0
      %v3882 = vand.u32 %v1478, 2139095040
      %v3883 = vshrl.u32 %v3882, 23
      %v3884 = vsub.s32 %v3883, 127
      %v3885 = vand.u32 2147483647, %v1478
      %v3886 = vand.u32 %v3885, 8388607
      %v3887 = vor.u32 %v3886, 8388608
      %v3888 = vsub.s32 0, %v3887
      %v3889 = vadd.s32 %v3884, 1
      %vm3890 = vcmp.gt.s32.totalorder %v3889, 0
      %v3891 = vsel %vm3890, %v3889, 0
      %v3892 = vshrl.u32 %v3891, 5
      %v3893 = vand.u32 %v3891, 31
      %v3894 = vsub.s32 32, %v3893
      %v3895 = vshrl.u32 683565275, %v3894
      %v3896 = vshll.u32 683565275, %v3893
      %v3897 = vshrl.u32 2475754826, %v3894
      %v3898 = vor.u32 %v3896, %v3897
      %v3899 = vshll.u32 2475754826, %v3893
      %v3900 = vshrl.u32 2131351028, %v3894
      %v3901 = vor.u32 %v3899, %v3900
      %v3902 = vshll.u32 2131351028, %v3893
      %v3903 = vshrl.u32 2102212464, %v3894
      %v3904 = vor.u32 %v3902, %v3903
      %v3905 = vshll.u32 2102212464, %v3893
      %v3906 = vshrl.u32 920167782, %v3894
      %v3907 = vor.u32 %v3905, %v3906
      %v3908 = vshll.u32 920167782, %v3893
      %v3909 = vshrl.u32 1326507024, %v3894
      %v3910 = vor.u32 %v3908, %v3909
      %vm3911 = vcmp.lt.s32.totalorder %v3892, 1
      %vm3912 = vcmp.lt.s32.totalorder %v3892, 2
      %vm3913 = vcmp.lt.s32.totalorder %v3892, 3
      %vm3914 = vcmp.lt.s32.totalorder %v3892, 4
      %v3915 = vsel %vm3911, %v3895, %v3898
      %v3916 = vsel %vm3914, %v3904, 2102212464
      %v3917 = vsel %vm3913, %v3901, %v3916
      %v3918 = vsel %vm3912, %v3915, %v3917
      %v3919 = vsel %vm3911, %v3898, %v3901
      %v3920 = vsel %vm3914, %v3907, 920167782
      %v3921 = vsel %vm3913, %v3904, %v3920
      %v3922 = vsel %vm3912, %v3919, %v3921
      %v3923 = vsel %vm3911, %v3901, %v3904
      %v3924 = vsel %vm3914, %v3910, 1326507024
      %v3925 = vsel %vm3913, %v3907, %v3924
      %v3926 = vsel %vm3912, %v3923, %v3925
      %v3927 = vshll.u32 %v3887, 8
      %v3928 = vmul.u32.u64.compose %v3927, %v3926
      %v3929 = vextract.low.u32 %v3928
      %v3930 = vextract.high.u32 %v3928
      %v3931 = vmul.u32.u64.compose %v3927, %v3922
      %v3932 = vextract.low.u32 %v3931
      %v3933 = vextract.high.u32 %v3931
      %v3934 = vmul.u32 %v3927, %v3918
      %v3935 = vadd.s32 %v3930, %v3932
      %vm3936 = vc.u32 %v3930, %v3932
      %v3937 = vadd.s32 %v3933, 1
      %v3938 = vsel %vm3936, %v3937, %v3933
      %v3939 = vadd.s32 %v3934, %v3938
      %v3940 = vadd.s32 %v3939, 536870912
      %v3941 = vshrl.u32 %v3940, 30
      %v3942 = vshll.u32 %v3941, 30
      %v3943 = vsub.s32 %v3939, %v3942
      %vm3944 = vcmp.lt.s32.totalorder %v3943, 0
      %v3945 = vsub.s32 0, %v3943
      %v3946 = vsel %vm3944, %v3945, %v3943
      %v3947 = vclz %v3946
      %v3948 = vsub.s32 %v3947, 2
      %vm3949 = vcmp.gt.s32.totalorder 0, %v3948
      %v3950 = vsel %vm3949, 0, %v3948
      %v3951 = vsub.s32 32, %v3950
      %v3952 = vshll.u32 %v3943, %v3950
      %v3953 = vshrl.u32 %v3935, %v3951
      %v3954 = vor.u32 %v3952, %v3953
      %v3955 = vsub.s32 4294967266, %v3950
      %v3956 = vadd.s32 %v3955, 127
      %v3957 = vshll.u32 %v3956, 23
      %v3958 = vor.u32 4788187, %v3957
      %v3959 = vand.u32 2147483647, %v3958
      %v3961 = vcvt.s32.f32 %v3954
      %v3962 = vmul.f32 %v3961, %v3959
      %v3963 = vxor.u32 %v3962, 2147483648
      %v3964 = vsel %vm3881, %v3963, %v3962
      %v3965 = vsub.s32 4, %v3941
      %v3966 = vsel %vm3881, %v3965, %v3941
      %v3967 = vsel %vm3880, %v1478, %v3964
      %v3968 = vsel %vm3880, 0, %v3966
      %v3969 = vcosq.f32.pop %v3967
      %v3970 = vsinq.f32.pop %v3967
      %vm3971 = vweird.f32 %v1478
      %v3972 = vadd.s32 %v3968, 3
      %v3973 = vand.u32 %v3972, 3
      %vm3974 = vcmp.lt.s32.totalorder %v3973, 2
      %vm3975 = vcmp.eq.s32.totalorder %v3973, 0
      %v3976 = vxor.u32 %v3970, 2147483648
      %v3977 = vsel %vm3975, %v3969, %v3976
      %vm3978 = vcmp.eq.s32.totalorder %v3973, 2
      %v3979 = vxor.u32 %v3969, 2147483648
      %v3980 = vsel %vm3978, %v3979, %v3970
      %v3981 = vsel %vm3974, %v3977, %v3980
      %v3982 = vsel %vm3971, nan, %v3981
      %v3983 = vand.u32 2147483647, %v1479
      %vm3984 = vcmp.le.f32.partialorder %v3983, 0.7853982
      %vm3985 = vcmp.lt.s32.totalorder %v1479, 0
      %v3986 = vand.u32 %v1479, 2139095040
      %v3987 = vshrl.u32 %v3986, 23
      %v3988 = vsub.s32 %v3987, 127
      %v3989 = vand.u32 2147483647, %v1479
      %v3990 = vand.u32 %v3989, 8388607
      %v3991 = vor.u32 %v3990, 8388608
      %v3992 = vsub.s32 0, %v3991
      %v3993 = vadd.s32 %v3988, 1
      %vm3994 = vcmp.gt.s32.totalorder %v3993, 0
      %v3995 = vsel %vm3994, %v3993, 0
      %v3996 = vshrl.u32 %v3995, 5
      %v3997 = vand.u32 %v3995, 31
      %v3998 = vsub.s32 32, %v3997
      %v3999 = vshrl.u32 683565275, %v3998
      %v4000 = vshll.u32 683565275, %v3997
      %v4001 = vshrl.u32 2475754826, %v3998
      %v4002 = vor.u32 %v4000, %v4001
      %v4003 = vshll.u32 2475754826, %v3997
      %v4004 = vshrl.u32 2131351028, %v3998
      %v4005 = vor.u32 %v4003, %v4004
      %v4006 = vshll.u32 2131351028, %v3997
      %v4007 = vshrl.u32 2102212464, %v3998
      %v4008 = vor.u32 %v4006, %v4007
      %v4009 = vshll.u32 2102212464, %v3997
      %v4010 = vshrl.u32 920167782, %v3998
      %v4011 = vor.u32 %v4009, %v4010
      %v4012 = vshll.u32 920167782, %v3997
      %v4013 = vshrl.u32 1326507024, %v3998
      %v4014 = vor.u32 %v4012, %v4013
      %vm4015 = vcmp.lt.s32.totalorder %v3996, 1
      %vm4016 = vcmp.lt.s32.totalorder %v3996, 2
      %vm4017 = vcmp.lt.s32.totalorder %v3996, 3
      %vm4018 = vcmp.lt.s32.totalorder %v3996, 4
      %v4019 = vsel %vm4015, %v3999, %v4002
      %v4020 = vsel %vm4018, %v4008, 2102212464
      %v4021 = vsel %vm4017, %v4005, %v4020
      %v4022 = vsel %vm4016, %v4019, %v4021
      %v4023 = vsel %vm4015, %v4002, %v4005
      %v4024 = vsel %vm4018, %v4011, 920167782
      %v4025 = vsel %vm4017, %v4008, %v4024
      %v4026 = vsel %vm4016, %v4023, %v4025
      %v4027 = vsel %vm4015, %v4005, %v4008
      %v4028 = vsel %vm4018, %v4014, 1326507024
      %v4029 = vsel %vm4017, %v4011, %v4028
      %v4030 = vsel %vm4016, %v4027, %v4029
      %v4031 = vshll.u32 %v3991, 8
      %v4032 = vmul.u32.u64.compose %v4031, %v4030
      %v4033 = vextract.low.u32 %v4032
      %v4034 = vextract.high.u32 %v4032
      %v4035 = vmul.u32.u64.compose %v4031, %v4026
      %v4036 = vextract.low.u32 %v4035
      %v4037 = vextract.high.u32 %v4035
      %v4038 = vmul.u32 %v4031, %v4022
      %v4039 = vadd.s32 %v4034, %v4036
      %vm4040 = vc.u32 %v4034, %v4036
      %v4041 = vadd.s32 %v4037, 1
      %v4042 = vsel %vm4040, %v4041, %v4037
      %v4043 = vadd.s32 %v4038, %v4042
      %v4044 = vadd.s32 %v4043, 536870912
      %v4045 = vshrl.u32 %v4044, 30
      %v4046 = vshll.u32 %v4045, 30
      %v4047 = vsub.s32 %v4043, %v4046
      %vm4048 = vcmp.lt.s32.totalorder %v4047, 0
      %v4049 = vsub.s32 0, %v4047
      %v4050 = vsel %vm4048, %v4049, %v4047
      %v4051 = vclz %v4050
      %v4052 = vsub.s32 %v4051, 2
      %vm4053 = vcmp.gt.s32.totalorder 0, %v4052
      %v4054 = vsel %vm4053, 0, %v4052
      %v4055 = vsub.s32 32, %v4054
      %v4056 = vshll.u32 %v4047, %v4054
      %v4057 = vshrl.u32 %v4039, %v4055
      %v4058 = vor.u32 %v4056, %v4057
      %v4059 = vsub.s32 4294967266, %v4054
      %v4060 = vadd.s32 %v4059, 127
      %v4061 = vshll.u32 %v4060, 23
      %v4062 = vor.u32 4788187, %v4061
      %v4063 = vand.u32 2147483647, %v4062
      %v4065 = vcvt.s32.f32 %v4058
      %v4066 = vmul.f32 %v4065, %v4063
      %v4067 = vxor.u32 %v4066, 2147483648
      %v4068 = vsel %vm3985, %v4067, %v4066
      %v4069 = vsub.s32 4, %v4045
      %v4070 = vsel %vm3985, %v4069, %v4045
      %v4071 = vsel %vm3984, %v1479, %v4068
      %v4072 = vsel %vm3984, 0, %v4070
      %v4073 = vcosq.f32.pop %v4071
      %v4074 = vsinq.f32.pop %v4071
      %vm4075 = vweird.f32 %v1479
      %v4076 = vadd.s32 %v4072, 3
      %v4077 = vand.u32 %v4076, 3
      %vm4078 = vcmp.lt.s32.totalorder %v4077, 2
      %vm4079 = vcmp.eq.s32.totalorder %v4077, 0
      %v4080 = vxor.u32 %v4074, 2147483648
      %v4081 = vsel %vm4079, %v4073, %v4080
      %vm4082 = vcmp.eq.s32.totalorder %v4077, 2
      %v4083 = vxor.u32 %v4073, 2147483648
      %v4084 = vsel %vm4082, %v4083, %v4074
      %v4085 = vsel %vm4078, %v4081, %v4084
      %v4086 = vsel %vm4075, nan, %v4085
      %v4087 = vand.u32 2147483647, %v1480
      %vm4088 = vcmp.le.f32.partialorder %v4087, 0.7853982
      %vm4089 = vcmp.lt.s32.totalorder %v1480, 0
      %v4090 = vand.u32 %v1480, 2139095040
      %v4091 = vshrl.u32 %v4090, 23
      %v4092 = vsub.s32 %v4091, 127
      %v4093 = vand.u32 2147483647, %v1480
      %v4094 = vand.u32 %v4093, 8388607
      %v4095 = vor.u32 %v4094, 8388608
      %v4096 = vsub.s32 0, %v4095
      %v4097 = vadd.s32 %v4092, 1
      %vm4098 = vcmp.gt.s32.totalorder %v4097, 0
      %v4099 = vsel %vm4098, %v4097, 0
      %v4100 = vshrl.u32 %v4099, 5
      %v4101 = vand.u32 %v4099, 31
      %v4102 = vsub.s32 32, %v4101
      %v4103 = vshrl.u32 683565275, %v4102
      %v4104 = vshll.u32 683565275, %v4101
      %v4105 = vshrl.u32 2475754826, %v4102
      %v4106 = vor.u32 %v4104, %v4105
      %v4107 = vshll.u32 2475754826, %v4101
      %v4108 = vshrl.u32 2131351028, %v4102
      %v4109 = vor.u32 %v4107, %v4108
      %v4110 = vshll.u32 2131351028, %v4101
      %v4111 = vshrl.u32 2102212464, %v4102
      %v4112 = vor.u32 %v4110, %v4111
      %v4113 = vshll.u32 2102212464, %v4101
      %v4114 = vshrl.u32 920167782, %v4102
      %v4115 = vor.u32 %v4113, %v4114
      %v4116 = vshll.u32 920167782, %v4101
      %v4117 = vshrl.u32 1326507024, %v4102
      %v4118 = vor.u32 %v4116, %v4117
      %vm4119 = vcmp.lt.s32.totalorder %v4100, 1
      %vm4120 = vcmp.lt.s32.totalorder %v4100, 2
      %vm4121 = vcmp.lt.s32.totalorder %v4100, 3
      %vm4122 = vcmp.lt.s32.totalorder %v4100, 4
      %v4123 = vsel %vm4119, %v4103, %v4106
      %v4124 = vsel %vm4122, %v4112, 2102212464
      %v4125 = vsel %vm4121, %v4109, %v4124
      %v4126 = vsel %vm4120, %v4123, %v4125
      %v4127 = vsel %vm4119, %v4106, %v4109
      %v4128 = vsel %vm4122, %v4115, 920167782
      %v4129 = vsel %vm4121, %v4112, %v4128
      %v4130 = vsel %vm4120, %v4127, %v4129
      %v4131 = vsel %vm4119, %v4109, %v4112
      %v4132 = vsel %vm4122, %v4118, 1326507024
      %v4133 = vsel %vm4121, %v4115, %v4132
      %v4134 = vsel %vm4120, %v4131, %v4133
      %v4135 = vshll.u32 %v4095, 8
      %v4136 = vmul.u32.u64.compose %v4135, %v4134
      %v4137 = vextract.low.u32 %v4136
      %v4138 = vextract.high.u32 %v4136
      %v4139 = vmul.u32.u64.compose %v4135, %v4130
      %v4140 = vextract.low.u32 %v4139
      %v4141 = vextract.high.u32 %v4139
      %v4142 = vmul.u32 %v4135, %v4126
      %v4143 = vadd.s32 %v4138, %v4140
      %vm4144 = vc.u32 %v4138, %v4140
      %v4145 = vadd.s32 %v4141, 1
      %v4146 = vsel %vm4144, %v4145, %v4141
      %v4147 = vadd.s32 %v4142, %v4146
      %v4148 = vadd.s32 %v4147, 536870912
      %v4149 = vshrl.u32 %v4148, 30
      %v4150 = vshll.u32 %v4149, 30
      %v4151 = vsub.s32 %v4147, %v4150
      %vm4152 = vcmp.lt.s32.totalorder %v4151, 0
      %v4153 = vsub.s32 0, %v4151
      %v4154 = vsel %vm4152, %v4153, %v4151
      %v4155 = vclz %v4154
      %v4156 = vsub.s32 %v4155, 2
      %vm4157 = vcmp.gt.s32.totalorder 0, %v4156
      %v4158 = vsel %vm4157, 0, %v4156
      %v4159 = vsub.s32 32, %v4158
      %v4160 = vshll.u32 %v4151, %v4158
      %v4161 = vshrl.u32 %v4143, %v4159
      %v4162 = vor.u32 %v4160, %v4161
      %v4163 = vsub.s32 4294967266, %v4158
      %v4164 = vadd.s32 %v4163, 127
      %v4165 = vshll.u32 %v4164, 23
      %v4166 = vor.u32 4788187, %v4165
      %v4167 = vand.u32 2147483647, %v4166
      %v4169 = vcvt.s32.f32 %v4162
      %v4170 = vmul.f32 %v4169, %v4167
      %v4171 = vxor.u32 %v4170, 2147483648
      %v4172 = vsel %vm4089, %v4171, %v4170
      %v4173 = vsub.s32 4, %v4149
      %v4174 = vsel %vm4089, %v4173, %v4149
      %v4175 = vsel %vm4088, %v1480, %v4172
      %v4176 = vsel %vm4088, 0, %v4174
      %v4177 = vcosq.f32.pop %v4175
      %v4178 = vsinq.f32.pop %v4175
      %vm4179 = vweird.f32 %v1480
      %v4180 = vadd.s32 %v4176, 3
      %v4181 = vand.u32 %v4180, 3
      %vm4182 = vcmp.lt.s32.totalorder %v4181, 2
      %vm4183 = vcmp.eq.s32.totalorder %v4181, 0
      %v4184 = vxor.u32 %v4178, 2147483648
      %v4185 = vsel %vm4183, %v4177, %v4184
      %vm4186 = vcmp.eq.s32.totalorder %v4181, 2
      %v4187 = vxor.u32 %v4177, 2147483648
      %v4188 = vsel %vm4186, %v4187, %v4178
      %v4189 = vsel %vm4182, %v4185, %v4188
      %v4190 = vsel %vm4179, nan, %v4189
      %v4191 = vand.u32 2147483647, %v1481
      %vm4192 = vcmp.le.f32.partialorder %v4191, 0.7853982
      %vm4193 = vcmp.lt.s32.totalorder %v1481, 0
      %v4194 = vand.u32 %v1481, 2139095040
      %v4195 = vshrl.u32 %v4194, 23
      %v4196 = vsub.s32 %v4195, 127
      %v4197 = vand.u32 2147483647, %v1481
      %v4198 = vand.u32 %v4197, 8388607
      %v4199 = vor.u32 %v4198, 8388608
      %v4200 = vsub.s32 0, %v4199
      %v4201 = vadd.s32 %v4196, 1
      %vm4202 = vcmp.gt.s32.totalorder %v4201, 0
      %v4203 = vsel %vm4202, %v4201, 0
      %v4204 = vshrl.u32 %v4203, 5
      %v4205 = vand.u32 %v4203, 31
      %v4206 = vsub.s32 32, %v4205
      %v4207 = vshrl.u32 683565275, %v4206
      %v4208 = vshll.u32 683565275, %v4205
      %v4209 = vshrl.u32 2475754826, %v4206
      %v4210 = vor.u32 %v4208, %v4209
      %v4211 = vshll.u32 2475754826, %v4205
      %v4212 = vshrl.u32 2131351028, %v4206
      %v4213 = vor.u32 %v4211, %v4212
      %v4214 = vshll.u32 2131351028, %v4205
      %v4215 = vshrl.u32 2102212464, %v4206
      %v4216 = vor.u32 %v4214, %v4215
      %v4217 = vshll.u32 2102212464, %v4205
      %v4218 = vshrl.u32 920167782, %v4206
      %v4219 = vor.u32 %v4217, %v4218
      %v4220 = vshll.u32 920167782, %v4205
      %v4221 = vshrl.u32 1326507024, %v4206
      %v4222 = vor.u32 %v4220, %v4221
      %vm4223 = vcmp.lt.s32.totalorder %v4204, 1
      %vm4224 = vcmp.lt.s32.totalorder %v4204, 2
      %vm4225 = vcmp.lt.s32.totalorder %v4204, 3
      %vm4226 = vcmp.lt.s32.totalorder %v4204, 4
      %v4227 = vsel %vm4223, %v4207, %v4210
      %v4228 = vsel %vm4226, %v4216, 2102212464
      %v4229 = vsel %vm4225, %v4213, %v4228
      %v4230 = vsel %vm4224, %v4227, %v4229
      %v4231 = vsel %vm4223, %v4210, %v4213
      %v4232 = vsel %vm4226, %v4219, 920167782
      %v4233 = vsel %vm4225, %v4216, %v4232
      %v4234 = vsel %vm4224, %v4231, %v4233
      %v4235 = vsel %vm4223, %v4213, %v4216
      %v4236 = vsel %vm4226, %v4222, 1326507024
      %v4237 = vsel %vm4225, %v4219, %v4236
      %v4238 = vsel %vm4224, %v4235, %v4237
      %v4239 = vshll.u32 %v4199, 8
      %v4240 = vmul.u32.u64.compose %v4239, %v4238
      %v4241 = vextract.low.u32 %v4240
      %v4242 = vextract.high.u32 %v4240
      %v4243 = vmul.u32.u64.compose %v4239, %v4234
      %v4244 = vextract.low.u32 %v4243
      %v4245 = vextract.high.u32 %v4243
      %v4246 = vmul.u32 %v4239, %v4230
      %v4247 = vadd.s32 %v4242, %v4244
      %vm4248 = vc.u32 %v4242, %v4244
      %v4249 = vadd.s32 %v4245, 1
      %v4250 = vsel %vm4248, %v4249, %v4245
      %v4251 = vadd.s32 %v4246, %v4250
      %v4252 = vadd.s32 %v4251, 536870912
      %v4253 = vshrl.u32 %v4252, 30
      %v4254 = vshll.u32 %v4253, 30
      %v4255 = vsub.s32 %v4251, %v4254
      %vm4256 = vcmp.lt.s32.totalorder %v4255, 0
      %v4257 = vsub.s32 0, %v4255
      %v4258 = vsel %vm4256, %v4257, %v4255
      %v4259 = vclz %v4258
      %v4260 = vsub.s32 %v4259, 2
      %vm4261 = vcmp.gt.s32.totalorder 0, %v4260
      %v4262 = vsel %vm4261, 0, %v4260
      %v4263 = vsub.s32 32, %v4262
      %v4264 = vshll.u32 %v4255, %v4262
      %v4265 = vshrl.u32 %v4247, %v4263
      %v4266 = vor.u32 %v4264, %v4265
      %v4267 = vsub.s32 4294967266, %v4262
      %v4268 = vadd.s32 %v4267, 127
      %v4269 = vshll.u32 %v4268, 23
      %v4270 = vor.u32 4788187, %v4269
      %v4271 = vand.u32 2147483647, %v4270
      %v4273 = vcvt.s32.f32 %v4266
      %v4274 = vmul.f32 %v4273, %v4271
      %v4275 = vxor.u32 %v4274, 2147483648
      %v4276 = vsel %vm4193, %v4275, %v4274
      %v4277 = vsub.s32 4, %v4253
      %v4278 = vsel %vm4193, %v4277, %v4253
      %v4279 = vsel %vm4192, %v1481, %v4276
      %v4280 = vsel %vm4192, 0, %v4278
      %v4281 = vcosq.f32.pop %v4279
      %v4282 = vsinq.f32.pop %v4279
      %vm4283 = vweird.f32 %v1481
      %v4284 = vadd.s32 %v4280, 3
      %v4285 = vand.u32 %v4284, 3
      %vm4286 = vcmp.lt.s32.totalorder %v4285, 2
      %vm4287 = vcmp.eq.s32.totalorder %v4285, 0
      %v4288 = vxor.u32 %v4282, 2147483648
      %v4289 = vsel %vm4287, %v4281, %v4288
      %vm4290 = vcmp.eq.s32.totalorder %v4285, 2
      %v4291 = vxor.u32 %v4281, 2147483648
      %v4292 = vsel %vm4290, %v4291, %v4282
      %v4293 = vsel %vm4286, %v4289, %v4292
      %v4294 = vsel %vm4283, nan, %v4293
      %v4295 = vand.u32 2147483647, %v1482
      %vm4296 = vcmp.le.f32.partialorder %v4295, 0.7853982
      %vm4297 = vcmp.lt.s32.totalorder %v1482, 0
      %v4298 = vand.u32 %v1482, 2139095040
      %v4299 = vshrl.u32 %v4298, 23
      %v4300 = vsub.s32 %v4299, 127
      %v4301 = vand.u32 2147483647, %v1482
      %v4302 = vand.u32 %v4301, 8388607
      %v4303 = vor.u32 %v4302, 8388608
      %v4304 = vsub.s32 0, %v4303
      %v4305 = vadd.s32 %v4300, 1
      %vm4306 = vcmp.gt.s32.totalorder %v4305, 0
      %v4307 = vsel %vm4306, %v4305, 0
      %v4308 = vshrl.u32 %v4307, 5
      %v4309 = vand.u32 %v4307, 31
      %v4310 = vsub.s32 32, %v4309
      %v4311 = vshrl.u32 683565275, %v4310
      %v4312 = vshll.u32 683565275, %v4309
      %v4313 = vshrl.u32 2475754826, %v4310
      %v4314 = vor.u32 %v4312, %v4313
      %v4315 = vshll.u32 2475754826, %v4309
      %v4316 = vshrl.u32 2131351028, %v4310
      %v4317 = vor.u32 %v4315, %v4316
      %v4318 = vshll.u32 2131351028, %v4309
      %v4319 = vshrl.u32 2102212464, %v4310
      %v4320 = vor.u32 %v4318, %v4319
      %v4321 = vshll.u32 2102212464, %v4309
      %v4322 = vshrl.u32 920167782, %v4310
      %v4323 = vor.u32 %v4321, %v4322
      %v4324 = vshll.u32 920167782, %v4309
      %v4325 = vshrl.u32 1326507024, %v4310
      %v4326 = vor.u32 %v4324, %v4325
      %vm4327 = vcmp.lt.s32.totalorder %v4308, 1
      %vm4328 = vcmp.lt.s32.totalorder %v4308, 2
      %vm4329 = vcmp.lt.s32.totalorder %v4308, 3
      %vm4330 = vcmp.lt.s32.totalorder %v4308, 4
      %v4331 = vsel %vm4327, %v4311, %v4314
      %v4332 = vsel %vm4330, %v4320, 2102212464
      %v4333 = vsel %vm4329, %v4317, %v4332
      %v4334 = vsel %vm4328, %v4331, %v4333
      %v4335 = vsel %vm4327, %v4314, %v4317
      %v4336 = vsel %vm4330, %v4323, 920167782
      %v4337 = vsel %vm4329, %v4320, %v4336
      %v4338 = vsel %vm4328, %v4335, %v4337
      %v4339 = vsel %vm4327, %v4317, %v4320
      %v4340 = vsel %vm4330, %v4326, 1326507024
      %v4341 = vsel %vm4329, %v4323, %v4340
      %v4342 = vsel %vm4328, %v4339, %v4341
      %v4343 = vshll.u32 %v4303, 8
      %v4344 = vmul.u32.u64.compose %v4343, %v4342
      %v4345 = vextract.low.u32 %v4344
      %v4346 = vextract.high.u32 %v4344
      %v4347 = vmul.u32.u64.compose %v4343, %v4338
      %v4348 = vextract.low.u32 %v4347
      %v4349 = vextract.high.u32 %v4347
      %v4350 = vmul.u32 %v4343, %v4334
      %v4351 = vadd.s32 %v4346, %v4348
      %vm4352 = vc.u32 %v4346, %v4348
      %v4353 = vadd.s32 %v4349, 1
      %v4354 = vsel %vm4352, %v4353, %v4349
      %v4355 = vadd.s32 %v4350, %v4354
      %v4356 = vadd.s32 %v4355, 536870912
      %v4357 = vshrl.u32 %v4356, 30
      %v4358 = vshll.u32 %v4357, 30
      %v4359 = vsub.s32 %v4355, %v4358
      %vm4360 = vcmp.lt.s32.totalorder %v4359, 0
      %v4361 = vsub.s32 0, %v4359
      %v4362 = vsel %vm4360, %v4361, %v4359
      %v4363 = vclz %v4362
      %v4364 = vsub.s32 %v4363, 2
      %vm4365 = vcmp.gt.s32.totalorder 0, %v4364
      %v4366 = vsel %vm4365, 0, %v4364
      %v4367 = vsub.s32 32, %v4366
      %v4368 = vshll.u32 %v4359, %v4366
      %v4369 = vshrl.u32 %v4351, %v4367
      %v4370 = vor.u32 %v4368, %v4369
      %v4371 = vsub.s32 4294967266, %v4366
      %v4372 = vadd.s32 %v4371, 127
      %v4373 = vshll.u32 %v4372, 23
      %v4374 = vor.u32 4788187, %v4373
      %v4375 = vand.u32 2147483647, %v4374
      %v4377 = vcvt.s32.f32 %v4370
      %v4378 = vmul.f32 %v4377, %v4375
      %v4379 = vxor.u32 %v4378, 2147483648
      %v4380 = vsel %vm4297, %v4379, %v4378
      %v4381 = vsub.s32 4, %v4357
      %v4382 = vsel %vm4297, %v4381, %v4357
      %v4383 = vsel %vm4296, %v1482, %v4380
      %v4384 = vsel %vm4296, 0, %v4382
      %v4385 = vcosq.f32.pop %v4383
      %v4386 = vsinq.f32.pop %v4383
      %vm4387 = vweird.f32 %v1482
      %v4388 = vadd.s32 %v4384, 3
      %v4389 = vand.u32 %v4388, 3
      %vm4390 = vcmp.lt.s32.totalorder %v4389, 2
      %vm4391 = vcmp.eq.s32.totalorder %v4389, 0
      %v4392 = vxor.u32 %v4386, 2147483648
      %v4393 = vsel %vm4391, %v4385, %v4392
      %vm4394 = vcmp.eq.s32.totalorder %v4389, 2
      %v4395 = vxor.u32 %v4385, 2147483648
      %v4396 = vsel %vm4394, %v4395, %v4386
      %v4397 = vsel %vm4390, %v4393, %v4396
      %v4398 = vsel %vm4387, nan, %v4397
      %v4399 = vand.u32 2147483647, %v1483
      %vm4400 = vcmp.le.f32.partialorder %v4399, 0.7853982
      %vm4401 = vcmp.lt.s32.totalorder %v1483, 0
      %v4402 = vand.u32 %v1483, 2139095040
      %v4403 = vshrl.u32 %v4402, 23
      %v4404 = vsub.s32 %v4403, 127
      %v4405 = vand.u32 2147483647, %v1483
      %v4406 = vand.u32 %v4405, 8388607
      %v4407 = vor.u32 %v4406, 8388608
      %v4408 = vsub.s32 0, %v4407
      %v4409 = vadd.s32 %v4404, 1
      %vm4410 = vcmp.gt.s32.totalorder %v4409, 0
      %v4411 = vsel %vm4410, %v4409, 0
      %v4412 = vshrl.u32 %v4411, 5
      %v4413 = vand.u32 %v4411, 31
      %v4414 = vsub.s32 32, %v4413
      %v4415 = vshrl.u32 683565275, %v4414
      %v4416 = vshll.u32 683565275, %v4413
      %v4417 = vshrl.u32 2475754826, %v4414
      %v4418 = vor.u32 %v4416, %v4417
      %v4419 = vshll.u32 2475754826, %v4413
      %v4420 = vshrl.u32 2131351028, %v4414
      %v4421 = vor.u32 %v4419, %v4420
      %v4422 = vshll.u32 2131351028, %v4413
      %v4423 = vshrl.u32 2102212464, %v4414
      %v4424 = vor.u32 %v4422, %v4423
      %v4425 = vshll.u32 2102212464, %v4413
      %v4426 = vshrl.u32 920167782, %v4414
      %v4427 = vor.u32 %v4425, %v4426
      %v4428 = vshll.u32 920167782, %v4413
      %v4429 = vshrl.u32 1326507024, %v4414
      %v4430 = vor.u32 %v4428, %v4429
      %vm4431 = vcmp.lt.s32.totalorder %v4412, 1
      %vm4432 = vcmp.lt.s32.totalorder %v4412, 2
      %vm4433 = vcmp.lt.s32.totalorder %v4412, 3
      %vm4434 = vcmp.lt.s32.totalorder %v4412, 4
      %v4435 = vsel %vm4431, %v4415, %v4418
      %v4436 = vsel %vm4434, %v4424, 2102212464
      %v4437 = vsel %vm4433, %v4421, %v4436
      %v4438 = vsel %vm4432, %v4435, %v4437
      %v4439 = vsel %vm4431, %v4418, %v4421
      %v4440 = vsel %vm4434, %v4427, 920167782
      %v4441 = vsel %vm4433, %v4424, %v4440
      %v4442 = vsel %vm4432, %v4439, %v4441
      %v4443 = vsel %vm4431, %v4421, %v4424
      %v4444 = vsel %vm4434, %v4430, 1326507024
      %v4445 = vsel %vm4433, %v4427, %v4444
      %v4446 = vsel %vm4432, %v4443, %v4445
      %v4447 = vshll.u32 %v4407, 8
      %v4448 = vmul.u32.u64.compose %v4447, %v4446
      %v4449 = vextract.low.u32 %v4448
      %v4450 = vextract.high.u32 %v4448
      %v4451 = vmul.u32.u64.compose %v4447, %v4442
      %v4452 = vextract.low.u32 %v4451
      %v4453 = vextract.high.u32 %v4451
      %v4454 = vmul.u32 %v4447, %v4438
      %v4455 = vadd.s32 %v4450, %v4452
      %vm4456 = vc.u32 %v4450, %v4452
      %v4457 = vadd.s32 %v4453, 1
      %v4458 = vsel %vm4456, %v4457, %v4453
      %v4459 = vadd.s32 %v4454, %v4458
      %v4460 = vadd.s32 %v4459, 536870912
      %v4461 = vshrl.u32 %v4460, 30
      %v4462 = vshll.u32 %v4461, 30
      %v4463 = vsub.s32 %v4459, %v4462
      %vm4464 = vcmp.lt.s32.totalorder %v4463, 0
      %v4465 = vsub.s32 0, %v4463
      %v4466 = vsel %vm4464, %v4465, %v4463
      %v4467 = vclz %v4466
      %v4468 = vsub.s32 %v4467, 2
      %vm4469 = vcmp.gt.s32.totalorder 0, %v4468
      %v4470 = vsel %vm4469, 0, %v4468
      %v4471 = vsub.s32 32, %v4470
      %v4472 = vshll.u32 %v4463, %v4470
      %v4473 = vshrl.u32 %v4455, %v4471
      %v4474 = vor.u32 %v4472, %v4473
      %v4475 = vsub.s32 4294967266, %v4470
      %v4476 = vadd.s32 %v4475, 127
      %v4477 = vshll.u32 %v4476, 23
      %v4478 = vor.u32 4788187, %v4477
      %v4479 = vand.u32 2147483647, %v4478
      %v4481 = vcvt.s32.f32 %v4474
      %v4482 = vmul.f32 %v4481, %v4479
      %v4483 = vxor.u32 %v4482, 2147483648
      %v4484 = vsel %vm4401, %v4483, %v4482
      %v4485 = vsub.s32 4, %v4461
      %v4486 = vsel %vm4401, %v4485, %v4461
      %v4487 = vsel %vm4400, %v1483, %v4484
      %v4488 = vsel %vm4400, 0, %v4486
      %v4489 = vcosq.f32.pop %v4487
      %v4490 = vsinq.f32.pop %v4487
      %vm4491 = vweird.f32 %v1483
      %v4492 = vadd.s32 %v4488, 3
      %v4493 = vand.u32 %v4492, 3
      %vm4494 = vcmp.lt.s32.totalorder %v4493, 2
      %vm4495 = vcmp.eq.s32.totalorder %v4493, 0
      %v4496 = vxor.u32 %v4490, 2147483648
      %v4497 = vsel %vm4495, %v4489, %v4496
      %vm4498 = vcmp.eq.s32.totalorder %v4493, 2
      %v4499 = vxor.u32 %v4489, 2147483648
      %v4500 = vsel %vm4498, %v4499, %v4490
      %v4501 = vsel %vm4494, %v4497, %v4500
      %v4502 = vsel %vm4491, nan, %v4501
      %v4503 = vand.u32 2147483647, %v1484
      %vm4504 = vcmp.le.f32.partialorder %v4503, 0.7853982
      %vm4505 = vcmp.lt.s32.totalorder %v1484, 0
      %v4506 = vand.u32 %v1484, 2139095040
      %v4507 = vshrl.u32 %v4506, 23
      %v4508 = vsub.s32 %v4507, 127
      %v4509 = vand.u32 2147483647, %v1484
      %v4510 = vand.u32 %v4509, 8388607
      %v4511 = vor.u32 %v4510, 8388608
      %v4512 = vsub.s32 0, %v4511
      %v4513 = vadd.s32 %v4508, 1
      %vm4514 = vcmp.gt.s32.totalorder %v4513, 0
      %v4515 = vsel %vm4514, %v4513, 0
      %v4516 = vshrl.u32 %v4515, 5
      %v4517 = vand.u32 %v4515, 31
      %v4518 = vsub.s32 32, %v4517
      %v4519 = vshrl.u32 683565275, %v4518
      %v4520 = vshll.u32 683565275, %v4517
      %v4521 = vshrl.u32 2475754826, %v4518
      %v4522 = vor.u32 %v4520, %v4521
      %v4523 = vshll.u32 2475754826, %v4517
      %v4524 = vshrl.u32 2131351028, %v4518
      %v4525 = vor.u32 %v4523, %v4524
      %v4526 = vshll.u32 2131351028, %v4517
      %v4527 = vshrl.u32 2102212464, %v4518
      %v4528 = vor.u32 %v4526, %v4527
      %v4529 = vshll.u32 2102212464, %v4517
      %v4530 = vshrl.u32 920167782, %v4518
      %v4531 = vor.u32 %v4529, %v4530
      %v4532 = vshll.u32 920167782, %v4517
      %v4533 = vshrl.u32 1326507024, %v4518
      %v4534 = vor.u32 %v4532, %v4533
      %vm4535 = vcmp.lt.s32.totalorder %v4516, 1
      %vm4536 = vcmp.lt.s32.totalorder %v4516, 2
      %vm4537 = vcmp.lt.s32.totalorder %v4516, 3
      %vm4538 = vcmp.lt.s32.totalorder %v4516, 4
      %v4539 = vsel %vm4535, %v4519, %v4522
      %v4540 = vsel %vm4538, %v4528, 2102212464
      %v4541 = vsel %vm4537, %v4525, %v4540
      %v4542 = vsel %vm4536, %v4539, %v4541
      %v4543 = vsel %vm4535, %v4522, %v4525
      %v4544 = vsel %vm4538, %v4531, 920167782
      %v4545 = vsel %vm4537, %v4528, %v4544
      %v4546 = vsel %vm4536, %v4543, %v4545
      %v4547 = vsel %vm4535, %v4525, %v4528
      %v4548 = vsel %vm4538, %v4534, 1326507024
      %v4549 = vsel %vm4537, %v4531, %v4548
      %v4550 = vsel %vm4536, %v4547, %v4549
      %v4551 = vshll.u32 %v4511, 8
      %v4552 = vmul.u32.u64.compose %v4551, %v4550
      %v4553 = vextract.low.u32 %v4552
      %v4554 = vextract.high.u32 %v4552
      %v4555 = vmul.u32.u64.compose %v4551, %v4546
      %v4556 = vextract.low.u32 %v4555
      %v4557 = vextract.high.u32 %v4555
      %v4558 = vmul.u32 %v4551, %v4542
      %v4559 = vadd.s32 %v4554, %v4556
      %vm4560 = vc.u32 %v4554, %v4556
      %v4561 = vadd.s32 %v4557, 1
      %v4562 = vsel %vm4560, %v4561, %v4557
      %v4563 = vadd.s32 %v4558, %v4562
      %v4564 = vadd.s32 %v4563, 536870912
      %v4565 = vshrl.u32 %v4564, 30
      %v4566 = vshll.u32 %v4565, 30
      %v4567 = vsub.s32 %v4563, %v4566
      %vm4568 = vcmp.lt.s32.totalorder %v4567, 0
      %v4569 = vsub.s32 0, %v4567
      %v4570 = vsel %vm4568, %v4569, %v4567
      %v4571 = vclz %v4570
      %v4572 = vsub.s32 %v4571, 2
      %vm4573 = vcmp.gt.s32.totalorder 0, %v4572
      %v4574 = vsel %vm4573, 0, %v4572
      %v4575 = vsub.s32 32, %v4574
      %v4576 = vshll.u32 %v4567, %v4574
      %v4577 = vshrl.u32 %v4559, %v4575
      %v4578 = vor.u32 %v4576, %v4577
      %v4579 = vsub.s32 4294967266, %v4574
      %v4580 = vadd.s32 %v4579, 127
      %v4581 = vshll.u32 %v4580, 23
      %v4582 = vor.u32 4788187, %v4581
      %v4583 = vand.u32 2147483647, %v4582
      %v4585 = vcvt.s32.f32 %v4578
      %v4586 = vmul.f32 %v4585, %v4583
      %v4587 = vxor.u32 %v4586, 2147483648
      %v4588 = vsel %vm4505, %v4587, %v4586
      %v4589 = vsub.s32 4, %v4565
      %v4590 = vsel %vm4505, %v4589, %v4565
      %v4591 = vsel %vm4504, %v1484, %v4588
      %v4592 = vsel %vm4504, 0, %v4590
      %v4593 = vcosq.f32.pop %v4591
      %v4594 = vsinq.f32.pop %v4591
      %vm4595 = vweird.f32 %v1484
      %v4596 = vadd.s32 %v4592, 3
      %v4597 = vand.u32 %v4596, 3
      %vm4598 = vcmp.lt.s32.totalorder %v4597, 2
      %vm4599 = vcmp.eq.s32.totalorder %v4597, 0
      %v4600 = vxor.u32 %v4594, 2147483648
      %v4601 = vsel %vm4599, %v4593, %v4600
      %vm4602 = vcmp.eq.s32.totalorder %v4597, 2
      %v4603 = vxor.u32 %v4593, 2147483648
      %v4604 = vsel %vm4602, %v4603, %v4594
      %v4605 = vsel %vm4598, %v4601, %v4604
      %v4606 = vsel %vm4595, nan, %v4605
      %v4607 = vand.u32 2147483647, %v1485
      %vm4608 = vcmp.le.f32.partialorder %v4607, 0.7853982
      %vm4609 = vcmp.lt.s32.totalorder %v1485, 0
      %v4610 = vand.u32 %v1485, 2139095040
      %v4611 = vshrl.u32 %v4610, 23
      %v4612 = vsub.s32 %v4611, 127
      %v4613 = vand.u32 2147483647, %v1485
      %v4614 = vand.u32 %v4613, 8388607
      %v4615 = vor.u32 %v4614, 8388608
      %v4616 = vsub.s32 0, %v4615
      %v4617 = vadd.s32 %v4612, 1
      %vm4618 = vcmp.gt.s32.totalorder %v4617, 0
      %v4619 = vsel %vm4618, %v4617, 0
      %v4620 = vshrl.u32 %v4619, 5
      %v4621 = vand.u32 %v4619, 31
      %v4622 = vsub.s32 32, %v4621
      %v4623 = vshrl.u32 683565275, %v4622
      %v4624 = vshll.u32 683565275, %v4621
      %v4625 = vshrl.u32 2475754826, %v4622
      %v4626 = vor.u32 %v4624, %v4625
      %v4627 = vshll.u32 2475754826, %v4621
      %v4628 = vshrl.u32 2131351028, %v4622
      %v4629 = vor.u32 %v4627, %v4628
      %v4630 = vshll.u32 2131351028, %v4621
      %v4631 = vshrl.u32 2102212464, %v4622
      %v4632 = vor.u32 %v4630, %v4631
      %v4633 = vshll.u32 2102212464, %v4621
      %v4634 = vshrl.u32 920167782, %v4622
      %v4635 = vor.u32 %v4633, %v4634
      %v4636 = vshll.u32 920167782, %v4621
      %v4637 = vshrl.u32 1326507024, %v4622
      %v4638 = vor.u32 %v4636, %v4637
      %vm4639 = vcmp.lt.s32.totalorder %v4620, 1
      %vm4640 = vcmp.lt.s32.totalorder %v4620, 2
      %vm4641 = vcmp.lt.s32.totalorder %v4620, 3
      %vm4642 = vcmp.lt.s32.totalorder %v4620, 4
      %v4643 = vsel %vm4639, %v4623, %v4626
      %v4644 = vsel %vm4642, %v4632, 2102212464
      %v4645 = vsel %vm4641, %v4629, %v4644
      %v4646 = vsel %vm4640, %v4643, %v4645
      %v4647 = vsel %vm4639, %v4626, %v4629
      %v4648 = vsel %vm4642, %v4635, 920167782
      %v4649 = vsel %vm4641, %v4632, %v4648
      %v4650 = vsel %vm4640, %v4647, %v4649
      %v4651 = vsel %vm4639, %v4629, %v4632
      %v4652 = vsel %vm4642, %v4638, 1326507024
      %v4653 = vsel %vm4641, %v4635, %v4652
      %v4654 = vsel %vm4640, %v4651, %v4653
      %v4655 = vshll.u32 %v4615, 8
      %v4656 = vmul.u32.u64.compose %v4655, %v4654
      %v4657 = vextract.low.u32 %v4656
      %v4658 = vextract.high.u32 %v4656
      %v4659 = vmul.u32.u64.compose %v4655, %v4650
      %v4660 = vextract.low.u32 %v4659
      %v4661 = vextract.high.u32 %v4659
      %v4662 = vmul.u32 %v4655, %v4646
      %v4663 = vadd.s32 %v4658, %v4660
      %vm4664 = vc.u32 %v4658, %v4660
      %v4665 = vadd.s32 %v4661, 1
      %v4666 = vsel %vm4664, %v4665, %v4661
      %v4667 = vadd.s32 %v4662, %v4666
      %v4668 = vadd.s32 %v4667, 536870912
      %v4669 = vshrl.u32 %v4668, 30
      %v4670 = vshll.u32 %v4669, 30
      %v4671 = vsub.s32 %v4667, %v4670
      %vm4672 = vcmp.lt.s32.totalorder %v4671, 0
      %v4673 = vsub.s32 0, %v4671
      %v4674 = vsel %vm4672, %v4673, %v4671
      %v4675 = vclz %v4674
      %v4676 = vsub.s32 %v4675, 2
      %vm4677 = vcmp.gt.s32.totalorder 0, %v4676
      %v4678 = vsel %vm4677, 0, %v4676
      %v4679 = vsub.s32 32, %v4678
      %v4680 = vshll.u32 %v4671, %v4678
      %v4681 = vshrl.u32 %v4663, %v4679
      %v4682 = vor.u32 %v4680, %v4681
      %v4683 = vsub.s32 4294967266, %v4678
      %v4684 = vadd.s32 %v4683, 127
      %v4685 = vshll.u32 %v4684, 23
      %v4686 = vor.u32 4788187, %v4685
      %v4687 = vand.u32 2147483647, %v4686
      %v4689 = vcvt.s32.f32 %v4682
      %v4690 = vmul.f32 %v4689, %v4687
      %v4691 = vxor.u32 %v4690, 2147483648
      %v4692 = vsel %vm4609, %v4691, %v4690
      %v4693 = vsub.s32 4, %v4669
      %v4694 = vsel %vm4609, %v4693, %v4669
      %v4695 = vsel %vm4608, %v1485, %v4692
      %v4696 = vsel %vm4608, 0, %v4694
      %v4697 = vcosq.f32.pop %v4695
      %v4698 = vsinq.f32.pop %v4695
      %vm4699 = vweird.f32 %v1485
      %v4700 = vadd.s32 %v4696, 3
      %v4701 = vand.u32 %v4700, 3
      %vm4702 = vcmp.lt.s32.totalorder %v4701, 2
      %vm4703 = vcmp.eq.s32.totalorder %v4701, 0
      %v4704 = vxor.u32 %v4698, 2147483648
      %v4705 = vsel %vm4703, %v4697, %v4704
      %vm4706 = vcmp.eq.s32.totalorder %v4701, 2
      %v4707 = vxor.u32 %v4697, 2147483648
      %v4708 = vsel %vm4706, %v4707, %v4698
      %v4709 = vsel %vm4702, %v4705, %v4708
      %v4710 = vsel %vm4699, nan, %v4709
      %v4711 = vand.u32 2147483647, %v1486
      %vm4712 = vcmp.le.f32.partialorder %v4711, 0.7853982
      %vm4713 = vcmp.lt.s32.totalorder %v1486, 0
      %v4714 = vand.u32 %v1486, 2139095040
      %v4715 = vshrl.u32 %v4714, 23
      %v4716 = vsub.s32 %v4715, 127
      %v4717 = vand.u32 2147483647, %v1486
      %v4718 = vand.u32 %v4717, 8388607
      %v4719 = vor.u32 %v4718, 8388608
      %v4720 = vsub.s32 0, %v4719
      %v4721 = vadd.s32 %v4716, 1
      %vm4722 = vcmp.gt.s32.totalorder %v4721, 0
      %v4723 = vsel %vm4722, %v4721, 0
      %v4724 = vshrl.u32 %v4723, 5
      %v4725 = vand.u32 %v4723, 31
      %v4726 = vsub.s32 32, %v4725
      %v4727 = vshrl.u32 683565275, %v4726
      %v4728 = vshll.u32 683565275, %v4725
      %v4729 = vshrl.u32 2475754826, %v4726
      %v4730 = vor.u32 %v4728, %v4729
      %v4731 = vshll.u32 2475754826, %v4725
      %v4732 = vshrl.u32 2131351028, %v4726
      %v4733 = vor.u32 %v4731, %v4732
      %v4734 = vshll.u32 2131351028, %v4725
      %v4735 = vshrl.u32 2102212464, %v4726
      %v4736 = vor.u32 %v4734, %v4735
      %v4737 = vshll.u32 2102212464, %v4725
      %v4738 = vshrl.u32 920167782, %v4726
      %v4739 = vor.u32 %v4737, %v4738
      %v4740 = vshll.u32 920167782, %v4725
      %v4741 = vshrl.u32 1326507024, %v4726
      %v4742 = vor.u32 %v4740, %v4741
      %vm4743 = vcmp.lt.s32.totalorder %v4724, 1
      %vm4744 = vcmp.lt.s32.totalorder %v4724, 2
      %vm4745 = vcmp.lt.s32.totalorder %v4724, 3
      %vm4746 = vcmp.lt.s32.totalorder %v4724, 4
      %v4747 = vsel %vm4743, %v4727, %v4730
      %v4748 = vsel %vm4746, %v4736, 2102212464
      %v4749 = vsel %vm4745, %v4733, %v4748
      %v4750 = vsel %vm4744, %v4747, %v4749
      %v4751 = vsel %vm4743, %v4730, %v4733
      %v4752 = vsel %vm4746, %v4739, 920167782
      %v4753 = vsel %vm4745, %v4736, %v4752
      %v4754 = vsel %vm4744, %v4751, %v4753
      %v4755 = vsel %vm4743, %v4733, %v4736
      %v4756 = vsel %vm4746, %v4742, 1326507024
      %v4757 = vsel %vm4745, %v4739, %v4756
      %v4758 = vsel %vm4744, %v4755, %v4757
      %v4759 = vshll.u32 %v4719, 8
      %v4760 = vmul.u32.u64.compose %v4759, %v4758
      %v4761 = vextract.low.u32 %v4760
      %v4762 = vextract.high.u32 %v4760
      %v4763 = vmul.u32.u64.compose %v4759, %v4754
      %v4764 = vextract.low.u32 %v4763
      %v4765 = vextract.high.u32 %v4763
      %v4766 = vmul.u32 %v4759, %v4750
      %v4767 = vadd.s32 %v4762, %v4764
      %vm4768 = vc.u32 %v4762, %v4764
      %v4769 = vadd.s32 %v4765, 1
      %v4770 = vsel %vm4768, %v4769, %v4765
      %v4771 = vadd.s32 %v4766, %v4770
      %v4772 = vadd.s32 %v4771, 536870912
      %v4773 = vshrl.u32 %v4772, 30
      %v4774 = vshll.u32 %v4773, 30
      %v4775 = vsub.s32 %v4771, %v4774
      %vm4776 = vcmp.lt.s32.totalorder %v4775, 0
      %v4777 = vsub.s32 0, %v4775
      %v4778 = vsel %vm4776, %v4777, %v4775
      %v4779 = vclz %v4778
      %v4780 = vsub.s32 %v4779, 2
      %vm4781 = vcmp.gt.s32.totalorder 0, %v4780
      %v4782 = vsel %vm4781, 0, %v4780
      %v4783 = vsub.s32 32, %v4782
      %v4784 = vshll.u32 %v4775, %v4782
      %v4785 = vshrl.u32 %v4767, %v4783
      %v4786 = vor.u32 %v4784, %v4785
      %v4787 = vsub.s32 4294967266, %v4782
      %v4788 = vadd.s32 %v4787, 127
      %v4789 = vshll.u32 %v4788, 23
      %v4790 = vor.u32 4788187, %v4789
      %v4791 = vand.u32 2147483647, %v4790
      %v4793 = vcvt.s32.f32 %v4786
      %v4794 = vmul.f32 %v4793, %v4791
      %v4795 = vxor.u32 %v4794, 2147483648
      %v4796 = vsel %vm4713, %v4795, %v4794
      %v4797 = vsub.s32 4, %v4773
      %v4798 = vsel %vm4713, %v4797, %v4773
      %v4799 = vsel %vm4712, %v1486, %v4796
      %v4800 = vsel %vm4712, 0, %v4798
      %v4801 = vcosq.f32.pop %v4799
      %v4802 = vsinq.f32.pop %v4799
      %vm4803 = vweird.f32 %v1486
      %v4804 = vadd.s32 %v4800, 3
      %v4805 = vand.u32 %v4804, 3
      %vm4806 = vcmp.lt.s32.totalorder %v4805, 2
      %vm4807 = vcmp.eq.s32.totalorder %v4805, 0
      %v4808 = vxor.u32 %v4802, 2147483648
      %v4809 = vsel %vm4807, %v4801, %v4808
      %vm4810 = vcmp.eq.s32.totalorder %v4805, 2
      %v4811 = vxor.u32 %v4801, 2147483648
      %v4812 = vsel %vm4810, %v4811, %v4802
      %v4813 = vsel %vm4806, %v4809, %v4812
      %v4814 = vsel %vm4803, nan, %v4813
      %v4815 = vpack.c.bf16 %v1694, %v1590
      %v4816 = vpack.c.bf16 %v1902, %v1798
      %v4817 = vpack.c.bf16 %v2110, %v2006
      %v4818 = vpack.c.bf16 %v2318, %v2214
      %v4819 = vpack.c.bf16 %v2526, %v2422
      %v4820 = vpack.c.bf16 %v2734, %v2630
      %v4821 = vpack.c.bf16 %v2942, %v2838
      %v4822 = vpack.c.bf16 %v3150, %v3046
      %v4823 = vpack.c.bf16 %v3358, %v3254
      %v4824 = vpack.c.bf16 %v3566, %v3462
      %v4825 = vpack.c.bf16 %v3774, %v3670
      %v4826 = vpack.c.bf16 %v3982, %v3878
      %v4827 = vpack.c.bf16 %v4190, %v4086
      %v4828 = vpack.c.bf16 %v4398, %v4294
      %v4829 = vpack.c.bf16 %v4606, %v4502
      %v4830 = vpack.c.bf16 %v4814, %v4710
      %v4831 = vand.u32 2147483647, %v1455
      %vm4832 = vcmp.le.f32.partialorder %v4831, 0.7853982
      %vm4833 = vcmp.lt.s32.totalorder %v1455, 0
      %v4834 = vand.u32 %v1455, 2139095040
      %v4835 = vshrl.u32 %v4834, 23
      %v4836 = vsub.s32 %v4835, 127
      %v4837 = vand.u32 2147483647, %v1455
      %v4838 = vand.u32 %v4837, 8388607
      %v4839 = vor.u32 %v4838, 8388608
      %v4840 = vsub.s32 0, %v4839
      %v4841 = vadd.s32 %v4836, 1
      %vm4842 = vcmp.gt.s32.totalorder %v4841, 0
      %v4843 = vsel %vm4842, %v4841, 0
      %v4844 = vshrl.u32 %v4843, 5
      %v4845 = vand.u32 %v4843, 31
      %v4846 = vsub.s32 32, %v4845
      %v4847 = vshrl.u32 683565275, %v4846
      %v4848 = vshll.u32 683565275, %v4845
      %v4849 = vshrl.u32 2475754826, %v4846
      %v4850 = vor.u32 %v4848, %v4849
      %v4851 = vshll.u32 2475754826, %v4845
      %v4852 = vshrl.u32 2131351028, %v4846
      %v4853 = vor.u32 %v4851, %v4852
      %v4854 = vshll.u32 2131351028, %v4845
      %v4855 = vshrl.u32 2102212464, %v4846
      %v4856 = vor.u32 %v4854, %v4855
      %v4857 = vshll.u32 2102212464, %v4845
      %v4858 = vshrl.u32 920167782, %v4846
      %v4859 = vor.u32 %v4857, %v4858
      %v4860 = vshll.u32 920167782, %v4845
      %v4861 = vshrl.u32 1326507024, %v4846
      %v4862 = vor.u32 %v4860, %v4861
      %vm4863 = vcmp.lt.s32.totalorder %v4844, 1
      %vm4864 = vcmp.lt.s32.totalorder %v4844, 2
      %vm4865 = vcmp.lt.s32.totalorder %v4844, 3
      %vm4866 = vcmp.lt.s32.totalorder %v4844, 4
      %v4867 = vsel %vm4863, %v4847, %v4850
      %v4868 = vsel %vm4866, %v4856, 2102212464
      %v4869 = vsel %vm4865, %v4853, %v4868
      %v4870 = vsel %vm4864, %v4867, %v4869
      %v4871 = vsel %vm4863, %v4850, %v4853
      %v4872 = vsel %vm4866, %v4859, 920167782
      %v4873 = vsel %vm4865, %v4856, %v4872
      %v4874 = vsel %vm4864, %v4871, %v4873
      %v4875 = vsel %vm4863, %v4853, %v4856
      %v4876 = vsel %vm4866, %v4862, 1326507024
      %v4877 = vsel %vm4865, %v4859, %v4876
      %v4878 = vsel %vm4864, %v4875, %v4877
      %v4879 = vshll.u32 %v4839, 8
      %v4880 = vmul.u32.u64.compose %v4879, %v4878
      %v4881 = vextract.low.u32 %v4880
      %v4882 = vextract.high.u32 %v4880
      %v4883 = vmul.u32.u64.compose %v4879, %v4874
      %v4884 = vextract.low.u32 %v4883
      %v4885 = vextract.high.u32 %v4883
      %v4886 = vmul.u32 %v4879, %v4870
      %v4887 = vadd.s32 %v4882, %v4884
      %vm4888 = vc.u32 %v4882, %v4884
      %v4889 = vadd.s32 %v4885, 1
      %v4890 = vsel %vm4888, %v4889, %v4885
      %v4891 = vadd.s32 %v4886, %v4890
      %v4892 = vadd.s32 %v4891, 536870912
      %v4893 = vshrl.u32 %v4892, 30
      %v4894 = vshll.u32 %v4893, 30
      %v4895 = vsub.s32 %v4891, %v4894
      %vm4896 = vcmp.lt.s32.totalorder %v4895, 0
      %v4897 = vsub.s32 0, %v4895
      %v4898 = vsel %vm4896, %v4897, %v4895
      %v4899 = vclz %v4898
      %v4900 = vsub.s32 %v4899, 2
      %vm4901 = vcmp.gt.s32.totalorder 0, %v4900
      %v4902 = vsel %vm4901, 0, %v4900
      %v4903 = vsub.s32 32, %v4902
      %v4904 = vshll.u32 %v4895, %v4902
      %v4905 = vshrl.u32 %v4887, %v4903
      %v4906 = vor.u32 %v4904, %v4905
      %v4907 = vsub.s32 4294967266, %v4902
      %v4908 = vadd.s32 %v4907, 127
      %v4909 = vshll.u32 %v4908, 23
      %v4910 = vor.u32 4788187, %v4909
      %v4911 = vand.u32 2147483647, %v4910
      %v4913 = vcvt.s32.f32 %v4906
      %v4914 = vmul.f32 %v4913, %v4911
      %v4915 = vxor.u32 %v4914, 2147483648
      %v4916 = vsel %vm4833, %v4915, %v4914
      %v4917 = vsub.s32 4, %v4893
      %v4918 = vsel %vm4833, %v4917, %v4893
      %v4919 = vsel %vm4832, %v1455, %v4916
      %v4920 = vsel %vm4832, 0, %v4918
      %v4921 = vcosq.f32.pop %v4919
      %v4922 = vsinq.f32.pop %v4919
      %vm4923 = vweird.f32 %v1455
      %v4924 = vand.u32 %v4920, 3
      %vm4925 = vcmp.lt.s32.totalorder %v4924, 2
      %vm4926 = vcmp.eq.s32.totalorder %v4924, 0
      %v4927 = vxor.u32 %v4922, 2147483648
      %v4928 = vsel %vm4926, %v4921, %v4927
      %vm4929 = vcmp.eq.s32.totalorder %v4924, 2
      %v4930 = vxor.u32 %v4921, 2147483648
      %v4931 = vsel %vm4929, %v4930, %v4922
      %v4932 = vsel %vm4925, %v4928, %v4931
      %v4933 = vsel %vm4923, nan, %v4932
      %v4934 = vand.u32 2147483647, %v1456
      %vm4935 = vcmp.le.f32.partialorder %v4934, 0.7853982
      %vm4936 = vcmp.lt.s32.totalorder %v1456, 0
      %v4937 = vand.u32 %v1456, 2139095040
      %v4938 = vshrl.u32 %v4937, 23
      %v4939 = vsub.s32 %v4938, 127
      %v4940 = vand.u32 2147483647, %v1456
      %v4941 = vand.u32 %v4940, 8388607
      %v4942 = vor.u32 %v4941, 8388608
      %v4943 = vsub.s32 0, %v4942
      %v4944 = vadd.s32 %v4939, 1
      %vm4945 = vcmp.gt.s32.totalorder %v4944, 0
      %v4946 = vsel %vm4945, %v4944, 0
      %v4947 = vshrl.u32 %v4946, 5
      %v4948 = vand.u32 %v4946, 31
      %v4949 = vsub.s32 32, %v4948
      %v4950 = vshrl.u32 683565275, %v4949
      %v4951 = vshll.u32 683565275, %v4948
      %v4952 = vshrl.u32 2475754826, %v4949
      %v4953 = vor.u32 %v4951, %v4952
      %v4954 = vshll.u32 2475754826, %v4948
      %v4955 = vshrl.u32 2131351028, %v4949
      %v4956 = vor.u32 %v4954, %v4955
      %v4957 = vshll.u32 2131351028, %v4948
      %v4958 = vshrl.u32 2102212464, %v4949
      %v4959 = vor.u32 %v4957, %v4958
      %v4960 = vshll.u32 2102212464, %v4948
      %v4961 = vshrl.u32 920167782, %v4949
      %v4962 = vor.u32 %v4960, %v4961
      %v4963 = vshll.u32 920167782, %v4948
      %v4964 = vshrl.u32 1326507024, %v4949
      %v4965 = vor.u32 %v4963, %v4964
      %vm4966 = vcmp.lt.s32.totalorder %v4947, 1
      %vm4967 = vcmp.lt.s32.totalorder %v4947, 2
      %vm4968 = vcmp.lt.s32.totalorder %v4947, 3
      %vm4969 = vcmp.lt.s32.totalorder %v4947, 4
      %v4970 = vsel %vm4966, %v4950, %v4953
      %v4971 = vsel %vm4969, %v4959, 2102212464
      %v4972 = vsel %vm4968, %v4956, %v4971
      %v4973 = vsel %vm4967, %v4970, %v4972
      %v4974 = vsel %vm4966, %v4953, %v4956
      %v4975 = vsel %vm4969, %v4962, 920167782
      %v4976 = vsel %vm4968, %v4959, %v4975
      %v4977 = vsel %vm4967, %v4974, %v4976
      %v4978 = vsel %vm4966, %v4956, %v4959
      %v4979 = vsel %vm4969, %v4965, 1326507024
      %v4980 = vsel %vm4968, %v4962, %v4979
      %v4981 = vsel %vm4967, %v4978, %v4980
      %v4982 = vshll.u32 %v4942, 8
      %v4983 = vmul.u32.u64.compose %v4982, %v4981
      %v4984 = vextract.low.u32 %v4983
      %v4985 = vextract.high.u32 %v4983
      %v4986 = vmul.u32.u64.compose %v4982, %v4977
      %v4987 = vextract.low.u32 %v4986
      %v4988 = vextract.high.u32 %v4986
      %v4989 = vmul.u32 %v4982, %v4973
      %v4990 = vadd.s32 %v4985, %v4987
      %vm4991 = vc.u32 %v4985, %v4987
      %v4992 = vadd.s32 %v4988, 1
      %v4993 = vsel %vm4991, %v4992, %v4988
      %v4994 = vadd.s32 %v4989, %v4993
      %v4995 = vadd.s32 %v4994, 536870912
      %v4996 = vshrl.u32 %v4995, 30
      %v4997 = vshll.u32 %v4996, 30
      %v4998 = vsub.s32 %v4994, %v4997
      %vm4999 = vcmp.lt.s32.totalorder %v4998, 0
      %v5000 = vsub.s32 0, %v4998
      %v5001 = vsel %vm4999, %v5000, %v4998
      %v5002 = vclz %v5001
      %v5003 = vsub.s32 %v5002, 2
      %vm5004 = vcmp.gt.s32.totalorder 0, %v5003
      %v5005 = vsel %vm5004, 0, %v5003
      %v5006 = vsub.s32 32, %v5005
      %v5007 = vshll.u32 %v4998, %v5005
      %v5008 = vshrl.u32 %v4990, %v5006
      %v5009 = vor.u32 %v5007, %v5008
      %v5010 = vsub.s32 4294967266, %v5005
      %v5011 = vadd.s32 %v5010, 127
      %v5012 = vshll.u32 %v5011, 23
      %v5013 = vor.u32 4788187, %v5012
      %v5014 = vand.u32 2147483647, %v5013
      %v5016 = vcvt.s32.f32 %v5009
      %v5017 = vmul.f32 %v5016, %v5014
      %v5018 = vxor.u32 %v5017, 2147483648
      %v5019 = vsel %vm4936, %v5018, %v5017
      %v5020 = vsub.s32 4, %v4996
      %v5021 = vsel %vm4936, %v5020, %v4996
      %v5022 = vsel %vm4935, %v1456, %v5019
      %v5023 = vsel %vm4935, 0, %v5021
      %v5024 = vcosq.f32.pop %v5022
      %v5025 = vsinq.f32.pop %v5022
      %vm5026 = vweird.f32 %v1456
      %v5027 = vand.u32 %v5023, 3
      %vm5028 = vcmp.lt.s32.totalorder %v5027, 2
      %vm5029 = vcmp.eq.s32.totalorder %v5027, 0
      %v5030 = vxor.u32 %v5025, 2147483648
      %v5031 = vsel %vm5029, %v5024, %v5030
      %vm5032 = vcmp.eq.s32.totalorder %v5027, 2
      %v5033 = vxor.u32 %v5024, 2147483648
      %v5034 = vsel %vm5032, %v5033, %v5025
      %v5035 = vsel %vm5028, %v5031, %v5034
      %v5036 = vsel %vm5026, nan, %v5035
      %v5037 = vand.u32 2147483647, %v1457
      %vm5038 = vcmp.le.f32.partialorder %v5037, 0.7853982
      %vm5039 = vcmp.lt.s32.totalorder %v1457, 0
      %v5040 = vand.u32 %v1457, 2139095040
      %v5041 = vshrl.u32 %v5040, 23
      %v5042 = vsub.s32 %v5041, 127
      %v5043 = vand.u32 2147483647, %v1457
      %v5044 = vand.u32 %v5043, 8388607
      %v5045 = vor.u32 %v5044, 8388608
      %v5046 = vsub.s32 0, %v5045
      %v5047 = vadd.s32 %v5042, 1
      %vm5048 = vcmp.gt.s32.totalorder %v5047, 0
      %v5049 = vsel %vm5048, %v5047, 0
      %v5050 = vshrl.u32 %v5049, 5
      %v5051 = vand.u32 %v5049, 31
      %v5052 = vsub.s32 32, %v5051
      %v5053 = vshrl.u32 683565275, %v5052
      %v5054 = vshll.u32 683565275, %v5051
      %v5055 = vshrl.u32 2475754826, %v5052
      %v5056 = vor.u32 %v5054, %v5055
      %v5057 = vshll.u32 2475754826, %v5051
      %v5058 = vshrl.u32 2131351028, %v5052
      %v5059 = vor.u32 %v5057, %v5058
      %v5060 = vshll.u32 2131351028, %v5051
      %v5061 = vshrl.u32 2102212464, %v5052
      %v5062 = vor.u32 %v5060, %v5061
      %v5063 = vshll.u32 2102212464, %v5051
      %v5064 = vshrl.u32 920167782, %v5052
      %v5065 = vor.u32 %v5063, %v5064
      %v5066 = vshll.u32 920167782, %v5051
      %v5067 = vshrl.u32 1326507024, %v5052
      %v5068 = vor.u32 %v5066, %v5067
      %vm5069 = vcmp.lt.s32.totalorder %v5050, 1
      %vm5070 = vcmp.lt.s32.totalorder %v5050, 2
      %vm5071 = vcmp.lt.s32.totalorder %v5050, 3
      %vm5072 = vcmp.lt.s32.totalorder %v5050, 4
      %v5073 = vsel %vm5069, %v5053, %v5056
      %v5074 = vsel %vm5072, %v5062, 2102212464
      %v5075 = vsel %vm5071, %v5059, %v5074
      %v5076 = vsel %vm5070, %v5073, %v5075
      %v5077 = vsel %vm5069, %v5056, %v5059
      %v5078 = vsel %vm5072, %v5065, 920167782
      %v5079 = vsel %vm5071, %v5062, %v5078
      %v5080 = vsel %vm5070, %v5077, %v5079
      %v5081 = vsel %vm5069, %v5059, %v5062
      %v5082 = vsel %vm5072, %v5068, 1326507024
      %v5083 = vsel %vm5071, %v5065, %v5082
      %v5084 = vsel %vm5070, %v5081, %v5083
      %v5085 = vshll.u32 %v5045, 8
      %v5086 = vmul.u32.u64.compose %v5085, %v5084
      %v5087 = vextract.low.u32 %v5086
      %v5088 = vextract.high.u32 %v5086
      %v5089 = vmul.u32.u64.compose %v5085, %v5080
      %v5090 = vextract.low.u32 %v5089
      %v5091 = vextract.high.u32 %v5089
      %v5092 = vmul.u32 %v5085, %v5076
      %v5093 = vadd.s32 %v5088, %v5090
      %vm5094 = vc.u32 %v5088, %v5090
      %v5095 = vadd.s32 %v5091, 1
      %v5096 = vsel %vm5094, %v5095, %v5091
      %v5097 = vadd.s32 %v5092, %v5096
      %v5098 = vadd.s32 %v5097, 536870912
      %v5099 = vshrl.u32 %v5098, 30
      %v5100 = vshll.u32 %v5099, 30
      %v5101 = vsub.s32 %v5097, %v5100
      %vm5102 = vcmp.lt.s32.totalorder %v5101, 0
      %v5103 = vsub.s32 0, %v5101
      %v5104 = vsel %vm5102, %v5103, %v5101
      %v5105 = vclz %v5104
      %v5106 = vsub.s32 %v5105, 2
      %vm5107 = vcmp.gt.s32.totalorder 0, %v5106
      %v5108 = vsel %vm5107, 0, %v5106
      %v5109 = vsub.s32 32, %v5108
      %v5110 = vshll.u32 %v5101, %v5108
      %v5111 = vshrl.u32 %v5093, %v5109
      %v5112 = vor.u32 %v5110, %v5111
      %v5113 = vsub.s32 4294967266, %v5108
      %v5114 = vadd.s32 %v5113, 127
      %v5115 = vshll.u32 %v5114, 23
      %v5116 = vor.u32 4788187, %v5115
      %v5117 = vand.u32 2147483647, %v5116
      %v5119 = vcvt.s32.f32 %v5112
      %v5120 = vmul.f32 %v5119, %v5117
      %v5121 = vxor.u32 %v5120, 2147483648
      %v5122 = vsel %vm5039, %v5121, %v5120
      %v5123 = vsub.s32 4, %v5099
      %v5124 = vsel %vm5039, %v5123, %v5099
      %v5125 = vsel %vm5038, %v1457, %v5122
      %v5126 = vsel %vm5038, 0, %v5124
      %v5127 = vcosq.f32.pop %v5125
      %v5128 = vsinq.f32.pop %v5125
      %vm5129 = vweird.f32 %v1457
      %v5130 = vand.u32 %v5126, 3
      %vm5131 = vcmp.lt.s32.totalorder %v5130, 2
      %vm5132 = vcmp.eq.s32.totalorder %v5130, 0
      %v5133 = vxor.u32 %v5128, 2147483648
      %v5134 = vsel %vm5132, %v5127, %v5133
      %vm5135 = vcmp.eq.s32.totalorder %v5130, 2
      %v5136 = vxor.u32 %v5127, 2147483648
      %v5137 = vsel %vm5135, %v5136, %v5128
      %v5138 = vsel %vm5131, %v5134, %v5137
      %v5139 = vsel %vm5129, nan, %v5138
      %v5140 = vand.u32 2147483647, %v1458
      %vm5141 = vcmp.le.f32.partialorder %v5140, 0.7853982
      %vm5142 = vcmp.lt.s32.totalorder %v1458, 0
      %v5143 = vand.u32 %v1458, 2139095040
      %v5144 = vshrl.u32 %v5143, 23
      %v5145 = vsub.s32 %v5144, 127
      %v5146 = vand.u32 2147483647, %v1458
      %v5147 = vand.u32 %v5146, 8388607
      %v5148 = vor.u32 %v5147, 8388608
      %v5149 = vsub.s32 0, %v5148
      %v5150 = vadd.s32 %v5145, 1
      %vm5151 = vcmp.gt.s32.totalorder %v5150, 0
      %v5152 = vsel %vm5151, %v5150, 0
      %v5153 = vshrl.u32 %v5152, 5
      %v5154 = vand.u32 %v5152, 31
      %v5155 = vsub.s32 32, %v5154
      %v5156 = vshrl.u32 683565275, %v5155
      %v5157 = vshll.u32 683565275, %v5154
      %v5158 = vshrl.u32 2475754826, %v5155
      %v5159 = vor.u32 %v5157, %v5158
      %v5160 = vshll.u32 2475754826, %v5154
      %v5161 = vshrl.u32 2131351028, %v5155
      %v5162 = vor.u32 %v5160, %v5161
      %v5163 = vshll.u32 2131351028, %v5154
      %v5164 = vshrl.u32 2102212464, %v5155
      %v5165 = vor.u32 %v5163, %v5164
      %v5166 = vshll.u32 2102212464, %v5154
      %v5167 = vshrl.u32 920167782, %v5155
      %v5168 = vor.u32 %v5166, %v5167
      %v5169 = vshll.u32 920167782, %v5154
      %v5170 = vshrl.u32 1326507024, %v5155
      %v5171 = vor.u32 %v5169, %v5170
      %vm5172 = vcmp.lt.s32.totalorder %v5153, 1
      %vm5173 = vcmp.lt.s32.totalorder %v5153, 2
      %vm5174 = vcmp.lt.s32.totalorder %v5153, 3
      %vm5175 = vcmp.lt.s32.totalorder %v5153, 4
      %v5176 = vsel %vm5172, %v5156, %v5159
      %v5177 = vsel %vm5175, %v5165, 2102212464
      %v5178 = vsel %vm5174, %v5162, %v5177
      %v5179 = vsel %vm5173, %v5176, %v5178
      %v5180 = vsel %vm5172, %v5159, %v5162
      %v5181 = vsel %vm5175, %v5168, 920167782
      %v5182 = vsel %vm5174, %v5165, %v5181
      %v5183 = vsel %vm5173, %v5180, %v5182
      %v5184 = vsel %vm5172, %v5162, %v5165
      %v5185 = vsel %vm5175, %v5171, 1326507024
      %v5186 = vsel %vm5174, %v5168, %v5185
      %v5187 = vsel %vm5173, %v5184, %v5186
      %v5188 = vshll.u32 %v5148, 8
      %v5189 = vmul.u32.u64.compose %v5188, %v5187
      %v5190 = vextract.low.u32 %v5189
      %v5191 = vextract.high.u32 %v5189
      %v5192 = vmul.u32.u64.compose %v5188, %v5183
      %v5193 = vextract.low.u32 %v5192
      %v5194 = vextract.high.u32 %v5192
      %v5195 = vmul.u32 %v5188, %v5179
      %v5196 = vadd.s32 %v5191, %v5193
      %vm5197 = vc.u32 %v5191, %v5193
      %v5198 = vadd.s32 %v5194, 1
      %v5199 = vsel %vm5197, %v5198, %v5194
      %v5200 = vadd.s32 %v5195, %v5199
      %v5201 = vadd.s32 %v5200, 536870912
      %v5202 = vshrl.u32 %v5201, 30
      %v5203 = vshll.u32 %v5202, 30
      %v5204 = vsub.s32 %v5200, %v5203
      %vm5205 = vcmp.lt.s32.totalorder %v5204, 0
      %v5206 = vsub.s32 0, %v5204
      %v5207 = vsel %vm5205, %v5206, %v5204
      %v5208 = vclz %v5207
      %v5209 = vsub.s32 %v5208, 2
      %vm5210 = vcmp.gt.s32.totalorder 0, %v5209
      %v5211 = vsel %vm5210, 0, %v5209
      %v5212 = vsub.s32 32, %v5211
      %v5213 = vshll.u32 %v5204, %v5211
      %v5214 = vshrl.u32 %v5196, %v5212
      %v5215 = vor.u32 %v5213, %v5214
      %v5216 = vsub.s32 4294967266, %v5211
      %v5217 = vadd.s32 %v5216, 127
      %v5218 = vshll.u32 %v5217, 23
      %v5219 = vor.u32 4788187, %v5218
      %v5220 = vand.u32 2147483647, %v5219
      %v5222 = vcvt.s32.f32 %v5215
      %v5223 = vmul.f32 %v5222, %v5220
      %v5224 = vxor.u32 %v5223, 2147483648
      %v5225 = vsel %vm5142, %v5224, %v5223
      %v5226 = vsub.s32 4, %v5202
      %v5227 = vsel %vm5142, %v5226, %v5202
      %v5228 = vsel %vm5141, %v1458, %v5225
      %v5229 = vsel %vm5141, 0, %v5227
      %v5230 = vcosq.f32.pop %v5228
      %v5231 = vsinq.f32.pop %v5228
      %vm5232 = vweird.f32 %v1458
      %v5233 = vand.u32 %v5229, 3
      %vm5234 = vcmp.lt.s32.totalorder %v5233, 2
      %vm5235 = vcmp.eq.s32.totalorder %v5233, 0
      %v5236 = vxor.u32 %v5231, 2147483648
      %v5237 = vsel %vm5235, %v5230, %v5236
      %vm5238 = vcmp.eq.s32.totalorder %v5233, 2
      %v5239 = vxor.u32 %v5230, 2147483648
      %v5240 = vsel %vm5238, %v5239, %v5231
      %v5241 = vsel %vm5234, %v5237, %v5240
      %v5242 = vsel %vm5232, nan, %v5241
      %v5243 = vand.u32 2147483647, %v1459
      %vm5244 = vcmp.le.f32.partialorder %v5243, 0.7853982
      %vm5245 = vcmp.lt.s32.totalorder %v1459, 0
      %v5246 = vand.u32 %v1459, 2139095040
      %v5247 = vshrl.u32 %v5246, 23
      %v5248 = vsub.s32 %v5247, 127
      %v5249 = vand.u32 2147483647, %v1459
      %v5250 = vand.u32 %v5249, 8388607
      %v5251 = vor.u32 %v5250, 8388608
      %v5252 = vsub.s32 0, %v5251
      %v5253 = vadd.s32 %v5248, 1
      %vm5254 = vcmp.gt.s32.totalorder %v5253, 0
      %v5255 = vsel %vm5254, %v5253, 0
      %v5256 = vshrl.u32 %v5255, 5
      %v5257 = vand.u32 %v5255, 31
      %v5258 = vsub.s32 32, %v5257
      %v5259 = vshrl.u32 683565275, %v5258
      %v5260 = vshll.u32 683565275, %v5257
      %v5261 = vshrl.u32 2475754826, %v5258
      %v5262 = vor.u32 %v5260, %v5261
      %v5263 = vshll.u32 2475754826, %v5257
      %v5264 = vshrl.u32 2131351028, %v5258
      %v5265 = vor.u32 %v5263, %v5264
      %v5266 = vshll.u32 2131351028, %v5257
      %v5267 = vshrl.u32 2102212464, %v5258
      %v5268 = vor.u32 %v5266, %v5267
      %v5269 = vshll.u32 2102212464, %v5257
      %v5270 = vshrl.u32 920167782, %v5258
      %v5271 = vor.u32 %v5269, %v5270
      %v5272 = vshll.u32 920167782, %v5257
      %v5273 = vshrl.u32 1326507024, %v5258
      %v5274 = vor.u32 %v5272, %v5273
      %vm5275 = vcmp.lt.s32.totalorder %v5256, 1
      %vm5276 = vcmp.lt.s32.totalorder %v5256, 2
      %vm5277 = vcmp.lt.s32.totalorder %v5256, 3
      %vm5278 = vcmp.lt.s32.totalorder %v5256, 4
      %v5279 = vsel %vm5275, %v5259, %v5262
      %v5280 = vsel %vm5278, %v5268, 2102212464
      %v5281 = vsel %vm5277, %v5265, %v5280
      %v5282 = vsel %vm5276, %v5279, %v5281
      %v5283 = vsel %vm5275, %v5262, %v5265
      %v5284 = vsel %vm5278, %v5271, 920167782
      %v5285 = vsel %vm5277, %v5268, %v5284
      %v5286 = vsel %vm5276, %v5283, %v5285
      %v5287 = vsel %vm5275, %v5265, %v5268
      %v5288 = vsel %vm5278, %v5274, 1326507024
      %v5289 = vsel %vm5277, %v5271, %v5288
      %v5290 = vsel %vm5276, %v5287, %v5289
      %v5291 = vshll.u32 %v5251, 8
      %v5292 = vmul.u32.u64.compose %v5291, %v5290
      %v5293 = vextract.low.u32 %v5292
      %v5294 = vextract.high.u32 %v5292
      %v5295 = vmul.u32.u64.compose %v5291, %v5286
      %v5296 = vextract.low.u32 %v5295
      %v5297 = vextract.high.u32 %v5295
      %v5298 = vmul.u32 %v5291, %v5282
      %v5299 = vadd.s32 %v5294, %v5296
      %vm5300 = vc.u32 %v5294, %v5296
      %v5301 = vadd.s32 %v5297, 1
      %v5302 = vsel %vm5300, %v5301, %v5297
      %v5303 = vadd.s32 %v5298, %v5302
      %v5304 = vadd.s32 %v5303, 536870912
      %v5305 = vshrl.u32 %v5304, 30
      %v5306 = vshll.u32 %v5305, 30
      %v5307 = vsub.s32 %v5303, %v5306
      %vm5308 = vcmp.lt.s32.totalorder %v5307, 0
      %v5309 = vsub.s32 0, %v5307
      %v5310 = vsel %vm5308, %v5309, %v5307
      %v5311 = vclz %v5310
      %v5312 = vsub.s32 %v5311, 2
      %vm5313 = vcmp.gt.s32.totalorder 0, %v5312
      %v5314 = vsel %vm5313, 0, %v5312
      %v5315 = vsub.s32 32, %v5314
      %v5316 = vshll.u32 %v5307, %v5314
      %v5317 = vshrl.u32 %v5299, %v5315
      %v5318 = vor.u32 %v5316, %v5317
      %v5319 = vsub.s32 4294967266, %v5314
      %v5320 = vadd.s32 %v5319, 127
      %v5321 = vshll.u32 %v5320, 23
      %v5322 = vor.u32 4788187, %v5321
      %v5323 = vand.u32 2147483647, %v5322
      %v5325 = vcvt.s32.f32 %v5318
      %v5326 = vmul.f32 %v5325, %v5323
      %v5327 = vxor.u32 %v5326, 2147483648
      %v5328 = vsel %vm5245, %v5327, %v5326
      %v5329 = vsub.s32 4, %v5305
      %v5330 = vsel %vm5245, %v5329, %v5305
      %v5331 = vsel %vm5244, %v1459, %v5328
      %v5332 = vsel %vm5244, 0, %v5330
      %v5333 = vcosq.f32.pop %v5331
      %v5334 = vsinq.f32.pop %v5331
      %vm5335 = vweird.f32 %v1459
      %v5336 = vand.u32 %v5332, 3
      %vm5337 = vcmp.lt.s32.totalorder %v5336, 2
      %vm5338 = vcmp.eq.s32.totalorder %v5336, 0
      %v5339 = vxor.u32 %v5334, 2147483648
      %v5340 = vsel %vm5338, %v5333, %v5339
      %vm5341 = vcmp.eq.s32.totalorder %v5336, 2
      %v5342 = vxor.u32 %v5333, 2147483648
      %v5343 = vsel %vm5341, %v5342, %v5334
      %v5344 = vsel %vm5337, %v5340, %v5343
      %v5345 = vsel %vm5335, nan, %v5344
      %v5346 = vand.u32 2147483647, %v1460
      %vm5347 = vcmp.le.f32.partialorder %v5346, 0.7853982
      %vm5348 = vcmp.lt.s32.totalorder %v1460, 0
      %v5349 = vand.u32 %v1460, 2139095040
      %v5350 = vshrl.u32 %v5349, 23
      %v5351 = vsub.s32 %v5350, 127
      %v5352 = vand.u32 2147483647, %v1460
      %v5353 = vand.u32 %v5352, 8388607
      %v5354 = vor.u32 %v5353, 8388608
      %v5355 = vsub.s32 0, %v5354
      %v5356 = vadd.s32 %v5351, 1
      %vm5357 = vcmp.gt.s32.totalorder %v5356, 0
      %v5358 = vsel %vm5357, %v5356, 0
      %v5359 = vshrl.u32 %v5358, 5
      %v5360 = vand.u32 %v5358, 31
      %v5361 = vsub.s32 32, %v5360
      %v5362 = vshrl.u32 683565275, %v5361
      %v5363 = vshll.u32 683565275, %v5360
      %v5364 = vshrl.u32 2475754826, %v5361
      %v5365 = vor.u32 %v5363, %v5364
      %v5366 = vshll.u32 2475754826, %v5360
      %v5367 = vshrl.u32 2131351028, %v5361
      %v5368 = vor.u32 %v5366, %v5367
      %v5369 = vshll.u32 2131351028, %v5360
      %v5370 = vshrl.u32 2102212464, %v5361
      %v5371 = vor.u32 %v5369, %v5370
      %v5372 = vshll.u32 2102212464, %v5360
      %v5373 = vshrl.u32 920167782, %v5361
      %v5374 = vor.u32 %v5372, %v5373
      %v5375 = vshll.u32 920167782, %v5360
      %v5376 = vshrl.u32 1326507024, %v5361
      %v5377 = vor.u32 %v5375, %v5376
      %vm5378 = vcmp.lt.s32.totalorder %v5359, 1
      %vm5379 = vcmp.lt.s32.totalorder %v5359, 2
      %vm5380 = vcmp.lt.s32.totalorder %v5359, 3
      %vm5381 = vcmp.lt.s32.totalorder %v5359, 4
      %v5382 = vsel %vm5378, %v5362, %v5365
      %v5383 = vsel %vm5381, %v5371, 2102212464
      %v5384 = vsel %vm5380, %v5368, %v5383
      %v5385 = vsel %vm5379, %v5382, %v5384
      %v5386 = vsel %vm5378, %v5365, %v5368
      %v5387 = vsel %vm5381, %v5374, 920167782
      %v5388 = vsel %vm5380, %v5371, %v5387
      %v5389 = vsel %vm5379, %v5386, %v5388
      %v5390 = vsel %vm5378, %v5368, %v5371
      %v5391 = vsel %vm5381, %v5377, 1326507024
      %v5392 = vsel %vm5380, %v5374, %v5391
      %v5393 = vsel %vm5379, %v5390, %v5392
      %v5394 = vshll.u32 %v5354, 8
      %v5395 = vmul.u32.u64.compose %v5394, %v5393
      %v5396 = vextract.low.u32 %v5395
      %v5397 = vextract.high.u32 %v5395
      %v5398 = vmul.u32.u64.compose %v5394, %v5389
      %v5399 = vextract.low.u32 %v5398
      %v5400 = vextract.high.u32 %v5398
      %v5401 = vmul.u32 %v5394, %v5385
      %v5402 = vadd.s32 %v5397, %v5399
      %vm5403 = vc.u32 %v5397, %v5399
      %v5404 = vadd.s32 %v5400, 1
      %v5405 = vsel %vm5403, %v5404, %v5400
      %v5406 = vadd.s32 %v5401, %v5405
      %v5407 = vadd.s32 %v5406, 536870912
      %v5408 = vshrl.u32 %v5407, 30
      %v5409 = vshll.u32 %v5408, 30
      %v5410 = vsub.s32 %v5406, %v5409
      %vm5411 = vcmp.lt.s32.totalorder %v5410, 0
      %v5412 = vsub.s32 0, %v5410
      %v5413 = vsel %vm5411, %v5412, %v5410
      %v5414 = vclz %v5413
      %v5415 = vsub.s32 %v5414, 2
      %vm5416 = vcmp.gt.s32.totalorder 0, %v5415
      %v5417 = vsel %vm5416, 0, %v5415
      %v5418 = vsub.s32 32, %v5417
      %v5419 = vshll.u32 %v5410, %v5417
      %v5420 = vshrl.u32 %v5402, %v5418
      %v5421 = vor.u32 %v5419, %v5420
      %v5422 = vsub.s32 4294967266, %v5417
      %v5423 = vadd.s32 %v5422, 127
      %v5424 = vshll.u32 %v5423, 23
      %v5425 = vor.u32 4788187, %v5424
      %v5426 = vand.u32 2147483647, %v5425
      %v5428 = vcvt.s32.f32 %v5421
      %v5429 = vmul.f32 %v5428, %v5426
      %v5430 = vxor.u32 %v5429, 2147483648
      %v5431 = vsel %vm5348, %v5430, %v5429
      %v5432 = vsub.s32 4, %v5408
      %v5433 = vsel %vm5348, %v5432, %v5408
      %v5434 = vsel %vm5347, %v1460, %v5431
      %v5435 = vsel %vm5347, 0, %v5433
      %v5436 = vcosq.f32.pop %v5434
      %v5437 = vsinq.f32.pop %v5434
      %vm5438 = vweird.f32 %v1460
      %v5439 = vand.u32 %v5435, 3
      %vm5440 = vcmp.lt.s32.totalorder %v5439, 2
      %vm5441 = vcmp.eq.s32.totalorder %v5439, 0
      %v5442 = vxor.u32 %v5437, 2147483648
      %v5443 = vsel %vm5441, %v5436, %v5442
      %vm5444 = vcmp.eq.s32.totalorder %v5439, 2
      %v5445 = vxor.u32 %v5436, 2147483648
      %v5446 = vsel %vm5444, %v5445, %v5437
      %v5447 = vsel %vm5440, %v5443, %v5446
      %v5448 = vsel %vm5438, nan, %v5447
      %v5449 = vand.u32 2147483647, %v1461
      %vm5450 = vcmp.le.f32.partialorder %v5449, 0.7853982
      %vm5451 = vcmp.lt.s32.totalorder %v1461, 0
      %v5452 = vand.u32 %v1461, 2139095040
      %v5453 = vshrl.u32 %v5452, 23
      %v5454 = vsub.s32 %v5453, 127
      %v5455 = vand.u32 2147483647, %v1461
      %v5456 = vand.u32 %v5455, 8388607
      %v5457 = vor.u32 %v5456, 8388608
      %v5458 = vsub.s32 0, %v5457
      %v5459 = vadd.s32 %v5454, 1
      %vm5460 = vcmp.gt.s32.totalorder %v5459, 0
      %v5461 = vsel %vm5460, %v5459, 0
      %v5462 = vshrl.u32 %v5461, 5
      %v5463 = vand.u32 %v5461, 31
      %v5464 = vsub.s32 32, %v5463
      %v5465 = vshrl.u32 683565275, %v5464
      %v5466 = vshll.u32 683565275, %v5463
      %v5467 = vshrl.u32 2475754826, %v5464
      %v5468 = vor.u32 %v5466, %v5467
      %v5469 = vshll.u32 2475754826, %v5463
      %v5470 = vshrl.u32 2131351028, %v5464
      %v5471 = vor.u32 %v5469, %v5470
      %v5472 = vshll.u32 2131351028, %v5463
      %v5473 = vshrl.u32 2102212464, %v5464
      %v5474 = vor.u32 %v5472, %v5473
      %v5475 = vshll.u32 2102212464, %v5463
      %v5476 = vshrl.u32 920167782, %v5464
      %v5477 = vor.u32 %v5475, %v5476
      %v5478 = vshll.u32 920167782, %v5463
      %v5479 = vshrl.u32 1326507024, %v5464
      %v5480 = vor.u32 %v5478, %v5479
      %vm5481 = vcmp.lt.s32.totalorder %v5462, 1
      %vm5482 = vcmp.lt.s32.totalorder %v5462, 2
      %vm5483 = vcmp.lt.s32.totalorder %v5462, 3
      %vm5484 = vcmp.lt.s32.totalorder %v5462, 4
      %v5485 = vsel %vm5481, %v5465, %v5468
      %v5486 = vsel %vm5484, %v5474, 2102212464
      %v5487 = vsel %vm5483, %v5471, %v5486
      %v5488 = vsel %vm5482, %v5485, %v5487
      %v5489 = vsel %vm5481, %v5468, %v5471
      %v5490 = vsel %vm5484, %v5477, 920167782
      %v5491 = vsel %vm5483, %v5474, %v5490
      %v5492 = vsel %vm5482, %v5489, %v5491
      %v5493 = vsel %vm5481, %v5471, %v5474
      %v5494 = vsel %vm5484, %v5480, 1326507024
      %v5495 = vsel %vm5483, %v5477, %v5494
      %v5496 = vsel %vm5482, %v5493, %v5495
      %v5497 = vshll.u32 %v5457, 8
      %v5498 = vmul.u32.u64.compose %v5497, %v5496
      %v5499 = vextract.low.u32 %v5498
      %v5500 = vextract.high.u32 %v5498
      %v5501 = vmul.u32.u64.compose %v5497, %v5492
      %v5502 = vextract.low.u32 %v5501
      %v5503 = vextract.high.u32 %v5501
      %v5504 = vmul.u32 %v5497, %v5488
      %v5505 = vadd.s32 %v5500, %v5502
      %vm5506 = vc.u32 %v5500, %v5502
      %v5507 = vadd.s32 %v5503, 1
      %v5508 = vsel %vm5506, %v5507, %v5503
      %v5509 = vadd.s32 %v5504, %v5508
      %v5510 = vadd.s32 %v5509, 536870912
      %v5511 = vshrl.u32 %v5510, 30
      %v5512 = vshll.u32 %v5511, 30
      %v5513 = vsub.s32 %v5509, %v5512
      %vm5514 = vcmp.lt.s32.totalorder %v5513, 0
      %v5515 = vsub.s32 0, %v5513
      %v5516 = vsel %vm5514, %v5515, %v5513
      %v5517 = vclz %v5516
      %v5518 = vsub.s32 %v5517, 2
      %vm5519 = vcmp.gt.s32.totalorder 0, %v5518
      %v5520 = vsel %vm5519, 0, %v5518
      %v5521 = vsub.s32 32, %v5520
      %v5522 = vshll.u32 %v5513, %v5520
      %v5523 = vshrl.u32 %v5505, %v5521
      %v5524 = vor.u32 %v5522, %v5523
      %v5525 = vsub.s32 4294967266, %v5520
      %v5526 = vadd.s32 %v5525, 127
      %v5527 = vshll.u32 %v5526, 23
      %v5528 = vor.u32 4788187, %v5527
      %v5529 = vand.u32 2147483647, %v5528
      %v5531 = vcvt.s32.f32 %v5524
      %v5532 = vmul.f32 %v5531, %v5529
      %v5533 = vxor.u32 %v5532, 2147483648
      %v5534 = vsel %vm5451, %v5533, %v5532
      %v5535 = vsub.s32 4, %v5511
      %v5536 = vsel %vm5451, %v5535, %v5511
      %v5537 = vsel %vm5450, %v1461, %v5534
      %v5538 = vsel %vm5450, 0, %v5536
      %v5539 = vcosq.f32.pop %v5537
      %v5540 = vsinq.f32.pop %v5537
      %vm5541 = vweird.f32 %v1461
      %v5542 = vand.u32 %v5538, 3
      %vm5543 = vcmp.lt.s32.totalorder %v5542, 2
      %vm5544 = vcmp.eq.s32.totalorder %v5542, 0
      %v5545 = vxor.u32 %v5540, 2147483648
      %v5546 = vsel %vm5544, %v5539, %v5545
      %vm5547 = vcmp.eq.s32.totalorder %v5542, 2
      %v5548 = vxor.u32 %v5539, 2147483648
      %v5549 = vsel %vm5547, %v5548, %v5540
      %v5550 = vsel %vm5543, %v5546, %v5549
      %v5551 = vsel %vm5541, nan, %v5550
      %v5552 = vand.u32 2147483647, %v1462
      %vm5553 = vcmp.le.f32.partialorder %v5552, 0.7853982
      %vm5554 = vcmp.lt.s32.totalorder %v1462, 0
      %v5555 = vand.u32 %v1462, 2139095040
      %v5556 = vshrl.u32 %v5555, 23
      %v5557 = vsub.s32 %v5556, 127
      %v5558 = vand.u32 2147483647, %v1462
      %v5559 = vand.u32 %v5558, 8388607
      %v5560 = vor.u32 %v5559, 8388608
      %v5561 = vsub.s32 0, %v5560
      %v5562 = vadd.s32 %v5557, 1
      %vm5563 = vcmp.gt.s32.totalorder %v5562, 0
      %v5564 = vsel %vm5563, %v5562, 0
      %v5565 = vshrl.u32 %v5564, 5
      %v5566 = vand.u32 %v5564, 31
      %v5567 = vsub.s32 32, %v5566
      %v5568 = vshrl.u32 683565275, %v5567
      %v5569 = vshll.u32 683565275, %v5566
      %v5570 = vshrl.u32 2475754826, %v5567
      %v5571 = vor.u32 %v5569, %v5570
      %v5572 = vshll.u32 2475754826, %v5566
      %v5573 = vshrl.u32 2131351028, %v5567
      %v5574 = vor.u32 %v5572, %v5573
      %v5575 = vshll.u32 2131351028, %v5566
      %v5576 = vshrl.u32 2102212464, %v5567
      %v5577 = vor.u32 %v5575, %v5576
      %v5578 = vshll.u32 2102212464, %v5566
      %v5579 = vshrl.u32 920167782, %v5567
      %v5580 = vor.u32 %v5578, %v5579
      %v5581 = vshll.u32 920167782, %v5566
      %v5582 = vshrl.u32 1326507024, %v5567
      %v5583 = vor.u32 %v5581, %v5582
      %vm5584 = vcmp.lt.s32.totalorder %v5565, 1
      %vm5585 = vcmp.lt.s32.totalorder %v5565, 2
      %vm5586 = vcmp.lt.s32.totalorder %v5565, 3
      %vm5587 = vcmp.lt.s32.totalorder %v5565, 4
      %v5588 = vsel %vm5584, %v5568, %v5571
      %v5589 = vsel %vm5587, %v5577, 2102212464
      %v5590 = vsel %vm5586, %v5574, %v5589
      %v5591 = vsel %vm5585, %v5588, %v5590
      %v5592 = vsel %vm5584, %v5571, %v5574
      %v5593 = vsel %vm5587, %v5580, 920167782
      %v5594 = vsel %vm5586, %v5577, %v5593
      %v5595 = vsel %vm5585, %v5592, %v5594
      %v5596 = vsel %vm5584, %v5574, %v5577
      %v5597 = vsel %vm5587, %v5583, 1326507024
      %v5598 = vsel %vm5586, %v5580, %v5597
      %v5599 = vsel %vm5585, %v5596, %v5598
      %v5600 = vshll.u32 %v5560, 8
      %v5601 = vmul.u32.u64.compose %v5600, %v5599
      %v5602 = vextract.low.u32 %v5601
      %v5603 = vextract.high.u32 %v5601
      %v5604 = vmul.u32.u64.compose %v5600, %v5595
      %v5605 = vextract.low.u32 %v5604
      %v5606 = vextract.high.u32 %v5604
      %v5607 = vmul.u32 %v5600, %v5591
      %v5608 = vadd.s32 %v5603, %v5605
      %vm5609 = vc.u32 %v5603, %v5605
      %v5610 = vadd.s32 %v5606, 1
      %v5611 = vsel %vm5609, %v5610, %v5606
      %v5612 = vadd.s32 %v5607, %v5611
      %v5613 = vadd.s32 %v5612, 536870912
      %v5614 = vshrl.u32 %v5613, 30
      %v5615 = vshll.u32 %v5614, 30
      %v5616 = vsub.s32 %v5612, %v5615
      %vm5617 = vcmp.lt.s32.totalorder %v5616, 0
      %v5618 = vsub.s32 0, %v5616
      %v5619 = vsel %vm5617, %v5618, %v5616
      %v5620 = vclz %v5619
      %v5621 = vsub.s32 %v5620, 2
      %vm5622 = vcmp.gt.s32.totalorder 0, %v5621
      %v5623 = vsel %vm5622, 0, %v5621
      %v5624 = vsub.s32 32, %v5623
      %v5625 = vshll.u32 %v5616, %v5623
      %v5626 = vshrl.u32 %v5608, %v5624
      %v5627 = vor.u32 %v5625, %v5626
      %v5628 = vsub.s32 4294967266, %v5623
      %v5629 = vadd.s32 %v5628, 127
      %v5630 = vshll.u32 %v5629, 23
      %v5631 = vor.u32 4788187, %v5630
      %v5632 = vand.u32 2147483647, %v5631
      %v5634 = vcvt.s32.f32 %v5627
      %v5635 = vmul.f32 %v5634, %v5632
      %v5636 = vxor.u32 %v5635, 2147483648
      %v5637 = vsel %vm5554, %v5636, %v5635
      %v5638 = vsub.s32 4, %v5614
      %v5639 = vsel %vm5554, %v5638, %v5614
      %v5640 = vsel %vm5553, %v1462, %v5637
      %v5641 = vsel %vm5553, 0, %v5639
      %v5642 = vcosq.f32.pop %v5640
      %v5643 = vsinq.f32.pop %v5640
      %vm5644 = vweird.f32 %v1462
      %v5645 = vand.u32 %v5641, 3
      %vm5646 = vcmp.lt.s32.totalorder %v5645, 2
      %vm5647 = vcmp.eq.s32.totalorder %v5645, 0
      %v5648 = vxor.u32 %v5643, 2147483648
      %v5649 = vsel %vm5647, %v5642, %v5648
      %vm5650 = vcmp.eq.s32.totalorder %v5645, 2
      %v5651 = vxor.u32 %v5642, 2147483648
      %v5652 = vsel %vm5650, %v5651, %v5643
      %v5653 = vsel %vm5646, %v5649, %v5652
      %v5654 = vsel %vm5644, nan, %v5653
      %v5655 = vand.u32 2147483647, %v1463
      %vm5656 = vcmp.le.f32.partialorder %v5655, 0.7853982
      %vm5657 = vcmp.lt.s32.totalorder %v1463, 0
      %v5658 = vand.u32 %v1463, 2139095040
      %v5659 = vshrl.u32 %v5658, 23
      %v5660 = vsub.s32 %v5659, 127
      %v5661 = vand.u32 2147483647, %v1463
      %v5662 = vand.u32 %v5661, 8388607
      %v5663 = vor.u32 %v5662, 8388608
      %v5664 = vsub.s32 0, %v5663
      %v5665 = vadd.s32 %v5660, 1
      %vm5666 = vcmp.gt.s32.totalorder %v5665, 0
      %v5667 = vsel %vm5666, %v5665, 0
      %v5668 = vshrl.u32 %v5667, 5
      %v5669 = vand.u32 %v5667, 31
      %v5670 = vsub.s32 32, %v5669
      %v5671 = vshrl.u32 683565275, %v5670
      %v5672 = vshll.u32 683565275, %v5669
      %v5673 = vshrl.u32 2475754826, %v5670
      %v5674 = vor.u32 %v5672, %v5673
      %v5675 = vshll.u32 2475754826, %v5669
      %v5676 = vshrl.u32 2131351028, %v5670
      %v5677 = vor.u32 %v5675, %v5676
      %v5678 = vshll.u32 2131351028, %v5669
      %v5679 = vshrl.u32 2102212464, %v5670
      %v5680 = vor.u32 %v5678, %v5679
      %v5681 = vshll.u32 2102212464, %v5669
      %v5682 = vshrl.u32 920167782, %v5670
      %v5683 = vor.u32 %v5681, %v5682
      %v5684 = vshll.u32 920167782, %v5669
      %v5685 = vshrl.u32 1326507024, %v5670
      %v5686 = vor.u32 %v5684, %v5685
      %vm5687 = vcmp.lt.s32.totalorder %v5668, 1
      %vm5688 = vcmp.lt.s32.totalorder %v5668, 2
      %vm5689 = vcmp.lt.s32.totalorder %v5668, 3
      %vm5690 = vcmp.lt.s32.totalorder %v5668, 4
      %v5691 = vsel %vm5687, %v5671, %v5674
      %v5692 = vsel %vm5690, %v5680, 2102212464
      %v5693 = vsel %vm5689, %v5677, %v5692
      %v5694 = vsel %vm5688, %v5691, %v5693
      %v5695 = vsel %vm5687, %v5674, %v5677
      %v5696 = vsel %vm5690, %v5683, 920167782
      %v5697 = vsel %vm5689, %v5680, %v5696
      %v5698 = vsel %vm5688, %v5695, %v5697
      %v5699 = vsel %vm5687, %v5677, %v5680
      %v5700 = vsel %vm5690, %v5686, 1326507024
      %v5701 = vsel %vm5689, %v5683, %v5700
      %v5702 = vsel %vm5688, %v5699, %v5701
      %v5703 = vshll.u32 %v5663, 8
      %v5704 = vmul.u32.u64.compose %v5703, %v5702
      %v5705 = vextract.low.u32 %v5704
      %v5706 = vextract.high.u32 %v5704
      %v5707 = vmul.u32.u64.compose %v5703, %v5698
      %v5708 = vextract.low.u32 %v5707
      %v5709 = vextract.high.u32 %v5707
      %v5710 = vmul.u32 %v5703, %v5694
      %v5711 = vadd.s32 %v5706, %v5708
      %vm5712 = vc.u32 %v5706, %v5708
      %v5713 = vadd.s32 %v5709, 1
      %v5714 = vsel %vm5712, %v5713, %v5709
      %v5715 = vadd.s32 %v5710, %v5714
      %v5716 = vadd.s32 %v5715, 536870912
      %v5717 = vshrl.u32 %v5716, 30
      %v5718 = vshll.u32 %v5717, 30
      %v5719 = vsub.s32 %v5715, %v5718
      %vm5720 = vcmp.lt.s32.totalorder %v5719, 0
      %v5721 = vsub.s32 0, %v5719
      %v5722 = vsel %vm5720, %v5721, %v5719
      %v5723 = vclz %v5722
      %v5724 = vsub.s32 %v5723, 2
      %vm5725 = vcmp.gt.s32.totalorder 0, %v5724
      %v5726 = vsel %vm5725, 0, %v5724
      %v5727 = vsub.s32 32, %v5726
      %v5728 = vshll.u32 %v5719, %v5726
      %v5729 = vshrl.u32 %v5711, %v5727
      %v5730 = vor.u32 %v5728, %v5729
      %v5731 = vsub.s32 4294967266, %v5726
      %v5732 = vadd.s32 %v5731, 127
      %v5733 = vshll.u32 %v5732, 23
      %v5734 = vor.u32 4788187, %v5733
      %v5735 = vand.u32 2147483647, %v5734
      %v5737 = vcvt.s32.f32 %v5730
      %v5738 = vmul.f32 %v5737, %v5735
      %v5739 = vxor.u32 %v5738, 2147483648
      %v5740 = vsel %vm5657, %v5739, %v5738
      %v5741 = vsub.s32 4, %v5717
      %v5742 = vsel %vm5657, %v5741, %v5717
      %v5743 = vsel %vm5656, %v1463, %v5740
      %v5744 = vsel %vm5656, 0, %v5742
      %v5745 = vcosq.f32.pop %v5743
      %v5746 = vsinq.f32.pop %v5743
      %vm5747 = vweird.f32 %v1463
      %v5748 = vand.u32 %v5744, 3
      %vm5749 = vcmp.lt.s32.totalorder %v5748, 2
      %vm5750 = vcmp.eq.s32.totalorder %v5748, 0
      %v5751 = vxor.u32 %v5746, 2147483648
      %v5752 = vsel %vm5750, %v5745, %v5751
      %vm5753 = vcmp.eq.s32.totalorder %v5748, 2
      %v5754 = vxor.u32 %v5745, 2147483648
      %v5755 = vsel %vm5753, %v5754, %v5746
      %v5756 = vsel %vm5749, %v5752, %v5755
      %v5757 = vsel %vm5747, nan, %v5756
      %v5758 = vand.u32 2147483647, %v1464
      %vm5759 = vcmp.le.f32.partialorder %v5758, 0.7853982
      %vm5760 = vcmp.lt.s32.totalorder %v1464, 0
      %v5761 = vand.u32 %v1464, 2139095040
      %v5762 = vshrl.u32 %v5761, 23
      %v5763 = vsub.s32 %v5762, 127
      %v5764 = vand.u32 2147483647, %v1464
      %v5765 = vand.u32 %v5764, 8388607
      %v5766 = vor.u32 %v5765, 8388608
      %v5767 = vsub.s32 0, %v5766
      %v5768 = vadd.s32 %v5763, 1
      %vm5769 = vcmp.gt.s32.totalorder %v5768, 0
      %v5770 = vsel %vm5769, %v5768, 0
      %v5771 = vshrl.u32 %v5770, 5
      %v5772 = vand.u32 %v5770, 31
      %v5773 = vsub.s32 32, %v5772
      %v5774 = vshrl.u32 683565275, %v5773
      %v5775 = vshll.u32 683565275, %v5772
      %v5776 = vshrl.u32 2475754826, %v5773
      %v5777 = vor.u32 %v5775, %v5776
      %v5778 = vshll.u32 2475754826, %v5772
      %v5779 = vshrl.u32 2131351028, %v5773
      %v5780 = vor.u32 %v5778, %v5779
      %v5781 = vshll.u32 2131351028, %v5772
      %v5782 = vshrl.u32 2102212464, %v5773
      %v5783 = vor.u32 %v5781, %v5782
      %v5784 = vshll.u32 2102212464, %v5772
      %v5785 = vshrl.u32 920167782, %v5773
      %v5786 = vor.u32 %v5784, %v5785
      %v5787 = vshll.u32 920167782, %v5772
      %v5788 = vshrl.u32 1326507024, %v5773
      %v5789 = vor.u32 %v5787, %v5788
      %vm5790 = vcmp.lt.s32.totalorder %v5771, 1
      %vm5791 = vcmp.lt.s32.totalorder %v5771, 2
      %vm5792 = vcmp.lt.s32.totalorder %v5771, 3
      %vm5793 = vcmp.lt.s32.totalorder %v5771, 4
      %v5794 = vsel %vm5790, %v5774, %v5777
      %v5795 = vsel %vm5793, %v5783, 2102212464
      %v5796 = vsel %vm5792, %v5780, %v5795
      %v5797 = vsel %vm5791, %v5794, %v5796
      %v5798 = vsel %vm5790, %v5777, %v5780
      %v5799 = vsel %vm5793, %v5786, 920167782
      %v5800 = vsel %vm5792, %v5783, %v5799
      %v5801 = vsel %vm5791, %v5798, %v5800
      %v5802 = vsel %vm5790, %v5780, %v5783
      %v5803 = vsel %vm5793, %v5789, 1326507024
      %v5804 = vsel %vm5792, %v5786, %v5803
      %v5805 = vsel %vm5791, %v5802, %v5804
      %v5806 = vshll.u32 %v5766, 8
      %v5807 = vmul.u32.u64.compose %v5806, %v5805
      %v5808 = vextract.low.u32 %v5807
      %v5809 = vextract.high.u32 %v5807
      %v5810 = vmul.u32.u64.compose %v5806, %v5801
      %v5811 = vextract.low.u32 %v5810
      %v5812 = vextract.high.u32 %v5810
      %v5813 = vmul.u32 %v5806, %v5797
      %v5814 = vadd.s32 %v5809, %v5811
      %vm5815 = vc.u32 %v5809, %v5811
      %v5816 = vadd.s32 %v5812, 1
      %v5817 = vsel %vm5815, %v5816, %v5812
      %v5818 = vadd.s32 %v5813, %v5817
      %v5819 = vadd.s32 %v5818, 536870912
      %v5820 = vshrl.u32 %v5819, 30
      %v5821 = vshll.u32 %v5820, 30
      %v5822 = vsub.s32 %v5818, %v5821
      %vm5823 = vcmp.lt.s32.totalorder %v5822, 0
      %v5824 = vsub.s32 0, %v5822
      %v5825 = vsel %vm5823, %v5824, %v5822
      %v5826 = vclz %v5825
      %v5827 = vsub.s32 %v5826, 2
      %vm5828 = vcmp.gt.s32.totalorder 0, %v5827
      %v5829 = vsel %vm5828, 0, %v5827
      %v5830 = vsub.s32 32, %v5829
      %v5831 = vshll.u32 %v5822, %v5829
      %v5832 = vshrl.u32 %v5814, %v5830
      %v5833 = vor.u32 %v5831, %v5832
      %v5834 = vsub.s32 4294967266, %v5829
      %v5835 = vadd.s32 %v5834, 127
      %v5836 = vshll.u32 %v5835, 23
      %v5837 = vor.u32 4788187, %v5836
      %v5838 = vand.u32 2147483647, %v5837
      %v5840 = vcvt.s32.f32 %v5833
      %v5841 = vmul.f32 %v5840, %v5838
      %v5842 = vxor.u32 %v5841, 2147483648
      %v5843 = vsel %vm5760, %v5842, %v5841
      %v5844 = vsub.s32 4, %v5820
      %v5845 = vsel %vm5760, %v5844, %v5820
      %v5846 = vsel %vm5759, %v1464, %v5843
      %v5847 = vsel %vm5759, 0, %v5845
      %v5848 = vcosq.f32.pop %v5846
      %v5849 = vsinq.f32.pop %v5846
      %vm5850 = vweird.f32 %v1464
      %v5851 = vand.u32 %v5847, 3
      %vm5852 = vcmp.lt.s32.totalorder %v5851, 2
      %vm5853 = vcmp.eq.s32.totalorder %v5851, 0
      %v5854 = vxor.u32 %v5849, 2147483648
      %v5855 = vsel %vm5853, %v5848, %v5854
      %vm5856 = vcmp.eq.s32.totalorder %v5851, 2
      %v5857 = vxor.u32 %v5848, 2147483648
      %v5858 = vsel %vm5856, %v5857, %v5849
      %v5859 = vsel %vm5852, %v5855, %v5858
      %v5860 = vsel %vm5850, nan, %v5859
      %v5861 = vand.u32 2147483647, %v1465
      %vm5862 = vcmp.le.f32.partialorder %v5861, 0.7853982
      %vm5863 = vcmp.lt.s32.totalorder %v1465, 0
      %v5864 = vand.u32 %v1465, 2139095040
      %v5865 = vshrl.u32 %v5864, 23
      %v5866 = vsub.s32 %v5865, 127
      %v5867 = vand.u32 2147483647, %v1465
      %v5868 = vand.u32 %v5867, 8388607
      %v5869 = vor.u32 %v5868, 8388608
      %v5870 = vsub.s32 0, %v5869
      %v5871 = vadd.s32 %v5866, 1
      %vm5872 = vcmp.gt.s32.totalorder %v5871, 0
      %v5873 = vsel %vm5872, %v5871, 0
      %v5874 = vshrl.u32 %v5873, 5
      %v5875 = vand.u32 %v5873, 31
      %v5876 = vsub.s32 32, %v5875
      %v5877 = vshrl.u32 683565275, %v5876
      %v5878 = vshll.u32 683565275, %v5875
      %v5879 = vshrl.u32 2475754826, %v5876
      %v5880 = vor.u32 %v5878, %v5879
      %v5881 = vshll.u32 2475754826, %v5875
      %v5882 = vshrl.u32 2131351028, %v5876
      %v5883 = vor.u32 %v5881, %v5882
      %v5884 = vshll.u32 2131351028, %v5875
      %v5885 = vshrl.u32 2102212464, %v5876
      %v5886 = vor.u32 %v5884, %v5885
      %v5887 = vshll.u32 2102212464, %v5875
      %v5888 = vshrl.u32 920167782, %v5876
      %v5889 = vor.u32 %v5887, %v5888
      %v5890 = vshll.u32 920167782, %v5875
      %v5891 = vshrl.u32 1326507024, %v5876
      %v5892 = vor.u32 %v5890, %v5891
      %vm5893 = vcmp.lt.s32.totalorder %v5874, 1
      %vm5894 = vcmp.lt.s32.totalorder %v5874, 2
      %vm5895 = vcmp.lt.s32.totalorder %v5874, 3
      %vm5896 = vcmp.lt.s32.totalorder %v5874, 4
      %v5897 = vsel %vm5893, %v5877, %v5880
      %v5898 = vsel %vm5896, %v5886, 2102212464
      %v5899 = vsel %vm5895, %v5883, %v5898
      %v5900 = vsel %vm5894, %v5897, %v5899
      %v5901 = vsel %vm5893, %v5880, %v5883
      %v5902 = vsel %vm5896, %v5889, 920167782
      %v5903 = vsel %vm5895, %v5886, %v5902
      %v5904 = vsel %vm5894, %v5901, %v5903
      %v5905 = vsel %vm5893, %v5883, %v5886
      %v5906 = vsel %vm5896, %v5892, 1326507024
      %v5907 = vsel %vm5895, %v5889, %v5906
      %v5908 = vsel %vm5894, %v5905, %v5907
      %v5909 = vshll.u32 %v5869, 8
      %v5910 = vmul.u32.u64.compose %v5909, %v5908
      %v5911 = vextract.low.u32 %v5910
      %v5912 = vextract.high.u32 %v5910
      %v5913 = vmul.u32.u64.compose %v5909, %v5904
      %v5914 = vextract.low.u32 %v5913
      %v5915 = vextract.high.u32 %v5913
      %v5916 = vmul.u32 %v5909, %v5900
      %v5917 = vadd.s32 %v5912, %v5914
      %vm5918 = vc.u32 %v5912, %v5914
      %v5919 = vadd.s32 %v5915, 1
      %v5920 = vsel %vm5918, %v5919, %v5915
      %v5921 = vadd.s32 %v5916, %v5920
      %v5922 = vadd.s32 %v5921, 536870912
      %v5923 = vshrl.u32 %v5922, 30
      %v5924 = vshll.u32 %v5923, 30
      %v5925 = vsub.s32 %v5921, %v5924
      %vm5926 = vcmp.lt.s32.totalorder %v5925, 0
      %v5927 = vsub.s32 0, %v5925
      %v5928 = vsel %vm5926, %v5927, %v5925
      %v5929 = vclz %v5928
      %v5930 = vsub.s32 %v5929, 2
      %vm5931 = vcmp.gt.s32.totalorder 0, %v5930
      %v5932 = vsel %vm5931, 0, %v5930
      %v5933 = vsub.s32 32, %v5932
      %v5934 = vshll.u32 %v5925, %v5932
      %v5935 = vshrl.u32 %v5917, %v5933
      %v5936 = vor.u32 %v5934, %v5935
      %v5937 = vsub.s32 4294967266, %v5932
      %v5938 = vadd.s32 %v5937, 127
      %v5939 = vshll.u32 %v5938, 23
      %v5940 = vor.u32 4788187, %v5939
      %v5941 = vand.u32 2147483647, %v5940
      %v5943 = vcvt.s32.f32 %v5936
      %v5944 = vmul.f32 %v5943, %v5941
      %v5945 = vxor.u32 %v5944, 2147483648
      %v5946 = vsel %vm5863, %v5945, %v5944
      %v5947 = vsub.s32 4, %v5923
      %v5948 = vsel %vm5863, %v5947, %v5923
      %v5949 = vsel %vm5862, %v1465, %v5946
      %v5950 = vsel %vm5862, 0, %v5948
      %v5951 = vcosq.f32.pop %v5949
      %v5952 = vsinq.f32.pop %v5949
      %vm5953 = vweird.f32 %v1465
      %v5954 = vand.u32 %v5950, 3
      %vm5955 = vcmp.lt.s32.totalorder %v5954, 2
      %vm5956 = vcmp.eq.s32.totalorder %v5954, 0
      %v5957 = vxor.u32 %v5952, 2147483648
      %v5958 = vsel %vm5956, %v5951, %v5957
      %vm5959 = vcmp.eq.s32.totalorder %v5954, 2
      %v5960 = vxor.u32 %v5951, 2147483648
      %v5961 = vsel %vm5959, %v5960, %v5952
      %v5962 = vsel %vm5955, %v5958, %v5961
      %v5963 = vsel %vm5953, nan, %v5962
      %v5964 = vand.u32 2147483647, %v1466
      %vm5965 = vcmp.le.f32.partialorder %v5964, 0.7853982
      %vm5966 = vcmp.lt.s32.totalorder %v1466, 0
      %v5967 = vand.u32 %v1466, 2139095040
      %v5968 = vshrl.u32 %v5967, 23
      %v5969 = vsub.s32 %v5968, 127
      %v5970 = vand.u32 2147483647, %v1466
      %v5971 = vand.u32 %v5970, 8388607
      %v5972 = vor.u32 %v5971, 8388608
      %v5973 = vsub.s32 0, %v5972
      %v5974 = vadd.s32 %v5969, 1
      %vm5975 = vcmp.gt.s32.totalorder %v5974, 0
      %v5976 = vsel %vm5975, %v5974, 0
      %v5977 = vshrl.u32 %v5976, 5
      %v5978 = vand.u32 %v5976, 31
      %v5979 = vsub.s32 32, %v5978
      %v5980 = vshrl.u32 683565275, %v5979
      %v5981 = vshll.u32 683565275, %v5978
      %v5982 = vshrl.u32 2475754826, %v5979
      %v5983 = vor.u32 %v5981, %v5982
      %v5984 = vshll.u32 2475754826, %v5978
      %v5985 = vshrl.u32 2131351028, %v5979
      %v5986 = vor.u32 %v5984, %v5985
      %v5987 = vshll.u32 2131351028, %v5978
      %v5988 = vshrl.u32 2102212464, %v5979
      %v5989 = vor.u32 %v5987, %v5988
      %v5990 = vshll.u32 2102212464, %v5978
      %v5991 = vshrl.u32 920167782, %v5979
      %v5992 = vor.u32 %v5990, %v5991
      %v5993 = vshll.u32 920167782, %v5978
      %v5994 = vshrl.u32 1326507024, %v5979
      %v5995 = vor.u32 %v5993, %v5994
      %vm5996 = vcmp.lt.s32.totalorder %v5977, 1
      %vm5997 = vcmp.lt.s32.totalorder %v5977, 2
      %vm5998 = vcmp.lt.s32.totalorder %v5977, 3
      %vm5999 = vcmp.lt.s32.totalorder %v5977, 4
      %v6000 = vsel %vm5996, %v5980, %v5983
      %v6001 = vsel %vm5999, %v5989, 2102212464
      %v6002 = vsel %vm5998, %v5986, %v6001
      %v6003 = vsel %vm5997, %v6000, %v6002
      %v6004 = vsel %vm5996, %v5983, %v5986
      %v6005 = vsel %vm5999, %v5992, 920167782
      %v6006 = vsel %vm5998, %v5989, %v6005
      %v6007 = vsel %vm5997, %v6004, %v6006
      %v6008 = vsel %vm5996, %v5986, %v5989
      %v6009 = vsel %vm5999, %v5995, 1326507024
      %v6010 = vsel %vm5998, %v5992, %v6009
      %v6011 = vsel %vm5997, %v6008, %v6010
      %v6012 = vshll.u32 %v5972, 8
      %v6013 = vmul.u32.u64.compose %v6012, %v6011
      %v6014 = vextract.low.u32 %v6013
      %v6015 = vextract.high.u32 %v6013
      %v6016 = vmul.u32.u64.compose %v6012, %v6007
      %v6017 = vextract.low.u32 %v6016
      %v6018 = vextract.high.u32 %v6016
      %v6019 = vmul.u32 %v6012, %v6003
      %v6020 = vadd.s32 %v6015, %v6017
      %vm6021 = vc.u32 %v6015, %v6017
      %v6022 = vadd.s32 %v6018, 1
      %v6023 = vsel %vm6021, %v6022, %v6018
      %v6024 = vadd.s32 %v6019, %v6023
      %v6025 = vadd.s32 %v6024, 536870912
      %v6026 = vshrl.u32 %v6025, 30
      %v6027 = vshll.u32 %v6026, 30
      %v6028 = vsub.s32 %v6024, %v6027
      %vm6029 = vcmp.lt.s32.totalorder %v6028, 0
      %v6030 = vsub.s32 0, %v6028
      %v6031 = vsel %vm6029, %v6030, %v6028
      %v6032 = vclz %v6031
      %v6033 = vsub.s32 %v6032, 2
      %vm6034 = vcmp.gt.s32.totalorder 0, %v6033
      %v6035 = vsel %vm6034, 0, %v6033
      %v6036 = vsub.s32 32, %v6035
      %v6037 = vshll.u32 %v6028, %v6035
      %v6038 = vshrl.u32 %v6020, %v6036
      %v6039 = vor.u32 %v6037, %v6038
      %v6040 = vsub.s32 4294967266, %v6035
      %v6041 = vadd.s32 %v6040, 127
      %v6042 = vshll.u32 %v6041, 23
      %v6043 = vor.u32 4788187, %v6042
      %v6044 = vand.u32 2147483647, %v6043
      %v6046 = vcvt.s32.f32 %v6039
      %v6047 = vmul.f32 %v6046, %v6044
      %v6048 = vxor.u32 %v6047, 2147483648
      %v6049 = vsel %vm5966, %v6048, %v6047
      %v6050 = vsub.s32 4, %v6026
      %v6051 = vsel %vm5966, %v6050, %v6026
      %v6052 = vsel %vm5965, %v1466, %v6049
      %v6053 = vsel %vm5965, 0, %v6051
      %v6054 = vcosq.f32.pop %v6052
      %v6055 = vsinq.f32.pop %v6052
      %vm6056 = vweird.f32 %v1466
      %v6057 = vand.u32 %v6053, 3
      %vm6058 = vcmp.lt.s32.totalorder %v6057, 2
      %vm6059 = vcmp.eq.s32.totalorder %v6057, 0
      %v6060 = vxor.u32 %v6055, 2147483648
      %v6061 = vsel %vm6059, %v6054, %v6060
      %vm6062 = vcmp.eq.s32.totalorder %v6057, 2
      %v6063 = vxor.u32 %v6054, 2147483648
      %v6064 = vsel %vm6062, %v6063, %v6055
      %v6065 = vsel %vm6058, %v6061, %v6064
      %v6066 = vsel %vm6056, nan, %v6065
      %v6067 = vand.u32 2147483647, %v1467
      %vm6068 = vcmp.le.f32.partialorder %v6067, 0.7853982
      %vm6069 = vcmp.lt.s32.totalorder %v1467, 0
      %v6070 = vand.u32 %v1467, 2139095040
      %v6071 = vshrl.u32 %v6070, 23
      %v6072 = vsub.s32 %v6071, 127
      %v6073 = vand.u32 2147483647, %v1467
      %v6074 = vand.u32 %v6073, 8388607
      %v6075 = vor.u32 %v6074, 8388608
      %v6076 = vsub.s32 0, %v6075
      %v6077 = vadd.s32 %v6072, 1
      %vm6078 = vcmp.gt.s32.totalorder %v6077, 0
      %v6079 = vsel %vm6078, %v6077, 0
      %v6080 = vshrl.u32 %v6079, 5
      %v6081 = vand.u32 %v6079, 31
      %v6082 = vsub.s32 32, %v6081
      %v6083 = vshrl.u32 683565275, %v6082
      %v6084 = vshll.u32 683565275, %v6081
      %v6085 = vshrl.u32 2475754826, %v6082
      %v6086 = vor.u32 %v6084, %v6085
      %v6087 = vshll.u32 2475754826, %v6081
      %v6088 = vshrl.u32 2131351028, %v6082
      %v6089 = vor.u32 %v6087, %v6088
      %v6090 = vshll.u32 2131351028, %v6081
      %v6091 = vshrl.u32 2102212464, %v6082
      %v6092 = vor.u32 %v6090, %v6091
      %v6093 = vshll.u32 2102212464, %v6081
      %v6094 = vshrl.u32 920167782, %v6082
      %v6095 = vor.u32 %v6093, %v6094
      %v6096 = vshll.u32 920167782, %v6081
      %v6097 = vshrl.u32 1326507024, %v6082
      %v6098 = vor.u32 %v6096, %v6097
      %vm6099 = vcmp.lt.s32.totalorder %v6080, 1
      %vm6100 = vcmp.lt.s32.totalorder %v6080, 2
      %vm6101 = vcmp.lt.s32.totalorder %v6080, 3
      %vm6102 = vcmp.lt.s32.totalorder %v6080, 4
      %v6103 = vsel %vm6099, %v6083, %v6086
      %v6104 = vsel %vm6102, %v6092, 2102212464
      %v6105 = vsel %vm6101, %v6089, %v6104
      %v6106 = vsel %vm6100, %v6103, %v6105
      %v6107 = vsel %vm6099, %v6086, %v6089
      %v6108 = vsel %vm6102, %v6095, 920167782
      %v6109 = vsel %vm6101, %v6092, %v6108
      %v6110 = vsel %vm6100, %v6107, %v6109
      %v6111 = vsel %vm6099, %v6089, %v6092
      %v6112 = vsel %vm6102, %v6098, 1326507024
      %v6113 = vsel %vm6101, %v6095, %v6112
      %v6114 = vsel %vm6100, %v6111, %v6113
      %v6115 = vshll.u32 %v6075, 8
      %v6116 = vmul.u32.u64.compose %v6115, %v6114
      %v6117 = vextract.low.u32 %v6116
      %v6118 = vextract.high.u32 %v6116
      %v6119 = vmul.u32.u64.compose %v6115, %v6110
      %v6120 = vextract.low.u32 %v6119
      %v6121 = vextract.high.u32 %v6119
      %v6122 = vmul.u32 %v6115, %v6106
      %v6123 = vadd.s32 %v6118, %v6120
      %vm6124 = vc.u32 %v6118, %v6120
      %v6125 = vadd.s32 %v6121, 1
      %v6126 = vsel %vm6124, %v6125, %v6121
      %v6127 = vadd.s32 %v6122, %v6126
      %v6128 = vadd.s32 %v6127, 536870912
      %v6129 = vshrl.u32 %v6128, 30
      %v6130 = vshll.u32 %v6129, 30
      %v6131 = vsub.s32 %v6127, %v6130
      %vm6132 = vcmp.lt.s32.totalorder %v6131, 0
      %v6133 = vsub.s32 0, %v6131
      %v6134 = vsel %vm6132, %v6133, %v6131
      %v6135 = vclz %v6134
      %v6136 = vsub.s32 %v6135, 2
      %vm6137 = vcmp.gt.s32.totalorder 0, %v6136
      %v6138 = vsel %vm6137, 0, %v6136
      %v6139 = vsub.s32 32, %v6138
      %v6140 = vshll.u32 %v6131, %v6138
      %v6141 = vshrl.u32 %v6123, %v6139
      %v6142 = vor.u32 %v6140, %v6141
      %v6143 = vsub.s32 4294967266, %v6138
      %v6144 = vadd.s32 %v6143, 127
      %v6145 = vshll.u32 %v6144, 23
      %v6146 = vor.u32 4788187, %v6145
      %v6147 = vand.u32 2147483647, %v6146
      %v6149 = vcvt.s32.f32 %v6142
      %v6150 = vmul.f32 %v6149, %v6147
      %v6151 = vxor.u32 %v6150, 2147483648
      %v6152 = vsel %vm6069, %v6151, %v6150
      %v6153 = vsub.s32 4, %v6129
      %v6154 = vsel %vm6069, %v6153, %v6129
      %v6155 = vsel %vm6068, %v1467, %v6152
      %v6156 = vsel %vm6068, 0, %v6154
      %v6157 = vcosq.f32.pop %v6155
      %v6158 = vsinq.f32.pop %v6155
      %vm6159 = vweird.f32 %v1467
      %v6160 = vand.u32 %v6156, 3
      %vm6161 = vcmp.lt.s32.totalorder %v6160, 2
      %vm6162 = vcmp.eq.s32.totalorder %v6160, 0
      %v6163 = vxor.u32 %v6158, 2147483648
      %v6164 = vsel %vm6162, %v6157, %v6163
      %vm6165 = vcmp.eq.s32.totalorder %v6160, 2
      %v6166 = vxor.u32 %v6157, 2147483648
      %v6167 = vsel %vm6165, %v6166, %v6158
      %v6168 = vsel %vm6161, %v6164, %v6167
      %v6169 = vsel %vm6159, nan, %v6168
      %v6170 = vand.u32 2147483647, %v1468
      %vm6171 = vcmp.le.f32.partialorder %v6170, 0.7853982
      %vm6172 = vcmp.lt.s32.totalorder %v1468, 0
      %v6173 = vand.u32 %v1468, 2139095040
      %v6174 = vshrl.u32 %v6173, 23
      %v6175 = vsub.s32 %v6174, 127
      %v6176 = vand.u32 2147483647, %v1468
      %v6177 = vand.u32 %v6176, 8388607
      %v6178 = vor.u32 %v6177, 8388608
      %v6179 = vsub.s32 0, %v6178
      %v6180 = vadd.s32 %v6175, 1
      %vm6181 = vcmp.gt.s32.totalorder %v6180, 0
      %v6182 = vsel %vm6181, %v6180, 0
      %v6183 = vshrl.u32 %v6182, 5
      %v6184 = vand.u32 %v6182, 31
      %v6185 = vsub.s32 32, %v6184
      %v6186 = vshrl.u32 683565275, %v6185
      %v6187 = vshll.u32 683565275, %v6184
      %v6188 = vshrl.u32 2475754826, %v6185
      %v6189 = vor.u32 %v6187, %v6188
      %v6190 = vshll.u32 2475754826, %v6184
      %v6191 = vshrl.u32 2131351028, %v6185
      %v6192 = vor.u32 %v6190, %v6191
      %v6193 = vshll.u32 2131351028, %v6184
      %v6194 = vshrl.u32 2102212464, %v6185
      %v6195 = vor.u32 %v6193, %v6194
      %v6196 = vshll.u32 2102212464, %v6184
      %v6197 = vshrl.u32 920167782, %v6185
      %v6198 = vor.u32 %v6196, %v6197
      %v6199 = vshll.u32 920167782, %v6184
      %v6200 = vshrl.u32 1326507024, %v6185
      %v6201 = vor.u32 %v6199, %v6200
      %vm6202 = vcmp.lt.s32.totalorder %v6183, 1
      %vm6203 = vcmp.lt.s32.totalorder %v6183, 2
      %vm6204 = vcmp.lt.s32.totalorder %v6183, 3
      %vm6205 = vcmp.lt.s32.totalorder %v6183, 4
      %v6206 = vsel %vm6202, %v6186, %v6189
      %v6207 = vsel %vm6205, %v6195, 2102212464
      %v6208 = vsel %vm6204, %v6192, %v6207
      %v6209 = vsel %vm6203, %v6206, %v6208
      %v6210 = vsel %vm6202, %v6189, %v6192
      %v6211 = vsel %vm6205, %v6198, 920167782
      %v6212 = vsel %vm6204, %v6195, %v6211
      %v6213 = vsel %vm6203, %v6210, %v6212
      %v6214 = vsel %vm6202, %v6192, %v6195
      %v6215 = vsel %vm6205, %v6201, 1326507024
      %v6216 = vsel %vm6204, %v6198, %v6215
      %v6217 = vsel %vm6203, %v6214, %v6216
      %v6218 = vshll.u32 %v6178, 8
      %v6219 = vmul.u32.u64.compose %v6218, %v6217
      %v6220 = vextract.low.u32 %v6219
      %v6221 = vextract.high.u32 %v6219
      %v6222 = vmul.u32.u64.compose %v6218, %v6213
      %v6223 = vextract.low.u32 %v6222
      %v6224 = vextract.high.u32 %v6222
      %v6225 = vmul.u32 %v6218, %v6209
      %v6226 = vadd.s32 %v6221, %v6223
      %vm6227 = vc.u32 %v6221, %v6223
      %v6228 = vadd.s32 %v6224, 1
      %v6229 = vsel %vm6227, %v6228, %v6224
      %v6230 = vadd.s32 %v6225, %v6229
      %v6231 = vadd.s32 %v6230, 536870912
      %v6232 = vshrl.u32 %v6231, 30
      %v6233 = vshll.u32 %v6232, 30
      %v6234 = vsub.s32 %v6230, %v6233
      %vm6235 = vcmp.lt.s32.totalorder %v6234, 0
      %v6236 = vsub.s32 0, %v6234
      %v6237 = vsel %vm6235, %v6236, %v6234
      %v6238 = vclz %v6237
      %v6239 = vsub.s32 %v6238, 2
      %vm6240 = vcmp.gt.s32.totalorder 0, %v6239
      %v6241 = vsel %vm6240, 0, %v6239
      %v6242 = vsub.s32 32, %v6241
      %v6243 = vshll.u32 %v6234, %v6241
      %v6244 = vshrl.u32 %v6226, %v6242
      %v6245 = vor.u32 %v6243, %v6244
      %v6246 = vsub.s32 4294967266, %v6241
      %v6247 = vadd.s32 %v6246, 127
      %v6248 = vshll.u32 %v6247, 23
      %v6249 = vor.u32 4788187, %v6248
      %v6250 = vand.u32 2147483647, %v6249
      %v6252 = vcvt.s32.f32 %v6245
      %v6253 = vmul.f32 %v6252, %v6250
      %v6254 = vxor.u32 %v6253, 2147483648
      %v6255 = vsel %vm6172, %v6254, %v6253
      %v6256 = vsub.s32 4, %v6232
      %v6257 = vsel %vm6172, %v6256, %v6232
      %v6258 = vsel %vm6171, %v1468, %v6255
      %v6259 = vsel %vm6171, 0, %v6257
      %v6260 = vcosq.f32.pop %v6258
      %v6261 = vsinq.f32.pop %v6258
      %vm6262 = vweird.f32 %v1468
      %v6263 = vand.u32 %v6259, 3
      %vm6264 = vcmp.lt.s32.totalorder %v6263, 2
      %vm6265 = vcmp.eq.s32.totalorder %v6263, 0
      %v6266 = vxor.u32 %v6261, 2147483648
      %v6267 = vsel %vm6265, %v6260, %v6266
      %vm6268 = vcmp.eq.s32.totalorder %v6263, 2
      %v6269 = vxor.u32 %v6260, 2147483648
      %v6270 = vsel %vm6268, %v6269, %v6261
      %v6271 = vsel %vm6264, %v6267, %v6270
      %v6272 = vsel %vm6262, nan, %v6271
      %v6273 = vand.u32 2147483647, %v1469
      %vm6274 = vcmp.le.f32.partialorder %v6273, 0.7853982
      %vm6275 = vcmp.lt.s32.totalorder %v1469, 0
      %v6276 = vand.u32 %v1469, 2139095040
      %v6277 = vshrl.u32 %v6276, 23
      %v6278 = vsub.s32 %v6277, 127
      %v6279 = vand.u32 2147483647, %v1469
      %v6280 = vand.u32 %v6279, 8388607
      %v6281 = vor.u32 %v6280, 8388608
      %v6282 = vsub.s32 0, %v6281
      %v6283 = vadd.s32 %v6278, 1
      %vm6284 = vcmp.gt.s32.totalorder %v6283, 0
      %v6285 = vsel %vm6284, %v6283, 0
      %v6286 = vshrl.u32 %v6285, 5
      %v6287 = vand.u32 %v6285, 31
      %v6288 = vsub.s32 32, %v6287
      %v6289 = vshrl.u32 683565275, %v6288
      %v6290 = vshll.u32 683565275, %v6287
      %v6291 = vshrl.u32 2475754826, %v6288
      %v6292 = vor.u32 %v6290, %v6291
      %v6293 = vshll.u32 2475754826, %v6287
      %v6294 = vshrl.u32 2131351028, %v6288
      %v6295 = vor.u32 %v6293, %v6294
      %v6296 = vshll.u32 2131351028, %v6287
      %v6297 = vshrl.u32 2102212464, %v6288
      %v6298 = vor.u32 %v6296, %v6297
      %v6299 = vshll.u32 2102212464, %v6287
      %v6300 = vshrl.u32 920167782, %v6288
      %v6301 = vor.u32 %v6299, %v6300
      %v6302 = vshll.u32 920167782, %v6287
      %v6303 = vshrl.u32 1326507024, %v6288
      %v6304 = vor.u32 %v6302, %v6303
      %vm6305 = vcmp.lt.s32.totalorder %v6286, 1
      %vm6306 = vcmp.lt.s32.totalorder %v6286, 2
      %vm6307 = vcmp.lt.s32.totalorder %v6286, 3
      %vm6308 = vcmp.lt.s32.totalorder %v6286, 4
      %v6309 = vsel %vm6305, %v6289, %v6292
      %v6310 = vsel %vm6308, %v6298, 2102212464
      %v6311 = vsel %vm6307, %v6295, %v6310
      %v6312 = vsel %vm6306, %v6309, %v6311
      %v6313 = vsel %vm6305, %v6292, %v6295
      %v6314 = vsel %vm6308, %v6301, 920167782
      %v6315 = vsel %vm6307, %v6298, %v6314
      %v6316 = vsel %vm6306, %v6313, %v6315
      %v6317 = vsel %vm6305, %v6295, %v6298
      %v6318 = vsel %vm6308, %v6304, 1326507024
      %v6319 = vsel %vm6307, %v6301, %v6318
      %v6320 = vsel %vm6306, %v6317, %v6319
      %v6321 = vshll.u32 %v6281, 8
      %v6322 = vmul.u32.u64.compose %v6321, %v6320
      %v6323 = vextract.low.u32 %v6322
      %v6324 = vextract.high.u32 %v6322
      %v6325 = vmul.u32.u64.compose %v6321, %v6316
      %v6326 = vextract.low.u32 %v6325
      %v6327 = vextract.high.u32 %v6325
      %v6328 = vmul.u32 %v6321, %v6312
      %v6329 = vadd.s32 %v6324, %v6326
      %vm6330 = vc.u32 %v6324, %v6326
      %v6331 = vadd.s32 %v6327, 1
      %v6332 = vsel %vm6330, %v6331, %v6327
      %v6333 = vadd.s32 %v6328, %v6332
      %v6334 = vadd.s32 %v6333, 536870912
      %v6335 = vshrl.u32 %v6334, 30
      %v6336 = vshll.u32 %v6335, 30
      %v6337 = vsub.s32 %v6333, %v6336
      %vm6338 = vcmp.lt.s32.totalorder %v6337, 0
      %v6339 = vsub.s32 0, %v6337
      %v6340 = vsel %vm6338, %v6339, %v6337
      %v6341 = vclz %v6340
      %v6342 = vsub.s32 %v6341, 2
      %vm6343 = vcmp.gt.s32.totalorder 0, %v6342
      %v6344 = vsel %vm6343, 0, %v6342
      %v6345 = vsub.s32 32, %v6344
      %v6346 = vshll.u32 %v6337, %v6344
      %v6347 = vshrl.u32 %v6329, %v6345
      %v6348 = vor.u32 %v6346, %v6347
      %v6349 = vsub.s32 4294967266, %v6344
      %v6350 = vadd.s32 %v6349, 127
      %v6351 = vshll.u32 %v6350, 23
      %v6352 = vor.u32 4788187, %v6351
      %v6353 = vand.u32 2147483647, %v6352
      %v6355 = vcvt.s32.f32 %v6348
      %v6356 = vmul.f32 %v6355, %v6353
      %v6357 = vxor.u32 %v6356, 2147483648
      %v6358 = vsel %vm6275, %v6357, %v6356
      %v6359 = vsub.s32 4, %v6335
      %v6360 = vsel %vm6275, %v6359, %v6335
      %v6361 = vsel %vm6274, %v1469, %v6358
      %v6362 = vsel %vm6274, 0, %v6360
      %v6363 = vcosq.f32.pop %v6361
      %v6364 = vsinq.f32.pop %v6361
      %vm6365 = vweird.f32 %v1469
      %v6366 = vand.u32 %v6362, 3
      %vm6367 = vcmp.lt.s32.totalorder %v6366, 2
      %vm6368 = vcmp.eq.s32.totalorder %v6366, 0
      %v6369 = vxor.u32 %v6364, 2147483648
      %v6370 = vsel %vm6368, %v6363, %v6369
      %vm6371 = vcmp.eq.s32.totalorder %v6366, 2
      %v6372 = vxor.u32 %v6363, 2147483648
      %v6373 = vsel %vm6371, %v6372, %v6364
      %v6374 = vsel %vm6367, %v6370, %v6373
      %v6375 = vsel %vm6365, nan, %v6374
      %v6376 = vand.u32 2147483647, %v1470
      %vm6377 = vcmp.le.f32.partialorder %v6376, 0.7853982
      %vm6378 = vcmp.lt.s32.totalorder %v1470, 0
      %v6379 = vand.u32 %v1470, 2139095040
      %v6380 = vshrl.u32 %v6379, 23
      %v6381 = vsub.s32 %v6380, 127
      %v6382 = vand.u32 2147483647, %v1470
      %v6383 = vand.u32 %v6382, 8388607
      %v6384 = vor.u32 %v6383, 8388608
      %v6385 = vsub.s32 0, %v6384
      %v6386 = vadd.s32 %v6381, 1
      %vm6387 = vcmp.gt.s32.totalorder %v6386, 0
      %v6388 = vsel %vm6387, %v6386, 0
      %v6389 = vshrl.u32 %v6388, 5
      %v6390 = vand.u32 %v6388, 31
      %v6391 = vsub.s32 32, %v6390
      %v6392 = vshrl.u32 683565275, %v6391
      %v6393 = vshll.u32 683565275, %v6390
      %v6394 = vshrl.u32 2475754826, %v6391
      %v6395 = vor.u32 %v6393, %v6394
      %v6396 = vshll.u32 2475754826, %v6390
      %v6397 = vshrl.u32 2131351028, %v6391
      %v6398 = vor.u32 %v6396, %v6397
      %v6399 = vshll.u32 2131351028, %v6390
      %v6400 = vshrl.u32 2102212464, %v6391
      %v6401 = vor.u32 %v6399, %v6400
      %v6402 = vshll.u32 2102212464, %v6390
      %v6403 = vshrl.u32 920167782, %v6391
      %v6404 = vor.u32 %v6402, %v6403
      %v6405 = vshll.u32 920167782, %v6390
      %v6406 = vshrl.u32 1326507024, %v6391
      %v6407 = vor.u32 %v6405, %v6406
      %vm6408 = vcmp.lt.s32.totalorder %v6389, 1
      %vm6409 = vcmp.lt.s32.totalorder %v6389, 2
      %vm6410 = vcmp.lt.s32.totalorder %v6389, 3
      %vm6411 = vcmp.lt.s32.totalorder %v6389, 4
      %v6412 = vsel %vm6408, %v6392, %v6395
      %v6413 = vsel %vm6411, %v6401, 2102212464
      %v6414 = vsel %vm6410, %v6398, %v6413
      %v6415 = vsel %vm6409, %v6412, %v6414
      %v6416 = vsel %vm6408, %v6395, %v6398
      %v6417 = vsel %vm6411, %v6404, 920167782
      %v6418 = vsel %vm6410, %v6401, %v6417
      %v6419 = vsel %vm6409, %v6416, %v6418
      %v6420 = vsel %vm6408, %v6398, %v6401
      %v6421 = vsel %vm6411, %v6407, 1326507024
      %v6422 = vsel %vm6410, %v6404, %v6421
      %v6423 = vsel %vm6409, %v6420, %v6422
      %v6424 = vshll.u32 %v6384, 8
      %v6425 = vmul.u32.u64.compose %v6424, %v6423
      %v6426 = vextract.low.u32 %v6425
      %v6427 = vextract.high.u32 %v6425
      %v6428 = vmul.u32.u64.compose %v6424, %v6419
      %v6429 = vextract.low.u32 %v6428
      %v6430 = vextract.high.u32 %v6428
      %v6431 = vmul.u32 %v6424, %v6415
      %v6432 = vadd.s32 %v6427, %v6429
      %vm6433 = vc.u32 %v6427, %v6429
      %v6434 = vadd.s32 %v6430, 1
      %v6435 = vsel %vm6433, %v6434, %v6430
      %v6436 = vadd.s32 %v6431, %v6435
      %v6437 = vadd.s32 %v6436, 536870912
      %v6438 = vshrl.u32 %v6437, 30
      %v6439 = vshll.u32 %v6438, 30
      %v6440 = vsub.s32 %v6436, %v6439
      %vm6441 = vcmp.lt.s32.totalorder %v6440, 0
      %v6442 = vsub.s32 0, %v6440
      %v6443 = vsel %vm6441, %v6442, %v6440
      %v6444 = vclz %v6443
      %v6445 = vsub.s32 %v6444, 2
      %vm6446 = vcmp.gt.s32.totalorder 0, %v6445
      %v6447 = vsel %vm6446, 0, %v6445
      %v6448 = vsub.s32 32, %v6447
      %v6449 = vshll.u32 %v6440, %v6447
      %v6450 = vshrl.u32 %v6432, %v6448
      %v6451 = vor.u32 %v6449, %v6450
      %v6452 = vsub.s32 4294967266, %v6447
      %v6453 = vadd.s32 %v6452, 127
      %v6454 = vshll.u32 %v6453, 23
      %v6455 = vor.u32 4788187, %v6454
      %v6456 = vand.u32 2147483647, %v6455
      %v6458 = vcvt.s32.f32 %v6451
      %v6459 = vmul.f32 %v6458, %v6456
      %v6460 = vxor.u32 %v6459, 2147483648
      %v6461 = vsel %vm6378, %v6460, %v6459
      %v6462 = vsub.s32 4, %v6438
      %v6463 = vsel %vm6378, %v6462, %v6438
      %v6464 = vsel %vm6377, %v1470, %v6461
      %v6465 = vsel %vm6377, 0, %v6463
      %v6466 = vcosq.f32.pop %v6464
      %v6467 = vsinq.f32.pop %v6464
      %vm6468 = vweird.f32 %v1470
      %v6469 = vand.u32 %v6465, 3
      %vm6470 = vcmp.lt.s32.totalorder %v6469, 2
      %vm6471 = vcmp.eq.s32.totalorder %v6469, 0
      %v6472 = vxor.u32 %v6467, 2147483648
      %v6473 = vsel %vm6471, %v6466, %v6472
      %vm6474 = vcmp.eq.s32.totalorder %v6469, 2
      %v6475 = vxor.u32 %v6466, 2147483648
      %v6476 = vsel %vm6474, %v6475, %v6467
      %v6477 = vsel %vm6470, %v6473, %v6476
      %v6478 = vsel %vm6468, nan, %v6477
      %v6479 = vand.u32 2147483647, %v1471
      %vm6480 = vcmp.le.f32.partialorder %v6479, 0.7853982
      %vm6481 = vcmp.lt.s32.totalorder %v1471, 0
      %v6482 = vand.u32 %v1471, 2139095040
      %v6483 = vshrl.u32 %v6482, 23
      %v6484 = vsub.s32 %v6483, 127
      %v6485 = vand.u32 2147483647, %v1471
      %v6486 = vand.u32 %v6485, 8388607
      %v6487 = vor.u32 %v6486, 8388608
      %v6488 = vsub.s32 0, %v6487
      %v6489 = vadd.s32 %v6484, 1
      %vm6490 = vcmp.gt.s32.totalorder %v6489, 0
      %v6491 = vsel %vm6490, %v6489, 0
      %v6492 = vshrl.u32 %v6491, 5
      %v6493 = vand.u32 %v6491, 31
      %v6494 = vsub.s32 32, %v6493
      %v6495 = vshrl.u32 683565275, %v6494
      %v6496 = vshll.u32 683565275, %v6493
      %v6497 = vshrl.u32 2475754826, %v6494
      %v6498 = vor.u32 %v6496, %v6497
      %v6499 = vshll.u32 2475754826, %v6493
      %v6500 = vshrl.u32 2131351028, %v6494
      %v6501 = vor.u32 %v6499, %v6500
      %v6502 = vshll.u32 2131351028, %v6493
      %v6503 = vshrl.u32 2102212464, %v6494
      %v6504 = vor.u32 %v6502, %v6503
      %v6505 = vshll.u32 2102212464, %v6493
      %v6506 = vshrl.u32 920167782, %v6494
      %v6507 = vor.u32 %v6505, %v6506
      %v6508 = vshll.u32 920167782, %v6493
      %v6509 = vshrl.u32 1326507024, %v6494
      %v6510 = vor.u32 %v6508, %v6509
      %vm6511 = vcmp.lt.s32.totalorder %v6492, 1
      %vm6512 = vcmp.lt.s32.totalorder %v6492, 2
      %vm6513 = vcmp.lt.s32.totalorder %v6492, 3
      %vm6514 = vcmp.lt.s32.totalorder %v6492, 4
      %v6515 = vsel %vm6511, %v6495, %v6498
      %v6516 = vsel %vm6514, %v6504, 2102212464
      %v6517 = vsel %vm6513, %v6501, %v6516
      %v6518 = vsel %vm6512, %v6515, %v6517
      %v6519 = vsel %vm6511, %v6498, %v6501
      %v6520 = vsel %vm6514, %v6507, 920167782
      %v6521 = vsel %vm6513, %v6504, %v6520
      %v6522 = vsel %vm6512, %v6519, %v6521
      %v6523 = vsel %vm6511, %v6501, %v6504
      %v6524 = vsel %vm6514, %v6510, 1326507024
      %v6525 = vsel %vm6513, %v6507, %v6524
      %v6526 = vsel %vm6512, %v6523, %v6525
      %v6527 = vshll.u32 %v6487, 8
      %v6528 = vmul.u32.u64.compose %v6527, %v6526
      %v6529 = vextract.low.u32 %v6528
      %v6530 = vextract.high.u32 %v6528
      %v6531 = vmul.u32.u64.compose %v6527, %v6522
      %v6532 = vextract.low.u32 %v6531
      %v6533 = vextract.high.u32 %v6531
      %v6534 = vmul.u32 %v6527, %v6518
      %v6535 = vadd.s32 %v6530, %v6532
      %vm6536 = vc.u32 %v6530, %v6532
      %v6537 = vadd.s32 %v6533, 1
      %v6538 = vsel %vm6536, %v6537, %v6533
      %v6539 = vadd.s32 %v6534, %v6538
      %v6540 = vadd.s32 %v6539, 536870912
      %v6541 = vshrl.u32 %v6540, 30
      %v6542 = vshll.u32 %v6541, 30
      %v6543 = vsub.s32 %v6539, %v6542
      %vm6544 = vcmp.lt.s32.totalorder %v6543, 0
      %v6545 = vsub.s32 0, %v6543
      %v6546 = vsel %vm6544, %v6545, %v6543
      %v6547 = vclz %v6546
      %v6548 = vsub.s32 %v6547, 2
      %vm6549 = vcmp.gt.s32.totalorder 0, %v6548
      %v6550 = vsel %vm6549, 0, %v6548
      %v6551 = vsub.s32 32, %v6550
      %v6552 = vshll.u32 %v6543, %v6550
      %v6553 = vshrl.u32 %v6535, %v6551
      %v6554 = vor.u32 %v6552, %v6553
      %v6555 = vsub.s32 4294967266, %v6550
      %v6556 = vadd.s32 %v6555, 127
      %v6557 = vshll.u32 %v6556, 23
      %v6558 = vor.u32 4788187, %v6557
      %v6559 = vand.u32 2147483647, %v6558
      %v6561 = vcvt.s32.f32 %v6554
      %v6562 = vmul.f32 %v6561, %v6559
      %v6563 = vxor.u32 %v6562, 2147483648
      %v6564 = vsel %vm6481, %v6563, %v6562
      %v6565 = vsub.s32 4, %v6541
      %v6566 = vsel %vm6481, %v6565, %v6541
      %v6567 = vsel %vm6480, %v1471, %v6564
      %v6568 = vsel %vm6480, 0, %v6566
      %v6569 = vcosq.f32.pop %v6567
      %v6570 = vsinq.f32.pop %v6567
      %vm6571 = vweird.f32 %v1471
      %v6572 = vand.u32 %v6568, 3
      %vm6573 = vcmp.lt.s32.totalorder %v6572, 2
      %vm6574 = vcmp.eq.s32.totalorder %v6572, 0
      %v6575 = vxor.u32 %v6570, 2147483648
      %v6576 = vsel %vm6574, %v6569, %v6575
      %vm6577 = vcmp.eq.s32.totalorder %v6572, 2
      %v6578 = vxor.u32 %v6569, 2147483648
      %v6579 = vsel %vm6577, %v6578, %v6570
      %v6580 = vsel %vm6573, %v6576, %v6579
      %v6581 = vsel %vm6571, nan, %v6580
      %v6582 = vand.u32 2147483647, %v1472
      %vm6583 = vcmp.le.f32.partialorder %v6582, 0.7853982
      %vm6584 = vcmp.lt.s32.totalorder %v1472, 0
      %v6585 = vand.u32 %v1472, 2139095040
      %v6586 = vshrl.u32 %v6585, 23
      %v6587 = vsub.s32 %v6586, 127
      %v6588 = vand.u32 2147483647, %v1472
      %v6589 = vand.u32 %v6588, 8388607
      %v6590 = vor.u32 %v6589, 8388608
      %v6591 = vsub.s32 0, %v6590
      %v6592 = vadd.s32 %v6587, 1
      %vm6593 = vcmp.gt.s32.totalorder %v6592, 0
      %v6594 = vsel %vm6593, %v6592, 0
      %v6595 = vshrl.u32 %v6594, 5
      %v6596 = vand.u32 %v6594, 31
      %v6597 = vsub.s32 32, %v6596
      %v6598 = vshrl.u32 683565275, %v6597
      %v6599 = vshll.u32 683565275, %v6596
      %v6600 = vshrl.u32 2475754826, %v6597
      %v6601 = vor.u32 %v6599, %v6600
      %v6602 = vshll.u32 2475754826, %v6596
      %v6603 = vshrl.u32 2131351028, %v6597
      %v6604 = vor.u32 %v6602, %v6603
      %v6605 = vshll.u32 2131351028, %v6596
      %v6606 = vshrl.u32 2102212464, %v6597
      %v6607 = vor.u32 %v6605, %v6606
      %v6608 = vshll.u32 2102212464, %v6596
      %v6609 = vshrl.u32 920167782, %v6597
      %v6610 = vor.u32 %v6608, %v6609
      %v6611 = vshll.u32 920167782, %v6596
      %v6612 = vshrl.u32 1326507024, %v6597
      %v6613 = vor.u32 %v6611, %v6612
      %vm6614 = vcmp.lt.s32.totalorder %v6595, 1
      %vm6615 = vcmp.lt.s32.totalorder %v6595, 2
      %vm6616 = vcmp.lt.s32.totalorder %v6595, 3
      %vm6617 = vcmp.lt.s32.totalorder %v6595, 4
      %v6618 = vsel %vm6614, %v6598, %v6601
      %v6619 = vsel %vm6617, %v6607, 2102212464
      %v6620 = vsel %vm6616, %v6604, %v6619
      %v6621 = vsel %vm6615, %v6618, %v6620
      %v6622 = vsel %vm6614, %v6601, %v6604
      %v6623 = vsel %vm6617, %v6610, 920167782
      %v6624 = vsel %vm6616, %v6607, %v6623
      %v6625 = vsel %vm6615, %v6622, %v6624
      %v6626 = vsel %vm6614, %v6604, %v6607
      %v6627 = vsel %vm6617, %v6613, 1326507024
      %v6628 = vsel %vm6616, %v6610, %v6627
      %v6629 = vsel %vm6615, %v6626, %v6628
      %v6630 = vshll.u32 %v6590, 8
      %v6631 = vmul.u32.u64.compose %v6630, %v6629
      %v6632 = vextract.low.u32 %v6631
      %v6633 = vextract.high.u32 %v6631
      %v6634 = vmul.u32.u64.compose %v6630, %v6625
      %v6635 = vextract.low.u32 %v6634
      %v6636 = vextract.high.u32 %v6634
      %v6637 = vmul.u32 %v6630, %v6621
      %v6638 = vadd.s32 %v6633, %v6635
      %vm6639 = vc.u32 %v6633, %v6635
      %v6640 = vadd.s32 %v6636, 1
      %v6641 = vsel %vm6639, %v6640, %v6636
      %v6642 = vadd.s32 %v6637, %v6641
      %v6643 = vadd.s32 %v6642, 536870912
      %v6644 = vshrl.u32 %v6643, 30
      %v6645 = vshll.u32 %v6644, 30
      %v6646 = vsub.s32 %v6642, %v6645
      %vm6647 = vcmp.lt.s32.totalorder %v6646, 0
      %v6648 = vsub.s32 0, %v6646
      %v6649 = vsel %vm6647, %v6648, %v6646
      %v6650 = vclz %v6649
      %v6651 = vsub.s32 %v6650, 2
      %vm6652 = vcmp.gt.s32.totalorder 0, %v6651
      %v6653 = vsel %vm6652, 0, %v6651
      %v6654 = vsub.s32 32, %v6653
      %v6655 = vshll.u32 %v6646, %v6653
      %v6656 = vshrl.u32 %v6638, %v6654
      %v6657 = vor.u32 %v6655, %v6656
      %v6658 = vsub.s32 4294967266, %v6653
      %v6659 = vadd.s32 %v6658, 127
      %v6660 = vshll.u32 %v6659, 23
      %v6661 = vor.u32 4788187, %v6660
      %v6662 = vand.u32 2147483647, %v6661
      %v6664 = vcvt.s32.f32 %v6657
      %v6665 = vmul.f32 %v6664, %v6662
      %v6666 = vxor.u32 %v6665, 2147483648
      %v6667 = vsel %vm6584, %v6666, %v6665
      %v6668 = vsub.s32 4, %v6644
      %v6669 = vsel %vm6584, %v6668, %v6644
      %v6670 = vsel %vm6583, %v1472, %v6667
      %v6671 = vsel %vm6583, 0, %v6669
      %v6672 = vcosq.f32.pop %v6670
      %v6673 = vsinq.f32.pop %v6670
      %vm6674 = vweird.f32 %v1472
      %v6675 = vand.u32 %v6671, 3
      %vm6676 = vcmp.lt.s32.totalorder %v6675, 2
      %vm6677 = vcmp.eq.s32.totalorder %v6675, 0
      %v6678 = vxor.u32 %v6673, 2147483648
      %v6679 = vsel %vm6677, %v6672, %v6678
      %vm6680 = vcmp.eq.s32.totalorder %v6675, 2
      %v6681 = vxor.u32 %v6672, 2147483648
      %v6682 = vsel %vm6680, %v6681, %v6673
      %v6683 = vsel %vm6676, %v6679, %v6682
      %v6684 = vsel %vm6674, nan, %v6683
      %v6685 = vand.u32 2147483647, %v1473
      %vm6686 = vcmp.le.f32.partialorder %v6685, 0.7853982
      %vm6687 = vcmp.lt.s32.totalorder %v1473, 0
      %v6688 = vand.u32 %v1473, 2139095040
      %v6689 = vshrl.u32 %v6688, 23
      %v6690 = vsub.s32 %v6689, 127
      %v6691 = vand.u32 2147483647, %v1473
      %v6692 = vand.u32 %v6691, 8388607
      %v6693 = vor.u32 %v6692, 8388608
      %v6694 = vsub.s32 0, %v6693
      %v6695 = vadd.s32 %v6690, 1
      %vm6696 = vcmp.gt.s32.totalorder %v6695, 0
      %v6697 = vsel %vm6696, %v6695, 0
      %v6698 = vshrl.u32 %v6697, 5
      %v6699 = vand.u32 %v6697, 31
      %v6700 = vsub.s32 32, %v6699
      %v6701 = vshrl.u32 683565275, %v6700
      %v6702 = vshll.u32 683565275, %v6699
      %v6703 = vshrl.u32 2475754826, %v6700
      %v6704 = vor.u32 %v6702, %v6703
      %v6705 = vshll.u32 2475754826, %v6699
      %v6706 = vshrl.u32 2131351028, %v6700
      %v6707 = vor.u32 %v6705, %v6706
      %v6708 = vshll.u32 2131351028, %v6699
      %v6709 = vshrl.u32 2102212464, %v6700
      %v6710 = vor.u32 %v6708, %v6709
      %v6711 = vshll.u32 2102212464, %v6699
      %v6712 = vshrl.u32 920167782, %v6700
      %v6713 = vor.u32 %v6711, %v6712
      %v6714 = vshll.u32 920167782, %v6699
      %v6715 = vshrl.u32 1326507024, %v6700
      %v6716 = vor.u32 %v6714, %v6715
      %vm6717 = vcmp.lt.s32.totalorder %v6698, 1
      %vm6718 = vcmp.lt.s32.totalorder %v6698, 2
      %vm6719 = vcmp.lt.s32.totalorder %v6698, 3
      %vm6720 = vcmp.lt.s32.totalorder %v6698, 4
      %v6721 = vsel %vm6717, %v6701, %v6704
      %v6722 = vsel %vm6720, %v6710, 2102212464
      %v6723 = vsel %vm6719, %v6707, %v6722
      %v6724 = vsel %vm6718, %v6721, %v6723
      %v6725 = vsel %vm6717, %v6704, %v6707
      %v6726 = vsel %vm6720, %v6713, 920167782
      %v6727 = vsel %vm6719, %v6710, %v6726
      %v6728 = vsel %vm6718, %v6725, %v6727
      %v6729 = vsel %vm6717, %v6707, %v6710
      %v6730 = vsel %vm6720, %v6716, 1326507024
      %v6731 = vsel %vm6719, %v6713, %v6730
      %v6732 = vsel %vm6718, %v6729, %v6731
      %v6733 = vshll.u32 %v6693, 8
      %v6734 = vmul.u32.u64.compose %v6733, %v6732
      %v6735 = vextract.low.u32 %v6734
      %v6736 = vextract.high.u32 %v6734
      %v6737 = vmul.u32.u64.compose %v6733, %v6728
      %v6738 = vextract.low.u32 %v6737
      %v6739 = vextract.high.u32 %v6737
      %v6740 = vmul.u32 %v6733, %v6724
      %v6741 = vadd.s32 %v6736, %v6738
      %vm6742 = vc.u32 %v6736, %v6738
      %v6743 = vadd.s32 %v6739, 1
      %v6744 = vsel %vm6742, %v6743, %v6739
      %v6745 = vadd.s32 %v6740, %v6744
      %v6746 = vadd.s32 %v6745, 536870912
      %v6747 = vshrl.u32 %v6746, 30
      %v6748 = vshll.u32 %v6747, 30
      %v6749 = vsub.s32 %v6745, %v6748
      %vm6750 = vcmp.lt.s32.totalorder %v6749, 0
      %v6751 = vsub.s32 0, %v6749
      %v6752 = vsel %vm6750, %v6751, %v6749
      %v6753 = vclz %v6752
      %v6754 = vsub.s32 %v6753, 2
      %vm6755 = vcmp.gt.s32.totalorder 0, %v6754
      %v6756 = vsel %vm6755, 0, %v6754
      %v6757 = vsub.s32 32, %v6756
      %v6758 = vshll.u32 %v6749, %v6756
      %v6759 = vshrl.u32 %v6741, %v6757
      %v6760 = vor.u32 %v6758, %v6759
      %v6761 = vsub.s32 4294967266, %v6756
      %v6762 = vadd.s32 %v6761, 127
      %v6763 = vshll.u32 %v6762, 23
      %v6764 = vor.u32 4788187, %v6763
      %v6765 = vand.u32 2147483647, %v6764
      %v6767 = vcvt.s32.f32 %v6760
      %v6768 = vmul.f32 %v6767, %v6765
      %v6769 = vxor.u32 %v6768, 2147483648
      %v6770 = vsel %vm6687, %v6769, %v6768
      %v6771 = vsub.s32 4, %v6747
      %v6772 = vsel %vm6687, %v6771, %v6747
      %v6773 = vsel %vm6686, %v1473, %v6770
      %v6774 = vsel %vm6686, 0, %v6772
      %v6775 = vcosq.f32.pop %v6773
      %v6776 = vsinq.f32.pop %v6773
      %vm6777 = vweird.f32 %v1473
      %v6778 = vand.u32 %v6774, 3
      %vm6779 = vcmp.lt.s32.totalorder %v6778, 2
      %vm6780 = vcmp.eq.s32.totalorder %v6778, 0
      %v6781 = vxor.u32 %v6776, 2147483648
      %v6782 = vsel %vm6780, %v6775, %v6781
      %vm6783 = vcmp.eq.s32.totalorder %v6778, 2
      %v6784 = vxor.u32 %v6775, 2147483648
      %v6785 = vsel %vm6783, %v6784, %v6776
      %v6786 = vsel %vm6779, %v6782, %v6785
      %v6787 = vsel %vm6777, nan, %v6786
      %v6788 = vand.u32 2147483647, %v1474
      %vm6789 = vcmp.le.f32.partialorder %v6788, 0.7853982
      %vm6790 = vcmp.lt.s32.totalorder %v1474, 0
      %v6791 = vand.u32 %v1474, 2139095040
      %v6792 = vshrl.u32 %v6791, 23
      %v6793 = vsub.s32 %v6792, 127
      %v6794 = vand.u32 2147483647, %v1474
      %v6795 = vand.u32 %v6794, 8388607
      %v6796 = vor.u32 %v6795, 8388608
      %v6797 = vsub.s32 0, %v6796
      %v6798 = vadd.s32 %v6793, 1
      %vm6799 = vcmp.gt.s32.totalorder %v6798, 0
      %v6800 = vsel %vm6799, %v6798, 0
      %v6801 = vshrl.u32 %v6800, 5
      %v6802 = vand.u32 %v6800, 31
      %v6803 = vsub.s32 32, %v6802
      %v6804 = vshrl.u32 683565275, %v6803
      %v6805 = vshll.u32 683565275, %v6802
      %v6806 = vshrl.u32 2475754826, %v6803
      %v6807 = vor.u32 %v6805, %v6806
      %v6808 = vshll.u32 2475754826, %v6802
      %v6809 = vshrl.u32 2131351028, %v6803
      %v6810 = vor.u32 %v6808, %v6809
      %v6811 = vshll.u32 2131351028, %v6802
      %v6812 = vshrl.u32 2102212464, %v6803
      %v6813 = vor.u32 %v6811, %v6812
      %v6814 = vshll.u32 2102212464, %v6802
      %v6815 = vshrl.u32 920167782, %v6803
      %v6816 = vor.u32 %v6814, %v6815
      %v6817 = vshll.u32 920167782, %v6802
      %v6818 = vshrl.u32 1326507024, %v6803
      %v6819 = vor.u32 %v6817, %v6818
      %vm6820 = vcmp.lt.s32.totalorder %v6801, 1
      %vm6821 = vcmp.lt.s32.totalorder %v6801, 2
      %vm6822 = vcmp.lt.s32.totalorder %v6801, 3
      %vm6823 = vcmp.lt.s32.totalorder %v6801, 4
      %v6824 = vsel %vm6820, %v6804, %v6807
      %v6825 = vsel %vm6823, %v6813, 2102212464
      %v6826 = vsel %vm6822, %v6810, %v6825
      %v6827 = vsel %vm6821, %v6824, %v6826
      %v6828 = vsel %vm6820, %v6807, %v6810
      %v6829 = vsel %vm6823, %v6816, 920167782
      %v6830 = vsel %vm6822, %v6813, %v6829
      %v6831 = vsel %vm6821, %v6828, %v6830
      %v6832 = vsel %vm6820, %v6810, %v6813
      %v6833 = vsel %vm6823, %v6819, 1326507024
      %v6834 = vsel %vm6822, %v6816, %v6833
      %v6835 = vsel %vm6821, %v6832, %v6834
      %v6836 = vshll.u32 %v6796, 8
      %v6837 = vmul.u32.u64.compose %v6836, %v6835
      %v6838 = vextract.low.u32 %v6837
      %v6839 = vextract.high.u32 %v6837
      %v6840 = vmul.u32.u64.compose %v6836, %v6831
      %v6841 = vextract.low.u32 %v6840
      %v6842 = vextract.high.u32 %v6840
      %v6843 = vmul.u32 %v6836, %v6827
      %v6844 = vadd.s32 %v6839, %v6841
      %vm6845 = vc.u32 %v6839, %v6841
      %v6846 = vadd.s32 %v6842, 1
      %v6847 = vsel %vm6845, %v6846, %v6842
      %v6848 = vadd.s32 %v6843, %v6847
      %v6849 = vadd.s32 %v6848, 536870912
      %v6850 = vshrl.u32 %v6849, 30
      %v6851 = vshll.u32 %v6850, 30
      %v6852 = vsub.s32 %v6848, %v6851
      %vm6853 = vcmp.lt.s32.totalorder %v6852, 0
      %v6854 = vsub.s32 0, %v6852
      %v6855 = vsel %vm6853, %v6854, %v6852
      %v6856 = vclz %v6855
      %v6857 = vsub.s32 %v6856, 2
      %vm6858 = vcmp.gt.s32.totalorder 0, %v6857
      %v6859 = vsel %vm6858, 0, %v6857
      %v6860 = vsub.s32 32, %v6859
      %v6861 = vshll.u32 %v6852, %v6859
      %v6862 = vshrl.u32 %v6844, %v6860
      %v6863 = vor.u32 %v6861, %v6862
      %v6864 = vsub.s32 4294967266, %v6859
      %v6865 = vadd.s32 %v6864, 127
      %v6866 = vshll.u32 %v6865, 23
      %v6867 = vor.u32 4788187, %v6866
      %v6868 = vand.u32 2147483647, %v6867
      %v6870 = vcvt.s32.f32 %v6863
      %v6871 = vmul.f32 %v6870, %v6868
      %v6872 = vxor.u32 %v6871, 2147483648
      %v6873 = vsel %vm6790, %v6872, %v6871
      %v6874 = vsub.s32 4, %v6850
      %v6875 = vsel %vm6790, %v6874, %v6850
      %v6876 = vsel %vm6789, %v1474, %v6873
      %v6877 = vsel %vm6789, 0, %v6875
      %v6878 = vcosq.f32.pop %v6876
      %v6879 = vsinq.f32.pop %v6876
      %vm6880 = vweird.f32 %v1474
      %v6881 = vand.u32 %v6877, 3
      %vm6882 = vcmp.lt.s32.totalorder %v6881, 2
      %vm6883 = vcmp.eq.s32.totalorder %v6881, 0
      %v6884 = vxor.u32 %v6879, 2147483648
      %v6885 = vsel %vm6883, %v6878, %v6884
      %vm6886 = vcmp.eq.s32.totalorder %v6881, 2
      %v6887 = vxor.u32 %v6878, 2147483648
      %v6888 = vsel %vm6886, %v6887, %v6879
      %v6889 = vsel %vm6882, %v6885, %v6888
      %v6890 = vsel %vm6880, nan, %v6889
      %v6891 = vand.u32 2147483647, %v1475
      %vm6892 = vcmp.le.f32.partialorder %v6891, 0.7853982
      %vm6893 = vcmp.lt.s32.totalorder %v1475, 0
      %v6894 = vand.u32 %v1475, 2139095040
      %v6895 = vshrl.u32 %v6894, 23
      %v6896 = vsub.s32 %v6895, 127
      %v6897 = vand.u32 2147483647, %v1475
      %v6898 = vand.u32 %v6897, 8388607
      %v6899 = vor.u32 %v6898, 8388608
      %v6900 = vsub.s32 0, %v6899
      %v6901 = vadd.s32 %v6896, 1
      %vm6902 = vcmp.gt.s32.totalorder %v6901, 0
      %v6903 = vsel %vm6902, %v6901, 0
      %v6904 = vshrl.u32 %v6903, 5
      %v6905 = vand.u32 %v6903, 31
      %v6906 = vsub.s32 32, %v6905
      %v6907 = vshrl.u32 683565275, %v6906
      %v6908 = vshll.u32 683565275, %v6905
      %v6909 = vshrl.u32 2475754826, %v6906
      %v6910 = vor.u32 %v6908, %v6909
      %v6911 = vshll.u32 2475754826, %v6905
      %v6912 = vshrl.u32 2131351028, %v6906
      %v6913 = vor.u32 %v6911, %v6912
      %v6914 = vshll.u32 2131351028, %v6905
      %v6915 = vshrl.u32 2102212464, %v6906
      %v6916 = vor.u32 %v6914, %v6915
      %v6917 = vshll.u32 2102212464, %v6905
      %v6918 = vshrl.u32 920167782, %v6906
      %v6919 = vor.u32 %v6917, %v6918
      %v6920 = vshll.u32 920167782, %v6905
      %v6921 = vshrl.u32 1326507024, %v6906
      %v6922 = vor.u32 %v6920, %v6921
      %vm6923 = vcmp.lt.s32.totalorder %v6904, 1
      %vm6924 = vcmp.lt.s32.totalorder %v6904, 2
      %vm6925 = vcmp.lt.s32.totalorder %v6904, 3
      %vm6926 = vcmp.lt.s32.totalorder %v6904, 4
      %v6927 = vsel %vm6923, %v6907, %v6910
      %v6928 = vsel %vm6926, %v6916, 2102212464
      %v6929 = vsel %vm6925, %v6913, %v6928
      %v6930 = vsel %vm6924, %v6927, %v6929
      %v6931 = vsel %vm6923, %v6910, %v6913
      %v6932 = vsel %vm6926, %v6919, 920167782
      %v6933 = vsel %vm6925, %v6916, %v6932
      %v6934 = vsel %vm6924, %v6931, %v6933
      %v6935 = vsel %vm6923, %v6913, %v6916
      %v6936 = vsel %vm6926, %v6922, 1326507024
      %v6937 = vsel %vm6925, %v6919, %v6936
      %v6938 = vsel %vm6924, %v6935, %v6937
      %v6939 = vshll.u32 %v6899, 8
      %v6940 = vmul.u32.u64.compose %v6939, %v6938
      %v6941 = vextract.low.u32 %v6940
      %v6942 = vextract.high.u32 %v6940
      %v6943 = vmul.u32.u64.compose %v6939, %v6934
      %v6944 = vextract.low.u32 %v6943
      %v6945 = vextract.high.u32 %v6943
      %v6946 = vmul.u32 %v6939, %v6930
      %v6947 = vadd.s32 %v6942, %v6944
      %vm6948 = vc.u32 %v6942, %v6944
      %v6949 = vadd.s32 %v6945, 1
      %v6950 = vsel %vm6948, %v6949, %v6945
      %v6951 = vadd.s32 %v6946, %v6950
      %v6952 = vadd.s32 %v6951, 536870912
      %v6953 = vshrl.u32 %v6952, 30
      %v6954 = vshll.u32 %v6953, 30
      %v6955 = vsub.s32 %v6951, %v6954
      %vm6956 = vcmp.lt.s32.totalorder %v6955, 0
      %v6957 = vsub.s32 0, %v6955
      %v6958 = vsel %vm6956, %v6957, %v6955
      %v6959 = vclz %v6958
      %v6960 = vsub.s32 %v6959, 2
      %vm6961 = vcmp.gt.s32.totalorder 0, %v6960
      %v6962 = vsel %vm6961, 0, %v6960
      %v6963 = vsub.s32 32, %v6962
      %v6964 = vshll.u32 %v6955, %v6962
      %v6965 = vshrl.u32 %v6947, %v6963
      %v6966 = vor.u32 %v6964, %v6965
      %v6967 = vsub.s32 4294967266, %v6962
      %v6968 = vadd.s32 %v6967, 127
      %v6969 = vshll.u32 %v6968, 23
      %v6970 = vor.u32 4788187, %v6969
      %v6971 = vand.u32 2147483647, %v6970
      %v6973 = vcvt.s32.f32 %v6966
      %v6974 = vmul.f32 %v6973, %v6971
      %v6975 = vxor.u32 %v6974, 2147483648
      %v6976 = vsel %vm6893, %v6975, %v6974
      %v6977 = vsub.s32 4, %v6953
      %v6978 = vsel %vm6893, %v6977, %v6953
      %v6979 = vsel %vm6892, %v1475, %v6976
      %v6980 = vsel %vm6892, 0, %v6978
      %v6981 = vcosq.f32.pop %v6979
      %v6982 = vsinq.f32.pop %v6979
      %vm6983 = vweird.f32 %v1475
      %v6984 = vand.u32 %v6980, 3
      %vm6985 = vcmp.lt.s32.totalorder %v6984, 2
      %vm6986 = vcmp.eq.s32.totalorder %v6984, 0
      %v6987 = vxor.u32 %v6982, 2147483648
      %v6988 = vsel %vm6986, %v6981, %v6987
      %vm6989 = vcmp.eq.s32.totalorder %v6984, 2
      %v6990 = vxor.u32 %v6981, 2147483648
      %v6991 = vsel %vm6989, %v6990, %v6982
      %v6992 = vsel %vm6985, %v6988, %v6991
      %v6993 = vsel %vm6983, nan, %v6992
      %v6994 = vand.u32 2147483647, %v1476
      %vm6995 = vcmp.le.f32.partialorder %v6994, 0.7853982
      %vm6996 = vcmp.lt.s32.totalorder %v1476, 0
      %v6997 = vand.u32 %v1476, 2139095040
      %v6998 = vshrl.u32 %v6997, 23
      %v6999 = vsub.s32 %v6998, 127
      %v7000 = vand.u32 2147483647, %v1476
      %v7001 = vand.u32 %v7000, 8388607
      %v7002 = vor.u32 %v7001, 8388608
      %v7003 = vsub.s32 0, %v7002
      %v7004 = vadd.s32 %v6999, 1
      %vm7005 = vcmp.gt.s32.totalorder %v7004, 0
      %v7006 = vsel %vm7005, %v7004, 0
      %v7007 = vshrl.u32 %v7006, 5
      %v7008 = vand.u32 %v7006, 31
      %v7009 = vsub.s32 32, %v7008
      %v7010 = vshrl.u32 683565275, %v7009
      %v7011 = vshll.u32 683565275, %v7008
      %v7012 = vshrl.u32 2475754826, %v7009
      %v7013 = vor.u32 %v7011, %v7012
      %v7014 = vshll.u32 2475754826, %v7008
      %v7015 = vshrl.u32 2131351028, %v7009
      %v7016 = vor.u32 %v7014, %v7015
      %v7017 = vshll.u32 2131351028, %v7008
      %v7018 = vshrl.u32 2102212464, %v7009
      %v7019 = vor.u32 %v7017, %v7018
      %v7020 = vshll.u32 2102212464, %v7008
      %v7021 = vshrl.u32 920167782, %v7009
      %v7022 = vor.u32 %v7020, %v7021
      %v7023 = vshll.u32 920167782, %v7008
      %v7024 = vshrl.u32 1326507024, %v7009
      %v7025 = vor.u32 %v7023, %v7024
      %vm7026 = vcmp.lt.s32.totalorder %v7007, 1
      %vm7027 = vcmp.lt.s32.totalorder %v7007, 2
      %vm7028 = vcmp.lt.s32.totalorder %v7007, 3
      %vm7029 = vcmp.lt.s32.totalorder %v7007, 4
      %v7030 = vsel %vm7026, %v7010, %v7013
      %v7031 = vsel %vm7029, %v7019, 2102212464
      %v7032 = vsel %vm7028, %v7016, %v7031
      %v7033 = vsel %vm7027, %v7030, %v7032
      %v7034 = vsel %vm7026, %v7013, %v7016
      %v7035 = vsel %vm7029, %v7022, 920167782
      %v7036 = vsel %vm7028, %v7019, %v7035
      %v7037 = vsel %vm7027, %v7034, %v7036
      %v7038 = vsel %vm7026, %v7016, %v7019
      %v7039 = vsel %vm7029, %v7025, 1326507024
      %v7040 = vsel %vm7028, %v7022, %v7039
      %v7041 = vsel %vm7027, %v7038, %v7040
      %v7042 = vshll.u32 %v7002, 8
      %v7043 = vmul.u32.u64.compose %v7042, %v7041
      %v7044 = vextract.low.u32 %v7043
      %v7045 = vextract.high.u32 %v7043
      %v7046 = vmul.u32.u64.compose %v7042, %v7037
      %v7047 = vextract.low.u32 %v7046
      %v7048 = vextract.high.u32 %v7046
      %v7049 = vmul.u32 %v7042, %v7033
      %v7050 = vadd.s32 %v7045, %v7047
      %vm7051 = vc.u32 %v7045, %v7047
      %v7052 = vadd.s32 %v7048, 1
      %v7053 = vsel %vm7051, %v7052, %v7048
      %v7054 = vadd.s32 %v7049, %v7053
      %v7055 = vadd.s32 %v7054, 536870912
      %v7056 = vshrl.u32 %v7055, 30
      %v7057 = vshll.u32 %v7056, 30
      %v7058 = vsub.s32 %v7054, %v7057
      %vm7059 = vcmp.lt.s32.totalorder %v7058, 0
      %v7060 = vsub.s32 0, %v7058
      %v7061 = vsel %vm7059, %v7060, %v7058
      %v7062 = vclz %v7061
      %v7063 = vsub.s32 %v7062, 2
      %vm7064 = vcmp.gt.s32.totalorder 0, %v7063
      %v7065 = vsel %vm7064, 0, %v7063
      %v7066 = vsub.s32 32, %v7065
      %v7067 = vshll.u32 %v7058, %v7065
      %v7068 = vshrl.u32 %v7050, %v7066
      %v7069 = vor.u32 %v7067, %v7068
      %v7070 = vsub.s32 4294967266, %v7065
      %v7071 = vadd.s32 %v7070, 127
      %v7072 = vshll.u32 %v7071, 23
      %v7073 = vor.u32 4788187, %v7072
      %v7074 = vand.u32 2147483647, %v7073
      %v7076 = vcvt.s32.f32 %v7069
      %v7077 = vmul.f32 %v7076, %v7074
      %v7078 = vxor.u32 %v7077, 2147483648
      %v7079 = vsel %vm6996, %v7078, %v7077
      %v7080 = vsub.s32 4, %v7056
      %v7081 = vsel %vm6996, %v7080, %v7056
      %v7082 = vsel %vm6995, %v1476, %v7079
      %v7083 = vsel %vm6995, 0, %v7081
      %v7084 = vcosq.f32.pop %v7082
      %v7085 = vsinq.f32.pop %v7082
      %vm7086 = vweird.f32 %v1476
      %v7087 = vand.u32 %v7083, 3
      %vm7088 = vcmp.lt.s32.totalorder %v7087, 2
      %vm7089 = vcmp.eq.s32.totalorder %v7087, 0
      %v7090 = vxor.u32 %v7085, 2147483648
      %v7091 = vsel %vm7089, %v7084, %v7090
      %vm7092 = vcmp.eq.s32.totalorder %v7087, 2
      %v7093 = vxor.u32 %v7084, 2147483648
      %v7094 = vsel %vm7092, %v7093, %v7085
      %v7095 = vsel %vm7088, %v7091, %v7094
      %v7096 = vsel %vm7086, nan, %v7095
      %v7097 = vand.u32 2147483647, %v1477
      %vm7098 = vcmp.le.f32.partialorder %v7097, 0.7853982
      %vm7099 = vcmp.lt.s32.totalorder %v1477, 0
      %v7100 = vand.u32 %v1477, 2139095040
      %v7101 = vshrl.u32 %v7100, 23
      %v7102 = vsub.s32 %v7101, 127
      %v7103 = vand.u32 2147483647, %v1477
      %v7104 = vand.u32 %v7103, 8388607
      %v7105 = vor.u32 %v7104, 8388608
      %v7106 = vsub.s32 0, %v7105
      %v7107 = vadd.s32 %v7102, 1
      %vm7108 = vcmp.gt.s32.totalorder %v7107, 0
      %v7109 = vsel %vm7108, %v7107, 0
      %v7110 = vshrl.u32 %v7109, 5
      %v7111 = vand.u32 %v7109, 31
      %v7112 = vsub.s32 32, %v7111
      %v7113 = vshrl.u32 683565275, %v7112
      %v7114 = vshll.u32 683565275, %v7111
      %v7115 = vshrl.u32 2475754826, %v7112
      %v7116 = vor.u32 %v7114, %v7115
      %v7117 = vshll.u32 2475754826, %v7111
      %v7118 = vshrl.u32 2131351028, %v7112
      %v7119 = vor.u32 %v7117, %v7118
      %v7120 = vshll.u32 2131351028, %v7111
      %v7121 = vshrl.u32 2102212464, %v7112
      %v7122 = vor.u32 %v7120, %v7121
      %v7123 = vshll.u32 2102212464, %v7111
      %v7124 = vshrl.u32 920167782, %v7112
      %v7125 = vor.u32 %v7123, %v7124
      %v7126 = vshll.u32 920167782, %v7111
      %v7127 = vshrl.u32 1326507024, %v7112
      %v7128 = vor.u32 %v7126, %v7127
      %vm7129 = vcmp.lt.s32.totalorder %v7110, 1
      %vm7130 = vcmp.lt.s32.totalorder %v7110, 2
      %vm7131 = vcmp.lt.s32.totalorder %v7110, 3
      %vm7132 = vcmp.lt.s32.totalorder %v7110, 4
      %v7133 = vsel %vm7129, %v7113, %v7116
      %v7134 = vsel %vm7132, %v7122, 2102212464
      %v7135 = vsel %vm7131, %v7119, %v7134
      %v7136 = vsel %vm7130, %v7133, %v7135
      %v7137 = vsel %vm7129, %v7116, %v7119
      %v7138 = vsel %vm7132, %v7125, 920167782
      %v7139 = vsel %vm7131, %v7122, %v7138
      %v7140 = vsel %vm7130, %v7137, %v7139
      %v7141 = vsel %vm7129, %v7119, %v7122
      %v7142 = vsel %vm7132, %v7128, 1326507024
      %v7143 = vsel %vm7131, %v7125, %v7142
      %v7144 = vsel %vm7130, %v7141, %v7143
      %v7145 = vshll.u32 %v7105, 8
      %v7146 = vmul.u32.u64.compose %v7145, %v7144
      %v7147 = vextract.low.u32 %v7146
      %v7148 = vextract.high.u32 %v7146
      %v7149 = vmul.u32.u64.compose %v7145, %v7140
      %v7150 = vextract.low.u32 %v7149
      %v7151 = vextract.high.u32 %v7149
      %v7152 = vmul.u32 %v7145, %v7136
      %v7153 = vadd.s32 %v7148, %v7150
      %vm7154 = vc.u32 %v7148, %v7150
      %v7155 = vadd.s32 %v7151, 1
      %v7156 = vsel %vm7154, %v7155, %v7151
      %v7157 = vadd.s32 %v7152, %v7156
      %v7158 = vadd.s32 %v7157, 536870912
      %v7159 = vshrl.u32 %v7158, 30
      %v7160 = vshll.u32 %v7159, 30
      %v7161 = vsub.s32 %v7157, %v7160
      %vm7162 = vcmp.lt.s32.totalorder %v7161, 0
      %v7163 = vsub.s32 0, %v7161
      %v7164 = vsel %vm7162, %v7163, %v7161
      %v7165 = vclz %v7164
      %v7166 = vsub.s32 %v7165, 2
      %vm7167 = vcmp.gt.s32.totalorder 0, %v7166
      %v7168 = vsel %vm7167, 0, %v7166
      %v7169 = vsub.s32 32, %v7168
      %v7170 = vshll.u32 %v7161, %v7168
      %v7171 = vshrl.u32 %v7153, %v7169
      %v7172 = vor.u32 %v7170, %v7171
      %v7173 = vsub.s32 4294967266, %v7168
      %v7174 = vadd.s32 %v7173, 127
      %v7175 = vshll.u32 %v7174, 23
      %v7176 = vor.u32 4788187, %v7175
      %v7177 = vand.u32 2147483647, %v7176
      %v7179 = vcvt.s32.f32 %v7172
      %v7180 = vmul.f32 %v7179, %v7177
      %v7181 = vxor.u32 %v7180, 2147483648
      %v7182 = vsel %vm7099, %v7181, %v7180
      %v7183 = vsub.s32 4, %v7159
      %v7184 = vsel %vm7099, %v7183, %v7159
      %v7185 = vsel %vm7098, %v1477, %v7182
      %v7186 = vsel %vm7098, 0, %v7184
      %v7187 = vcosq.f32.pop %v7185
      %v7188 = vsinq.f32.pop %v7185
      %vm7189 = vweird.f32 %v1477
      %v7190 = vand.u32 %v7186, 3
      %vm7191 = vcmp.lt.s32.totalorder %v7190, 2
      %vm7192 = vcmp.eq.s32.totalorder %v7190, 0
      %v7193 = vxor.u32 %v7188, 2147483648
      %v7194 = vsel %vm7192, %v7187, %v7193
      %vm7195 = vcmp.eq.s32.totalorder %v7190, 2
      %v7196 = vxor.u32 %v7187, 2147483648
      %v7197 = vsel %vm7195, %v7196, %v7188
      %v7198 = vsel %vm7191, %v7194, %v7197
      %v7199 = vsel %vm7189, nan, %v7198
      %v7200 = vand.u32 2147483647, %v1478
      %vm7201 = vcmp.le.f32.partialorder %v7200, 0.7853982
      %vm7202 = vcmp.lt.s32.totalorder %v1478, 0
      %v7203 = vand.u32 %v1478, 2139095040
      %v7204 = vshrl.u32 %v7203, 23
      %v7205 = vsub.s32 %v7204, 127
      %v7206 = vand.u32 2147483647, %v1478
      %v7207 = vand.u32 %v7206, 8388607
      %v7208 = vor.u32 %v7207, 8388608
      %v7209 = vsub.s32 0, %v7208
      %v7210 = vadd.s32 %v7205, 1
      %vm7211 = vcmp.gt.s32.totalorder %v7210, 0
      %v7212 = vsel %vm7211, %v7210, 0
      %v7213 = vshrl.u32 %v7212, 5
      %v7214 = vand.u32 %v7212, 31
      %v7215 = vsub.s32 32, %v7214
      %v7216 = vshrl.u32 683565275, %v7215
      %v7217 = vshll.u32 683565275, %v7214
      %v7218 = vshrl.u32 2475754826, %v7215
      %v7219 = vor.u32 %v7217, %v7218
      %v7220 = vshll.u32 2475754826, %v7214
      %v7221 = vshrl.u32 2131351028, %v7215
      %v7222 = vor.u32 %v7220, %v7221
      %v7223 = vshll.u32 2131351028, %v7214
      %v7224 = vshrl.u32 2102212464, %v7215
      %v7225 = vor.u32 %v7223, %v7224
      %v7226 = vshll.u32 2102212464, %v7214
      %v7227 = vshrl.u32 920167782, %v7215
      %v7228 = vor.u32 %v7226, %v7227
      %v7229 = vshll.u32 920167782, %v7214
      %v7230 = vshrl.u32 1326507024, %v7215
      %v7231 = vor.u32 %v7229, %v7230
      %vm7232 = vcmp.lt.s32.totalorder %v7213, 1
      %vm7233 = vcmp.lt.s32.totalorder %v7213, 2
      %vm7234 = vcmp.lt.s32.totalorder %v7213, 3
      %vm7235 = vcmp.lt.s32.totalorder %v7213, 4
      %v7236 = vsel %vm7232, %v7216, %v7219
      %v7237 = vsel %vm7235, %v7225, 2102212464
      %v7238 = vsel %vm7234, %v7222, %v7237
      %v7239 = vsel %vm7233, %v7236, %v7238
      %v7240 = vsel %vm7232, %v7219, %v7222
      %v7241 = vsel %vm7235, %v7228, 920167782
      %v7242 = vsel %vm7234, %v7225, %v7241
      %v7243 = vsel %vm7233, %v7240, %v7242
      %v7244 = vsel %vm7232, %v7222, %v7225
      %v7245 = vsel %vm7235, %v7231, 1326507024
      %v7246 = vsel %vm7234, %v7228, %v7245
      %v7247 = vsel %vm7233, %v7244, %v7246
      %v7248 = vshll.u32 %v7208, 8
      %v7249 = vmul.u32.u64.compose %v7248, %v7247
      %v7250 = vextract.low.u32 %v7249
      %v7251 = vextract.high.u32 %v7249
      %v7252 = vmul.u32.u64.compose %v7248, %v7243
      %v7253 = vextract.low.u32 %v7252
      %v7254 = vextract.high.u32 %v7252
      %v7255 = vmul.u32 %v7248, %v7239
      %v7256 = vadd.s32 %v7251, %v7253
      %vm7257 = vc.u32 %v7251, %v7253
      %v7258 = vadd.s32 %v7254, 1
      %v7259 = vsel %vm7257, %v7258, %v7254
      %v7260 = vadd.s32 %v7255, %v7259
      %v7261 = vadd.s32 %v7260, 536870912
      %v7262 = vshrl.u32 %v7261, 30
      %v7263 = vshll.u32 %v7262, 30
      %v7264 = vsub.s32 %v7260, %v7263
      %vm7265 = vcmp.lt.s32.totalorder %v7264, 0
      %v7266 = vsub.s32 0, %v7264
      %v7267 = vsel %vm7265, %v7266, %v7264
      %v7268 = vclz %v7267
      %v7269 = vsub.s32 %v7268, 2
      %vm7270 = vcmp.gt.s32.totalorder 0, %v7269
      %v7271 = vsel %vm7270, 0, %v7269
      %v7272 = vsub.s32 32, %v7271
      %v7273 = vshll.u32 %v7264, %v7271
      %v7274 = vshrl.u32 %v7256, %v7272
      %v7275 = vor.u32 %v7273, %v7274
      %v7276 = vsub.s32 4294967266, %v7271
      %v7277 = vadd.s32 %v7276, 127
      %v7278 = vshll.u32 %v7277, 23
      %v7279 = vor.u32 4788187, %v7278
      %v7280 = vand.u32 2147483647, %v7279
      %v7282 = vcvt.s32.f32 %v7275
      %v7283 = vmul.f32 %v7282, %v7280
      %v7284 = vxor.u32 %v7283, 2147483648
      %v7285 = vsel %vm7202, %v7284, %v7283
      %v7286 = vsub.s32 4, %v7262
      %v7287 = vsel %vm7202, %v7286, %v7262
      %v7288 = vsel %vm7201, %v1478, %v7285
      %v7289 = vsel %vm7201, 0, %v7287
      %v7290 = vcosq.f32.pop %v7288
      %v7291 = vsinq.f32.pop %v7288
      %vm7292 = vweird.f32 %v1478
      %v7293 = vand.u32 %v7289, 3
      %vm7294 = vcmp.lt.s32.totalorder %v7293, 2
      %vm7295 = vcmp.eq.s32.totalorder %v7293, 0
      %v7296 = vxor.u32 %v7291, 2147483648
      %v7297 = vsel %vm7295, %v7290, %v7296
      %vm7298 = vcmp.eq.s32.totalorder %v7293, 2
      %v7299 = vxor.u32 %v7290, 2147483648
      %v7300 = vsel %vm7298, %v7299, %v7291
      %v7301 = vsel %vm7294, %v7297, %v7300
      %v7302 = vsel %vm7292, nan, %v7301
      %v7303 = vand.u32 2147483647, %v1479
      %vm7304 = vcmp.le.f32.partialorder %v7303, 0.7853982
      %vm7305 = vcmp.lt.s32.totalorder %v1479, 0
      %v7306 = vand.u32 %v1479, 2139095040
      %v7307 = vshrl.u32 %v7306, 23
      %v7308 = vsub.s32 %v7307, 127
      %v7309 = vand.u32 2147483647, %v1479
      %v7310 = vand.u32 %v7309, 8388607
      %v7311 = vor.u32 %v7310, 8388608
      %v7312 = vsub.s32 0, %v7311
      %v7313 = vadd.s32 %v7308, 1
      %vm7314 = vcmp.gt.s32.totalorder %v7313, 0
      %v7315 = vsel %vm7314, %v7313, 0
      %v7316 = vshrl.u32 %v7315, 5
      %v7317 = vand.u32 %v7315, 31
      %v7318 = vsub.s32 32, %v7317
      %v7319 = vshrl.u32 683565275, %v7318
      %v7320 = vshll.u32 683565275, %v7317
      %v7321 = vshrl.u32 2475754826, %v7318
      %v7322 = vor.u32 %v7320, %v7321
      %v7323 = vshll.u32 2475754826, %v7317
      %v7324 = vshrl.u32 2131351028, %v7318
      %v7325 = vor.u32 %v7323, %v7324
      %v7326 = vshll.u32 2131351028, %v7317
      %v7327 = vshrl.u32 2102212464, %v7318
      %v7328 = vor.u32 %v7326, %v7327
      %v7329 = vshll.u32 2102212464, %v7317
      %v7330 = vshrl.u32 920167782, %v7318
      %v7331 = vor.u32 %v7329, %v7330
      %v7332 = vshll.u32 920167782, %v7317
      %v7333 = vshrl.u32 1326507024, %v7318
      %v7334 = vor.u32 %v7332, %v7333
      %vm7335 = vcmp.lt.s32.totalorder %v7316, 1
      %vm7336 = vcmp.lt.s32.totalorder %v7316, 2
      %vm7337 = vcmp.lt.s32.totalorder %v7316, 3
      %vm7338 = vcmp.lt.s32.totalorder %v7316, 4
      %v7339 = vsel %vm7335, %v7319, %v7322
      %v7340 = vsel %vm7338, %v7328, 2102212464
      %v7341 = vsel %vm7337, %v7325, %v7340
      %v7342 = vsel %vm7336, %v7339, %v7341
      %v7343 = vsel %vm7335, %v7322, %v7325
      %v7344 = vsel %vm7338, %v7331, 920167782
      %v7345 = vsel %vm7337, %v7328, %v7344
      %v7346 = vsel %vm7336, %v7343, %v7345
      %v7347 = vsel %vm7335, %v7325, %v7328
      %v7348 = vsel %vm7338, %v7334, 1326507024
      %v7349 = vsel %vm7337, %v7331, %v7348
      %v7350 = vsel %vm7336, %v7347, %v7349
      %v7351 = vshll.u32 %v7311, 8
      %v7352 = vmul.u32.u64.compose %v7351, %v7350
      %v7353 = vextract.low.u32 %v7352
      %v7354 = vextract.high.u32 %v7352
      %v7355 = vmul.u32.u64.compose %v7351, %v7346
      %v7356 = vextract.low.u32 %v7355
      %v7357 = vextract.high.u32 %v7355
      %v7358 = vmul.u32 %v7351, %v7342
      %v7359 = vadd.s32 %v7354, %v7356
      %vm7360 = vc.u32 %v7354, %v7356
      %v7361 = vadd.s32 %v7357, 1
      %v7362 = vsel %vm7360, %v7361, %v7357
      %v7363 = vadd.s32 %v7358, %v7362
      %v7364 = vadd.s32 %v7363, 536870912
      %v7365 = vshrl.u32 %v7364, 30
      %v7366 = vshll.u32 %v7365, 30
      %v7367 = vsub.s32 %v7363, %v7366
      %vm7368 = vcmp.lt.s32.totalorder %v7367, 0
      %v7369 = vsub.s32 0, %v7367
      %v7370 = vsel %vm7368, %v7369, %v7367
      %v7371 = vclz %v7370
      %v7372 = vsub.s32 %v7371, 2
      %vm7373 = vcmp.gt.s32.totalorder 0, %v7372
      %v7374 = vsel %vm7373, 0, %v7372
      %v7375 = vsub.s32 32, %v7374
      %v7376 = vshll.u32 %v7367, %v7374
      %v7377 = vshrl.u32 %v7359, %v7375
      %v7378 = vor.u32 %v7376, %v7377
      %v7379 = vsub.s32 4294967266, %v7374
      %v7380 = vadd.s32 %v7379, 127
      %v7381 = vshll.u32 %v7380, 23
      %v7382 = vor.u32 4788187, %v7381
      %v7383 = vand.u32 2147483647, %v7382
      %v7385 = vcvt.s32.f32 %v7378
      %v7386 = vmul.f32 %v7385, %v7383
      %v7387 = vxor.u32 %v7386, 2147483648
      %v7388 = vsel %vm7305, %v7387, %v7386
      %v7389 = vsub.s32 4, %v7365
      %v7390 = vsel %vm7305, %v7389, %v7365
      %v7391 = vsel %vm7304, %v1479, %v7388
      %v7392 = vsel %vm7304, 0, %v7390
      %v7393 = vcosq.f32.pop %v7391
      %v7394 = vsinq.f32.pop %v7391
      %vm7395 = vweird.f32 %v1479
      %v7396 = vand.u32 %v7392, 3
      %vm7397 = vcmp.lt.s32.totalorder %v7396, 2
      %vm7398 = vcmp.eq.s32.totalorder %v7396, 0
      %v7399 = vxor.u32 %v7394, 2147483648
      %v7400 = vsel %vm7398, %v7393, %v7399
      %vm7401 = vcmp.eq.s32.totalorder %v7396, 2
      %v7402 = vxor.u32 %v7393, 2147483648
      %v7403 = vsel %vm7401, %v7402, %v7394
      %v7404 = vsel %vm7397, %v7400, %v7403
      %v7405 = vsel %vm7395, nan, %v7404
      %v7406 = vand.u32 2147483647, %v1480
      %vm7407 = vcmp.le.f32.partialorder %v7406, 0.7853982
      %vm7408 = vcmp.lt.s32.totalorder %v1480, 0
      %v7409 = vand.u32 %v1480, 2139095040
      %v7410 = vshrl.u32 %v7409, 23
      %v7411 = vsub.s32 %v7410, 127
      %v7412 = vand.u32 2147483647, %v1480
      %v7413 = vand.u32 %v7412, 8388607
      %v7414 = vor.u32 %v7413, 8388608
      %v7415 = vsub.s32 0, %v7414
      %v7416 = vadd.s32 %v7411, 1
      %vm7417 = vcmp.gt.s32.totalorder %v7416, 0
      %v7418 = vsel %vm7417, %v7416, 0
      %v7419 = vshrl.u32 %v7418, 5
      %v7420 = vand.u32 %v7418, 31
      %v7421 = vsub.s32 32, %v7420
      %v7422 = vshrl.u32 683565275, %v7421
      %v7423 = vshll.u32 683565275, %v7420
      %v7424 = vshrl.u32 2475754826, %v7421
      %v7425 = vor.u32 %v7423, %v7424
      %v7426 = vshll.u32 2475754826, %v7420
      %v7427 = vshrl.u32 2131351028, %v7421
      %v7428 = vor.u32 %v7426, %v7427
      %v7429 = vshll.u32 2131351028, %v7420
      %v7430 = vshrl.u32 2102212464, %v7421
      %v7431 = vor.u32 %v7429, %v7430
      %v7432 = vshll.u32 2102212464, %v7420
      %v7433 = vshrl.u32 920167782, %v7421
      %v7434 = vor.u32 %v7432, %v7433
      %v7435 = vshll.u32 920167782, %v7420
      %v7436 = vshrl.u32 1326507024, %v7421
      %v7437 = vor.u32 %v7435, %v7436
      %vm7438 = vcmp.lt.s32.totalorder %v7419, 1
      %vm7439 = vcmp.lt.s32.totalorder %v7419, 2
      %vm7440 = vcmp.lt.s32.totalorder %v7419, 3
      %vm7441 = vcmp.lt.s32.totalorder %v7419, 4
      %v7442 = vsel %vm7438, %v7422, %v7425
      %v7443 = vsel %vm7441, %v7431, 2102212464
      %v7444 = vsel %vm7440, %v7428, %v7443
      %v7445 = vsel %vm7439, %v7442, %v7444
      %v7446 = vsel %vm7438, %v7425, %v7428
      %v7447 = vsel %vm7441, %v7434, 920167782
      %v7448 = vsel %vm7440, %v7431, %v7447
      %v7449 = vsel %vm7439, %v7446, %v7448
      %v7450 = vsel %vm7438, %v7428, %v7431
      %v7451 = vsel %vm7441, %v7437, 1326507024
      %v7452 = vsel %vm7440, %v7434, %v7451
      %v7453 = vsel %vm7439, %v7450, %v7452
      %v7454 = vshll.u32 %v7414, 8
      %v7455 = vmul.u32.u64.compose %v7454, %v7453
      %v7456 = vextract.low.u32 %v7455
      %v7457 = vextract.high.u32 %v7455
      %v7458 = vmul.u32.u64.compose %v7454, %v7449
      %v7459 = vextract.low.u32 %v7458
      %v7460 = vextract.high.u32 %v7458
      %v7461 = vmul.u32 %v7454, %v7445
      %v7462 = vadd.s32 %v7457, %v7459
      %vm7463 = vc.u32 %v7457, %v7459
      %v7464 = vadd.s32 %v7460, 1
      %v7465 = vsel %vm7463, %v7464, %v7460
      %v7466 = vadd.s32 %v7461, %v7465
      %v7467 = vadd.s32 %v7466, 536870912
      %v7468 = vshrl.u32 %v7467, 30
      %v7469 = vshll.u32 %v7468, 30
      %v7470 = vsub.s32 %v7466, %v7469
      %vm7471 = vcmp.lt.s32.totalorder %v7470, 0
      %v7472 = vsub.s32 0, %v7470
      %v7473 = vsel %vm7471, %v7472, %v7470
      %v7474 = vclz %v7473
      %v7475 = vsub.s32 %v7474, 2
      %vm7476 = vcmp.gt.s32.totalorder 0, %v7475
      %v7477 = vsel %vm7476, 0, %v7475
      %v7478 = vsub.s32 32, %v7477
      %v7479 = vshll.u32 %v7470, %v7477
      %v7480 = vshrl.u32 %v7462, %v7478
      %v7481 = vor.u32 %v7479, %v7480
      %v7482 = vsub.s32 4294967266, %v7477
      %v7483 = vadd.s32 %v7482, 127
      %v7484 = vshll.u32 %v7483, 23
      %v7485 = vor.u32 4788187, %v7484
      %v7486 = vand.u32 2147483647, %v7485
      %v7488 = vcvt.s32.f32 %v7481
      %v7489 = vmul.f32 %v7488, %v7486
      %v7490 = vxor.u32 %v7489, 2147483648
      %v7491 = vsel %vm7408, %v7490, %v7489
      %v7492 = vsub.s32 4, %v7468
      %v7493 = vsel %vm7408, %v7492, %v7468
      %v7494 = vsel %vm7407, %v1480, %v7491
      %v7495 = vsel %vm7407, 0, %v7493
      %v7496 = vcosq.f32.pop %v7494
      %v7497 = vsinq.f32.pop %v7494
      %vm7498 = vweird.f32 %v1480
      %v7499 = vand.u32 %v7495, 3
      %vm7500 = vcmp.lt.s32.totalorder %v7499, 2
      %vm7501 = vcmp.eq.s32.totalorder %v7499, 0
      %v7502 = vxor.u32 %v7497, 2147483648
      %v7503 = vsel %vm7501, %v7496, %v7502
      %vm7504 = vcmp.eq.s32.totalorder %v7499, 2
      %v7505 = vxor.u32 %v7496, 2147483648
      %v7506 = vsel %vm7504, %v7505, %v7497
      %v7507 = vsel %vm7500, %v7503, %v7506
      %v7508 = vsel %vm7498, nan, %v7507
      %v7509 = vand.u32 2147483647, %v1481
      %vm7510 = vcmp.le.f32.partialorder %v7509, 0.7853982
      %vm7511 = vcmp.lt.s32.totalorder %v1481, 0
      %v7512 = vand.u32 %v1481, 2139095040
      %v7513 = vshrl.u32 %v7512, 23
      %v7514 = vsub.s32 %v7513, 127
      %v7515 = vand.u32 2147483647, %v1481
      %v7516 = vand.u32 %v7515, 8388607
      %v7517 = vor.u32 %v7516, 8388608
      %v7518 = vsub.s32 0, %v7517
      %v7519 = vadd.s32 %v7514, 1
      %vm7520 = vcmp.gt.s32.totalorder %v7519, 0
      %v7521 = vsel %vm7520, %v7519, 0
      %v7522 = vshrl.u32 %v7521, 5
      %v7523 = vand.u32 %v7521, 31
      %v7524 = vsub.s32 32, %v7523
      %v7525 = vshrl.u32 683565275, %v7524
      %v7526 = vshll.u32 683565275, %v7523
      %v7527 = vshrl.u32 2475754826, %v7524
      %v7528 = vor.u32 %v7526, %v7527
      %v7529 = vshll.u32 2475754826, %v7523
      %v7530 = vshrl.u32 2131351028, %v7524
      %v7531 = vor.u32 %v7529, %v7530
      %v7532 = vshll.u32 2131351028, %v7523
      %v7533 = vshrl.u32 2102212464, %v7524
      %v7534 = vor.u32 %v7532, %v7533
      %v7535 = vshll.u32 2102212464, %v7523
      %v7536 = vshrl.u32 920167782, %v7524
      %v7537 = vor.u32 %v7535, %v7536
      %v7538 = vshll.u32 920167782, %v7523
      %v7539 = vshrl.u32 1326507024, %v7524
      %v7540 = vor.u32 %v7538, %v7539
      %vm7541 = vcmp.lt.s32.totalorder %v7522, 1
      %vm7542 = vcmp.lt.s32.totalorder %v7522, 2
      %vm7543 = vcmp.lt.s32.totalorder %v7522, 3
      %vm7544 = vcmp.lt.s32.totalorder %v7522, 4
      %v7545 = vsel %vm7541, %v7525, %v7528
      %v7546 = vsel %vm7544, %v7534, 2102212464
      %v7547 = vsel %vm7543, %v7531, %v7546
      %v7548 = vsel %vm7542, %v7545, %v7547
      %v7549 = vsel %vm7541, %v7528, %v7531
      %v7550 = vsel %vm7544, %v7537, 920167782
      %v7551 = vsel %vm7543, %v7534, %v7550
      %v7552 = vsel %vm7542, %v7549, %v7551
      %v7553 = vsel %vm7541, %v7531, %v7534
      %v7554 = vsel %vm7544, %v7540, 1326507024
      %v7555 = vsel %vm7543, %v7537, %v7554
      %v7556 = vsel %vm7542, %v7553, %v7555
      %v7557 = vshll.u32 %v7517, 8
      %v7558 = vmul.u32.u64.compose %v7557, %v7556
      %v7559 = vextract.low.u32 %v7558
      %v7560 = vextract.high.u32 %v7558
      %v7561 = vmul.u32.u64.compose %v7557, %v7552
      %v7562 = vextract.low.u32 %v7561
      %v7563 = vextract.high.u32 %v7561
      %v7564 = vmul.u32 %v7557, %v7548
      %v7565 = vadd.s32 %v7560, %v7562
      %vm7566 = vc.u32 %v7560, %v7562
      %v7567 = vadd.s32 %v7563, 1
      %v7568 = vsel %vm7566, %v7567, %v7563
      %v7569 = vadd.s32 %v7564, %v7568
      %v7570 = vadd.s32 %v7569, 536870912
      %v7571 = vshrl.u32 %v7570, 30
      %v7572 = vshll.u32 %v7571, 30
      %v7573 = vsub.s32 %v7569, %v7572
      %vm7574 = vcmp.lt.s32.totalorder %v7573, 0
      %v7575 = vsub.s32 0, %v7573
      %v7576 = vsel %vm7574, %v7575, %v7573
      %v7577 = vclz %v7576
      %v7578 = vsub.s32 %v7577, 2
      %vm7579 = vcmp.gt.s32.totalorder 0, %v7578
      %v7580 = vsel %vm7579, 0, %v7578
      %v7581 = vsub.s32 32, %v7580
      %v7582 = vshll.u32 %v7573, %v7580
      %v7583 = vshrl.u32 %v7565, %v7581
      %v7584 = vor.u32 %v7582, %v7583
      %v7585 = vsub.s32 4294967266, %v7580
      %v7586 = vadd.s32 %v7585, 127
      %v7587 = vshll.u32 %v7586, 23
      %v7588 = vor.u32 4788187, %v7587
      %v7589 = vand.u32 2147483647, %v7588
      %v7591 = vcvt.s32.f32 %v7584
      %v7592 = vmul.f32 %v7591, %v7589
      %v7593 = vxor.u32 %v7592, 2147483648
      %v7594 = vsel %vm7511, %v7593, %v7592
      %v7595 = vsub.s32 4, %v7571
      %v7596 = vsel %vm7511, %v7595, %v7571
      %v7597 = vsel %vm7510, %v1481, %v7594
      %v7598 = vsel %vm7510, 0, %v7596
      %v7599 = vcosq.f32.pop %v7597
      %v7600 = vsinq.f32.pop %v7597
      %vm7601 = vweird.f32 %v1481
      %v7602 = vand.u32 %v7598, 3
      %vm7603 = vcmp.lt.s32.totalorder %v7602, 2
      %vm7604 = vcmp.eq.s32.totalorder %v7602, 0
      %v7605 = vxor.u32 %v7600, 2147483648
      %v7606 = vsel %vm7604, %v7599, %v7605
      %vm7607 = vcmp.eq.s32.totalorder %v7602, 2
      %v7608 = vxor.u32 %v7599, 2147483648
      %v7609 = vsel %vm7607, %v7608, %v7600
      %v7610 = vsel %vm7603, %v7606, %v7609
      %v7611 = vsel %vm7601, nan, %v7610
      %v7612 = vand.u32 2147483647, %v1482
      %vm7613 = vcmp.le.f32.partialorder %v7612, 0.7853982
      %vm7614 = vcmp.lt.s32.totalorder %v1482, 0
      %v7615 = vand.u32 %v1482, 2139095040
      %v7616 = vshrl.u32 %v7615, 23
      %v7617 = vsub.s32 %v7616, 127
      %v7618 = vand.u32 2147483647, %v1482
      %v7619 = vand.u32 %v7618, 8388607
      %v7620 = vor.u32 %v7619, 8388608
      %v7621 = vsub.s32 0, %v7620
      %v7622 = vadd.s32 %v7617, 1
      %vm7623 = vcmp.gt.s32.totalorder %v7622, 0
      %v7624 = vsel %vm7623, %v7622, 0
      %v7625 = vshrl.u32 %v7624, 5
      %v7626 = vand.u32 %v7624, 31
      %v7627 = vsub.s32 32, %v7626
      %v7628 = vshrl.u32 683565275, %v7627
      %v7629 = vshll.u32 683565275, %v7626
      %v7630 = vshrl.u32 2475754826, %v7627
      %v7631 = vor.u32 %v7629, %v7630
      %v7632 = vshll.u32 2475754826, %v7626
      %v7633 = vshrl.u32 2131351028, %v7627
      %v7634 = vor.u32 %v7632, %v7633
      %v7635 = vshll.u32 2131351028, %v7626
      %v7636 = vshrl.u32 2102212464, %v7627
      %v7637 = vor.u32 %v7635, %v7636
      %v7638 = vshll.u32 2102212464, %v7626
      %v7639 = vshrl.u32 920167782, %v7627
      %v7640 = vor.u32 %v7638, %v7639
      %v7641 = vshll.u32 920167782, %v7626
      %v7642 = vshrl.u32 1326507024, %v7627
      %v7643 = vor.u32 %v7641, %v7642
      %vm7644 = vcmp.lt.s32.totalorder %v7625, 1
      %vm7645 = vcmp.lt.s32.totalorder %v7625, 2
      %vm7646 = vcmp.lt.s32.totalorder %v7625, 3
      %vm7647 = vcmp.lt.s32.totalorder %v7625, 4
      %v7648 = vsel %vm7644, %v7628, %v7631
      %v7649 = vsel %vm7647, %v7637, 2102212464
      %v7650 = vsel %vm7646, %v7634, %v7649
      %v7651 = vsel %vm7645, %v7648, %v7650
      %v7652 = vsel %vm7644, %v7631, %v7634
      %v7653 = vsel %vm7647, %v7640, 920167782
      %v7654 = vsel %vm7646, %v7637, %v7653
      %v7655 = vsel %vm7645, %v7652, %v7654
      %v7656 = vsel %vm7644, %v7634, %v7637
      %v7657 = vsel %vm7647, %v7643, 1326507024
      %v7658 = vsel %vm7646, %v7640, %v7657
      %v7659 = vsel %vm7645, %v7656, %v7658
      %v7660 = vshll.u32 %v7620, 8
      %v7661 = vmul.u32.u64.compose %v7660, %v7659
      %v7662 = vextract.low.u32 %v7661
      %v7663 = vextract.high.u32 %v7661
      %v7664 = vmul.u32.u64.compose %v7660, %v7655
      %v7665 = vextract.low.u32 %v7664
      %v7666 = vextract.high.u32 %v7664
      %v7667 = vmul.u32 %v7660, %v7651
      %v7668 = vadd.s32 %v7663, %v7665
      %vm7669 = vc.u32 %v7663, %v7665
      %v7670 = vadd.s32 %v7666, 1
      %v7671 = vsel %vm7669, %v7670, %v7666
      %v7672 = vadd.s32 %v7667, %v7671
      %v7673 = vadd.s32 %v7672, 536870912
      %v7674 = vshrl.u32 %v7673, 30
      %v7675 = vshll.u32 %v7674, 30
      %v7676 = vsub.s32 %v7672, %v7675
      %vm7677 = vcmp.lt.s32.totalorder %v7676, 0
      %v7678 = vsub.s32 0, %v7676
      %v7679 = vsel %vm7677, %v7678, %v7676
      %v7680 = vclz %v7679
      %v7681 = vsub.s32 %v7680, 2
      %vm7682 = vcmp.gt.s32.totalorder 0, %v7681
      %v7683 = vsel %vm7682, 0, %v7681
      %v7684 = vsub.s32 32, %v7683
      %v7685 = vshll.u32 %v7676, %v7683
      %v7686 = vshrl.u32 %v7668, %v7684
      %v7687 = vor.u32 %v7685, %v7686
      %v7688 = vsub.s32 4294967266, %v7683
      %v7689 = vadd.s32 %v7688, 127
      %v7690 = vshll.u32 %v7689, 23
      %v7691 = vor.u32 4788187, %v7690
      %v7692 = vand.u32 2147483647, %v7691
      %v7694 = vcvt.s32.f32 %v7687
      %v7695 = vmul.f32 %v7694, %v7692
      %v7696 = vxor.u32 %v7695, 2147483648
      %v7697 = vsel %vm7614, %v7696, %v7695
      %v7698 = vsub.s32 4, %v7674
      %v7699 = vsel %vm7614, %v7698, %v7674
      %v7700 = vsel %vm7613, %v1482, %v7697
      %v7701 = vsel %vm7613, 0, %v7699
      %v7702 = vcosq.f32.pop %v7700
      %v7703 = vsinq.f32.pop %v7700
      %vm7704 = vweird.f32 %v1482
      %v7705 = vand.u32 %v7701, 3
      %vm7706 = vcmp.lt.s32.totalorder %v7705, 2
      %vm7707 = vcmp.eq.s32.totalorder %v7705, 0
      %v7708 = vxor.u32 %v7703, 2147483648
      %v7709 = vsel %vm7707, %v7702, %v7708
      %vm7710 = vcmp.eq.s32.totalorder %v7705, 2
      %v7711 = vxor.u32 %v7702, 2147483648
      %v7712 = vsel %vm7710, %v7711, %v7703
      %v7713 = vsel %vm7706, %v7709, %v7712
      %v7714 = vsel %vm7704, nan, %v7713
      %v7715 = vand.u32 2147483647, %v1483
      %vm7716 = vcmp.le.f32.partialorder %v7715, 0.7853982
      %vm7717 = vcmp.lt.s32.totalorder %v1483, 0
      %v7718 = vand.u32 %v1483, 2139095040
      %v7719 = vshrl.u32 %v7718, 23
      %v7720 = vsub.s32 %v7719, 127
      %v7721 = vand.u32 2147483647, %v1483
      %v7722 = vand.u32 %v7721, 8388607
      %v7723 = vor.u32 %v7722, 8388608
      %v7724 = vsub.s32 0, %v7723
      %v7725 = vadd.s32 %v7720, 1
      %vm7726 = vcmp.gt.s32.totalorder %v7725, 0
      %v7727 = vsel %vm7726, %v7725, 0
      %v7728 = vshrl.u32 %v7727, 5
      %v7729 = vand.u32 %v7727, 31
      %v7730 = vsub.s32 32, %v7729
      %v7731 = vshrl.u32 683565275, %v7730
      %v7732 = vshll.u32 683565275, %v7729
      %v7733 = vshrl.u32 2475754826, %v7730
      %v7734 = vor.u32 %v7732, %v7733
      %v7735 = vshll.u32 2475754826, %v7729
      %v7736 = vshrl.u32 2131351028, %v7730
      %v7737 = vor.u32 %v7735, %v7736
      %v7738 = vshll.u32 2131351028, %v7729
      %v7739 = vshrl.u32 2102212464, %v7730
      %v7740 = vor.u32 %v7738, %v7739
      %v7741 = vshll.u32 2102212464, %v7729
      %v7742 = vshrl.u32 920167782, %v7730
      %v7743 = vor.u32 %v7741, %v7742
      %v7744 = vshll.u32 920167782, %v7729
      %v7745 = vshrl.u32 1326507024, %v7730
      %v7746 = vor.u32 %v7744, %v7745
      %vm7747 = vcmp.lt.s32.totalorder %v7728, 1
      %vm7748 = vcmp.lt.s32.totalorder %v7728, 2
      %vm7749 = vcmp.lt.s32.totalorder %v7728, 3
      %vm7750 = vcmp.lt.s32.totalorder %v7728, 4
      %v7751 = vsel %vm7747, %v7731, %v7734
      %v7752 = vsel %vm7750, %v7740, 2102212464
      %v7753 = vsel %vm7749, %v7737, %v7752
      %v7754 = vsel %vm7748, %v7751, %v7753
      %v7755 = vsel %vm7747, %v7734, %v7737
      %v7756 = vsel %vm7750, %v7743, 920167782
      %v7757 = vsel %vm7749, %v7740, %v7756
      %v7758 = vsel %vm7748, %v7755, %v7757
      %v7759 = vsel %vm7747, %v7737, %v7740
      %v7760 = vsel %vm7750, %v7746, 1326507024
      %v7761 = vsel %vm7749, %v7743, %v7760
      %v7762 = vsel %vm7748, %v7759, %v7761
      %v7763 = vshll.u32 %v7723, 8
      %v7764 = vmul.u32.u64.compose %v7763, %v7762
      %v7765 = vextract.low.u32 %v7764
      %v7766 = vextract.high.u32 %v7764
      %v7767 = vmul.u32.u64.compose %v7763, %v7758
      %v7768 = vextract.low.u32 %v7767
      %v7769 = vextract.high.u32 %v7767
      %v7770 = vmul.u32 %v7763, %v7754
      %v7771 = vadd.s32 %v7766, %v7768
      %vm7772 = vc.u32 %v7766, %v7768
      %v7773 = vadd.s32 %v7769, 1
      %v7774 = vsel %vm7772, %v7773, %v7769
      %v7775 = vadd.s32 %v7770, %v7774
      %v7776 = vadd.s32 %v7775, 536870912
      %v7777 = vshrl.u32 %v7776, 30
      %v7778 = vshll.u32 %v7777, 30
      %v7779 = vsub.s32 %v7775, %v7778
      %vm7780 = vcmp.lt.s32.totalorder %v7779, 0
      %v7781 = vsub.s32 0, %v7779
      %v7782 = vsel %vm7780, %v7781, %v7779
      %v7783 = vclz %v7782
      %v7784 = vsub.s32 %v7783, 2
      %vm7785 = vcmp.gt.s32.totalorder 0, %v7784
      %v7786 = vsel %vm7785, 0, %v7784
      %v7787 = vsub.s32 32, %v7786
      %v7788 = vshll.u32 %v7779, %v7786
      %v7789 = vshrl.u32 %v7771, %v7787
      %v7790 = vor.u32 %v7788, %v7789
      %v7791 = vsub.s32 4294967266, %v7786
      %v7792 = vadd.s32 %v7791, 127
      %v7793 = vshll.u32 %v7792, 23
      %v7794 = vor.u32 4788187, %v7793
      %v7795 = vand.u32 2147483647, %v7794
      %v7797 = vcvt.s32.f32 %v7790
      %v7798 = vmul.f32 %v7797, %v7795
      %v7799 = vxor.u32 %v7798, 2147483648
      %v7800 = vsel %vm7717, %v7799, %v7798
      %v7801 = vsub.s32 4, %v7777
      %v7802 = vsel %vm7717, %v7801, %v7777
      %v7803 = vsel %vm7716, %v1483, %v7800
      %v7804 = vsel %vm7716, 0, %v7802
      %v7805 = vcosq.f32.pop %v7803
      %v7806 = vsinq.f32.pop %v7803
      %vm7807 = vweird.f32 %v1483
      %v7808 = vand.u32 %v7804, 3
      %vm7809 = vcmp.lt.s32.totalorder %v7808, 2
      %vm7810 = vcmp.eq.s32.totalorder %v7808, 0
      %v7811 = vxor.u32 %v7806, 2147483648
      %v7812 = vsel %vm7810, %v7805, %v7811
      %vm7813 = vcmp.eq.s32.totalorder %v7808, 2
      %v7814 = vxor.u32 %v7805, 2147483648
      %v7815 = vsel %vm7813, %v7814, %v7806
      %v7816 = vsel %vm7809, %v7812, %v7815
      %v7817 = vsel %vm7807, nan, %v7816
      %v7818 = vand.u32 2147483647, %v1484
      %vm7819 = vcmp.le.f32.partialorder %v7818, 0.7853982
      %vm7820 = vcmp.lt.s32.totalorder %v1484, 0
      %v7821 = vand.u32 %v1484, 2139095040
      %v7822 = vshrl.u32 %v7821, 23
      %v7823 = vsub.s32 %v7822, 127
      %v7824 = vand.u32 2147483647, %v1484
      %v7825 = vand.u32 %v7824, 8388607
      %v7826 = vor.u32 %v7825, 8388608
      %v7827 = vsub.s32 0, %v7826
      %v7828 = vadd.s32 %v7823, 1
      %vm7829 = vcmp.gt.s32.totalorder %v7828, 0
      %v7830 = vsel %vm7829, %v7828, 0
      %v7831 = vshrl.u32 %v7830, 5
      %v7832 = vand.u32 %v7830, 31
      %v7833 = vsub.s32 32, %v7832
      %v7834 = vshrl.u32 683565275, %v7833
      %v7835 = vshll.u32 683565275, %v7832
      %v7836 = vshrl.u32 2475754826, %v7833
      %v7837 = vor.u32 %v7835, %v7836
      %v7838 = vshll.u32 2475754826, %v7832
      %v7839 = vshrl.u32 2131351028, %v7833
      %v7840 = vor.u32 %v7838, %v7839
      %v7841 = vshll.u32 2131351028, %v7832
      %v7842 = vshrl.u32 2102212464, %v7833
      %v7843 = vor.u32 %v7841, %v7842
      %v7844 = vshll.u32 2102212464, %v7832
      %v7845 = vshrl.u32 920167782, %v7833
      %v7846 = vor.u32 %v7844, %v7845
      %v7847 = vshll.u32 920167782, %v7832
      %v7848 = vshrl.u32 1326507024, %v7833
      %v7849 = vor.u32 %v7847, %v7848
      %vm7850 = vcmp.lt.s32.totalorder %v7831, 1
      %vm7851 = vcmp.lt.s32.totalorder %v7831, 2
      %vm7852 = vcmp.lt.s32.totalorder %v7831, 3
      %vm7853 = vcmp.lt.s32.totalorder %v7831, 4
      %v7854 = vsel %vm7850, %v7834, %v7837
      %v7855 = vsel %vm7853, %v7843, 2102212464
      %v7856 = vsel %vm7852, %v7840, %v7855
      %v7857 = vsel %vm7851, %v7854, %v7856
      %v7858 = vsel %vm7850, %v7837, %v7840
      %v7859 = vsel %vm7853, %v7846, 920167782
      %v7860 = vsel %vm7852, %v7843, %v7859
      %v7861 = vsel %vm7851, %v7858, %v7860
      %v7862 = vsel %vm7850, %v7840, %v7843
      %v7863 = vsel %vm7853, %v7849, 1326507024
      %v7864 = vsel %vm7852, %v7846, %v7863
      %v7865 = vsel %vm7851, %v7862, %v7864
      %v7866 = vshll.u32 %v7826, 8
      %v7867 = vmul.u32.u64.compose %v7866, %v7865
      %v7868 = vextract.low.u32 %v7867
      %v7869 = vextract.high.u32 %v7867
      %v7870 = vmul.u32.u64.compose %v7866, %v7861
      %v7871 = vextract.low.u32 %v7870
      %v7872 = vextract.high.u32 %v7870
      %v7873 = vmul.u32 %v7866, %v7857
      %v7874 = vadd.s32 %v7869, %v7871
      %vm7875 = vc.u32 %v7869, %v7871
      %v7876 = vadd.s32 %v7872, 1
      %v7877 = vsel %vm7875, %v7876, %v7872
      %v7878 = vadd.s32 %v7873, %v7877
      %v7879 = vadd.s32 %v7878, 536870912
      %v7880 = vshrl.u32 %v7879, 30
      %v7881 = vshll.u32 %v7880, 30
      %v7882 = vsub.s32 %v7878, %v7881
      %vm7883 = vcmp.lt.s32.totalorder %v7882, 0
      %v7884 = vsub.s32 0, %v7882
      %v7885 = vsel %vm7883, %v7884, %v7882
      %v7886 = vclz %v7885
      %v7887 = vsub.s32 %v7886, 2
      %vm7888 = vcmp.gt.s32.totalorder 0, %v7887
      %v7889 = vsel %vm7888, 0, %v7887
      %v7890 = vsub.s32 32, %v7889
      %v7891 = vshll.u32 %v7882, %v7889
      %v7892 = vshrl.u32 %v7874, %v7890
      %v7893 = vor.u32 %v7891, %v7892
      %v7894 = vsub.s32 4294967266, %v7889
      %v7895 = vadd.s32 %v7894, 127
      %v7896 = vshll.u32 %v7895, 23
      %v7897 = vor.u32 4788187, %v7896
      %v7898 = vand.u32 2147483647, %v7897
      %v7900 = vcvt.s32.f32 %v7893
      %v7901 = vmul.f32 %v7900, %v7898
      %v7902 = vxor.u32 %v7901, 2147483648
      %v7903 = vsel %vm7820, %v7902, %v7901
      %v7904 = vsub.s32 4, %v7880
      %v7905 = vsel %vm7820, %v7904, %v7880
      %v7906 = vsel %vm7819, %v1484, %v7903
      %v7907 = vsel %vm7819, 0, %v7905
      %v7908 = vcosq.f32.pop %v7906
      %v7909 = vsinq.f32.pop %v7906
      %vm7910 = vweird.f32 %v1484
      %v7911 = vand.u32 %v7907, 3
      %vm7912 = vcmp.lt.s32.totalorder %v7911, 2
      %vm7913 = vcmp.eq.s32.totalorder %v7911, 0
      %v7914 = vxor.u32 %v7909, 2147483648
      %v7915 = vsel %vm7913, %v7908, %v7914
      %vm7916 = vcmp.eq.s32.totalorder %v7911, 2
      %v7917 = vxor.u32 %v7908, 2147483648
      %v7918 = vsel %vm7916, %v7917, %v7909
      %v7919 = vsel %vm7912, %v7915, %v7918
      %v7920 = vsel %vm7910, nan, %v7919
      %v7921 = vand.u32 2147483647, %v1485
      %vm7922 = vcmp.le.f32.partialorder %v7921, 0.7853982
      %vm7923 = vcmp.lt.s32.totalorder %v1485, 0
      %v7924 = vand.u32 %v1485, 2139095040
      %v7925 = vshrl.u32 %v7924, 23
      %v7926 = vsub.s32 %v7925, 127
      %v7927 = vand.u32 2147483647, %v1485
      %v7928 = vand.u32 %v7927, 8388607
      %v7929 = vor.u32 %v7928, 8388608
      %v7930 = vsub.s32 0, %v7929
      %v7931 = vadd.s32 %v7926, 1
      %vm7932 = vcmp.gt.s32.totalorder %v7931, 0
      %v7933 = vsel %vm7932, %v7931, 0
      %v7934 = vshrl.u32 %v7933, 5
      %v7935 = vand.u32 %v7933, 31
      %v7936 = vsub.s32 32, %v7935
      %v7937 = vshrl.u32 683565275, %v7936
      %v7938 = vshll.u32 683565275, %v7935
      %v7939 = vshrl.u32 2475754826, %v7936
      %v7940 = vor.u32 %v7938, %v7939
      %v7941 = vshll.u32 2475754826, %v7935
      %v7942 = vshrl.u32 2131351028, %v7936
      %v7943 = vor.u32 %v7941, %v7942
      %v7944 = vshll.u32 2131351028, %v7935
      %v7945 = vshrl.u32 2102212464, %v7936
      %v7946 = vor.u32 %v7944, %v7945
      %v7947 = vshll.u32 2102212464, %v7935
      %v7948 = vshrl.u32 920167782, %v7936
      %v7949 = vor.u32 %v7947, %v7948
      %v7950 = vshll.u32 920167782, %v7935
      %v7951 = vshrl.u32 1326507024, %v7936
      %v7952 = vor.u32 %v7950, %v7951
      %vm7953 = vcmp.lt.s32.totalorder %v7934, 1
      %vm7954 = vcmp.lt.s32.totalorder %v7934, 2
      %vm7955 = vcmp.lt.s32.totalorder %v7934, 3
      %vm7956 = vcmp.lt.s32.totalorder %v7934, 4
      %v7957 = vsel %vm7953, %v7937, %v7940
      %v7958 = vsel %vm7956, %v7946, 2102212464
      %v7959 = vsel %vm7955, %v7943, %v7958
      %v7960 = vsel %vm7954, %v7957, %v7959
      %v7961 = vsel %vm7953, %v7940, %v7943
      %v7962 = vsel %vm7956, %v7949, 920167782
      %v7963 = vsel %vm7955, %v7946, %v7962
      %v7964 = vsel %vm7954, %v7961, %v7963
      %v7965 = vsel %vm7953, %v7943, %v7946
      %v7966 = vsel %vm7956, %v7952, 1326507024
      %v7967 = vsel %vm7955, %v7949, %v7966
      %v7968 = vsel %vm7954, %v7965, %v7967
      %v7969 = vshll.u32 %v7929, 8
      %v7970 = vmul.u32.u64.compose %v7969, %v7968
      %v7971 = vextract.low.u32 %v7970
      %v7972 = vextract.high.u32 %v7970
      %v7973 = vmul.u32.u64.compose %v7969, %v7964
      %v7974 = vextract.low.u32 %v7973
      %v7975 = vextract.high.u32 %v7973
      %v7976 = vmul.u32 %v7969, %v7960
      %v7977 = vadd.s32 %v7972, %v7974
      %vm7978 = vc.u32 %v7972, %v7974
      %v7979 = vadd.s32 %v7975, 1
      %v7980 = vsel %vm7978, %v7979, %v7975
      %v7981 = vadd.s32 %v7976, %v7980
      %v7982 = vadd.s32 %v7981, 536870912
      %v7983 = vshrl.u32 %v7982, 30
      %v7984 = vshll.u32 %v7983, 30
      %v7985 = vsub.s32 %v7981, %v7984
      %vm7986 = vcmp.lt.s32.totalorder %v7985, 0
      %v7987 = vsub.s32 0, %v7985
      %v7988 = vsel %vm7986, %v7987, %v7985
      %v7989 = vclz %v7988
      %v7990 = vsub.s32 %v7989, 2
      %vm7991 = vcmp.gt.s32.totalorder 0, %v7990
      %v7992 = vsel %vm7991, 0, %v7990
      %v7993 = vsub.s32 32, %v7992
      %v7994 = vshll.u32 %v7985, %v7992
      %v7995 = vshrl.u32 %v7977, %v7993
      %v7996 = vor.u32 %v7994, %v7995
      %v7997 = vsub.s32 4294967266, %v7992
      %v7998 = vadd.s32 %v7997, 127
      %v7999 = vshll.u32 %v7998, 23
      %v8000 = vor.u32 4788187, %v7999
      %v8001 = vand.u32 2147483647, %v8000
      %v8003 = vcvt.s32.f32 %v7996
      %v8004 = vmul.f32 %v8003, %v8001
      %v8005 = vxor.u32 %v8004, 2147483648
      %v8006 = vsel %vm7923, %v8005, %v8004
      %v8007 = vsub.s32 4, %v7983
      %v8008 = vsel %vm7923, %v8007, %v7983
      %v8009 = vsel %vm7922, %v1485, %v8006
      %v8010 = vsel %vm7922, 0, %v8008
      %v8011 = vcosq.f32.pop %v8009
      %v8012 = vsinq.f32.pop %v8009
      %vm8013 = vweird.f32 %v1485
      %v8014 = vand.u32 %v8010, 3
      %vm8015 = vcmp.lt.s32.totalorder %v8014, 2
      %vm8016 = vcmp.eq.s32.totalorder %v8014, 0
      %v8017 = vxor.u32 %v8012, 2147483648
      %v8018 = vsel %vm8016, %v8011, %v8017
      %vm8019 = vcmp.eq.s32.totalorder %v8014, 2
      %v8020 = vxor.u32 %v8011, 2147483648
      %v8021 = vsel %vm8019, %v8020, %v8012
      %v8022 = vsel %vm8015, %v8018, %v8021
      %v8023 = vsel %vm8013, nan, %v8022
      %v8024 = vand.u32 2147483647, %v1486
      %vm8025 = vcmp.le.f32.partialorder %v8024, 0.7853982
      %vm8026 = vcmp.lt.s32.totalorder %v1486, 0
      %v8027 = vand.u32 %v1486, 2139095040
      %v8028 = vshrl.u32 %v8027, 23
      %v8029 = vsub.s32 %v8028, 127
      %v8030 = vand.u32 2147483647, %v1486
      %v8031 = vand.u32 %v8030, 8388607
      %v8032 = vor.u32 %v8031, 8388608
      %v8033 = vsub.s32 0, %v8032
      %v8034 = vadd.s32 %v8029, 1
      %vm8035 = vcmp.gt.s32.totalorder %v8034, 0
      %v8036 = vsel %vm8035, %v8034, 0
      %v8037 = vshrl.u32 %v8036, 5
      %v8038 = vand.u32 %v8036, 31
      %v8039 = vsub.s32 32, %v8038
      %v8040 = vshrl.u32 683565275, %v8039
      %v8041 = vshll.u32 683565275, %v8038
      %v8042 = vshrl.u32 2475754826, %v8039
      %v8043 = vor.u32 %v8041, %v8042
      %v8044 = vshll.u32 2475754826, %v8038
      %v8045 = vshrl.u32 2131351028, %v8039
      %v8046 = vor.u32 %v8044, %v8045
      %v8047 = vshll.u32 2131351028, %v8038
      %v8048 = vshrl.u32 2102212464, %v8039
      %v8049 = vor.u32 %v8047, %v8048
      %v8050 = vshll.u32 2102212464, %v8038
      %v8051 = vshrl.u32 920167782, %v8039
      %v8052 = vor.u32 %v8050, %v8051
      %v8053 = vshll.u32 920167782, %v8038
      %v8054 = vshrl.u32 1326507024, %v8039
      %v8055 = vor.u32 %v8053, %v8054
      %vm8056 = vcmp.lt.s32.totalorder %v8037, 1
      %vm8057 = vcmp.lt.s32.totalorder %v8037, 2
      %vm8058 = vcmp.lt.s32.totalorder %v8037, 3
      %vm8059 = vcmp.lt.s32.totalorder %v8037, 4
      %v8060 = vsel %vm8056, %v8040, %v8043
      %v8061 = vsel %vm8059, %v8049, 2102212464
      %v8062 = vsel %vm8058, %v8046, %v8061
      %v8063 = vsel %vm8057, %v8060, %v8062
      %v8064 = vsel %vm8056, %v8043, %v8046
      %v8065 = vsel %vm8059, %v8052, 920167782
      %v8066 = vsel %vm8058, %v8049, %v8065
      %v8067 = vsel %vm8057, %v8064, %v8066
      %v8068 = vsel %vm8056, %v8046, %v8049
      %v8069 = vsel %vm8059, %v8055, 1326507024
      %v8070 = vsel %vm8058, %v8052, %v8069
      %v8071 = vsel %vm8057, %v8068, %v8070
      %v8072 = vshll.u32 %v8032, 8
      %v8073 = vmul.u32.u64.compose %v8072, %v8071
      %v8074 = vextract.low.u32 %v8073
      %v8075 = vextract.high.u32 %v8073
      %v8076 = vmul.u32.u64.compose %v8072, %v8067
      %v8077 = vextract.low.u32 %v8076
      %v8078 = vextract.high.u32 %v8076
      %v8079 = vmul.u32 %v8072, %v8063
      %v8080 = vadd.s32 %v8075, %v8077
      %vm8081 = vc.u32 %v8075, %v8077
      %v8082 = vadd.s32 %v8078, 1
      %v8083 = vsel %vm8081, %v8082, %v8078
      %v8084 = vadd.s32 %v8079, %v8083
      %v8085 = vadd.s32 %v8084, 536870912
      %v8086 = vshrl.u32 %v8085, 30
      %v8087 = vshll.u32 %v8086, 30
      %v8088 = vsub.s32 %v8084, %v8087
      %vm8089 = vcmp.lt.s32.totalorder %v8088, 0
      %v8090 = vsub.s32 0, %v8088
      %v8091 = vsel %vm8089, %v8090, %v8088
      %v8092 = vclz %v8091
      %v8093 = vsub.s32 %v8092, 2
      %vm8094 = vcmp.gt.s32.totalorder 0, %v8093
      %v8095 = vsel %vm8094, 0, %v8093
      %v8096 = vsub.s32 32, %v8095
      %v8097 = vshll.u32 %v8088, %v8095
      %v8098 = vshrl.u32 %v8080, %v8096
      %v8099 = vor.u32 %v8097, %v8098
      %v8100 = vsub.s32 4294967266, %v8095
      %v8101 = vadd.s32 %v8100, 127
      %v8102 = vshll.u32 %v8101, 23
      %v8103 = vor.u32 4788187, %v8102
      %v8104 = vand.u32 2147483647, %v8103
      %v8106 = vcvt.s32.f32 %v8099
      %v8107 = vmul.f32 %v8106, %v8104
      %v8108 = vxor.u32 %v8107, 2147483648
      %v8109 = vsel %vm8026, %v8108, %v8107
      %v8110 = vsub.s32 4, %v8086
      %v8111 = vsel %vm8026, %v8110, %v8086
      %v8112 = vsel %vm8025, %v1486, %v8109
      %v8113 = vsel %vm8025, 0, %v8111
      %v8114 = vcosq.f32.pop %v8112
      %v8115 = vsinq.f32.pop %v8112
      %vm8116 = vweird.f32 %v1486
      %v8117 = vand.u32 %v8113, 3
      %vm8118 = vcmp.lt.s32.totalorder %v8117, 2
      %vm8119 = vcmp.eq.s32.totalorder %v8117, 0
      %v8120 = vxor.u32 %v8115, 2147483648
      %v8121 = vsel %vm8119, %v8114, %v8120
      %vm8122 = vcmp.eq.s32.totalorder %v8117, 2
      %v8123 = vxor.u32 %v8114, 2147483648
      %v8124 = vsel %vm8122, %v8123, %v8115
      %v8125 = vsel %vm8118, %v8121, %v8124
      %v8126 = vsel %vm8116, nan, %v8125
      %v8127 = vpack.c.bf16 %v5036, %v4933
      %v8128 = vpack.c.bf16 %v5242, %v5139
      %v8129 = vpack.c.bf16 %v5448, %v5345
      %v8130 = vpack.c.bf16 %v5654, %v5551
      %v8131 = vpack.c.bf16 %v5860, %v5757
      %v8132 = vpack.c.bf16 %v6066, %v5963
      %v8133 = vpack.c.bf16 %v6272, %v6169
      %v8134 = vpack.c.bf16 %v6478, %v6375
      %v8135 = vpack.c.bf16 %v6684, %v6581
      %v8136 = vpack.c.bf16 %v6890, %v6787
      %v8137 = vpack.c.bf16 %v7096, %v6993
      %v8138 = vpack.c.bf16 %v7302, %v7199
      %v8139 = vpack.c.bf16 %v7508, %v7405
      %v8140 = vpack.c.bf16 %v7714, %v7611
      %v8141 = vpack.c.bf16 %v7920, %v7817
      %v8142 = vpack.c.bf16 %v8126, %v8023
      %v8143 = vpack.c.bf16 %v878, %v877
      %v8144 = vpack.c.bf16 %v880, %v879
      %v8145 = vpack.c.bf16 %v882, %v881
      %v8146 = vpack.c.bf16 %v884, %v883
      %v8147 = vpack.c.bf16 %v886, %v885
      %v8148 = vpack.c.bf16 %v888, %v887
      %v8149 = vpack.c.bf16 %v890, %v889
      %v8150 = vpack.c.bf16 %v892, %v891
      %v8151 = vpack.c.bf16 %v894, %v893
      %v8152 = vpack.c.bf16 %v896, %v895
      %v8153 = vpack.c.bf16 %v898, %v897
      %v8154 = vpack.c.bf16 %v900, %v899
      %v8155 = vpack.c.bf16 %v902, %v901
      %v8156 = vpack.c.bf16 %v904, %v903
      %v8157 = vpack.c.bf16 %v906, %v905
      %v8158 = vpack.c.bf16 %v908, %v907
      %v8159 = vld [vmem:[%s1] sm:$0xf]
      %v8160 = vld [vmem:[%s1 + $0x4] sm:$0xf]
      %v8161 = vld [vmem:[%s1 + $0x8] sm:$0xf]
      %v8162 = vld [vmem:[%s1 + $0xc] sm:$0xf]
      %v8163 = vld [vmem:[%s1 + $0x10] sm:$0xf]
      %v8164 = vld [vmem:[%s1 + $0x14] sm:$0x1]
      %v8165 = vld [vmem:[%s2] sm:$0x3]
      %8182 = vrot.lane.b32.xlu0 %v8143, 125
      %v8183 = vpop.permute.xlu0 %8182
      %8184 = vrot.lane.b32.xlu0 %v8144, 125
      %v8185 = vpop.permute.xlu0 %8184
      %8186 = vrot.lane.b32.xlu0 %v8145, 125
      %v8187 = vpop.permute.xlu0 %8186
      %8188 = vrot.lane.b32.xlu0 %v8146, 125
      %v8189 = vpop.permute.xlu0 %8188
      %8190 = vrot.lane.b32.xlu0 %v8147, 125
      %v8191 = vpop.permute.xlu0 %8190
      %8192 = vrot.lane.b32.xlu0 %v8148, 125
      %v8193 = vpop.permute.xlu0 %8192
      %8194 = vrot.lane.b32.xlu0 %v8149, 125
      %v8195 = vpop.permute.xlu0 %8194
      %8196 = vrot.lane.b32.xlu0 %v8150, 125
      %v8197 = vpop.permute.xlu0 %8196
      %8198 = vrot.lane.b32.xlu0 %v8151, 125
      %v8199 = vpop.permute.xlu0 %8198
      %8200 = vrot.lane.b32.xlu0 %v8152, 125
      %v8201 = vpop.permute.xlu0 %8200
      %8202 = vrot.lane.b32.xlu0 %v8153, 125
      %v8203 = vpop.permute.xlu0 %8202
      %8204 = vrot.lane.b32.xlu0 %v8154, 125
      %v8205 = vpop.permute.xlu0 %8204
      %8206 = vrot.lane.b32.xlu0 %v8155, 125
      %v8207 = vpop.permute.xlu0 %8206
      %8208 = vrot.lane.b32.xlu0 %v8156, 125
      %v8209 = vpop.permute.xlu0 %8208
      %8210 = vrot.lane.b32.xlu0 %v8157, 125
      %v8211 = vpop.permute.xlu0 %8210
      %8212 = vrot.lane.b32.xlu0 %v8158, 125
      %v8213 = vpop.permute.xlu0 %8212
      %v8215 = vsel %vm716, %v8183, 0
      %v8218 = vsel %vm716, %v8185, 0
      %v8221 = vsel %vm716, %v8187, 0
      %v8224 = vsel %vm716, %v8189, 0
      %v8227 = vsel %vm716, %v8191, 0
      %v8230 = vsel %vm716, %v8193, 0
      %v8233 = vsel %vm716, %v8195, 0
      %v8236 = vsel %vm716, %v8197, 0
      %v8239 = vsel %vm716, %v8199, 0
      %v8242 = vsel %vm716, %v8201, 0
      %v8245 = vsel %vm716, %v8203, 0
      %v8248 = vsel %vm716, %v8205, 0
      %v8251 = vsel %vm716, %v8207, 0
      %v8254 = vsel %vm716, %v8209, 0
      %v8257 = vsel %vm716, %v8211, 0
      %v8260 = vsel %vm716, %v8213, 0
      %vm8262 = vcmask 1040384
      %vm8263 = vcmask 1041408
      %v8264 = vsel %vm8262, 4294967295, 65535
      %v8265 = vsel %vm8263, %v8264, 0
      %v8267 = vand.u32 %v8165, %v8265
      %8269 = vmatprep.subr.bf16.mxu0 0
      %8270 = vmatpush1.bf16.msra.mxu0 %v8267
      %8271 = vmatprep.subr.bf16.mxu0 0
      %8272 = vmatpush1.bf16.msra.mxu0 0
      %8273 = vmatprep.subr.bf16.mxu0 0
      %8274 = vmatpush1.bf16.msra.mxu0 0
      %8275 = vmatprep.subr.bf16.mxu0 0
      %8276 = vmatpush1.bf16.msra.mxu0 0
      %8277 = vmatprep.subr.bf16.mxu0 0
      %8278 = vmatpush1.bf16.msra.mxu0 0
      %8279 = vmatprep.subr.bf16.mxu0 0
      %8280 = vmatpush1.bf16.msra.mxu0 0
      %8281 = vmatprep.subr.bf16.mxu0 0
      %8282 = vmatpush1.bf16.msra.mxu0 0
      %8283 = vmatprep.subr.bf16.mxu0 0
      %8284 = vmatpush1.bf16.msra.mxu0 0
      %8285 = vmatprep.subr.bf16.mxu0 0
      %8286 = vmatpush1.bf16.msra.mxu0 0
      %8287 = vmatprep.subr.bf16.mxu0 0
      %8288 = vmatpush1.bf16.msra.mxu0 0
      %8289 = vmatprep.subr.bf16.mxu0 0
      %8290 = vmatpush1.bf16.msra.mxu0 0
      %8291 = vmatprep.subr.bf16.mxu0 0
      %8292 = vmatpush1.bf16.msra.mxu0 0
      %8293 = vmatprep.subr.bf16.mxu0 0
      %8294 = vmatpush1.bf16.msra.mxu0 0
      %8295 = vmatprep.subr.bf16.mxu0 0
      %8296 = vmatpush1.bf16.msra.mxu0 0
      %8297 = vmatprep.subr.bf16.mxu0 0
      %8298 = vmatpush1.bf16.msra.mxu0 0
      %8299 = vmatprep.subr.bf16.mxu0 0
      %8300 = vmatpush1.bf16.msra.mxu0 0
      %8301 = vmatprep.mubr.bf16.mxu0 0
      %8302 = vmatmul.mubr.bf16.gmra.mrb[0].mxu0 %v8215
      %v8303 = vpop.f32.mrb[0].mxu0
      %v8304 = vadd.f32 0.0, %v8303
      %v8305 = vpop.f32.mrb[0].mxu0
      %v8306 = vpop.f32.mrb[0].mxu0
      %v8307 = vadd.f32 0.0, %v8306
      %v8308 = vpop.f32.mrb[0].mxu0
      %8309 = vmatprep.mubr.bf16.mxu0 0
      %8310 = vmatmul.mubr.bf16.gmra.mrb[0].mxu0 %v8218
      %v8311 = vpop.f32.mrb[0].mxu0
      %v8312 = vadd.f32 0.0, %v8311
      %v8313 = vpop.f32.mrb[0].mxu0
      %v8314 = vpop.f32.mrb[0].mxu0
      %v8315 = vadd.f32 0.0, %v8314
      %v8316 = vpop.f32.mrb[0].mxu0
      %8317 = vmatprep.mubr.bf16.mxu0 0
      %8318 = vmatmul.mubr.bf16.gmra.mrb[0].mxu0 %v8221
      %v8319 = vpop.f32.mrb[0].mxu0
      %v8320 = vadd.f32 0.0, %v8319
      %v8321 = vpop.f32.mrb[0].mxu0
      %v8322 = vpop.f32.mrb[0].mxu0
      %v8323 = vadd.f32 0.0, %v8322
      %v8324 = vpop.f32.mrb[0].mxu0
      %8325 = vmatprep.mubr.bf16.mxu0 0
      %8326 = vmatmul.mubr.bf16.gmra.mrb[0].mxu0 %v8224
      %v8327 = vpop.f32.mrb[0].mxu0
      %v8328 = vadd.f32 0.0, %v8327
      %v8329 = vpop.f32.mrb[0].mxu0
      %v8330 = vpop.f32.mrb[0].mxu0
      %v8331 = vadd.f32 0.0, %v8330
      %v8332 = vpop.f32.mrb[0].mxu0
      %8333 = vmatprep.mubr.bf16.mxu0 0
      %8334 = vmatmul.mubr.bf16.gmra.mrb[0].mxu0 %v8227
      %v8335 = vpop.f32.mrb[0].mxu0
      %v8336 = vadd.f32 0.0, %v8335
      %v8337 = vpop.f32.mrb[0].mxu0
      %v8338 = vpop.f32.mrb[0].mxu0
      %v8339 = vadd.f32 0.0, %v8338
      %v8340 = vpop.f32.mrb[0].mxu0
      %8341 = vmatprep.mubr.bf16.mxu0 0
      %8342 = vmatmul.mubr.bf16.gmra.mrb[0].mxu0 %v8230
      %v8343 = vpop.f32.mrb[0].mxu0
      %v8344 = vadd.f32 0.0, %v8343
      %v8345 = vpop.f32.mrb[0].mxu0
      %v8346 = vpop.f32.mrb[0].mxu0
      %v8347 = vadd.f32 0.0, %v8346
      %v8348 = vpop.f32.mrb[0].mxu0
      %8349 = vmatprep.mubr.bf16.mxu0 0
      %8350 = vmatmul.mubr.bf16.gmra.mrb[0].mxu0 %v8233
      %v8351 = vpop.f32.mrb[0].mxu0
      %v8352 = vadd.f32 0.0, %v8351
      %v8353 = vpop.f32.mrb[0].mxu0
      %v8354 = vpop.f32.mrb[0].mxu0
      %v8355 = vadd.f32 0.0, %v8354
      %v8356 = vpop.f32.mrb[0].mxu0
      %8357 = vmatprep.mubr.bf16.mxu0 0
      %8358 = vmatmul.mubr.bf16.gmra.mrb[0].mxu0 %v8236
      %v8359 = vpop.f32.mrb[0].mxu0
      %v8360 = vadd.f32 0.0, %v8359
      %v8361 = vpop.f32.mrb[0].mxu0
      %v8362 = vpop.f32.mrb[0].mxu0
      %v8363 = vadd.f32 0.0, %v8362
      %v8364 = vpop.f32.mrb[0].mxu0
      %8365 = vmatprep.mubr.bf16.mxu0 0
      %8366 = vmatmul.mubr.bf16.gmra.mrb[0].mxu0 %v8239
      %v8367 = vpop.f32.mrb[0].mxu0
      %v8368 = vadd.f32 0.0, %v8367
      %v8369 = vpop.f32.mrb[0].mxu0
      %v8370 = vpop.f32.mrb[0].mxu0
      %v8371 = vadd.f32 0.0, %v8370
      %v8372 = vpop.f32.mrb[0].mxu0
      %8373 = vmatprep.mubr.bf16.mxu0 0
      %8374 = vmatmul.mubr.bf16.gmra.mrb[0].mxu0 %v8242
      %v8375 = vpop.f32.mrb[0].mxu0
      %v8376 = vadd.f32 0.0, %v8375
      %v8377 = vpop.f32.mrb[0].mxu0
      %v8378 = vpop.f32.mrb[0].mxu0
      %v8379 = vadd.f32 0.0, %v8378
      %v8380 = vpop.f32.mrb[0].mxu0
      %8381 = vmatprep.mubr.bf16.mxu0 0
      %8382 = vmatmul.mubr.bf16.gmra.mrb[0].mxu0 %v8245
      %v8383 = vpop.f32.mrb[0].mxu0
      %v8384 = vadd.f32 0.0, %v8383
      %v8385 = vpop.f32.mrb[0].mxu0
      %v8386 = vpop.f32.mrb[0].mxu0
      %v8387 = vadd.f32 0.0, %v8386
      %v8388 = vpop.f32.mrb[0].mxu0
      %8389 = vmatprep.mubr.bf16.mxu0 0
      %8390 = vmatmul.mubr.bf16.gmra.mrb[0].mxu0 %v8248
      %v8391 = vpop.f32.mrb[0].mxu0
      %v8392 = vadd.f32 0.0, %v8391
      %v8393 = vpop.f32.mrb[0].mxu0
      %v8394 = vpop.f32.mrb[0].mxu0
      %v8395 = vadd.f32 0.0, %v8394
      %v8396 = vpop.f32.mrb[0].mxu0
      %8397 = vmatprep.mubr.bf16.mxu0 0
      %8398 = vmatmul.mubr.bf16.gmra.mrb[0].mxu0 %v8251
      %v8399 = vpop.f32.mrb[0].mxu0
      %v8400 = vadd.f32 0.0, %v8399
      %v8401 = vpop.f32.mrb[0].mxu0
      %v8402 = vpop.f32.mrb[0].mxu0
      %v8403 = vadd.f32 0.0, %v8402
      %v8404 = vpop.f32.mrb[0].mxu0
      %8405 = vmatprep.mubr.bf16.mxu0 0
      %8406 = vmatmul.mubr.bf16.gmra.mrb[0].mxu0 %v8254
      %v8407 = vpop.f32.mrb[0].mxu0
      %v8408 = vadd.f32 0.0, %v8407
      %v8409 = vpop.f32.mrb[0].mxu0
      %v8410 = vpop.f32.mrb[0].mxu0
      %v8411 = vadd.f32 0.0, %v8410
      %v8412 = vpop.f32.mrb[0].mxu0
      %8413 = vmatprep.mubr.bf16.mxu0 0
      %8414 = vmatmul.mubr.bf16.gmra.mrb[0].mxu0 %v8257
      %v8415 = vpop.f32.mrb[0].mxu0
      %v8416 = vadd.f32 0.0, %v8415
      %v8417 = vpop.f32.mrb[0].mxu0
      %v8418 = vpop.f32.mrb[0].mxu0
      %v8419 = vadd.f32 0.0, %v8418
      %v8420 = vpop.f32.mrb[0].mxu0
      %8421 = vmatprep.mubr.bf16.mxu0 0
      %8422 = vmatmul.mubr.bf16.gmra.mrb[0].mxu0 %v8260
      %v8423 = vpop.f32.mrb[0].mxu0
      %v8424 = vadd.f32 0.0, %v8423
      %v8425 = vpop.f32.mrb[0].mxu0
      %v8426 = vpop.f32.mrb[0].mxu0
      %v8427 = vadd.f32 0.0, %v8426
      %v8428 = vpop.f32.mrb[0].mxu0
      %8429 = vdwg.mxu0
      %v8462 = vunpack.c.l.b16 %v364
      %v8463 = vunpack.c.l.b16 %v365
      %v8464 = vunpack.c.l.b16 %v366
      %v8465 = vunpack.c.l.b16 %v367
      %v8466 = vunpack.c.l.b16 %v368
      %v8467 = vunpack.c.l.b16 %v369
      %v8468 = vunpack.c.l.b16 %v370
      %v8469 = vunpack.c.l.b16 %v371
      %v8470 = vunpack.c.l.b16 %v372
      %v8471 = vunpack.c.l.b16 %v373
      %v8472 = vunpack.c.l.b16 %v374
      %v8473 = vunpack.c.l.b16 %v375
      %v8474 = vunpack.c.l.b16 %v376
      %v8475 = vunpack.c.l.b16 %v377
      %v8476 = vunpack.c.l.b16 %v378
      %v8477 = vunpack.c.l.b16 %v379
      %v8478 = vunpack.c.l.b16 %v380
      %v8479 = vunpack.c.l.b16 %v381
      %v8480 = vunpack.c.l.b16 %v382
      %v8481 = vunpack.c.l.b16 %v383
      %v8482 = vunpack.c.l.b16 %v384
      %v8483 = vunpack.c.l.b16 %v385
      %v8484 = vunpack.c.l.b16 %v386
      %v8485 = vunpack.c.l.b16 %v387
      %v8486 = vunpack.c.l.b16 %v388
      %v8487 = vunpack.c.l.b16 %v389
      %v8488 = vunpack.c.l.b16 %v390
      %v8489 = vunpack.c.l.b16 %v391
      %v8490 = vunpack.c.l.b16 %v392
      %v8491 = vunpack.c.l.b16 %v393
      %v8492 = vunpack.c.l.b16 %v394
      %v8493 = vunpack.c.l.b16 %v395
      %v8494 = vpack.c.b16 %v8463, %v8462
      %v8495 = vpack.c.b16 %v8465, %v8464
      %v8496 = vpack.c.b16 %v8467, %v8466
      %v8497 = vpack.c.b16 %v8469, %v8468
      %v8498 = vpack.c.b16 %v8471, %v8470
      %v8499 = vpack.c.b16 %v8473, %v8472
      %v8500 = vpack.c.b16 %v8475, %v8474
      %v8501 = vpack.c.b16 %v8477, %v8476
      %v8502 = vpack.c.b16 %v8479, %v8478
      %v8503 = vpack.c.b16 %v8481, %v8480
      %v8504 = vpack.c.b16 %v8483, %v8482
      %v8505 = vpack.c.b16 %v8485, %v8484
      %v8506 = vpack.c.b16 %v8487, %v8486
      %v8507 = vpack.c.b16 %v8489, %v8488
      %v8508 = vpack.c.b16 %v8491, %v8490
      %v8509 = vpack.c.b16 %v8493, %v8492
      %v8516 = vunpack.c.l.b16 %v8159
      %v8517 = vunpack.c.l.b16 %v8160
      %v8518 = vunpack.c.l.b16 %v8161
      %v8519 = vunpack.c.l.b16 %v8162
      %v8520 = vunpack.c.l.b16 %v8163
      %v8521 = vunpack.c.l.b16 %v8164
      %v8522 = vpack.c.b16 %v8517, %v8516
      %v8523 = vpack.c.b16 %v8519, %v8518
      %v8524 = vpack.c.b16 %v8521, %v8520
      %vm8527 = vcmask 334848
      %v8529 = vsel %vm8527, %v8494, 0
      %v8532 = vsel %vm8527, %v8495, 0
      %v8535 = vsel %vm8527, %v8496, 0
      %v8538 = vsel %vm8527, %v8497, 0
      %v8541 = vsel %vm8527, %v8498, 0
      %v8544 = vsel %vm8527, %v8499, 0
      %v8547 = vsel %vm8527, %v8500, 0
      %v8550 = vsel %vm8527, %v8501, 0
      %v8553 = vsel %vm8527, %v8502, 0
      %v8556 = vsel %vm8527, %v8503, 0
      %v8559 = vsel %vm8527, %v8504, 0
      %v8562 = vsel %vm8527, %v8505, 0
      %v8565 = vsel %vm8527, %v8506, 0
      %v8568 = vsel %vm8527, %v8507, 0
      %v8571 = vsel %vm8527, %v8508, 0
      %v8574 = vsel %vm8527, %v8509, 0
      %vm8576 = vcmask 1043456
      %vm8577 = vcmask 1044480
      %v8578 = vsel %vm8576, 4294967295, 65535
      %v8579 = vsel %vm8577, %v8578, 0
      %v8581 = vand.u32 %v8524, %v8579
      %8583 = vmatprep.subr.bf16.mxu0 0
      %8584 = vmatpush1.bf16.msra.mxu0 %v8522
      %8585 = vmatprep.subr.bf16.mxu0 0
      %8586 = vmatpush1.bf16.msra.mxu0 %v8523
      %8587 = vmatprep.subr.bf16.mxu0 0
      %8588 = vmatpush1.bf16.msra.mxu0 %v8581
      %8589 = vmatprep.subr.bf16.mxu0 0
      %8590 = vmatpush1.bf16.msra.mxu0 0
      %8591 = vmatprep.subr.bf16.mxu0 0
      %8592 = vmatpush1.bf16.msra.mxu0 0
      %8593 = vmatprep.subr.bf16.mxu0 0
      %8594 = vmatpush1.bf16.msra.mxu0 0
      %8595 = vmatprep.subr.bf16.mxu0 0
      %8596 = vmatpush1.bf16.msra.mxu0 0
      %8597 = vmatprep.subr.bf16.mxu0 0
      %8598 = vmatpush1.bf16.msra.mxu0 0
      %8599 = vmatprep.subr.bf16.mxu0 0
      %8600 = vmatpush1.bf16.msra.mxu0 0
      %8601 = vmatprep.subr.bf16.mxu0 0
      %8602 = vmatpush1.bf16.msra.mxu0 0
      %8603 = vmatprep.subr.bf16.mxu0 0
      %8604 = vmatpush1.bf16.msra.mxu0 0
      %8605 = vmatprep.subr.bf16.mxu0 0
      %8606 = vmatpush1.bf16.msra.mxu0 0
      %8607 = vmatprep.subr.bf16.mxu0 0
      %8608 = vmatpush1.bf16.msra.mxu0 0
      %8609 = vmatprep.subr.bf16.mxu0 0
      %8610 = vmatpush1.bf16.msra.mxu0 0
      %8611 = vmatprep.subr.bf16.mxu0 0
      %8612 = vmatpush1.bf16.msra.mxu0 0
      %8613 = vmatprep.subr.bf16.mxu0 0
      %8614 = vmatpush1.bf16.msra.mxu0 0
      %8615 = vmatprep.mubr.bf16.mxu0 0
      %8616 = vmatmul.mubr.bf16.gmra.mrb[0].mxu0 %v8529
      %v8617 = vpop.f32.mrb[0].mxu0
      %v8618 = vadd.f32 %v8304, %v8617
      %v8619 = vpop.f32.mrb[0].mxu0
      %v8620 = vpop.f32.mrb[0].mxu0
      %v8621 = vadd.f32 %v8307, %v8620
      %v8622 = vpop.f32.mrb[0].mxu0
      %8623 = vmatprep.mubr.bf16.mxu0 0
      %8624 = vmatmul.mubr.bf16.gmra.mrb[0].mxu0 %v8532
      %v8625 = vpop.f32.mrb[0].mxu0
      %v8626 = vadd.f32 %v8312, %v8625
      %v8627 = vpop.f32.mrb[0].mxu0
      %v8628 = vpop.f32.mrb[0].mxu0
      %v8629 = vadd.f32 %v8315, %v8628
      %v8630 = vpop.f32.mrb[0].mxu0
      %8631 = vmatprep.mubr.bf16.mxu0 0
      %8632 = vmatmul.mubr.bf16.gmra.mrb[0].mxu0 %v8535
      %v8633 = vpop.f32.mrb[0].mxu0
      %v8634 = vadd.f32 %v8320, %v8633
      %v8635 = vpop.f32.mrb[0].mxu0
      %v8636 = vpop.f32.mrb[0].mxu0
      %v8637 = vadd.f32 %v8323, %v8636
      %v8638 = vpop.f32.mrb[0].mxu0
      %8639 = vmatprep.mubr.bf16.mxu0 0
      %8640 = vmatmul.mubr.bf16.gmra.mrb[0].mxu0 %v8538
      %v8641 = vpop.f32.mrb[0].mxu0
      %v8642 = vadd.f32 %v8328, %v8641
      %v8643 = vpop.f32.mrb[0].mxu0
      %v8644 = vpop.f32.mrb[0].mxu0
      %v8645 = vadd.f32 %v8331, %v8644
      %v8646 = vpop.f32.mrb[0].mxu0
      %8647 = vmatprep.mubr.bf16.mxu0 0
      %8648 = vmatmul.mubr.bf16.gmra.mrb[0].mxu0 %v8541
      %v8649 = vpop.f32.mrb[0].mxu0
      %v8650 = vadd.f32 %v8336, %v8649
      %v8651 = vpop.f32.mrb[0].mxu0
      %v8652 = vpop.f32.mrb[0].mxu0
      %v8653 = vadd.f32 %v8339, %v8652
      %v8654 = vpop.f32.mrb[0].mxu0
      %8655 = vmatprep.mubr.bf16.mxu0 0
      %8656 = vmatmul.mubr.bf16.gmra.mrb[0].mxu0 %v8544
      %v8657 = vpop.f32.mrb[0].mxu0
      %v8658 = vadd.f32 %v8344, %v8657
      %v8659 = vpop.f32.mrb[0].mxu0
      %v8660 = vpop.f32.mrb[0].mxu0
      %v8661 = vadd.f32 %v8347, %v8660
      %v8662 = vpop.f32.mrb[0].mxu0
      %8663 = vmatprep.mubr.bf16.mxu0 0
      %8664 = vmatmul.mubr.bf16.gmra.mrb[0].mxu0 %v8547
      %v8665 = vpop.f32.mrb[0].mxu0
      %v8666 = vadd.f32 %v8352, %v8665
      %v8667 = vpop.f32.mrb[0].mxu0
      %v8668 = vpop.f32.mrb[0].mxu0
      %v8669 = vadd.f32 %v8355, %v8668
      %v8670 = vpop.f32.mrb[0].mxu0
      %8671 = vmatprep.mubr.bf16.mxu0 0
      %8672 = vmatmul.mubr.bf16.gmra.mrb[0].mxu0 %v8550
      %v8673 = vpop.f32.mrb[0].mxu0
      %v8674 = vadd.f32 %v8360, %v8673
      %v8675 = vpop.f32.mrb[0].mxu0
      %v8676 = vpop.f32.mrb[0].mxu0
      %v8677 = vadd.f32 %v8363, %v8676
      %v8678 = vpop.f32.mrb[0].mxu0
      %8679 = vmatprep.mubr.bf16.mxu0 0
      %8680 = vmatmul.mubr.bf16.gmra.mrb[0].mxu0 %v8553
      %v8681 = vpop.f32.mrb[0].mxu0
      %v8682 = vadd.f32 %v8368, %v8681
      %v8683 = vpop.f32.mrb[0].mxu0
      %v8684 = vpop.f32.mrb[0].mxu0
      %v8685 = vadd.f32 %v8371, %v8684
      %v8686 = vpop.f32.mrb[0].mxu0
      %8687 = vmatprep.mubr.bf16.mxu0 0
      %8688 = vmatmul.mubr.bf16.gmra.mrb[0].mxu0 %v8556
      %v8689 = vpop.f32.mrb[0].mxu0
      %v8690 = vadd.f32 %v8376, %v8689
      %v8691 = vpop.f32.mrb[0].mxu0
      %v8692 = vpop.f32.mrb[0].mxu0
      %v8693 = vadd.f32 %v8379, %v8692
      %v8694 = vpop.f32.mrb[0].mxu0
      %8695 = vmatprep.mubr.bf16.mxu0 0
      %8696 = vmatmul.mubr.bf16.gmra.mrb[0].mxu0 %v8559
      %v8697 = vpop.f32.mrb[0].mxu0
      %v8698 = vadd.f32 %v8384, %v8697
      %v8699 = vpop.f32.mrb[0].mxu0
      %v8700 = vpop.f32.mrb[0].mxu0
      %v8701 = vadd.f32 %v8387, %v8700
      %v8702 = vpop.f32.mrb[0].mxu0
      %8703 = vmatprep.mubr.bf16.mxu0 0
      %8704 = vmatmul.mubr.bf16.gmra.mrb[0].mxu0 %v8562
      %v8705 = vpop.f32.mrb[0].mxu0
      %v8706 = vadd.f32 %v8392, %v8705
      %v8707 = vpop.f32.mrb[0].mxu0
      %v8708 = vpop.f32.mrb[0].mxu0
      %v8709 = vadd.f32 %v8395, %v8708
      %v8710 = vpop.f32.mrb[0].mxu0
      %8711 = vmatprep.mubr.bf16.mxu0 0
      %8712 = vmatmul.mubr.bf16.gmra.mrb[0].mxu0 %v8565
      %v8713 = vpop.f32.mrb[0].mxu0
      %v8714 = vadd.f32 %v8400, %v8713
      %v8715 = vpop.f32.mrb[0].mxu0
      %v8716 = vpop.f32.mrb[0].mxu0
      %v8717 = vadd.f32 %v8403, %v8716
      %v8718 = vpop.f32.mrb[0].mxu0
      %8719 = vmatprep.mubr.bf16.mxu0 0
      %8720 = vmatmul.mubr.bf16.gmra.mrb[0].mxu0 %v8568
      %v8721 = vpop.f32.mrb[0].mxu0
      %v8722 = vadd.f32 %v8408, %v8721
      %v8723 = vpop.f32.mrb[0].mxu0
      %v8724 = vpop.f32.mrb[0].mxu0
      %v8725 = vadd.f32 %v8411, %v8724
      %v8726 = vpop.f32.mrb[0].mxu0
      %8727 = vmatprep.mubr.bf16.mxu0 0
      %8728 = vmatmul.mubr.bf16.gmra.mrb[0].mxu0 %v8571
      %v8729 = vpop.f32.mrb[0].mxu0
      %v8730 = vadd.f32 %v8416, %v8729
      %v8731 = vpop.f32.mrb[0].mxu0
      %v8732 = vpop.f32.mrb[0].mxu0
      %v8733 = vadd.f32 %v8419, %v8732
      %v8734 = vpop.f32.mrb[0].mxu0
      %8735 = vmatprep.mubr.bf16.mxu0 0
      %8736 = vmatmul.mubr.bf16.gmra.mrb[0].mxu0 %v8574
      %v8737 = vpop.f32.mrb[0].mxu0
      %v8738 = vadd.f32 %v8424, %v8737
      %v8739 = vpop.f32.mrb[0].mxu0
      %v8740 = vpop.f32.mrb[0].mxu0
      %v8741 = vadd.f32 %v8427, %v8740
      %v8742 = vpop.f32.mrb[0].mxu0
      %8743 = vdwg.mxu0
      %v8744 = vld [vmem:[%s3] sm:$0xf]
      %v8745 = vld [vmem:[%s3 + $0x4] sm:$0x3]
      %v8748 = vunpack.c.l.b16 %v8744
      %v8749 = vunpack.c.l.b16 %v8745
      %v8750 = vpack.c.b16 %v8749, %v8748
      %vm8751 = vcmask 97280
      %v8753 = vsel %vm8751, %v4815, 0
      %v8756 = vsel %vm8751, %v4816, 0
      %v8759 = vsel %vm8751, %v4817, 0
      %v8762 = vsel %vm8751, %v4818, 0
      %v8765 = vsel %vm8751, %v4819, 0
      %v8768 = vsel %vm8751, %v4820, 0
      %v8771 = vsel %vm8751, %v4821, 0
      %v8774 = vsel %vm8751, %v4822, 0
      %v8777 = vsel %vm8751, %v4823, 0
      %v8780 = vsel %vm8751, %v4824, 0
      %v8783 = vsel %vm8751, %v4825, 0
      %v8786 = vsel %vm8751, %v4826, 0
      %v8789 = vsel %vm8751, %v4827, 0
      %v8792 = vsel %vm8751, %v4828, 0
      %v8795 = vsel %vm8751, %v4829, 0
      %v8798 = vsel %vm8751, %v4830, 0
      %vm8800 = vcmask 1045504
      %v8802 = vsel %vm8800, %v8750, 0
      %8804 = vmatprep.subr.bf16.mxu0 0
      %8805 = vmatpush1.bf16.msra.mxu0 %v8802
      %8806 = vmatprep.subr.bf16.mxu0 0
      %8807 = vmatpush1.bf16.msra.mxu0 0
      %8808 = vmatprep.subr.bf16.mxu0 0
      %8809 = vmatpush1.bf16.msra.mxu0 0
      %8810 = vmatprep.subr.bf16.mxu0 0
      %8811 = vmatpush1.bf16.msra.mxu0 0
      %8812 = vmatprep.subr.bf16.mxu0 0
      %8813 = vmatpush1.bf16.msra.mxu0 0
      %8814 = vmatprep.subr.bf16.mxu0 0
      %8815 = vmatpush1.bf16.msra.mxu0 0
      %8816 = vmatprep.subr.bf16.mxu0 0
      %8817 = vmatpush1.bf16.msra.mxu0 0
      %8818 = vmatprep.subr.bf16.mxu0 0
      %8819 = vmatpush1.bf16.msra.mxu0 0
      %8820 = vmatprep.subr.bf16.mxu0 0
      %8821 = vmatpush1.bf16.msra.mxu0 0
      %8822 = vmatprep.subr.bf16.mxu0 0
      %8823 = vmatpush1.bf16.msra.mxu0 0
      %8824 = vmatprep.subr.bf16.mxu0 0
      %8825 = vmatpush1.bf16.msra.mxu0 0
      %8826 = vmatprep.subr.bf16.mxu0 0
      %8827 = vmatpush1.bf16.msra.mxu0 0
      %8828 = vmatprep.subr.bf16.mxu0 0
      %8829 = vmatpush1.bf16.msra.mxu0 0
      %8830 = vmatprep.subr.bf16.mxu0 0
      %8831 = vmatpush1.bf16.msra.mxu0 0
      %8832 = vmatprep.subr.bf16.mxu0 0
      %8833 = vmatpush1.bf16.msra.mxu0 0
      %8834 = vmatprep.subr.bf16.mxu0 0
      %8835 = vmatpush1.bf16.msra.mxu0 0
      %8836 = vmatprep.mubr.bf16.mxu0 0
      %8837 = vmatmul.mubr.bf16.gmra.mrb[0].mxu0 %v8753
      %v8838 = vpop.f32.mrb[0].mxu0
      %v8839 = vadd.f32 0.0, %v8838
      %v8840 = vpop.f32.mrb[0].mxu0
      %v8841 = vpop.f32.mrb[0].mxu0
      %v8842 = vadd.f32 0.0, %v8841
      %v8843 = vpop.f32.mrb[0].mxu0
      %8844 = vmatprep.mubr.bf16.mxu0 0
      %8845 = vmatmul.mubr.bf16.gmra.mrb[0].mxu0 %v8756
      %v8846 = vpop.f32.mrb[0].mxu0
      %v8847 = vadd.f32 0.0, %v8846
      %v8848 = vpop.f32.mrb[0].mxu0
      %v8849 = vpop.f32.mrb[0].mxu0
      %v8850 = vadd.f32 0.0, %v8849
      %v8851 = vpop.f32.mrb[0].mxu0
      %8852 = vmatprep.mubr.bf16.mxu0 0
      %8853 = vmatmul.mubr.bf16.gmra.mrb[0].mxu0 %v8759
      %v8854 = vpop.f32.mrb[0].mxu0
      %v8855 = vadd.f32 0.0, %v8854
      %v8856 = vpop.f32.mrb[0].mxu0
      %v8857 = vpop.f32.mrb[0].mxu0
      %v8858 = vadd.f32 0.0, %v8857
      %v8859 = vpop.f32.mrb[0].mxu0
      %8860 = vmatprep.mubr.bf16.mxu0 0
      %8861 = vmatmul.mubr.bf16.gmra.mrb[0].mxu0 %v8762
      %v8862 = vpop.f32.mrb[0].mxu0
      %v8863 = vadd.f32 0.0, %v8862
      %v8864 = vpop.f32.mrb[0].mxu0
      %v8865 = vpop.f32.mrb[0].mxu0
      %v8866 = vadd.f32 0.0, %v8865
      %v8867 = vpop.f32.mrb[0].mxu0
      %8868 = vmatprep.mubr.bf16.mxu0 0
      %8869 = vmatmul.mubr.bf16.gmra.mrb[0].mxu0 %v8765
      %v8870 = vpop.f32.mrb[0].mxu0
      %v8871 = vadd.f32 0.0, %v8870
      %v8872 = vpop.f32.mrb[0].mxu0
      %v8873 = vpop.f32.mrb[0].mxu0
      %v8874 = vadd.f32 0.0, %v8873
      %v8875 = vpop.f32.mrb[0].mxu0
      %8876 = vmatprep.mubr.bf16.mxu0 0
      %8877 = vmatmul.mubr.bf16.gmra.mrb[0].mxu0 %v8768
      %v8878 = vpop.f32.mrb[0].mxu0
      %v8879 = vadd.f32 0.0, %v8878
      %v8880 = vpop.f32.mrb[0].mxu0
      %v8881 = vpop.f32.mrb[0].mxu0
      %v8882 = vadd.f32 0.0, %v8881
      %v8883 = vpop.f32.mrb[0].mxu0
      %8884 = vmatprep.mubr.bf16.mxu0 0
      %8885 = vmatmul.mubr.bf16.gmra.mrb[0].mxu0 %v8771
      %v8886 = vpop.f32.mrb[0].mxu0
      %v8887 = vadd.f32 0.0, %v8886
      %v8888 = vpop.f32.mrb[0].mxu0
      %v8889 = vpop.f32.mrb[0].mxu0
      %v8890 = vadd.f32 0.0, %v8889
      %v8891 = vpop.f32.mrb[0].mxu0
      %8892 = vmatprep.mubr.bf16.mxu0 0
      %8893 = vmatmul.mubr.bf16.gmra.mrb[0].mxu0 %v8774
      %v8894 = vpop.f32.mrb[0].mxu0
      %v8895 = vadd.f32 0.0, %v8894
      %v8896 = vpop.f32.mrb[0].mxu0
      %v8897 = vpop.f32.mrb[0].mxu0
      %v8898 = vadd.f32 0.0, %v8897
      %v8899 = vpop.f32.mrb[0].mxu0
      %8900 = vmatprep.mubr.bf16.mxu0 0
      %8901 = vmatmul.mubr.bf16.gmra.mrb[0].mxu0 %v8777
      %v8902 = vpop.f32.mrb[0].mxu0
      %v8903 = vadd.f32 0.0, %v8902
      %v8904 = vpop.f32.mrb[0].mxu0
      %v8905 = vpop.f32.mrb[0].mxu0
      %v8906 = vadd.f32 0.0, %v8905
      %v8907 = vpop.f32.mrb[0].mxu0
      %8908 = vmatprep.mubr.bf16.mxu0 0
      %8909 = vmatmul.mubr.bf16.gmra.mrb[0].mxu0 %v8780
      %v8910 = vpop.f32.mrb[0].mxu0
      %v8911 = vadd.f32 0.0, %v8910
      %v8912 = vpop.f32.mrb[0].mxu0
      %v8913 = vpop.f32.mrb[0].mxu0
      %v8914 = vadd.f32 0.0, %v8913
      %v8915 = vpop.f32.mrb[0].mxu0
      %8916 = vmatprep.mubr.bf16.mxu0 0
      %8917 = vmatmul.mubr.bf16.gmra.mrb[0].mxu0 %v8783
      %v8918 = vpop.f32.mrb[0].mxu0
      %v8919 = vadd.f32 0.0, %v8918
      %v8920 = vpop.f32.mrb[0].mxu0
      %v8921 = vpop.f32.mrb[0].mxu0
      %v8922 = vadd.f32 0.0, %v8921
      %v8923 = vpop.f32.mrb[0].mxu0
      %8924 = vmatprep.mubr.bf16.mxu0 0
      %8925 = vmatmul.mubr.bf16.gmra.mrb[0].mxu0 %v8786
      %v8926 = vpop.f32.mrb[0].mxu0
      %v8927 = vadd.f32 0.0, %v8926
      %v8928 = vpop.f32.mrb[0].mxu0
      %v8929 = vpop.f32.mrb[0].mxu0
      %v8930 = vadd.f32 0.0, %v8929
      %v8931 = vpop.f32.mrb[0].mxu0
      %8932 = vmatprep.mubr.bf16.mxu0 0
      %8933 = vmatmul.mubr.bf16.gmra.mrb[0].mxu0 %v8789
      %v8934 = vpop.f32.mrb[0].mxu0
      %v8935 = vadd.f32 0.0, %v8934
      %v8936 = vpop.f32.mrb[0].mxu0
      %v8937 = vpop.f32.mrb[0].mxu0
      %v8938 = vadd.f32 0.0, %v8937
      %v8939 = vpop.f32.mrb[0].mxu0
      %8940 = vmatprep.mubr.bf16.mxu0 0
      %8941 = vmatmul.mubr.bf16.gmra.mrb[0].mxu0 %v8792
      %v8942 = vpop.f32.mrb[0].mxu0
      %v8943 = vadd.f32 0.0, %v8942
      %v8944 = vpop.f32.mrb[0].mxu0
      %v8945 = vpop.f32.mrb[0].mxu0
      %v8946 = vadd.f32 0.0, %v8945
      %v8947 = vpop.f32.mrb[0].mxu0
      %8948 = vmatprep.mubr.bf16.mxu0 0
      %8949 = vmatmul.mubr.bf16.gmra.mrb[0].mxu0 %v8795
      %v8950 = vpop.f32.mrb[0].mxu0
      %v8951 = vadd.f32 0.0, %v8950
      %v8952 = vpop.f32.mrb[0].mxu0
      %v8953 = vpop.f32.mrb[0].mxu0
      %v8954 = vadd.f32 0.0, %v8953
      %v8955 = vpop.f32.mrb[0].mxu0
      %8956 = vmatprep.mubr.bf16.mxu0 0
      %8957 = vmatmul.mubr.bf16.gmra.mrb[0].mxu0 %v8798
      %v8958 = vpop.f32.mrb[0].mxu0
      %v8959 = vadd.f32 0.0, %v8958
      %v8960 = vpop.f32.mrb[0].mxu0
      %v8961 = vpop.f32.mrb[0].mxu0
      %v8962 = vadd.f32 0.0, %v8961
      %v8963 = vpop.f32.mrb[0].mxu0
      %8964 = vdwg.mxu0
      %v8965 = vadd.f32 %v8618, %v8839
      %v8966 = vadd.f32 %v8621, %v8842
      %v8967 = vadd.f32 %v8626, %v8847
      %v8968 = vadd.f32 %v8629, %v8850
      %v8969 = vadd.f32 %v8634, %v8855
      %v8970 = vadd.f32 %v8637, %v8858
      %v8971 = vadd.f32 %v8642, %v8863
      %v8972 = vadd.f32 %v8645, %v8866
      %v8973 = vadd.f32 %v8650, %v8871
      %v8974 = vadd.f32 %v8653, %v8874
      %v8975 = vadd.f32 %v8658, %v8879
      %v8976 = vadd.f32 %v8661, %v8882
      %v8977 = vadd.f32 %v8666, %v8887
      %v8978 = vadd.f32 %v8669, %v8890
      %v8979 = vadd.f32 %v8674, %v8895
      %v8980 = vadd.f32 %v8677, %v8898
      %v8981 = vadd.f32 %v8682, %v8903
      %v8982 = vadd.f32 %v8685, %v8906
      %v8983 = vadd.f32 %v8690, %v8911
      %v8984 = vadd.f32 %v8693, %v8914
      %v8985 = vadd.f32 %v8698, %v8919
      %v8986 = vadd.f32 %v8701, %v8922
      %v8987 = vadd.f32 %v8706, %v8927
      %v8988 = vadd.f32 %v8709, %v8930
      %v8989 = vadd.f32 %v8714, %v8935
      %v8990 = vadd.f32 %v8717, %v8938
      %v8991 = vadd.f32 %v8722, %v8943
      %v8992 = vadd.f32 %v8725, %v8946
      %v8993 = vadd.f32 %v8730, %v8951
      %v8994 = vadd.f32 %v8733, %v8954
      %v8995 = vadd.f32 %v8738, %v8959
      %v8996 = vadd.f32 %v8741, %v8962
      %v8997 = vld [vmem:[%s4] sm:$0xf]
      %v8998 = vld [vmem:[%s4 + $0x4] sm:$0x3]
      %v9001 = vunpack.c.l.b16 %v8997
      %v9002 = vunpack.c.l.b16 %v8998
      %v9003 = vpack.c.b16 %v9002, %v9001
      %v9005 = vsel %vm8751, %v8127, 0
      %v9008 = vsel %vm8751, %v8128, 0
      %v9011 = vsel %vm8751, %v8129, 0
      %v9014 = vsel %vm8751, %v8130, 0
      %v9017 = vsel %vm8751, %v8131, 0
      %v9020 = vsel %vm8751, %v8132, 0
      %v9023 = vsel %vm8751, %v8133, 0
      %v9026 = vsel %vm8751, %v8134, 0
      %v9029 = vsel %vm8751, %v8135, 0
      %v9032 = vsel %vm8751, %v8136, 0
      %v9035 = vsel %vm8751, %v8137, 0
      %v9038 = vsel %vm8751, %v8138, 0
      %v9041 = vsel %vm8751, %v8139, 0
      %v9044 = vsel %vm8751, %v8140, 0
      %v9047 = vsel %vm8751, %v8141, 0
      %v9050 = vsel %vm8751, %v8142, 0
      %v9053 = vsel %vm8800, %v9003, 0
      %9055 = vmatprep.subr.bf16.mxu0 0
      %9056 = vmatpush1.bf16.msra.mxu0 %v9053
      %9057 = vmatprep.subr.bf16.mxu0 0
      %9058 = vmatpush1.bf16.msra.mxu0 0
      %9059 = vmatprep.subr.bf16.mxu0 0
      %9060 = vmatpush1.bf16.msra.mxu0 0
      %9061 = vmatprep.subr.bf16.mxu0 0
      %9062 = vmatpush1.bf16.msra.mxu0 0
      %9063 = vmatprep.subr.bf16.mxu0 0
      %9064 = vmatpush1.bf16.msra.mxu0 0
      %9065 = vmatprep.subr.bf16.mxu0 0
      %9066 = vmatpush1.bf16.msra.mxu0 0
      %9067 = vmatprep.subr.bf16.mxu0 0
      %9068 = vmatpush1.bf16.msra.mxu0 0
      %9069 = vmatprep.subr.bf16.mxu0 0
      %9070 = vmatpush1.bf16.msra.mxu0 0
      %9071 = vmatprep.subr.bf16.mxu0 0
      %9072 = vmatpush1.bf16.msra.mxu0 0
      %9073 = vmatprep.subr.bf16.mxu0 0
      %9074 = vmatpush1.bf16.msra.mxu0 0
      %9075 = vmatprep.subr.bf16.mxu0 0
      %9076 = vmatpush1.bf16.msra.mxu0 0
      %9077 = vmatprep.subr.bf16.mxu0 0
      %9078 = vmatpush1.bf16.msra.mxu0 0
      %9079 = vmatprep.subr.bf16.mxu0 0
      %9080 = vmatpush1.bf16.msra.mxu0 0
      %9081 = vmatprep.subr.bf16.mxu0 0
      %9082 = vmatpush1.bf16.msra.mxu0 0
      %9083 = vmatprep.subr.bf16.mxu0 0
      %9084 = vmatpush1.bf16.msra.mxu0 0
      %9085 = vmatprep.subr.bf16.mxu0 0
      %9086 = vmatpush1.bf16.msra.mxu0 0
      %9087 = vmatprep.mubr.bf16.mxu0 0
      %9088 = vmatmul.mubr.bf16.gmra.mrb[0].mxu0 %v9005
      %v9089 = vpop.f32.mrb[0].mxu0
      %v9090 = vadd.f32 0.0, %v9089
      %v9091 = vpop.f32.mrb[0].mxu0
      %v9092 = vpop.f32.mrb[0].mxu0
      %v9093 = vadd.f32 0.0, %v9092
      %v9094 = vpop.f32.mrb[0].mxu0
      %9095 = vmatprep.mubr.bf16.mxu0 0
      %9096 = vmatmul.mubr.bf16.gmra.mrb[0].mxu0 %v9008
      %v9097 = vpop.f32.mrb[0].mxu0
      %v9098 = vadd.f32 0.0, %v9097
      %v9099 = vpop.f32.mrb[0].mxu0
      %v9100 = vpop.f32.mrb[0].mxu0
      %v9101 = vadd.f32 0.0, %v9100
      %v9102 = vpop.f32.mrb[0].mxu0
      %9103 = vmatprep.mubr.bf16.mxu0 0
      %9104 = vmatmul.mubr.bf16.gmra.mrb[0].mxu0 %v9011
      %v9105 = vpop.f32.mrb[0].mxu0
      %v9106 = vadd.f32 0.0, %v9105
      %v9107 = vpop.f32.mrb[0].mxu0
      %v9108 = vpop.f32.mrb[0].mxu0
      %v9109 = vadd.f32 0.0, %v9108
      %v9110 = vpop.f32.mrb[0].mxu0
      %9111 = vmatprep.mubr.bf16.mxu0 0
      %9112 = vmatmul.mubr.bf16.gmra.mrb[0].mxu0 %v9014
      %v9113 = vpop.f32.mrb[0].mxu0
      %v9114 = vadd.f32 0.0, %v9113
      %v9115 = vpop.f32.mrb[0].mxu0
      %v9116 = vpop.f32.mrb[0].mxu0
      %v9117 = vadd.f32 0.0, %v9116
      %v9118 = vpop.f32.mrb[0].mxu0
      %9119 = vmatprep.mubr.bf16.mxu0 0
      %9120 = vmatmul.mubr.bf16.gmra.mrb[0].mxu0 %v9017
      %v9121 = vpop.f32.mrb[0].mxu0
      %v9122 = vadd.f32 0.0, %v9121
      %v9123 = vpop.f32.mrb[0].mxu0
      %v9124 = vpop.f32.mrb[0].mxu0
      %v9125 = vadd.f32 0.0, %v9124
      %v9126 = vpop.f32.mrb[0].mxu0
      %9127 = vmatprep.mubr.bf16.mxu0 0
      %9128 = vmatmul.mubr.bf16.gmra.mrb[0].mxu0 %v9020
      %v9129 = vpop.f32.mrb[0].mxu0
      %v9130 = vadd.f32 0.0, %v9129
      %v9131 = vpop.f32.mrb[0].mxu0
      %v9132 = vpop.f32.mrb[0].mxu0
      %v9133 = vadd.f32 0.0, %v9132
      %v9134 = vpop.f32.mrb[0].mxu0
      %9135 = vmatprep.mubr.bf16.mxu0 0
      %9136 = vmatmul.mubr.bf16.gmra.mrb[0].mxu0 %v9023
      %v9137 = vpop.f32.mrb[0].mxu0
      %v9138 = vadd.f32 0.0, %v9137
      %v9139 = vpop.f32.mrb[0].mxu0
      %v9140 = vpop.f32.mrb[0].mxu0
      %v9141 = vadd.f32 0.0, %v9140
      %v9142 = vpop.f32.mrb[0].mxu0
      %9143 = vmatprep.mubr.bf16.mxu0 0
      %9144 = vmatmul.mubr.bf16.gmra.mrb[0].mxu0 %v9026
      %v9145 = vpop.f32.mrb[0].mxu0
      %v9146 = vadd.f32 0.0, %v9145
      %v9147 = vpop.f32.mrb[0].mxu0
      %v9148 = vpop.f32.mrb[0].mxu0
      %v9149 = vadd.f32 0.0, %v9148
      %v9150 = vpop.f32.mrb[0].mxu0
      %9151 = vmatprep.mubr.bf16.mxu0 0
      %9152 = vmatmul.mubr.bf16.gmra.mrb[0].mxu0 %v9029
      %v9153 = vpop.f32.mrb[0].mxu0
      %v9154 = vadd.f32 0.0, %v9153
      %v9155 = vpop.f32.mrb[0].mxu0
      %v9156 = vpop.f32.mrb[0].mxu0
      %v9157 = vadd.f32 0.0, %v9156
      %v9158 = vpop.f32.mrb[0].mxu0
      %9159 = vmatprep.mubr.bf16.mxu0 0
      %9160 = vmatmul.mubr.bf16.gmra.mrb[0].mxu0 %v9032
      %v9161 = vpop.f32.mrb[0].mxu0
      %v9162 = vadd.f32 0.0, %v9161
      %v9163 = vpop.f32.mrb[0].mxu0
      %v9164 = vpop.f32.mrb[0].mxu0
      %v9165 = vadd.f32 0.0, %v9164
      %v9166 = vpop.f32.mrb[0].mxu0
      %9167 = vmatprep.mubr.bf16.mxu0 0
      %9168 = vmatmul.mubr.bf16.gmra.mrb[0].mxu0 %v9035
      %v9169 = vpop.f32.mrb[0].mxu0
      %v9170 = vadd.f32 0.0, %v9169
      %v9171 = vpop.f32.mrb[0].mxu0
      %v9172 = vpop.f32.mrb[0].mxu0
      %v9173 = vadd.f32 0.0, %v9172
      %v9174 = vpop.f32.mrb[0].mxu0
      %9175 = vmatprep.mubr.bf16.mxu0 0
      %9176 = vmatmul.mubr.bf16.gmra.mrb[0].mxu0 %v9038
      %v9177 = vpop.f32.mrb[0].mxu0
      %v9178 = vadd.f32 0.0, %v9177
      %v9179 = vpop.f32.mrb[0].mxu0
      %v9180 = vpop.f32.mrb[0].mxu0
      %v9181 = vadd.f32 0.0, %v9180
      %v9182 = vpop.f32.mrb[0].mxu0
      %9183 = vmatprep.mubr.bf16.mxu0 0
      %9184 = vmatmul.mubr.bf16.gmra.mrb[0].mxu0 %v9041
      %v9185 = vpop.f32.mrb[0].mxu0
      %v9186 = vadd.f32 0.0, %v9185
      %v9187 = vpop.f32.mrb[0].mxu0
      %v9188 = vpop.f32.mrb[0].mxu0
      %v9189 = vadd.f32 0.0, %v9188
      %v9190 = vpop.f32.mrb[0].mxu0
      %9191 = vmatprep.mubr.bf16.mxu0 0
      %9192 = vmatmul.mubr.bf16.gmra.mrb[0].mxu0 %v9044
      %v9193 = vpop.f32.mrb[0].mxu0
      %v9194 = vadd.f32 0.0, %v9193
      %v9195 = vpop.f32.mrb[0].mxu0
      %v9196 = vpop.f32.mrb[0].mxu0
      %v9197 = vadd.f32 0.0, %v9196
      %v9198 = vpop.f32.mrb[0].mxu0
      %9199 = vmatprep.mubr.bf16.mxu0 0
      %9200 = vmatmul.mubr.bf16.gmra.mrb[0].mxu0 %v9047
      %v9201 = vpop.f32.mrb[0].mxu0
      %v9202 = vadd.f32 0.0, %v9201
      %v9203 = vpop.f32.mrb[0].mxu0
      %v9204 = vpop.f32.mrb[0].mxu0
      %v9205 = vadd.f32 0.0, %v9204
      %v9206 = vpop.f32.mrb[0].mxu0
      %9207 = vmatprep.mubr.bf16.mxu0 0
      %9208 = vmatmul.mubr.bf16.gmra.mrb[0].mxu0 %v9050
      %v9209 = vpop.f32.mrb[0].mxu0
      %v9210 = vadd.f32 0.0, %v9209
      %v9211 = vpop.f32.mrb[0].mxu0
      %v9212 = vpop.f32.mrb[0].mxu0
      %v9213 = vadd.f32 0.0, %v9212
      %v9214 = vpop.f32.mrb[0].mxu0
      %9215 = vdwg.mxu0
      %v9216 = vadd.f32 %v8965, %v9090
      %v9217 = vadd.f32 %v8966, %v9093
      %v9218 = vadd.f32 %v8967, %v9098
      %v9219 = vadd.f32 %v8968, %v9101
      %v9220 = vadd.f32 %v8969, %v9106
      %v9221 = vadd.f32 %v8970, %v9109
      %v9222 = vadd.f32 %v8971, %v9114
      %v9223 = vadd.f32 %v8972, %v9117
      %v9224 = vadd.f32 %v8973, %v9122
      %v9225 = vadd.f32 %v8974, %v9125
      %v9226 = vadd.f32 %v8975, %v9130
      %v9227 = vadd.f32 %v8976, %v9133
      %v9228 = vadd.f32 %v8977, %v9138
      %v9229 = vadd.f32 %v8978, %v9141
      %v9230 = vadd.f32 %v8979, %v9146
      %v9231 = vadd.f32 %v8980, %v9149
      %v9232 = vadd.f32 %v8981, %v9154
      %v9233 = vadd.f32 %v8982, %v9157
      %v9234 = vadd.f32 %v8983, %v9162
      %v9235 = vadd.f32 %v8984, %v9165
      %v9236 = vadd.f32 %v8985, %v9170
      %v9237 = vadd.f32 %v8986, %v9173
      %v9238 = vadd.f32 %v8987, %v9178
      %v9239 = vadd.f32 %v8988, %v9181
      %v9240 = vadd.f32 %v8989, %v9186
      %v9241 = vadd.f32 %v8990, %v9189
      %v9242 = vadd.f32 %v8991, %v9194
      %v9243 = vadd.f32 %v8992, %v9197
      %v9244 = vadd.f32 %v8993, %v9202
      %v9245 = vadd.f32 %v8994, %v9205
      %v9246 = vadd.f32 %v8995, %v9210
      %v9247 = vadd.f32 %v8996, %v9213
      %v9248 = vld [vmem:[%s5] sm:$0x1]
      %v9250 = vlaneseq
      %v9251 = vshrl.u32 %v9250, 7
      %v9252 = vsub.s32 0, %v9251
      %v9253 = vrot.slane %v9248, %v9252
      %v9255 = vadd.f32 %v9216, %v9253
      %v9256 = vadd.f32 %v9217, %v9253
      %v9257 = vadd.f32 %v9218, %v9253
      %v9258 = vadd.f32 %v9219, %v9253
      %v9259 = vadd.f32 %v9220, %v9253
      %v9260 = vadd.f32 %v9221, %v9253
      %v9261 = vadd.f32 %v9222, %v9253
      %v9262 = vadd.f32 %v9223, %v9253
      %v9263 = vadd.f32 %v9224, %v9253
      %v9264 = vadd.f32 %v9225, %v9253
      %v9265 = vadd.f32 %v9226, %v9253
      %v9266 = vadd.f32 %v9227, %v9253
      %v9267 = vadd.f32 %v9228, %v9253
      %v9268 = vadd.f32 %v9229, %v9253
      %v9269 = vadd.f32 %v9230, %v9253
      %v9270 = vadd.f32 %v9231, %v9253
      %v9271 = vadd.f32 %v9232, %v9253
      %v9272 = vadd.f32 %v9233, %v9253
      %v9273 = vadd.f32 %v9234, %v9253
      %v9274 = vadd.f32 %v9235, %v9253
      %v9275 = vadd.f32 %v9236, %v9253
      %v9276 = vadd.f32 %v9237, %v9253
      %v9277 = vadd.f32 %v9238, %v9253
      %v9278 = vadd.f32 %v9239, %v9253
      %v9279 = vadd.f32 %v9240, %v9253
      %v9280 = vadd.f32 %v9241, %v9253
      %v9281 = vadd.f32 %v9242, %v9253
      %v9282 = vadd.f32 %v9243, %v9253
      %v9283 = vadd.f32 %v9244, %v9253
      %v9284 = vadd.f32 %v9245, %v9253
      %v9285 = vadd.f32 %v9246, %v9253
      %v9286 = vadd.f32 %v9247, %v9253
      %v9287 = vmax.f32 %v9255, 0.0
      %v9288 = vmax.f32 %v9256, 0.0
      %v9289 = vmax.f32 %v9257, 0.0
      %v9290 = vmax.f32 %v9258, 0.0
      %v9291 = vmax.f32 %v9259, 0.0
      %v9292 = vmax.f32 %v9260, 0.0
      %v9293 = vmax.f32 %v9261, 0.0
      %v9294 = vmax.f32 %v9262, 0.0
      %v9295 = vmax.f32 %v9263, 0.0
      %v9296 = vmax.f32 %v9264, 0.0
      %v9297 = vmax.f32 %v9265, 0.0
      %v9298 = vmax.f32 %v9266, 0.0
      %v9299 = vmax.f32 %v9267, 0.0
      %v9300 = vmax.f32 %v9268, 0.0
      %v9301 = vmax.f32 %v9269, 0.0
      %v9302 = vmax.f32 %v9270, 0.0
      %v9303 = vmax.f32 %v9271, 0.0
      %v9304 = vmax.f32 %v9272, 0.0
      %v9305 = vmax.f32 %v9273, 0.0
      %v9306 = vmax.f32 %v9274, 0.0
      %v9307 = vmax.f32 %v9275, 0.0
      %v9308 = vmax.f32 %v9276, 0.0
      %v9309 = vmax.f32 %v9277, 0.0
      %v9310 = vmax.f32 %v9278, 0.0
      %v9311 = vmax.f32 %v9279, 0.0
      %v9312 = vmax.f32 %v9280, 0.0
      %v9313 = vmax.f32 %v9281, 0.0
      %v9314 = vmax.f32 %v9282, 0.0
      %v9315 = vmax.f32 %v9283, 0.0
      %v9316 = vmax.f32 %v9284, 0.0
      %v9317 = vmax.f32 %v9285, 0.0
      %v9318 = vmax.f32 %v9286, 0.0
      %v9319 = vpack.c.bf16 %v9288, %v9287
      %v9320 = vpack.c.bf16 %v9290, %v9289
      %v9321 = vpack.c.bf16 %v9292, %v9291
      %v9322 = vpack.c.bf16 %v9294, %v9293
      %v9323 = vpack.c.bf16 %v9296, %v9295
      %v9324 = vpack.c.bf16 %v9298, %v9297
      %v9325 = vpack.c.bf16 %v9300, %v9299
      %v9326 = vpack.c.bf16 %v9302, %v9301
      %v9327 = vpack.c.bf16 %v9304, %v9303
      %v9328 = vpack.c.bf16 %v9306, %v9305
      %v9329 = vpack.c.bf16 %v9308, %v9307
      %v9330 = vpack.c.bf16 %v9310, %v9309
      %v9331 = vpack.c.bf16 %v9312, %v9311
      %v9332 = vpack.c.bf16 %v9314, %v9313
      %v9333 = vpack.c.bf16 %v9316, %v9315
      %v9334 = vpack.c.bf16 %v9318, %v9317
      %v9335 = vld [vmem:[%s6] sm:$0xf]
      %v9336 = vld [vmem:[%s6 + $0x4] sm:$0xf]
      %v9337 = vld [vmem:[%s6 + $0x8] sm:$0xf]
      %v9338 = vld [vmem:[%s6 + $0xc] sm:$0xf]
      %v9339 = vld [vmem:[%s6 + $0x10] sm:$0xf]
      %v9340 = vld [vmem:[%s6 + $0x14] sm:$0xf]
      %v9341 = vld [vmem:[%s6 + $0x18] sm:$0xf]
      %v9342 = vld [vmem:[%s6 + $0x1c] sm:$0xf]
      %v9343 = vld [vmem:[%s7] sm:$0x1]
      %v9345 = vlaneseq
      %v9346 = vshrl.u32 %v9345, 7
      %v9347 = vsub.s32 0, %v9346
      %v9348 = vrot.slane %v9343, %v9347
      %v9358 = vunpack.c.l.b16 %v9335
      %v9359 = vunpack.c.l.b16 %v9336
      %v9360 = vunpack.c.l.b16 %v9337
      %v9361 = vunpack.c.l.b16 %v9338
      %v9362 = vunpack.c.l.b16 %v9339
      %v9363 = vunpack.c.l.b16 %v9340
      %v9364 = vunpack.c.l.b16 %v9341
      %v9365 = vunpack.c.l.b16 %v9342
      %v9366 = vpack.c.b16 %v9359, %v9358
      %v9367 = vpack.c.b16 %v9361, %v9360
      %v9368 = vpack.c.b16 %v9363, %v9362
      %v9369 = vpack.c.b16 %v9365, %v9364
      %vm9374 = vcmask 523264
      %v9376 = vsel %vm9374, %v9319, 0
      %v9379 = vsel %vm9374, %v9320, 0
      %v9382 = vsel %vm9374, %v9321, 0
      %v9385 = vsel %vm9374, %v9322, 0
      %v9388 = vsel %vm9374, %v9323, 0
      %v9391 = vsel %vm9374, %v9324, 0
      %v9394 = vsel %vm9374, %v9325, 0
      %v9397 = vsel %vm9374, %v9326, 0
      %v9400 = vsel %vm9374, %v9327, 0
      %v9403 = vsel %vm9374, %v9328, 0
      %v9406 = vsel %vm9374, %v9329, 0
      %v9409 = vsel %vm9374, %v9330, 0
      %v9412 = vsel %vm9374, %v9331, 0
      %v9415 = vsel %vm9374, %v9332, 0
      %v9418 = vsel %vm9374, %v9333, 0
      %v9421 = vsel %vm9374, %v9334, 0
      %9423 = vmatprep.subr.bf16.mxu0 0
      %9424 = vmatpush1.bf16.msra.mxu0 %v9366
      %9425 = vmatprep.subr.bf16.mxu0 0
      %9426 = vmatpush1.bf16.msra.mxu0 %v9367
      %9427 = vmatprep.subr.bf16.mxu0 0
      %9428 = vmatpush1.bf16.msra.mxu0 %v9368
      %9429 = vmatprep.subr.bf16.mxu0 0
      %9430 = vmatpush1.bf16.msra.mxu0 %v9369
      %9431 = vmatprep.subr.bf16.mxu0 0
      %9432 = vmatpush1.bf16.msra.mxu0 0
      %9433 = vmatprep.subr.bf16.mxu0 0
      %9434 = vmatpush1.bf16.msra.mxu0 0
      %9435 = vmatprep.subr.bf16.mxu0 0
      %9436 = vmatpush1.bf16.msra.mxu0 0
      %9437 = vmatprep.subr.bf16.mxu0 0
      %9438 = vmatpush1.bf16.msra.mxu0 0
      %9439 = vmatprep.subr.bf16.mxu0 0
      %9440 = vmatpush1.bf16.msra.mxu0 0
      %9441 = vmatprep.subr.bf16.mxu0 0
      %9442 = vmatpush1.bf16.msra.mxu0 0
      %9443 = vmatprep.subr.bf16.mxu0 0
      %9444 = vmatpush1.bf16.msra.mxu0 0
      %9445 = vmatprep.subr.bf16.mxu0 0
      %9446 = vmatpush1.bf16.msra.mxu0 0
      %9447 = vmatprep.subr.bf16.mxu0 0
      %9448 = vmatpush1.bf16.msra.mxu0 0
      %9449 = vmatprep.subr.bf16.mxu0 0
      %9450 = vmatpush1.bf16.msra.mxu0 0
      %9451 = vmatprep.subr.bf16.mxu0 0
      %9452 = vmatpush1.bf16.msra.mxu0 0
      %9453 = vmatprep.subr.bf16.mxu0 0
      %9454 = vmatpush1.bf16.msra.mxu0 0
      %9455 = vmatprep.mubr.bf16.mxu0 0
      %9456 = vmatmul.mubr.bf16.gmra.mrb[0].mxu0 %v9376
      %v9457 = vpop.f32.mrb[0].mxu0
      %v9458 = vadd.f32 %v9348, %v9457
      %v9459 = vpop.f32.mrb[0].mxu0
      %v9460 = vpop.f32.mrb[0].mxu0
      %v9461 = vadd.f32 %v9348, %v9460
      %v9462 = vpop.f32.mrb[0].mxu0
      %9463 = vmatprep.mubr.bf16.mxu0 0
      %9464 = vmatmul.mubr.bf16.gmra.mrb[0].mxu0 %v9379
      %v9465 = vpop.f32.mrb[0].mxu0
      %v9466 = vadd.f32 %v9348, %v9465
      %v9467 = vpop.f32.mrb[0].mxu0
      %v9468 = vpop.f32.mrb[0].mxu0
      %v9469 = vadd.f32 %v9348, %v9468
      %v9470 = vpop.f32.mrb[0].mxu0
      %9471 = vmatprep.mubr.bf16.mxu0 0
      %9472 = vmatmul.mubr.bf16.gmra.mrb[0].mxu0 %v9382
      %v9473 = vpop.f32.mrb[0].mxu0
      %v9474 = vadd.f32 %v9348, %v9473
      %v9475 = vpop.f32.mrb[0].mxu0
      %v9476 = vpop.f32.mrb[0].mxu0
      %v9477 = vadd.f32 %v9348, %v9476
      %v9478 = vpop.f32.mrb[0].mxu0
      %9479 = vmatprep.mubr.bf16.mxu0 0
      %9480 = vmatmul.mubr.bf16.gmra.mrb[0].mxu0 %v9385
      %v9481 = vpop.f32.mrb[0].mxu0
      %v9482 = vadd.f32 %v9348, %v9481
      %v9483 = vpop.f32.mrb[0].mxu0
      %v9484 = vpop.f32.mrb[0].mxu0
      %v9485 = vadd.f32 %v9348, %v9484
      %v9486 = vpop.f32.mrb[0].mxu0
      %9487 = vmatprep.mubr.bf16.mxu0 0
      %9488 = vmatmul.mubr.bf16.gmra.mrb[0].mxu0 %v9388
      %v9489 = vpop.f32.mrb[0].mxu0
      %v9490 = vadd.f32 %v9348, %v9489
      %v9491 = vpop.f32.mrb[0].mxu0
      %v9492 = vpop.f32.mrb[0].mxu0
      %v9493 = vadd.f32 %v9348, %v9492
      %v9494 = vpop.f32.mrb[0].mxu0
      %9495 = vmatprep.mubr.bf16.mxu0 0
      %9496 = vmatmul.mubr.bf16.gmra.mrb[0].mxu0 %v9391
      %v9497 = vpop.f32.mrb[0].mxu0
      %v9498 = vadd.f32 %v9348, %v9497
      %v9499 = vpop.f32.mrb[0].mxu0
      %v9500 = vpop.f32.mrb[0].mxu0
      %v9501 = vadd.f32 %v9348, %v9500
      %v9502 = vpop.f32.mrb[0].mxu0
      %9503 = vmatprep.mubr.bf16.mxu0 0
      %9504 = vmatmul.mubr.bf16.gmra.mrb[0].mxu0 %v9394
      %v9505 = vpop.f32.mrb[0].mxu0
      %v9506 = vadd.f32 %v9348, %v9505
      %v9507 = vpop.f32.mrb[0].mxu0
      %v9508 = vpop.f32.mrb[0].mxu0
      %v9509 = vadd.f32 %v9348, %v9508
      %v9510 = vpop.f32.mrb[0].mxu0
      %9511 = vmatprep.mubr.bf16.mxu0 0
      %9512 = vmatmul.mubr.bf16.gmra.mrb[0].mxu0 %v9397
      %v9513 = vpop.f32.mrb[0].mxu0
      %v9514 = vadd.f32 %v9348, %v9513
      %v9515 = vpop.f32.mrb[0].mxu0
      %v9516 = vpop.f32.mrb[0].mxu0
      %v9517 = vadd.f32 %v9348, %v9516
      %v9518 = vpop.f32.mrb[0].mxu0
      %9519 = vmatprep.mubr.bf16.mxu0 0
      %9520 = vmatmul.mubr.bf16.gmra.mrb[0].mxu0 %v9400
      %v9521 = vpop.f32.mrb[0].mxu0
      %v9522 = vadd.f32 %v9348, %v9521
      %v9523 = vpop.f32.mrb[0].mxu0
      %v9524 = vpop.f32.mrb[0].mxu0
      %v9525 = vadd.f32 %v9348, %v9524
      %v9526 = vpop.f32.mrb[0].mxu0
      %9527 = vmatprep.mubr.bf16.mxu0 0
      %9528 = vmatmul.mubr.bf16.gmra.mrb[0].mxu0 %v9403
      %v9529 = vpop.f32.mrb[0].mxu0
      %v9530 = vadd.f32 %v9348, %v9529
      %v9531 = vpop.f32.mrb[0].mxu0
      %v9532 = vpop.f32.mrb[0].mxu0
      %v9533 = vadd.f32 %v9348, %v9532
      %v9534 = vpop.f32.mrb[0].mxu0
      %9535 = vmatprep.mubr.bf16.mxu0 0
      %9536 = vmatmul.mubr.bf16.gmra.mrb[0].mxu0 %v9406
      %v9537 = vpop.f32.mrb[0].mxu0
      %v9538 = vadd.f32 %v9348, %v9537
      %v9539 = vpop.f32.mrb[0].mxu0
      %v9540 = vpop.f32.mrb[0].mxu0
      %v9541 = vadd.f32 %v9348, %v9540
      %v9542 = vpop.f32.mrb[0].mxu0
      %9543 = vmatprep.mubr.bf16.mxu0 0
      %9544 = vmatmul.mubr.bf16.gmra.mrb[0].mxu0 %v9409
      %v9545 = vpop.f32.mrb[0].mxu0
      %v9546 = vadd.f32 %v9348, %v9545
      %v9547 = vpop.f32.mrb[0].mxu0
      %v9548 = vpop.f32.mrb[0].mxu0
      %v9549 = vadd.f32 %v9348, %v9548
      %v9550 = vpop.f32.mrb[0].mxu0
      %9551 = vmatprep.mubr.bf16.mxu0 0
      %9552 = vmatmul.mubr.bf16.gmra.mrb[0].mxu0 %v9412
      %v9553 = vpop.f32.mrb[0].mxu0
      %v9554 = vadd.f32 %v9348, %v9553
      %v9555 = vpop.f32.mrb[0].mxu0
      %v9556 = vpop.f32.mrb[0].mxu0
      %v9557 = vadd.f32 %v9348, %v9556
      %v9558 = vpop.f32.mrb[0].mxu0
      %9559 = vmatprep.mubr.bf16.mxu0 0
      %9560 = vmatmul.mubr.bf16.gmra.mrb[0].mxu0 %v9415
      %v9561 = vpop.f32.mrb[0].mxu0
      %v9562 = vadd.f32 %v9348, %v9561
      %v9563 = vpop.f32.mrb[0].mxu0
      %v9564 = vpop.f32.mrb[0].mxu0
      %v9565 = vadd.f32 %v9348, %v9564
      %v9566 = vpop.f32.mrb[0].mxu0
      %9567 = vmatprep.mubr.bf16.mxu0 0
      %9568 = vmatmul.mubr.bf16.gmra.mrb[0].mxu0 %v9418
      %v9569 = vpop.f32.mrb[0].mxu0
      %v9570 = vadd.f32 %v9348, %v9569
      %v9571 = vpop.f32.mrb[0].mxu0
      %v9572 = vpop.f32.mrb[0].mxu0
      %v9573 = vadd.f32 %v9348, %v9572
      %v9574 = vpop.f32.mrb[0].mxu0
      %9575 = vmatprep.mubr.bf16.mxu0 0
      %9576 = vmatmul.mubr.bf16.gmra.mrb[0].mxu0 %v9421
      %v9577 = vpop.f32.mrb[0].mxu0
      %v9578 = vadd.f32 %v9348, %v9577
      %v9579 = vpop.f32.mrb[0].mxu0
      %v9580 = vpop.f32.mrb[0].mxu0
      %v9581 = vadd.f32 %v9348, %v9580
      %v9582 = vpop.f32.mrb[0].mxu0
      %9583 = vdwg.mxu0
      %v9584 = vmax.f32 %v9458, 0.0
      %v9585 = vmax.f32 %v9461, 0.0
      %v9586 = vmax.f32 %v9466, 0.0
      %v9587 = vmax.f32 %v9469, 0.0
      %v9588 = vmax.f32 %v9474, 0.0
      %v9589 = vmax.f32 %v9477, 0.0
      %v9590 = vmax.f32 %v9482, 0.0
      %v9591 = vmax.f32 %v9485, 0.0
      %v9592 = vmax.f32 %v9490, 0.0
      %v9593 = vmax.f32 %v9493, 0.0
      %v9594 = vmax.f32 %v9498, 0.0
      %v9595 = vmax.f32 %v9501, 0.0
      %v9596 = vmax.f32 %v9506, 0.0
      %v9597 = vmax.f32 %v9509, 0.0
      %v9598 = vmax.f32 %v9514, 0.0
      %v9599 = vmax.f32 %v9517, 0.0
      %v9600 = vmax.f32 %v9522, 0.0
      %v9601 = vmax.f32 %v9525, 0.0
      %v9602 = vmax.f32 %v9530, 0.0
      %v9603 = vmax.f32 %v9533, 0.0
      %v9604 = vmax.f32 %v9538, 0.0
      %v9605 = vmax.f32 %v9541, 0.0
      %v9606 = vmax.f32 %v9546, 0.0
      %v9607 = vmax.f32 %v9549, 0.0
      %v9608 = vmax.f32 %v9554, 0.0
      %v9609 = vmax.f32 %v9557, 0.0
      %v9610 = vmax.f32 %v9562, 0.0
      %v9611 = vmax.f32 %v9565, 0.0
      %v9612 = vmax.f32 %v9570, 0.0
      %v9613 = vmax.f32 %v9573, 0.0
      %v9614 = vmax.f32 %v9578, 0.0
      %v9615 = vmax.f32 %v9581, 0.0
      %v9616 = vpack.c.bf16 %v9585, %v9584
      %v9617 = vpack.c.bf16 %v9587, %v9586
      %v9618 = vpack.c.bf16 %v9589, %v9588
      %v9619 = vpack.c.bf16 %v9591, %v9590
      %v9620 = vpack.c.bf16 %v9593, %v9592
      %v9621 = vpack.c.bf16 %v9595, %v9594
      %v9622 = vpack.c.bf16 %v9597, %v9596
      %v9623 = vpack.c.bf16 %v9599, %v9598
      %v9624 = vpack.c.bf16 %v9601, %v9600
      %v9625 = vpack.c.bf16 %v9603, %v9602
      %v9626 = vpack.c.bf16 %v9605, %v9604
      %v9627 = vpack.c.bf16 %v9607, %v9606
      %v9628 = vpack.c.bf16 %v9609, %v9608
      %v9629 = vpack.c.bf16 %v9611, %v9610
      %v9630 = vpack.c.bf16 %v9613, %v9612
      %v9631 = vpack.c.bf16 %v9615, %v9614
      %v9632 = vld [vmem:[%s8] sm:$0xf]
      %v9633 = vld [vmem:[%s8 + $0x4] sm:$0xf]
      %v9634 = vld [vmem:[%s8 + $0x8] sm:$0xf]
      %v9635 = vld [vmem:[%s8 + $0xc] sm:$0xf]
      %v9636 = vld [vmem:[%s8 + $0x10] sm:$0xf]
      %v9637 = vld [vmem:[%s8 + $0x14] sm:$0xf]
      %v9638 = vld [vmem:[%s8 + $0x18] sm:$0xf]
      %v9639 = vld [vmem:[%s8 + $0x1c] sm:$0xf]
      %v9640 = vld [vmem:[%s9] sm:$0x1]
      %v9642 = vlaneseq
      %v9643 = vshrl.u32 %v9642, 7
      %v9644 = vsub.s32 0, %v9643
      %v9645 = vrot.slane %v9640, %v9644
      %v9655 = vunpack.c.l.b16 %v9632
      %v9656 = vunpack.c.l.b16 %v9633
      %v9657 = vunpack.c.l.b16 %v9634
      %v9658 = vunpack.c.l.b16 %v9635
      %v9659 = vunpack.c.l.b16 %v9636
      %v9660 = vunpack.c.l.b16 %v9637
      %v9661 = vunpack.c.l.b16 %v9638
      %v9662 = vunpack.c.l.b16 %v9639
      %v9663 = vpack.c.b16 %v9656, %v9655
      %v9664 = vpack.c.b16 %v9658, %v9657
      %v9665 = vpack.c.b16 %v9660, %v9659
      %v9666 = vpack.c.b16 %v9662, %v9661
      %v9672 = vsel %vm9374, %v9616, 0
      %v9675 = vsel %vm9374, %v9617, 0
      %v9678 = vsel %vm9374, %v9618, 0
      %v9681 = vsel %vm9374, %v9619, 0
      %v9684 = vsel %vm9374, %v9620, 0
      %v9687 = vsel %vm9374, %v9621, 0
      %v9690 = vsel %vm9374, %v9622, 0
      %v9693 = vsel %vm9374, %v9623, 0
      %v9696 = vsel %vm9374, %v9624, 0
      %v9699 = vsel %vm9374, %v9625, 0
      %v9702 = vsel %vm9374, %v9626, 0
      %v9705 = vsel %vm9374, %v9627, 0
      %v9708 = vsel %vm9374, %v9628, 0
      %v9711 = vsel %vm9374, %v9629, 0
      %v9714 = vsel %vm9374, %v9630, 0
      %v9717 = vsel %vm9374, %v9631, 0
      %9719 = vmatprep.subr.bf16.mxu0 0
      %9720 = vmatpush1.bf16.msra.mxu0 %v9663
      %9721 = vmatprep.subr.bf16.mxu0 0
      %9722 = vmatpush1.bf16.msra.mxu0 %v9664
      %9723 = vmatprep.subr.bf16.mxu0 0
      %9724 = vmatpush1.bf16.msra.mxu0 %v9665
      %9725 = vmatprep.subr.bf16.mxu0 0
      %9726 = vmatpush1.bf16.msra.mxu0 %v9666
      %9727 = vmatprep.subr.bf16.mxu0 0
      %9728 = vmatpush1.bf16.msra.mxu0 0
      %9729 = vmatprep.subr.bf16.mxu0 0
      %9730 = vmatpush1.bf16.msra.mxu0 0
      %9731 = vmatprep.subr.bf16.mxu0 0
      %9732 = vmatpush1.bf16.msra.mxu0 0
      %9733 = vmatprep.subr.bf16.mxu0 0
      %9734 = vmatpush1.bf16.msra.mxu0 0
      %9735 = vmatprep.subr.bf16.mxu0 0
      %9736 = vmatpush1.bf16.msra.mxu0 0
      %9737 = vmatprep.subr.bf16.mxu0 0
      %9738 = vmatpush1.bf16.msra.mxu0 0
      %9739 = vmatprep.subr.bf16.mxu0 0
      %9740 = vmatpush1.bf16.msra.mxu0 0
      %9741 = vmatprep.subr.bf16.mxu0 0
      %9742 = vmatpush1.bf16.msra.mxu0 0
      %9743 = vmatprep.subr.bf16.mxu0 0
      %9744 = vmatpush1.bf16.msra.mxu0 0
      %9745 = vmatprep.subr.bf16.mxu0 0
      %9746 = vmatpush1.bf16.msra.mxu0 0
      %9747 = vmatprep.subr.bf16.mxu0 0
      %9748 = vmatpush1.bf16.msra.mxu0 0
      %9749 = vmatprep.subr.bf16.mxu0 0
      %9750 = vmatpush1.bf16.msra.mxu0 0
      %9751 = vmatprep.mubr.bf16.mxu0 0
      %9752 = vmatmul.mubr.bf16.gmra.mrb[0].mxu0 %v9672
      %v9753 = vpop.f32.mrb[0].mxu0
      %v9754 = vadd.f32 %v9645, %v9753
      %v9755 = vpop.f32.mrb[0].mxu0
      %v9756 = vpop.f32.mrb[0].mxu0
      %v9757 = vadd.f32 %v9645, %v9756
      %v9758 = vpop.f32.mrb[0].mxu0
      %9759 = vmatprep.mubr.bf16.mxu0 0
      %9760 = vmatmul.mubr.bf16.gmra.mrb[0].mxu0 %v9675
      %v9761 = vpop.f32.mrb[0].mxu0
      %v9762 = vadd.f32 %v9645, %v9761
      %v9763 = vpop.f32.mrb[0].mxu0
      %v9764 = vpop.f32.mrb[0].mxu0
      %v9765 = vadd.f32 %v9645, %v9764
      %v9766 = vpop.f32.mrb[0].mxu0
      %9767 = vmatprep.mubr.bf16.mxu0 0
      %9768 = vmatmul.mubr.bf16.gmra.mrb[0].mxu0 %v9678
      %v9769 = vpop.f32.mrb[0].mxu0
      %v9770 = vadd.f32 %v9645, %v9769
      %v9771 = vpop.f32.mrb[0].mxu0
      %v9772 = vpop.f32.mrb[0].mxu0
      %v9773 = vadd.f32 %v9645, %v9772
      %v9774 = vpop.f32.mrb[0].mxu0
      %9775 = vmatprep.mubr.bf16.mxu0 0
      %9776 = vmatmul.mubr.bf16.gmra.mrb[0].mxu0 %v9681
      %v9777 = vpop.f32.mrb[0].mxu0
      %v9778 = vadd.f32 %v9645, %v9777
      %v9779 = vpop.f32.mrb[0].mxu0
      %v9780 = vpop.f32.mrb[0].mxu0
      %v9781 = vadd.f32 %v9645, %v9780
      %v9782 = vpop.f32.mrb[0].mxu0
      %9783 = vmatprep.mubr.bf16.mxu0 0
      %9784 = vmatmul.mubr.bf16.gmra.mrb[0].mxu0 %v9684
      %v9785 = vpop.f32.mrb[0].mxu0
      %v9786 = vadd.f32 %v9645, %v9785
      %v9787 = vpop.f32.mrb[0].mxu0
      %v9788 = vpop.f32.mrb[0].mxu0
      %v9789 = vadd.f32 %v9645, %v9788
      %v9790 = vpop.f32.mrb[0].mxu0
      %9791 = vmatprep.mubr.bf16.mxu0 0
      %9792 = vmatmul.mubr.bf16.gmra.mrb[0].mxu0 %v9687
      %v9793 = vpop.f32.mrb[0].mxu0
      %v9794 = vadd.f32 %v9645, %v9793
      %v9795 = vpop.f32.mrb[0].mxu0
      %v9796 = vpop.f32.mrb[0].mxu0
      %v9797 = vadd.f32 %v9645, %v9796
      %v9798 = vpop.f32.mrb[0].mxu0
      %9799 = vmatprep.mubr.bf16.mxu0 0
      %9800 = vmatmul.mubr.bf16.gmra.mrb[0].mxu0 %v9690
      %v9801 = vpop.f32.mrb[0].mxu0
      %v9802 = vadd.f32 %v9645, %v9801
      %v9803 = vpop.f32.mrb[0].mxu0
      %v9804 = vpop.f32.mrb[0].mxu0
      %v9805 = vadd.f32 %v9645, %v9804
      %v9806 = vpop.f32.mrb[0].mxu0
      %9807 = vmatprep.mubr.bf16.mxu0 0
      %9808 = vmatmul.mubr.bf16.gmra.mrb[0].mxu0 %v9693
      %v9809 = vpop.f32.mrb[0].mxu0
      %v9810 = vadd.f32 %v9645, %v9809
      %v9811 = vpop.f32.mrb[0].mxu0
      %v9812 = vpop.f32.mrb[0].mxu0
      %v9813 = vadd.f32 %v9645, %v9812
      %v9814 = vpop.f32.mrb[0].mxu0
      %9815 = vmatprep.mubr.bf16.mxu0 0
      %9816 = vmatmul.mubr.bf16.gmra.mrb[0].mxu0 %v9696
      %v9817 = vpop.f32.mrb[0].mxu0
      %v9818 = vadd.f32 %v9645, %v9817
      %v9819 = vpop.f32.mrb[0].mxu0
      %v9820 = vpop.f32.mrb[0].mxu0
      %v9821 = vadd.f32 %v9645, %v9820
      %v9822 = vpop.f32.mrb[0].mxu0
      %9823 = vmatprep.mubr.bf16.mxu0 0
      %9824 = vmatmul.mubr.bf16.gmra.mrb[0].mxu0 %v9699
      %v9825 = vpop.f32.mrb[0].mxu0
      %v9826 = vadd.f32 %v9645, %v9825
      %v9827 = vpop.f32.mrb[0].mxu0
      %v9828 = vpop.f32.mrb[0].mxu0
      %v9829 = vadd.f32 %v9645, %v9828
      %v9830 = vpop.f32.mrb[0].mxu0
      %9831 = vmatprep.mubr.bf16.mxu0 0
      %9832 = vmatmul.mubr.bf16.gmra.mrb[0].mxu0 %v9702
      %v9833 = vpop.f32.mrb[0].mxu0
      %v9834 = vadd.f32 %v9645, %v9833
      %v9835 = vpop.f32.mrb[0].mxu0
      %v9836 = vpop.f32.mrb[0].mxu0
      %v9837 = vadd.f32 %v9645, %v9836
      %v9838 = vpop.f32.mrb[0].mxu0
      %9839 = vmatprep.mubr.bf16.mxu0 0
      %9840 = vmatmul.mubr.bf16.gmra.mrb[0].mxu0 %v9705
      %v9841 = vpop.f32.mrb[0].mxu0
      %v9842 = vadd.f32 %v9645, %v9841
      %v9843 = vpop.f32.mrb[0].mxu0
      %v9844 = vpop.f32.mrb[0].mxu0
      %v9845 = vadd.f32 %v9645, %v9844
      %v9846 = vpop.f32.mrb[0].mxu0
      %9847 = vmatprep.mubr.bf16.mxu0 0
      %9848 = vmatmul.mubr.bf16.gmra.mrb[0].mxu0 %v9708
      %v9849 = vpop.f32.mrb[0].mxu0
      %v9850 = vadd.f32 %v9645, %v9849
      %v9851 = vpop.f32.mrb[0].mxu0
      %v9852 = vpop.f32.mrb[0].mxu0
      %v9853 = vadd.f32 %v9645, %v9852
      %v9854 = vpop.f32.mrb[0].mxu0
      %9855 = vmatprep.mubr.bf16.mxu0 0
      %9856 = vmatmul.mubr.bf16.gmra.mrb[0].mxu0 %v9711
      %v9857 = vpop.f32.mrb[0].mxu0
      %v9858 = vadd.f32 %v9645, %v9857
      %v9859 = vpop.f32.mrb[0].mxu0
      %v9860 = vpop.f32.mrb[0].mxu0
      %v9861 = vadd.f32 %v9645, %v9860
      %v9862 = vpop.f32.mrb[0].mxu0
      %9863 = vmatprep.mubr.bf16.mxu0 0
      %9864 = vmatmul.mubr.bf16.gmra.mrb[0].mxu0 %v9714
      %v9865 = vpop.f32.mrb[0].mxu0
      %v9866 = vadd.f32 %v9645, %v9865
      %v9867 = vpop.f32.mrb[0].mxu0
      %v9868 = vpop.f32.mrb[0].mxu0
      %v9869 = vadd.f32 %v9645, %v9868
      %v9870 = vpop.f32.mrb[0].mxu0
      %9871 = vmatprep.mubr.bf16.mxu0 0
      %9872 = vmatmul.mubr.bf16.gmra.mrb[0].mxu0 %v9717
      %v9873 = vpop.f32.mrb[0].mxu0
      %v9874 = vadd.f32 %v9645, %v9873
      %v9875 = vpop.f32.mrb[0].mxu0
      %v9876 = vpop.f32.mrb[0].mxu0
      %v9877 = vadd.f32 %v9645, %v9876
      %v9878 = vpop.f32.mrb[0].mxu0
      %9879 = vdwg.mxu0
      %v9880 = vtanh.pop %v9754
      %v9881 = vtanh.pop %v9757
      %v9882 = vtanh.pop %v9762
      %v9883 = vtanh.pop %v9765
      %v9884 = vtanh.pop %v9770
      %v9885 = vtanh.pop %v9773
      %v9886 = vtanh.pop %v9778
      %v9887 = vtanh.pop %v9781
      %v9888 = vtanh.pop %v9786
      %v9889 = vtanh.pop %v9789
      %v9890 = vtanh.pop %v9794
      %v9891 = vtanh.pop %v9797
      %v9892 = vtanh.pop %v9802
      %v9893 = vtanh.pop %v9805
      %v9894 = vtanh.pop %v9810
      %v9895 = vtanh.pop %v9813
      %v9896 = vtanh.pop %v9818
      %v9897 = vtanh.pop %v9821
      %v9898 = vtanh.pop %v9826
      %v9899 = vtanh.pop %v9829
      %v9900 = vtanh.pop %v9834
      %v9901 = vtanh.pop %v9837
      %v9902 = vtanh.pop %v9842
      %v9903 = vtanh.pop %v9845
      %v9904 = vtanh.pop %v9850
      %v9905 = vtanh.pop %v9853
      %v9906 = vtanh.pop %v9858
      %v9907 = vtanh.pop %v9861
      %v9908 = vtanh.pop %v9866
      %v9909 = vtanh.pop %v9869
      %v9910 = vtanh.pop %v9874
      %v9911 = vtanh.pop %v9877
      %9912 = vst.msk [vmem:[%s361] sm:$0xff] %vm716, %v9880
      %9913 = vst.msk [vmem:[%s361 + $0x8] sm:$0xff] %vm716, %v9881
      %9914 = vst.msk [vmem:[%s361 + $0x10] sm:$0xff] %vm716, %v9882
      %9915 = vst.msk [vmem:[%s361 + $0x18] sm:$0xff] %vm716, %v9883
      %9916 = vst.msk [vmem:[%s361 + $0x20] sm:$0xff] %vm716, %v9884
      %9917 = vst.msk [vmem:[%s361 + $0x28] sm:$0xff] %vm716, %v9885
      %9918 = vst.msk [vmem:[%s361 + $0x30] sm:$0xff] %vm716, %v9886
      %9919 = vst.msk [vmem:[%s361 + $0x38] sm:$0xff] %vm716, %v9887
      %9920 = vst.msk [vmem:[%s361 + $0x40] sm:$0xff] %vm716, %v9888
      %9921 = vst.msk [vmem:[%s361 + $0x48] sm:$0xff] %vm716, %v9889
      %9922 = vst.msk [vmem:[%s361 + $0x50] sm:$0xff] %vm716, %v9890
      %9923 = vst.msk [vmem:[%s361 + $0x58] sm:$0xff] %vm716, %v9891
      %9924 = vst.msk [vmem:[%s361 + $0x60] sm:$0xff] %vm716, %v9892
      %9925 = vst.msk [vmem:[%s361 + $0x68] sm:$0xff] %vm716, %v9893
      %9926 = vst.msk [vmem:[%s361 + $0x70] sm:$0xff] %vm716, %v9894
      %9927 = vst.msk [vmem:[%s361 + $0x78] sm:$0xff] %vm716, %v9895
      %9928 = vst.msk [vmem:[%s361 + $0x80] sm:$0xff] %vm716, %v9896
      %9929 = vst.msk [vmem:[%s361 + $0x88] sm:$0xff] %vm716, %v9897
      %9930 = vst.msk [vmem:[%s361 + $0x90] sm:$0xff] %vm716, %v9898
      %9931 = vst.msk [vmem:[%s361 + $0x98] sm:$0xff] %vm716, %v9899
      %9932 = vst.msk [vmem:[%s361 + $0xa0] sm:$0xff] %vm716, %v9900
      %9933 = vst.msk [vmem:[%s361 + $0xa8] sm:$0xff] %vm716, %v9901
      %9934 = vst.msk [vmem:[%s361 + $0xb0] sm:$0xff] %vm716, %v9902
      %9935 = vst.msk [vmem:[%s361 + $0xb8] sm:$0xff] %vm716, %v9903
      %9936 = vst.msk [vmem:[%s361 + $0xc0] sm:$0xff] %vm716, %v9904
      %9937 = vst.msk [vmem:[%s361 + $0xc8] sm:$0xff] %vm716, %v9905
      %9938 = vst.msk [vmem:[%s361 + $0xd0] sm:$0xff] %vm716, %v9906
      %9939 = vst.msk [vmem:[%s361 + $0xd8] sm:$0xff] %vm716, %v9907
      %9940 = vst.msk [vmem:[%s361 + $0xe0] sm:$0xff] %vm716, %v9908
      %9941 = vst.msk [vmem:[%s361 + $0xe8] sm:$0xff] %vm716, %v9909
      %9942 = vst.msk [vmem:[%s361 + $0xf0] sm:$0xff] %vm716, %v9910
      %9943 = vst.msk [vmem:[%s361 + $0xf8] sm:$0xff] %vm716, %v9911
      %s9944 = smul.u32 32, %s21
      %p9945 = scmp.lt.s32.totalorder %s9944, 63
      %s9946 = scalar_select %p9945, %s9944, 63
      %s9947 = smul.addr %s9946, 8
      %s9948 = scalar_lea.vmem %s10, %s9947
      // Predicated region
      $region61: #{rendering_network_forward.1} parent=59 // pred_check
        %p9949 = pneg %p254
      $region62: #{rendering_network_forward.1} parent=59 // pred_check_branch
        %9951 = sbr.rel (%p9949) target = $region64
      $region63: #{rendering_network_forward.1} parent=59 // pred_region
        %s9952 = smul.u32 32, %s21
      $region64: #{rendering_network_forward.1} parent=59 // pred_fallthru
        _
    $region60: #{rendering_network_forward.1} parent=5 // pred_fallthru
      _
    %p9953 = scmp.le.s32.totalorder 2, %s16
    // Predicated region
    $region65: #{rendering_network_forward.1} parent=5 // pred_check
      %p9954 = pneg %p9953
    $region66: #{rendering_network_forward.1} parent=5 // pred_check_branch
      %9956 = sbr.rel (%p9954) target = $region68
    $region67: #{rendering_network_forward.1} parent=5 // pred_region
      %s9957 = ssub.s32 %s16, 2
      // Predicated region
      $region69: #{rendering_network_forward.1} parent=67 // pred_check
        %p9958 = pneg %p260
      $region70: #{rendering_network_forward.1} parent=67 // pred_check_branch
        %9960 = sbr.rel (%p9958) target = $region72
      $region71: #{rendering_network_forward.1} parent=67 // pred_region
        %s9961 = smul.u32 32, %s22
        %p9962 = scmp.lt.s32.totalorder %s9961, 63
        %s9963 = scalar_select %p9962, %s9961, 63
        %s9964 = smul.addr %s9963, 8
        %s9965 = scalar_lea.vmem %s10, %s9964
      $region72: #{rendering_network_forward.1} parent=67 // pred_fallthru
        _
    $region68: #{rendering_network_forward.1} parent=5 // pred_fallthru
      _
  $region6: #{rendering_network_forward.1} parent=0 // loop_footer
    %s20 = sadd.s32 1, %s16
  $region7: #{rendering_network_forward.1} parent=0 // loop_footer_branch
    %15 = sbr.rel target = $region3
  $region8: #{rendering_network_forward.1} parent=0 // loop_exit
    _

</llo_original>
